<compile_context>
chip_gen: v7x
topology: tpu7x:2x2x1
jax: 0.10.0
libtpu: 0.0.40
codegen_flags: <defaults>
</compile_context>

<pallas_src>
import functools

import jax
import jax.numpy as jnp
import numpy as np
from jax import lax
from jax.experimental import pallas as pl
from jax.experimental.pallas import tpu as pltpu

MIN_VALUE = -9.662e+37
MAX_VALUE = 6.687e+37


# ------------------------------ Pallas kernel ------------------------------ #

def _fused_kernel(p1_ref, w1_ref, b1_ref, m1_ref, w2_ref, b2_ref, o_ref,
                  pad2_ref, p2_ref, *,
                  cout1, cin2, d2, k, wp2, slab_d, p2cols, pad3,
                  min_value, max_value):
    """Fused ConvTranspose2d + clamp + ConvTranspose3d.

    Stage 1: one MXU matmul on a host-built im2col patch matrix whose columns
    already live on the stage-2 padded (Hp2 x Wp2) grid (extra columns are
    garbage and are masked to zero).  The clamped result is scattered into the
    flattened zero-padded stage-2 input volume with one contiguous lane-store
    per output channel -- the intermediate stays in VMEM.

    Stage 2: every im2col row is a shifted contiguous lane-slice of that
    flattened volume (no reshapes), followed by a second MXU matmul.
    """
    # ---------------- stage 1: ConvTranspose2d + clamp ----------------------
    y1 = jnp.dot(w1_ref[...], p1_ref[...],
                 preferred_element_type=jnp.float32,
                 precision=lax.Precision.HIGHEST)            # (Cout1, SLAB_D)
    y1 = y1 + b1_ref[...]                                    # bias  (Cout1, 1)
    y1 = jnp.minimum(jnp.maximum(y1, min_value), max_value)  # clamp_min/max
    y1 = y1 * m1_ref[...]                                    # zero garbage cols

    # ------ scatter clamped intermediate into the padded 3-D volume ---------
    pad2_ref[...] = jnp.zeros_like(pad2_ref)
    for co1 in range(cout1):
        c2, d = co1 // d2, co1 % d2
        start = (pad3 + d) * slab_d + pad3 * wp2 + pad3
        pad2_ref[c2:c2 + 1, start:start + slab_d] = y1[co1:co1 + 1, :]

    # ------------- stage 2: ConvTranspose3d as im2col + matmul --------------
    t = 0
    for ci in range(cin2):
        for kd in range(k):
            for kh in range(k):
                for kw in range(k):
                    off = kd * slab_d + kh * wp2 + kw
                    p2_ref[t:t + 1, :] = pad2_ref[ci:ci + 1, off:off + p2cols]
                    t += 1
    y2 = jnp.dot(w2_ref[...], p2_ref[...],
                 preferred_element_type=jnp.float32,
                 precision=lax.Precision.HIGHEST)            # (Cout2, P2COLS)
    o_ref[...] = y2 + b2_ref[...]


# ------------------------------ host wrapper ------------------------------- #

def model_forward(x1, w2, b2, w3, b3,
                  min_value=MIN_VALUE, max_value=MAX_VALUE):
    x = jnp.asarray(x1, jnp.float32)[..., 0]                 # (N, Cin, H, W)
    N, Cin, H, W = x.shape
    Cout1, K = w2.shape[1], w2.shape[2]
    Cin2, Cout2 = w3.shape[0], w3.shape[1]
    D2 = Cout1 // Cin2                                       # channel -> (C, D)
    s1, p1 = 2, 1                                            # ConvTranspose2d
    p3 = K - 1                                               # stage-2 full pad

    # stage-1 geometry (transposed conv == conv on dilated+padded input)
    Hd, Wd = (H - 1) * s1 + 1, (W - 1) * s1 + 1
    pd1 = K - 1 - p1
    Hp, Wp = Hd + 2 * pd1, Wd + 2 * pd1
    Ho, Wo = Hp - K + 1, Wp - K + 1                          # stage-1 out HxW

    # stage-2 geometry
    Dp2, Hp2, Wp2 = D2 + 2 * p3, Ho + 2 * p3, Wo + 2 * p3
    Do, Ho2, Wo2 = Dp2 - K + 1, Hp2 - K + 1, Wp2 - K + 1

    SLAB_N = Hp2 * Wp2                                       # per (n, d) slab
    SLAB_D = N * SLAB_N                                      # per d slab
    P2COLS = Do * SLAB_D                                     # kernel out cols
    PAD2_COLS = Dp2 * SLAB_D + (K - 1) * Wp2 + (K - 1)       # volume + slack

    # ------------------ host-side prep (tiny, one-shot XLA) -----------------
    xd = jnp.zeros((N, Cin, Hd, Wd), jnp.float32).at[:, :, ::s1, ::s1].set(x)
    xp = jnp.pad(xd, ((0, 0), (0, 0), (pd1, pd1), (pd1, pd1)))
    # extend bottom/right so stage-1 im2col columns live on the stage-2
    # (Hp2 x Wp2) padded grid; the extra columns are masked to 0 in-kernel.
    xe = jnp.pad(xp, ((0, 0), (0, 0), (0, Hp2 - Ho), (0, Wp2 - Wo)))
    rows = []
    for ci in range(Cin):
        for kh in range(K):
            for kw in range(K):
                rows.append(xe[:, ci, kh:kh + Hp2, kw:kw + Wp2].reshape(-1))
    p1g = jnp.stack(rows, axis=0)                            # (Cin*K*K, SLAB_D)

    w1m = jnp.transpose(jnp.asarray(w2, jnp.float32)[:, :, ::-1, ::-1],
                        (1, 0, 2, 3)).reshape(Cout1, Cin * K * K)
    b1c = jnp.asarray(b2, jnp.float32).reshape(Cout1, 1)
    w2m = jnp.transpose(jnp.asarray(w3, jnp.float32)[:, :, ::-1, ::-1, ::-1],
                        (1, 0, 2, 3, 4)).reshape(Cout2, Cin2 * K ** 3)
    b2c = jnp.asarray(b3, jnp.float32).reshape(Cout2, 1)

    valid_h = jnp.arange(Hp2) < Ho
    valid_w = jnp.arange(Wp2) < Wo
    m2d = (valid_h[:, None] & valid_w[None, :]).astype(jnp.float32)
    m1 = jnp.tile(m2d.reshape(-1), N).reshape(1, SLAB_D)

    kernel = functools.partial(
        _fused_kernel, cout1=Cout1, cin2=Cin2, d2=D2, k=K, wp2=Wp2,
        slab_d=SLAB_D, p2cols=P2COLS, pad3=p3,
        min_value=float(min_value), max_value=float(max_value))

    out2 = pl.pallas_call(
        kernel,
        out_shape=jax.ShapeDtypeStruct((Cout2, P2COLS), jnp.float32),
        in_specs=[pl.BlockSpec(memory_space=pltpu.MemorySpace.VMEM)] * 6,
        out_specs=pl.BlockSpec(memory_space=pltpu.MemorySpace.VMEM),
        scratch_shapes=[
            pltpu.VMEM((Cin2, PAD2_COLS), jnp.float32),       # padded interm.
            pltpu.VMEM((Cin2 * K ** 3, P2COLS), jnp.float32), # stage-2 im2col
        ],
    )(p1g, w1m, b1c, m1, w2m, b2c)

    # kernel output columns are (od, n, oh, ow) on the padded (Hp2, Wp2) grid:
    # crop the garbage columns and reorder to NCDHW.
    out = out2.reshape(Cout2, Do, N, Hp2, Wp2)[:, :, :, :Ho2, :Wo2]
    return jnp.transpose(out, (2, 0, 1, 3, 4))               # (N,Cout2,Do,Ho2,Wo2)


# --------------------------- pure-JAX reference ----------------------------- #

def _ref_convt2d(x, w_t, b, stride, padding):
    K = w_t.shape[2]
    w_conv = jnp.transpose(w_t[:, :, ::-1, ::-1], (1, 0, 2, 3))
    pad = K - 1 - padding
    y = lax.conv_general_dilated(
        x, w_conv, window_strides=(1, 1), padding=[(pad, pad), (pad, pad)],
        lhs_dilation=(stride, stride),
        dimension_numbers=('NCHW', 'OIHW', 'NCHW'),
        precision=lax.Precision.HIGHEST)
    return y + b[None, :, None, None]


def _ref_convt3d(x, w_t, b, stride, padding):
    K = w_t.shape[2]
    w_conv = jnp.transpose(w_t[:, :, ::-1, ::-1, ::-1], (1, 0, 2, 3, 4))
    pad = K - 1 - padding
    y = lax.conv_general_dilated(
        x, w_conv, window_strides=(1, 1, 1),
        padding=[(pad, pad)] * 3, lhs_dilation=(stride,) * 3,
        dimension_numbers=('NCDHW', 'OIDHW', 'NCDHW'),
        precision=lax.Precision.HIGHEST)
    return y + b[None, :, None, None, None]


def _ref_forward(x1, w2, b2, w3, b3):
    x = jnp.asarray(x1, jnp.float32)[..., 0]
    v1 = _ref_convt2d(x, jnp.asarray(w2, jnp.float32),
                      jnp.asarray(b2, jnp.float32), 2, 1)
    v3 = jnp.minimum(jnp.maximum(v1, MIN_VALUE), MAX_VALUE)
    N, _, Ho, Wo = v3.shape
    return _ref_convt3d(v3.reshape(N, 2, 2, Ho, Wo),
                        jnp.asarray(w3, jnp.float32),
                        jnp.asarray(b3, jnp.float32), 1, 0)


# ---------------------------------- main ------------------------------------ #

if __name__ == "__main__":
    key = jax.random.PRNGKey(0)
    k1, k2, k3, k4, k5 = jax.random.split(key, 5)

    N, H, W = 2, 8, 8
    x1 = jax.random.normal(k1, (N, 3, H, W, 1), dtype=jnp.float32)

    # ConvTranspose2d(3, 4, kernel=3, stride=2, padding=1) params (Cin,Cout,K,K)
    bound2 = float(1.0 / np.sqrt(4 * 3 * 3))
    w2 = jax.random.uniform(k2, (3, 4, 3, 3), jnp.float32, -bound2, bound2)
    b2 = jax.random.uniform(k3, (4,), jnp.float32, -bound2, bound2)

    # ConvTranspose3d(2, 5, kernel=3, stride=1, padding=0) params (Cin,Cout,K^3)
    bound3 = float(1.0 / np.sqrt(5 * 3 * 3 * 3))
    w3 = jax.random.uniform(k4, (2, 5, 3, 3, 3), jnp.float32, -bound3, bound3)
    b3 = jax.random.uniform(k5, (5,), jnp.float32, -bound3, bound3)

    fwd = jax.jit(model_forward)
    out = jax.block_until_ready(fwd(x1, w2, b2, w3, b3))
    ref = jax.block_until_ready(_ref_forward(x1, w2, b2, w3, b3))

    assert out.shape == (N, 5, 4, 2 * H + 1, 2 * W + 1), out.shape
    np.testing.assert_allclose(np.asarray(out), np.asarray(ref),
                               rtol=5e-4, atol=5e-4)
    print("KERNEL_OK")
</pallas_src>

<mosaic_0001>
module attributes {stable_mosaic.version = 11 : i64} {
  func.func @_fused_kernel(%arg0: memref<27x722xf32, #tpu.memory_space<vmem>>, %arg1: memref<4x27xf32, #tpu.memory_space<vmem>>, %arg2: memref<4x1xf32, #tpu.memory_space<vmem>>, %arg3: memref<1x722xf32, #tpu.memory_space<vmem>>, %arg4: memref<5x54xf32, #tpu.memory_space<vmem>>, %arg5: memref<5x1xf32, #tpu.memory_space<vmem>>, %arg6: memref<5x2888xf32, #tpu.memory_space<vmem>>, %arg7: memref<2x4372xf32, #tpu.memory_space<vmem>>, %arg8: memref<54x2888xf32, #tpu.memory_space<vmem>>) attributes {dimension_semantics = [], scalar_prefetch = 0 : i64, scratch_operands = 2 : i64, tpu.core_type = #tpu.core_type<tc>} {
    %c0 = arith.constant 0 : index
    %c0_0 = arith.constant 0 : index
    %0 = vector.load %arg1[%c0, %c0_0] : memref<4x27xf32, #tpu.memory_space<vmem>>, vector<4x27xf32>
    %c0_1 = arith.constant 0 : index
    %c0_2 = arith.constant 0 : index
    %1 = vector.load %arg0[%c0_1, %c0_2] : memref<27x722xf32, #tpu.memory_space<vmem>>, vector<27x722xf32>
    %cst = arith.constant dense<0.000000e+00> : vector<4x722xf32>
    %2 = tpu.matmul %0, %1, %cst {dimension_numbers = #tpu.dot_dimension_numbers<[1], [0], [0], [1], [0, 0, 1, 1], [], []>, precision = #tpu.contract_precision<fp32>} : vector<4x27xf32>, vector<27x722xf32>, vector<4x722xf32> -> vector<4x722xf32>
    %c0_3 = arith.constant 0 : index
    %c0_4 = arith.constant 0 : index
    %3 = vector.load %arg2[%c0_3, %c0_4] : memref<4x1xf32, #tpu.memory_space<vmem>>, vector<4x1xf32>
    %4 = vector.broadcast %3 : vector<4x1xf32> to vector<4x722xf32>
    %5 = arith.addf %2, %4 : vector<4x722xf32>
    %cst_5 = arith.constant -9.662000e+37 : f32
    %6 = vector.broadcast %cst_5 : f32 to vector<4x722xf32>
    %7 = arith.maximumf %5, %6 : vector<4x722xf32>
    %cst_6 = arith.constant 6.687000e+37 : f32
    %8 = vector.broadcast %cst_6 : f32 to vector<4x722xf32>
    %9 = arith.minimumf %7, %8 : vector<4x722xf32>
    %c0_7 = arith.constant 0 : index
    %c0_8 = arith.constant 0 : index
    %10 = vector.load %arg3[%c0_7, %c0_8] : memref<1x722xf32, #tpu.memory_space<vmem>>, vector<1x722xf32>
    %11 = vector.broadcast %10 : vector<1x722xf32> to vector<4x722xf32>
    %12 = arith.mulf %9, %11 : vector<4x722xf32>
    %cst_9 = arith.constant 0.000000e+00 : f32
    %13 = vector.broadcast %cst_9 : f32 to vector<2x4372xf32>
    %c0_10 = arith.constant 0 : index
    %c0_11 = arith.constant 0 : index
    %14 = vector.load %arg7[%c0_10, %c0_11] : memref<2x4372xf32, #tpu.memory_space<vmem>>, vector<2x4372xf32>
    tpu.vector_store %arg7[%c0_10, %c0_11], %13 {strides = array<i32>} : memref<2x4372xf32, #tpu.memory_space<vmem>>, vector<2x4372xf32>,
    %15 = vector.extract_strided_slice %12 {offsets = [0, 0], sizes = [1, 722], strides = [1, 1]} : vector<4x722xf32> to vector<1x722xf32>
    %c0_12 = arith.constant 0 : index
    %c1484 = arith.constant 1484 : index
    %16 = vector.load %arg7[%c0_12, %c1484] : memref<2x4372xf32, #tpu.memory_space<vmem>>, vector<1x722xf32>
    tpu.vector_store %arg7[%c0_12, %c1484], %15 {strides = array<i32>} : memref<2x4372xf32, #tpu.memory_space<vmem>>, vector<1x722xf32>,
    %17 = vector.extract_strided_slice %12 {offsets = [1, 0], sizes = [1, 722], strides = [1, 1]} : vector<4x722xf32> to vector<1x722xf32>
    %c0_13 = arith.constant 0 : index
    %c2206 = arith.constant 2206 : index
    %18 = vector.load %arg7[%c0_13, %c2206] : memref<2x4372xf32, #tpu.memory_space<vmem>>, vector<1x722xf32>
    tpu.vector_store %arg7[%c0_13, %c2206], %17 {strides = array<i32>} : memref<2x4372xf32, #tpu.memory_space<vmem>>, vector<1x722xf32>,
    %19 = vector.extract_strided_slice %12 {offsets = [2, 0], sizes = [1, 722], strides = [1, 1]} : vector<4x722xf32> to vector<1x722xf32>
    %c1 = arith.constant 1 : index
    %c1484_14 = arith.constant 1484 : index
    %20 = vector.load %arg7[%c1, %c1484_14] : memref<2x4372xf32, #tpu.memory_space<vmem>>, vector<1x722xf32>
    tpu.vector_store %arg7[%c1, %c1484_14], %19 {strides = array<i32>} : memref<2x4372xf32, #tpu.memory_space<vmem>>, vector<1x722xf32>,
    %21 = vector.extract_strided_slice %12 {offsets = [3, 0], sizes = [1, 722], strides = [1, 1]} : vector<4x722xf32> to vector<1x722xf32>
    %c1_15 = arith.constant 1 : index
    %c2206_16 = arith.constant 2206 : index
    %22 = vector.load %arg7[%c1_15, %c2206_16] : memref<2x4372xf32, #tpu.memory_space<vmem>>, vector<1x722xf32>
    tpu.vector_store %arg7[%c1_15, %c2206_16], %21 {strides = array<i32>} : memref<2x4372xf32, #tpu.memory_space<vmem>>, vector<1x722xf32>,
    %c0_17 = arith.constant 0 : index
    %c0_18 = arith.constant 0 : index
    %23 = vector.load %arg7[%c0_17, %c0_18] : memref<2x4372xf32, #tpu.memory_space<vmem>>, vector<1x2888xf32>
    %c0_19 = arith.constant 0 : index
    %c0_20 = arith.constant 0 : index
    %24 = vector.load %arg8[%c0_19, %c0_20] : memref<54x2888xf32, #tpu.memory_space<vmem>>, vector<1x2888xf32>
    tpu.vector_store %arg8[%c0_19, %c0_20], %23 {strides = array<i32>} : memref<54x2888xf32, #tpu.memory_space<vmem>>, vector<1x2888xf32>,
    %c0_21 = arith.constant 0 : index
    %c1_22 = arith.constant 1 : index
    %25 = vector.load %arg7[%c0_21, %c1_22] : memref<2x4372xf32, #tpu.memory_space<vmem>>, vector<1x2888xf32>
    %c1_23 = arith.constant 1 : index
    %c0_24 = arith.constant 0 : index
    %26 = vector.load %arg8[%c1_23, %c0_24] : memref<54x2888xf32, #tpu.memory_space<vmem>>, vector<1x2888xf32>
    tpu.vector_store %arg8[%c1_23, %c0_24], %25 {strides = array<i32>} : memref<54x2888xf32, #tpu.memory_space<vmem>>, vector<1x2888xf32>,
    %c0_25 = arith.constant 0 : index
    %c2 = arith.constant 2 : index
    %27 = vector.load %arg7[%c0_25, %c2] : memref<2x4372xf32, #tpu.memory_space<vmem>>, vector<1x2888xf32>
    %c2_26 = arith.constant 2 : index
    %c0_27 = arith.constant 0 : index
    %28 = vector.load %arg8[%c2_26, %c0_27] : memref<54x2888xf32, #tpu.memory_space<vmem>>, vector<1x2888xf32>
    tpu.vector_store %arg8[%c2_26, %c0_27], %27 {strides = array<i32>} : memref<54x2888xf32, #tpu.memory_space<vmem>>, vector<1x2888xf32>,
    %c0_28 = arith.constant 0 : index
    %c19 = arith.constant 19 : index
    %29 = vector.load %arg7[%c0_28, %c19] : memref<2x4372xf32, #tpu.memory_space<vmem>>, vector<1x2888xf32>
    %c3 = arith.constant 3 : index
    %c0_29 = arith.constant 0 : index
    %30 = vector.load %arg8[%c3, %c0_29] : memref<54x2888xf32, #tpu.memory_space<vmem>>, vector<1x2888xf32>
    tpu.vector_store %arg8[%c3, %c0_29], %29 {strides = array<i32>} : memref<54x2888xf32, #tpu.memory_space<vmem>>, vector<1x2888xf32>,
    %c0_30 = arith.constant 0 : index
    %c20 = arith.constant 20 : index
    %31 = vector.load %arg7[%c0_30, %c20] : memref<2x4372xf32, #tpu.memory_space<vmem>>, vector<1x2888xf32>
    %c4 = arith.constant 4 : index
    %c0_31 = arith.constant 0 : index
    %32 = vector.load %arg8[%c4, %c0_31] : memref<54x2888xf32, #tpu.memory_space<vmem>>, vector<1x2888xf32>
    tpu.vector_store %arg8[%c4, %c0_31], %31 {strides = array<i32>} : memref<54x2888xf32, #tpu.memory_space<vmem>>, vector<1x2888xf32>,
    %c0_32 = arith.constant 0 : index
    %c21 = arith.constant 21 : index
    %33 = vector.load %arg7[%c0_32, %c21] : memref<2x4372xf32, #tpu.memory_space<vmem>>, vector<1x2888xf32>
    %c5 = arith.constant 5 : index
    %c0_33 = arith.constant 0 : index
    %34 = vector.load %arg8[%c5, %c0_33] : memref<54x2888xf32, #tpu.memory_space<vmem>>, vector<1x2888xf32>
    tpu.vector_store %arg8[%c5, %c0_33], %33 {strides = array<i32>} : memref<54x2888xf32, #tpu.memory_space<vmem>>, vector<1x2888xf32>,
    %c0_34 = arith.constant 0 : index
    %c38 = arith.constant 38 : index
    %35 = vector.load %arg7[%c0_34, %c38] : memref<2x4372xf32, #tpu.memory_space<vmem>>, vector<1x2888xf32>
    %c6 = arith.constant 6 : index
    %c0_35 = arith.constant 0 : index
    %36 = vector.load %arg8[%c6, %c0_35] : memref<54x2888xf32, #tpu.memory_space<vmem>>, vector<1x2888xf32>
    tpu.vector_store %arg8[%c6, %c0_35], %35 {strides = array<i32>} : memref<54x2888xf32, #tpu.memory_space<vmem>>, vector<1x2888xf32>,
    %c0_36 = arith.constant 0 : index
    %c39 = arith.constant 39 : index
    %37 = vector.load %arg7[%c0_36, %c39] : memref<2x4372xf32, #tpu.memory_space<vmem>>, vector<1x2888xf32>
    %c7 = arith.constant 7 : index
    %c0_37 = arith.constant 0 : index
    %38 = vector.load %arg8[%c7, %c0_37] : memref<54x2888xf32, #tpu.memory_space<vmem>>, vector<1x2888xf32>
    tpu.vector_store %arg8[%c7, %c0_37], %37 {strides = array<i32>} : memref<54x2888xf32, #tpu.memory_space<vmem>>, vector<1x2888xf32>,
    %c0_38 = arith.constant 0 : index
    %c40 = arith.constant 40 : index
    %39 = vector.load %arg7[%c0_38, %c40] : memref<2x4372xf32, #tpu.memory_space<vmem>>, vector<1x2888xf32>
    %c8 = arith.constant 8 : index
    %c0_39 = arith.constant 0 : index
    %40 = vector.load %arg8[%c8, %c0_39] : memref<54x2888xf32, #tpu.memory_space<vmem>>, vector<1x2888xf32>
    tpu.vector_store %arg8[%c8, %c0_39], %39 {strides = array<i32>} : memref<54x2888xf32, #tpu.memory_space<vmem>>, vector<1x2888xf32>,
    %c0_40 = arith.constant 0 : index
    %c722 = arith.constant 722 : index
    %41 = vector.load %arg7[%c0_40, %c722] : memref<2x4372xf32, #tpu.memory_space<vmem>>, vector<1x2888xf32>
    %c9 = arith.constant 9 : index
    %c0_41 = arith.constant 0 : index
    %42 = vector.load %arg8[%c9, %c0_41] : memref<54x2888xf32, #tpu.memory_space<vmem>>, vector<1x2888xf32>
    tpu.vector_store %arg8[%c9, %c0_41], %41 {strides = array<i32>} : memref<54x2888xf32, #tpu.memory_space<vmem>>, vector<1x2888xf32>,
    %c0_42 = arith.constant 0 : index
    %c723 = arith.constant 723 : index
    %43 = vector.load %arg7[%c0_42, %c723] : memref<2x4372xf32, #tpu.memory_space<vmem>>, vector<1x2888xf32>
    %c10 = arith.constant 10 : index
    %c0_43 = arith.constant 0 : index
    %44 = vector.load %arg8[%c10, %c0_43] : memref<54x2888xf32, #tpu.memory_space<vmem>>, vector<1x2888xf32>
    tpu.vector_store %arg8[%c10, %c0_43], %43 {strides = array<i32>} : memref<54x2888xf32, #tpu.memory_space<vmem>>, vector<1x2888xf32>,
    %c0_44 = arith.constant 0 : index
    %c724 = arith.constant 724 : index
    %45 = vector.load %arg7[%c0_44, %c724] : memref<2x4372xf32, #tpu.memory_space<vmem>>, vector<1x2888xf32>
    %c11 = arith.constant 11 : index
    %c0_45 = arith.constant 0 : index
    %46 = vector.load %arg8[%c11, %c0_45] : memref<54x2888xf32, #tpu.memory_space<vmem>>, vector<1x2888xf32>
    tpu.vector_store %arg8[%c11, %c0_45], %45 {strides = array<i32>} : memref<54x2888xf32, #tpu.memory_space<vmem>>, vector<1x2888xf32>,
    %c0_46 = arith.constant 0 : index
    %c741 = arith.constant 741 : index
    %47 = vector.load %arg7[%c0_46, %c741] : memref<2x4372xf32, #tpu.memory_space<vmem>>, vector<1x2888xf32>
    %c12 = arith.constant 12 : index
    %c0_47 = arith.constant 0 : index
    %48 = vector.load %arg8[%c12, %c0_47] : memref<54x2888xf32, #tpu.memory_space<vmem>>, vector<1x2888xf32>
    tpu.vector_store %arg8[%c12, %c0_47], %47 {strides = array<i32>} : memref<54x2888xf32, #tpu.memory_space<vmem>>, vector<1x2888xf32>,
    %c0_48 = arith.constant 0 : index
    %c742 = arith.constant 742 : index
    %49 = vector.load %arg7[%c0_48, %c742] : memref<2x4372xf32, #tpu.memory_space<vmem>>, vector<1x2888xf32>
    %c13 = arith.constant 13 : index
    %c0_49 = arith.constant 0 : index
    %50 = vector.load %arg8[%c13, %c0_49] : memref<54x2888xf32, #tpu.memory_space<vmem>>, vector<1x2888xf32>
    tpu.vector_store %arg8[%c13, %c0_49], %49 {strides = array<i32>} : memref<54x2888xf32, #tpu.memory_space<vmem>>, vector<1x2888xf32>,
    %c0_50 = arith.constant 0 : index
    %c743 = arith.constant 743 : index
    %51 = vector.load %arg7[%c0_50, %c743] : memref<2x4372xf32, #tpu.memory_space<vmem>>, vector<1x2888xf32>
    %c14 = arith.constant 14 : index
    %c0_51 = arith.constant 0 : index
    %52 = vector.load %arg8[%c14, %c0_51] : memref<54x2888xf32, #tpu.memory_space<vmem>>, vector<1x2888xf32>
    tpu.vector_store %arg8[%c14, %c0_51], %51 {strides = array<i32>} : memref<54x2888xf32, #tpu.memory_space<vmem>>, vector<1x2888xf32>,
    %c0_52 = arith.constant 0 : index
    %c760 = arith.constant 760 : index
    %53 = vector.load %arg7[%c0_52, %c760] : memref<2x4372xf32, #tpu.memory_space<vmem>>, vector<1x2888xf32>
    %c15 = arith.constant 15 : index
    %c0_53 = arith.constant 0 : index
    %54 = vector.load %arg8[%c15, %c0_53] : memref<54x2888xf32, #tpu.memory_space<vmem>>, vector<1x2888xf32>
    tpu.vector_store %arg8[%c15, %c0_53], %53 {strides = array<i32>} : memref<54x2888xf32, #tpu.memory_space<vmem>>, vector<1x2888xf32>,
    %c0_54 = arith.constant 0 : index
    %c761 = arith.constant 761 : index
    %55 = vector.load %arg7[%c0_54, %c761] : memref<2x4372xf32, #tpu.memory_space<vmem>>, vector<1x2888xf32>
    %c16 = arith.constant 16 : index
    %c0_55 = arith.constant 0 : index
    %56 = vector.load %arg8[%c16, %c0_55] : memref<54x2888xf32, #tpu.memory_space<vmem>>, vector<1x2888xf32>
    tpu.vector_store %arg8[%c16, %c0_55], %55 {strides = array<i32>} : memref<54x2888xf32, #tpu.memory_space<vmem>>, vector<1x2888xf32>,
    %c0_56 = arith.constant 0 : index
    %c762 = arith.constant 762 : index
    %57 = vector.load %arg7[%c0_56, %c762] : memref<2x4372xf32, #tpu.memory_space<vmem>>, vector<1x2888xf32>
    %c17 = arith.constant 17 : index
    %c0_57 = arith.constant 0 : index
    %58 = vector.load %arg8[%c17, %c0_57] : memref<54x2888xf32, #tpu.memory_space<vmem>>, vector<1x2888xf32>
    tpu.vector_store %arg8[%c17, %c0_57], %57 {strides = array<i32>} : memref<54x2888xf32, #tpu.memory_space<vmem>>, vector<1x2888xf32>,
    %c0_58 = arith.constant 0 : index
    %c1444 = arith.constant 1444 : index
    %59 = vector.load %arg7[%c0_58, %c1444] : memref<2x4372xf32, #tpu.memory_space<vmem>>, vector<1x2888xf32>
    %c18 = arith.constant 18 : index
    %c0_59 = arith.constant 0 : index
    %60 = vector.load %arg8[%c18, %c0_59] : memref<54x2888xf32, #tpu.memory_space<vmem>>, vector<1x2888xf32>
    tpu.vector_store %arg8[%c18, %c0_59], %59 {strides = array<i32>} : memref<54x2888xf32, #tpu.memory_space<vmem>>, vector<1x2888xf32>,
    %c0_60 = arith.constant 0 : index
    %c1445 = arith.constant 1445 : index
    %61 = vector.load %arg7[%c0_60, %c1445] : memref<2x4372xf32, #tpu.memory_space<vmem>>, vector<1x2888xf32>
    %c19_61 = arith.constant 19 : index
    %c0_62 = arith.constant 0 : index
    %62 = vector.load %arg8[%c19_61, %c0_62] : memref<54x2888xf32, #tpu.memory_space<vmem>>, vector<1x2888xf32>
    tpu.vector_store %arg8[%c19_61, %c0_62], %61 {strides = array<i32>} : memref<54x2888xf32, #tpu.memory_space<vmem>>, vector<1x2888xf32>,
    %c0_63 = arith.constant 0 : index
    %c1446 = arith.constant 1446 : index
    %63 = vector.load %arg7[%c0_63, %c1446] : memref<2x4372xf32, #tpu.memory_space<vmem>>, vector<1x2888xf32>
    %c20_64 = arith.constant 20 : index
    %c0_65 = arith.constant 0 : index
    %64 = vector.load %arg8[%c20_64, %c0_65] : memref<54x2888xf32, #tpu.memory_space<vmem>>, vector<1x2888xf32>
    tpu.vector_store %arg8[%c20_64, %c0_65], %63 {strides = array<i32>} : memref<54x2888xf32, #tpu.memory_space<vmem>>, vector<1x2888xf32>,
    %c0_66 = arith.constant 0 : index
    %c1463 = arith.constant 1463 : index
    %65 = vector.load %arg7[%c0_66, %c1463] : memref<2x4372xf32, #tpu.memory_space<vmem>>, vector<1x2888xf32>
    %c21_67 = arith.constant 21 : index
    %c0_68 = arith.constant 0 : index
    %66 = vector.load %arg8[%c21_67, %c0_68] : memref<54x2888xf32, #tpu.memory_space<vmem>>, vector<1x2888xf32>
    tpu.vector_store %arg8[%c21_67, %c0_68], %65 {strides = array<i32>} : memref<54x2888xf32, #tpu.memory_space<vmem>>, vector<1x2888xf32>,
    %c0_69 = arith.constant 0 : index
    %c1464 = arith.constant 1464 : index
    %67 = vector.load %arg7[%c0_69, %c1464] : memref<2x4372xf32, #tpu.memory_space<vmem>>, vector<1x2888xf32>
    %c22 = arith.constant 22 : index
    %c0_70 = arith.constant 0 : index
    %68 = vector.load %arg8[%c22, %c0_70] : memref<54x2888xf32, #tpu.memory_space<vmem>>, vector<1x2888xf32>
    tpu.vector_store %arg8[%c22, %c0_70], %67 {strides = array<i32>} : memref<54x2888xf32, #tpu.memory_space<vmem>>, vector<1x2888xf32>,
    %c0_71 = arith.constant 0 : index
    %c1465 = arith.constant 1465 : index
    %69 = vector.load %arg7[%c0_71, %c1465] : memref<2x4372xf32, #tpu.memory_space<vmem>>, vector<1x2888xf32>
    %c23 = arith.constant 23 : index
    %c0_72 = arith.constant 0 : index
    %70 = vector.load %arg8[%c23, %c0_72] : memref<54x2888xf32, #tpu.memory_space<vmem>>, vector<1x2888xf32>
    tpu.vector_store %arg8[%c23, %c0_72], %69 {strides = array<i32>} : memref<54x2888xf32, #tpu.memory_space<vmem>>, vector<1x2888xf32>,
    %c0_73 = arith.constant 0 : index
    %c1482 = arith.constant 1482 : index
    %71 = vector.load %arg7[%c0_73, %c1482] : memref<2x4372xf32, #tpu.memory_space<vmem>>, vector<1x2888xf32>
    %c24 = arith.constant 24 : index
    %c0_74 = arith.constant 0 : index
    %72 = vector.load %arg8[%c24, %c0_74] : memref<54x2888xf32, #tpu.memory_space<vmem>>, vector<1x2888xf32>
    tpu.vector_store %arg8[%c24, %c0_74], %71 {strides = array<i32>} : memref<54x2888xf32, #tpu.memory_space<vmem>>, vector<1x2888xf32>,
    %c0_75 = arith.constant 0 : index
    %c1483 = arith.constant 1483 : index
    %73 = vector.load %arg7[%c0_75, %c1483] : memref<2x4372xf32, #tpu.memory_space<vmem>>, vector<1x2888xf32>
    %c25 = arith.constant 25 : index
    %c0_76 = arith.constant 0 : index
    %74 = vector.load %arg8[%c25, %c0_76] : memref<54x2888xf32, #tpu.memory_space<vmem>>, vector<1x2888xf32>
    tpu.vector_store %arg8[%c25, %c0_76], %73 {strides = array<i32>} : memref<54x2888xf32, #tpu.memory_space<vmem>>, vector<1x2888xf32>,
    %c0_77 = arith.constant 0 : index
    %c1484_78 = arith.constant 1484 : index
    %75 = vector.load %arg7[%c0_77, %c1484_78] : memref<2x4372xf32, #tpu.memory_space<vmem>>, vector<1x2888xf32>
    %c26 = arith.constant 26 : index
    %c0_79 = arith.constant 0 : index
    %76 = vector.load %arg8[%c26, %c0_79] : memref<54x2888xf32, #tpu.memory_space<vmem>>, vector<1x2888xf32>
    tpu.vector_store %arg8[%c26, %c0_79], %75 {strides = array<i32>} : memref<54x2888xf32, #tpu.memory_space<vmem>>, vector<1x2888xf32>,
    %c1_80 = arith.constant 1 : index
    %c0_81 = arith.constant 0 : index
    %77 = vector.load %arg7[%c1_80, %c0_81] : memref<2x4372xf32, #tpu.memory_space<vmem>>, vector<1x2888xf32>
    %c27 = arith.constant 27 : index
    %c0_82 = arith.constant 0 : index
    %78 = vector.load %arg8[%c27, %c0_82] : memref<54x2888xf32, #tpu.memory_space<vmem>>, vector<1x2888xf32>
    tpu.vector_store %arg8[%c27, %c0_82], %77 {strides = array<i32>} : memref<54x2888xf32, #tpu.memory_space<vmem>>, vector<1x2888xf32>,
    %c1_83 = arith.constant 1 : index
    %c1_84 = arith.constant 1 : index
    %79 = vector.load %arg7[%c1_83, %c1_84] : memref<2x4372xf32, #tpu.memory_space<vmem>>, vector<1x2888xf32>
    %c28 = arith.constant 28 : index
    %c0_85 = arith.constant 0 : index
    %80 = vector.load %arg8[%c28, %c0_85] : memref<54x2888xf32, #tpu.memory_space<vmem>>, vector<1x2888xf32>
    tpu.vector_store %arg8[%c28, %c0_85], %79 {strides = array<i32>} : memref<54x2888xf32, #tpu.memory_space<vmem>>, vector<1x2888xf32>,
    %c1_86 = arith.constant 1 : index
    %c2_87 = arith.constant 2 : index
    %81 = vector.load %arg7[%c1_86, %c2_87] : memref<2x4372xf32, #tpu.memory_space<vmem>>, vector<1x2888xf32>
    %c29 = arith.constant 29 : index
    %c0_88 = arith.constant 0 : index
    %82 = vector.load %arg8[%c29, %c0_88] : memref<54x2888xf32, #tpu.memory_space<vmem>>, vector<1x2888xf32>
    tpu.vector_store %arg8[%c29, %c0_88], %81 {strides = array<i32>} : memref<54x2888xf32, #tpu.memory_space<vmem>>, vector<1x2888xf32>,
    %c1_89 = arith.constant 1 : index
    %c19_90 = arith.constant 19 : index
    %83 = vector.load %arg7[%c1_89, %c19_90] : memref<2x4372xf32, #tpu.memory_space<vmem>>, vector<1x2888xf32>
    %c30 = arith.constant 30 : index
    %c0_91 = arith.constant 0 : index
    %84 = vector.load %arg8[%c30, %c0_91] : memref<54x2888xf32, #tpu.memory_space<vmem>>, vector<1x2888xf32>
    tpu.vector_store %arg8[%c30, %c0_91], %83 {strides = array<i32>} : memref<54x2888xf32, #tpu.memory_space<vmem>>, vector<1x2888xf32>,
    %c1_92 = arith.constant 1 : index
    %c20_93 = arith.constant 20 : index
    %85 = vector.load %arg7[%c1_92, %c20_93] : memref<2x4372xf32, #tpu.memory_space<vmem>>, vector<1x2888xf32>
    %c31 = arith.constant 31 : index
    %c0_94 = arith.constant 0 : index
    %86 = vector.load %arg8[%c31, %c0_94] : memref<54x2888xf32, #tpu.memory_space<vmem>>, vector<1x2888xf32>
    tpu.vector_store %arg8[%c31, %c0_94], %85 {strides = array<i32>} : memref<54x2888xf32, #tpu.memory_space<vmem>>, vector<1x2888xf32>,
    %c1_95 = arith.constant 1 : index
    %c21_96 = arith.constant 21 : index
    %87 = vector.load %arg7[%c1_95, %c21_96] : memref<2x4372xf32, #tpu.memory_space<vmem>>, vector<1x2888xf32>
    %c32 = arith.constant 32 : index
    %c0_97 = arith.constant 0 : index
    %88 = vector.load %arg8[%c32, %c0_97] : memref<54x2888xf32, #tpu.memory_space<vmem>>, vector<1x2888xf32>
    tpu.vector_store %arg8[%c32, %c0_97], %87 {strides = array<i32>} : memref<54x2888xf32, #tpu.memory_space<vmem>>, vector<1x2888xf32>,
    %c1_98 = arith.constant 1 : index
    %c38_99 = arith.constant 38 : index
    %89 = vector.load %arg7[%c1_98, %c38_99] : memref<2x4372xf32, #tpu.memory_space<vmem>>, vector<1x2888xf32>
    %c33 = arith.constant 33 : index
    %c0_100 = arith.constant 0 : index
    %90 = vector.load %arg8[%c33, %c0_100] : memref<54x2888xf32, #tpu.memory_space<vmem>>, vector<1x2888xf32>
    tpu.vector_store %arg8[%c33, %c0_100], %89 {strides = array<i32>} : memref<54x2888xf32, #tpu.memory_space<vmem>>, vector<1x2888xf32>,
    %c1_101 = arith.constant 1 : index
    %c39_102 = arith.constant 39 : index
    %91 = vector.load %arg7[%c1_101, %c39_102] : memref<2x4372xf32, #tpu.memory_space<vmem>>, vector<1x2888xf32>
    %c34 = arith.constant 34 : index
    %c0_103 = arith.constant 0 : index
    %92 = vector.load %arg8[%c34, %c0_103] : memref<54x2888xf32, #tpu.memory_space<vmem>>, vector<1x2888xf32>
    tpu.vector_store %arg8[%c34, %c0_103], %91 {strides = array<i32>} : memref<54x2888xf32, #tpu.memory_space<vmem>>, vector<1x2888xf32>,
    %c1_104 = arith.constant 1 : index
    %c40_105 = arith.constant 40 : index
    %93 = vector.load %arg7[%c1_104, %c40_105] : memref<2x4372xf32, #tpu.memory_space<vmem>>, vector<1x2888xf32>
    %c35 = arith.constant 35 : index
    %c0_106 = arith.constant 0 : index
    %94 = vector.load %arg8[%c35, %c0_106] : memref<54x2888xf32, #tpu.memory_space<vmem>>, vector<1x2888xf32>
    tpu.vector_store %arg8[%c35, %c0_106], %93 {strides = array<i32>} : memref<54x2888xf32, #tpu.memory_space<vmem>>, vector<1x2888xf32>,
    %c1_107 = arith.constant 1 : index
    %c722_108 = arith.constant 722 : index
    %95 = vector.load %arg7[%c1_107, %c722_108] : memref<2x4372xf32, #tpu.memory_space<vmem>>, vector<1x2888xf32>
    %c36 = arith.constant 36 : index
    %c0_109 = arith.constant 0 : index
    %96 = vector.load %arg8[%c36, %c0_109] : memref<54x2888xf32, #tpu.memory_space<vmem>>, vector<1x2888xf32>
    tpu.vector_store %arg8[%c36, %c0_109], %95 {strides = array<i32>} : memref<54x2888xf32, #tpu.memory_space<vmem>>, vector<1x2888xf32>,
    %c1_110 = arith.constant 1 : index
    %c723_111 = arith.constant 723 : index
    %97 = vector.load %arg7[%c1_110, %c723_111] : memref<2x4372xf32, #tpu.memory_space<vmem>>, vector<1x2888xf32>
    %c37 = arith.constant 37 : index
    %c0_112 = arith.constant 0 : index
    %98 = vector.load %arg8[%c37, %c0_112] : memref<54x2888xf32, #tpu.memory_space<vmem>>, vector<1x2888xf32>
    tpu.vector_store %arg8[%c37, %c0_112], %97 {strides = array<i32>} : memref<54x2888xf32, #tpu.memory_space<vmem>>, vector<1x2888xf32>,
    %c1_113 = arith.constant 1 : index
    %c724_114 = arith.constant 724 : index
    %99 = vector.load %arg7[%c1_113, %c724_114] : memref<2x4372xf32, #tpu.memory_space<vmem>>, vector<1x2888xf32>
    %c38_115 = arith.constant 38 : index
    %c0_116 = arith.constant 0 : index
    %100 = vector.load %arg8[%c38_115, %c0_116] : memref<54x2888xf32, #tpu.memory_space<vmem>>, vector<1x2888xf32>
    tpu.vector_store %arg8[%c38_115, %c0_116], %99 {strides = array<i32>} : memref<54x2888xf32, #tpu.memory_space<vmem>>, vector<1x2888xf32>,
    %c1_117 = arith.constant 1 : index
    %c741_118 = arith.constant 741 : index
    %101 = vector.load %arg7[%c1_117, %c741_118] : memref<2x4372xf32, #tpu.memory_space<vmem>>, vector<1x2888xf32>
    %c39_119 = arith.constant 39 : index
    %c0_120 = arith.constant 0 : index
    %102 = vector.load %arg8[%c39_119, %c0_120] : memref<54x2888xf32, #tpu.memory_space<vmem>>, vector<1x2888xf32>
    tpu.vector_store %arg8[%c39_119, %c0_120], %101 {strides = array<i32>} : memref<54x2888xf32, #tpu.memory_space<vmem>>, vector<1x2888xf32>,
    %c1_121 = arith.constant 1 : index
    %c742_122 = arith.constant 742 : index
    %103 = vector.load %arg7[%c1_121, %c742_122] : memref<2x4372xf32, #tpu.memory_space<vmem>>, vector<1x2888xf32>
    %c40_123 = arith.constant 40 : index
    %c0_124 = arith.constant 0 : index
    %104 = vector.load %arg8[%c40_123, %c0_124] : memref<54x2888xf32, #tpu.memory_space<vmem>>, vector<1x2888xf32>
    tpu.vector_store %arg8[%c40_123, %c0_124], %103 {strides = array<i32>} : memref<54x2888xf32, #tpu.memory_space<vmem>>, vector<1x2888xf32>,
    %c1_125 = arith.constant 1 : index
    %c743_126 = arith.constant 743 : index
    %105 = vector.load %arg7[%c1_125, %c743_126] : memref<2x4372xf32, #tpu.memory_space<vmem>>, vector<1x2888xf32>
    %c41 = arith.constant 41 : index
    %c0_127 = arith.constant 0 : index
    %106 = vector.load %arg8[%c41, %c0_127] : memref<54x2888xf32, #tpu.memory_space<vmem>>, vector<1x2888xf32>
    tpu.vector_store %arg8[%c41, %c0_127], %105 {strides = array<i32>} : memref<54x2888xf32, #tpu.memory_space<vmem>>, vector<1x2888xf32>,
    %c1_128 = arith.constant 1 : index
    %c760_129 = arith.constant 760 : index
    %107 = vector.load %arg7[%c1_128, %c760_129] : memref<2x4372xf32, #tpu.memory_space<vmem>>, vector<1x2888xf32>
    %c42 = arith.constant 42 : index
    %c0_130 = arith.constant 0 : index
    %108 = vector.load %arg8[%c42, %c0_130] : memref<54x2888xf32, #tpu.memory_space<vmem>>, vector<1x2888xf32>
    tpu.vector_store %arg8[%c42, %c0_130], %107 {strides = array<i32>} : memref<54x2888xf32, #tpu.memory_space<vmem>>, vector<1x2888xf32>,
    %c1_131 = arith.constant 1 : index
    %c761_132 = arith.constant 761 : index
    %109 = vector.load %arg7[%c1_131, %c761_132] : memref<2x4372xf32, #tpu.memory_space<vmem>>, vector<1x2888xf32>
    %c43 = arith.constant 43 : index
    %c0_133 = arith.constant 0 : index
    %110 = vector.load %arg8[%c43, %c0_133] : memref<54x2888xf32, #tpu.memory_space<vmem>>, vector<1x2888xf32>
    tpu.vector_store %arg8[%c43, %c0_133], %109 {strides = array<i32>} : memref<54x2888xf32, #tpu.memory_space<vmem>>, vector<1x2888xf32>,
    %c1_134 = arith.constant 1 : index
    %c762_135 = arith.constant 762 : index
    %111 = vector.load %arg7[%c1_134, %c762_135] : memref<2x4372xf32, #tpu.memory_space<vmem>>, vector<1x2888xf32>
    %c44 = arith.constant 44 : index
    %c0_136 = arith.constant 0 : index
    %112 = vector.load %arg8[%c44, %c0_136] : memref<54x2888xf32, #tpu.memory_space<vmem>>, vector<1x2888xf32>
    tpu.vector_store %arg8[%c44, %c0_136], %111 {strides = array<i32>} : memref<54x2888xf32, #tpu.memory_space<vmem>>, vector<1x2888xf32>,
    %c1_137 = arith.constant 1 : index
    %c1444_138 = arith.constant 1444 : index
    %113 = vector.load %arg7[%c1_137, %c1444_138] : memref<2x4372xf32, #tpu.memory_space<vmem>>, vector<1x2888xf32>
    %c45 = arith.constant 45 : index
    %c0_139 = arith.constant 0 : index
    %114 = vector.load %arg8[%c45, %c0_139] : memref<54x2888xf32, #tpu.memory_space<vmem>>, vector<1x2888xf32>
    tpu.vector_store %arg8[%c45, %c0_139], %113 {strides = array<i32>} : memref<54x2888xf32, #tpu.memory_space<vmem>>, vector<1x2888xf32>,
    %c1_140 = arith.constant 1 : index
    %c1445_141 = arith.constant 1445 : index
    %115 = vector.load %arg7[%c1_140, %c1445_141] : memref<2x4372xf32, #tpu.memory_space<vmem>>, vector<1x2888xf32>
    %c46 = arith.constant 46 : index
    %c0_142 = arith.constant 0 : index
    %116 = vector.load %arg8[%c46, %c0_142] : memref<54x2888xf32, #tpu.memory_space<vmem>>, vector<1x2888xf32>
    tpu.vector_store %arg8[%c46, %c0_142], %115 {strides = array<i32>} : memref<54x2888xf32, #tpu.memory_space<vmem>>, vector<1x2888xf32>,
    %c1_143 = arith.constant 1 : index
    %c1446_144 = arith.constant 1446 : index
    %117 = vector.load %arg7[%c1_143, %c1446_144] : memref<2x4372xf32, #tpu.memory_space<vmem>>, vector<1x2888xf32>
    %c47 = arith.constant 47 : index
    %c0_145 = arith.constant 0 : index
    %118 = vector.load %arg8[%c47, %c0_145] : memref<54x2888xf32, #tpu.memory_space<vmem>>, vector<1x2888xf32>
    tpu.vector_store %arg8[%c47, %c0_145], %117 {strides = array<i32>} : memref<54x2888xf32, #tpu.memory_space<vmem>>, vector<1x2888xf32>,
    %c1_146 = arith.constant 1 : index
    %c1463_147 = arith.constant 1463 : index
    %119 = vector.load %arg7[%c1_146, %c1463_147] : memref<2x4372xf32, #tpu.memory_space<vmem>>, vector<1x2888xf32>
    %c48 = arith.constant 48 : index
    %c0_148 = arith.constant 0 : index
    %120 = vector.load %arg8[%c48, %c0_148] : memref<54x2888xf32, #tpu.memory_space<vmem>>, vector<1x2888xf32>
    tpu.vector_store %arg8[%c48, %c0_148], %119 {strides = array<i32>} : memref<54x2888xf32, #tpu.memory_space<vmem>>, vector<1x2888xf32>,
    %c1_149 = arith.constant 1 : index
    %c1464_150 = arith.constant 1464 : index
    %121 = vector.load %arg7[%c1_149, %c1464_150] : memref<2x4372xf32, #tpu.memory_space<vmem>>, vector<1x2888xf32>
    %c49 = arith.constant 49 : index
    %c0_151 = arith.constant 0 : index
    %122 = vector.load %arg8[%c49, %c0_151] : memref<54x2888xf32, #tpu.memory_space<vmem>>, vector<1x2888xf32>
    tpu.vector_store %arg8[%c49, %c0_151], %121 {strides = array<i32>} : memref<54x2888xf32, #tpu.memory_space<vmem>>, vector<1x2888xf32>,
    %c1_152 = arith.constant 1 : index
    %c1465_153 = arith.constant 1465 : index
    %123 = vector.load %arg7[%c1_152, %c1465_153] : memref<2x4372xf32, #tpu.memory_space<vmem>>, vector<1x2888xf32>
    %c50 = arith.constant 50 : index
    %c0_154 = arith.constant 0 : index
    %124 = vector.load %arg8[%c50, %c0_154] : memref<54x2888xf32, #tpu.memory_space<vmem>>, vector<1x2888xf32>
    tpu.vector_store %arg8[%c50, %c0_154], %123 {strides = array<i32>} : memref<54x2888xf32, #tpu.memory_space<vmem>>, vector<1x2888xf32>,
    %c1_155 = arith.constant 1 : index
    %c1482_156 = arith.constant 1482 : index
    %125 = vector.load %arg7[%c1_155, %c1482_156] : memref<2x4372xf32, #tpu.memory_space<vmem>>, vector<1x2888xf32>
    %c51 = arith.constant 51 : index
    %c0_157 = arith.constant 0 : index
    %126 = vector.load %arg8[%c51, %c0_157] : memref<54x2888xf32, #tpu.memory_space<vmem>>, vector<1x2888xf32>
    tpu.vector_store %arg8[%c51, %c0_157], %125 {strides = array<i32>} : memref<54x2888xf32, #tpu.memory_space<vmem>>, vector<1x2888xf32>,
    %c1_158 = arith.constant 1 : index
    %c1483_159 = arith.constant 1483 : index
    %127 = vector.load %arg7[%c1_158, %c1483_159] : memref<2x4372xf32, #tpu.memory_space<vmem>>, vector<1x2888xf32>
    %c52 = arith.constant 52 : index
    %c0_160 = arith.constant 0 : index
    %128 = vector.load %arg8[%c52, %c0_160] : memref<54x2888xf32, #tpu.memory_space<vmem>>, vector<1x2888xf32>
    tpu.vector_store %arg8[%c52, %c0_160], %127 {strides = array<i32>} : memref<54x2888xf32, #tpu.memory_space<vmem>>, vector<1x2888xf32>,
    %c1_161 = arith.constant 1 : index
    %c1484_162 = arith.constant 1484 : index
    %129 = vector.load %arg7[%c1_161, %c1484_162] : memref<2x4372xf32, #tpu.memory_space<vmem>>, vector<1x2888xf32>
    %c53 = arith.constant 53 : index
    %c0_163 = arith.constant 0 : index
    %130 = vector.load %arg8[%c53, %c0_163] : memref<54x2888xf32, #tpu.memory_space<vmem>>, vector<1x2888xf32>
    tpu.vector_store %arg8[%c53, %c0_163], %129 {strides = array<i32>} : memref<54x2888xf32, #tpu.memory_space<vmem>>, vector<1x2888xf32>,
    %c0_164 = arith.constant 0 : index
    %c0_165 = arith.constant 0 : index
    %131 = vector.load %arg4[%c0_164, %c0_165] : memref<5x54xf32, #tpu.memory_space<vmem>>, vector<5x54xf32>
    %c0_166 = arith.constant 0 : index
    %c0_167 = arith.constant 0 : index
    %132 = vector.load %arg8[%c0_166, %c0_167] : memref<54x2888xf32, #tpu.memory_space<vmem>>, vector<54x2888xf32>
    %cst_168 = arith.constant dense<0.000000e+00> : vector<5x2888xf32>
    %133 = tpu.matmul %131, %132, %cst_168 {dimension_numbers = #tpu.dot_dimension_numbers<[1], [0], [0], [1], [0, 0, 1, 1], [], []>, precision = #tpu.contract_precision<fp32>} : vector<5x54xf32>, vector<54x2888xf32>, vector<5x2888xf32> -> vector<5x2888xf32>
    %c0_169 = arith.constant 0 : index
    %c0_170 = arith.constant 0 : index
    %134 = vector.load %arg5[%c0_169, %c0_170] : memref<5x1xf32, #tpu.memory_space<vmem>>, vector<5x1xf32>
    %135 = vector.broadcast %134 : vector<5x1xf32> to vector<5x2888xf32>
    %136 = arith.addf %133, %135 : vector<5x2888xf32>
    %c0_171 = arith.constant 0 : index
    %c0_172 = arith.constant 0 : index
    %137 = vector.load %arg6[%c0_171, %c0_172] : memref<5x2888xf32, #tpu.memory_space<vmem>>, vector<5x2888xf32>
    tpu.vector_store %arg6[%c0_171, %c0_172], %136 {strides = array<i32>} : memref<5x2888xf32, #tpu.memory_space<vmem>>, vector<5x2888xf32>,
    return
  }
}

</mosaic_0001>

<llo_original>
// kernel: squeeze.29
$region0: #{squeeze.29}
  %s0 = inlined_call_operand.vmem [shape: f32[2,1,19,19], index: 0, kind: input, shape index: {}]
  %s1 = inlined_call_operand.vmem [shape: f32[1,722], index: 1, kind: output, shape index: {}]
  $region1: #{squeeze.29} parent=0
    #allocation0 [shape = 'u8[24576]{0}', space=vmem, size = 0x6000, scoped, tag = 'scoped mem for output reshape']
    %v2 = vld [vmem:[%s0] sm:$0x1]
    %vm3 = vcmask 154624
    %4 = vst.msk [vmem:[#allocation0] sm:$0x1] %vm3, %v2
    %s5 = scalar_lea.vmem %s0, 25
    %v6 = vld [vmem:[%s5] sm:$0x1]
    %s7 = scalar_lea.vmem %s0, 25
    %v8 = vld [vmem:[%s7] sm:$0x1]
    %vm9 = vcmask 31744
    %v10 = vsel %vm9, %v8, %v6
    %11 = vrot.lane.b32.xlu0 %v10, 124
    %v12 = vpop.permute.xlu0 %11
    %vm13 = vcmask 121856
    %s14 = scalar_lea.vmem [#allocation0], 24
    %15 = vst.msk [vmem:[%s14] sm:$0x1] %vm13, %v12
    %vm16 = vcmask 1048544
    %s17 = scalar_lea.vmem [#allocation0], 16
    %18 = vst.msk [vmem:[%s17] sm:$0x1] %vm16, %v12
    %s19 = scalar_lea.vmem %s0, 13
    %v20 = vld [vmem:[%s19] sm:$0x1]
    %s21 = scalar_lea.vmem %s0, 13
    %v22 = vld [vmem:[%s21] sm:$0x1]
    %vm23 = vcmask 72704
    %v24 = vsel %vm23, %v22, %v20
    %25 = vrot.lane.b32.xlu0 %v24, 119
    %v26 = vpop.permute.xlu0 %25
    %vm27 = vcmask 80896
    %s28 = scalar_lea.vmem [#allocation0], 16
    %29 = vst.msk [vmem:[%s28] sm:$0x1] %vm27, %v26
    %vm30 = vcmask 1048504
    %s31 = scalar_lea.vmem [#allocation0], 8
    %32 = vst.msk [vmem:[%s31] sm:$0x1] %vm30, %v26
    %s33 = scalar_lea.vmem %s0, 38
    %v34 = vld [vmem:[%s33] sm:$0x1]
    %s35 = scalar_lea.vmem %s0, 38
    %v36 = vld [vmem:[%s35] sm:$0x1]
    %vm37 = vcmask 105472
    %v38 = vsel %vm37, %v36, %v34
    %39 = vrot.lane.b32.xlu0 %v38, 115
    %v40 = vpop.permute.xlu0 %39
    %vm41 = vcmask 48128
    %s42 = scalar_lea.vmem [#allocation0], 40
    %43 = vst.msk [vmem:[%s42] sm:$0x1] %vm41, %v40
    %vm44 = vcmask 1048472
    %s45 = scalar_lea.vmem [#allocation0], 32
    %46 = vst.msk [vmem:[%s45] sm:$0x1] %vm44, %v40
    %s47 = scalar_lea.vmem %s0, 6
    %v48 = vld [vmem:[%s47] sm:$0x1]
    %s49 = scalar_lea.vmem %s0, 6
    %v50 = vld [vmem:[%s49] sm:$0x1]
    %vm51 = vcmask 113664
    %v52 = vsel %vm51, %v50, %v48
    %53 = vrot.lane.b32.xlu0 %v52, 114
    %v54 = vpop.permute.xlu0 %53
    %vm55 = vcmask 39936
    %s56 = scalar_lea.vmem [#allocation0], 8
    %57 = vst.msk [vmem:[%s56] sm:$0x1] %vm55, %v54
    %vm58 = vcmask 1048464
    %59 = vst.msk [vmem:[#allocation0] sm:$0x1] %vm58, %v54
    %s60 = scalar_lea.vmem %s0, 31
    %v61 = vld [vmem:[%s60] sm:$0x1]
    %s62 = scalar_lea.vmem %s0, 31
    %v63 = vld [vmem:[%s62] sm:$0x1]
    %vm64 = vcmask 146432
    %v65 = vsel %vm64, %v63, %v61
    %66 = vrot.lane.b32.xlu0 %v65, 110
    %v67 = vpop.permute.xlu0 %66
    %vm68 = vcmask 7168
    %s69 = scalar_lea.vmem [#allocation0], 32
    %70 = vst.msk [vmem:[%s69] sm:$0x1] %vm68, %v67
    %vm71 = vcmask 1048432
    %s72 = scalar_lea.vmem [#allocation0], 24
    %73 = vst.msk [vmem:[%s72] sm:$0x1] %vm71, %v67
    %s74 = scalar_lea.vmem %s0, 24
    %v75 = vld [vmem:[%s74] sm:$0x1]
    %76 = vrot.lane.b32.xlu0 %v75, 105
    %v77 = vpop.permute.xlu0 %76
    %vm78 = vcmask 1015624
    %s79 = scalar_lea.vmem [#allocation0], 16
    %80 = vst.msk [vmem:[%s79] sm:$0x1] %vm78, %v77
    %s81 = scalar_lea.vmem %s0, 12
    %v82 = vld [vmem:[%s81] sm:$0x1]
    %83 = vrot.lane.b32.xlu0 %v82, 100
    %v84 = vpop.permute.xlu0 %83
    %vm85 = vcmask 974624
    %s86 = scalar_lea.vmem [#allocation0], 8
    %87 = vst.msk [vmem:[%s86] sm:$0x1] %vm85, %v84
    %s88 = scalar_lea.vmem %s0, 37
    %v89 = vld [vmem:[%s88] sm:$0x1]
    %90 = vrot.lane.b32.xlu0 %v89, 96
    %v91 = vpop.permute.xlu0 %90
    %vm92 = vcmask 941824
    %s93 = scalar_lea.vmem [#allocation0], 32
    %94 = vst.msk [vmem:[%s93] sm:$0x1] %vm92, %v91
    %s95 = scalar_lea.vmem %s0, 5
    %v96 = vld [vmem:[%s95] sm:$0x1]
    %97 = vrot.lane.b32.xlu0 %v96, 95
    %v98 = vpop.permute.xlu0 %97
    %vm99 = vcmask 933624
    %100 = vst.msk [vmem:[#allocation0] sm:$0x1] %vm99, %v98
    %s101 = scalar_lea.vmem %s0, 30
    %v102 = vld [vmem:[%s101] sm:$0x1]
    %103 = vrot.lane.b32.xlu0 %v102, 91
    %v104 = vpop.permute.xlu0 %103
    %vm105 = vcmask 900824
    %s106 = scalar_lea.vmem [#allocation0], 24
    %107 = vst.msk [vmem:[%s106] sm:$0x1] %vm105, %v104
    %s108 = scalar_lea.vmem %s0, 18
    %v109 = vld [vmem:[%s108] sm:$0x1]
    %110 = vrot.lane.b32.xlu0 %v109, 86
    %v111 = vpop.permute.xlu0 %110
    %vm112 = vcmask 859824
    %s113 = scalar_lea.vmem [#allocation0], 16
    %114 = vst.msk [vmem:[%s113] sm:$0x1] %vm112, %v111
    %s115 = scalar_lea.vmem %s0, 11
    %v116 = vld [vmem:[%s115] sm:$0x1]
    %117 = vrot.lane.b32.xlu0 %v116, 81
    %v118 = vpop.permute.xlu0 %117
    %vm119 = vcmask 818824
    %s120 = scalar_lea.vmem [#allocation0], 8
    %121 = vst.msk [vmem:[%s120] sm:$0x1] %vm119, %v118
    %s122 = scalar_lea.vmem %s0, 36
    %v123 = vld [vmem:[%s122] sm:$0x1]
    %124 = vrot.lane.b32.xlu0 %v123, 77
    %v125 = vpop.permute.xlu0 %124
    %vm126 = vcmask 786024
    %s127 = scalar_lea.vmem [#allocation0], 32
    %128 = vst.msk [vmem:[%s127] sm:$0x1] %vm126, %v125
    %s129 = scalar_lea.vmem %s0, 4
    %v130 = vld [vmem:[%s129] sm:$0x1]
    %131 = vrot.lane.b32.xlu0 %v130, 76
    %v132 = vpop.permute.xlu0 %131
    %vm133 = vcmask 777824
    %134 = vst.msk [vmem:[#allocation0] sm:$0x1] %vm133, %v132
    %s135 = scalar_lea.vmem %s0, 29
    %v136 = vld [vmem:[%s135] sm:$0x1]
    %137 = vrot.lane.b32.xlu0 %v136, 72
    %v138 = vpop.permute.xlu0 %137
    %vm139 = vcmask 745024
    %s140 = scalar_lea.vmem [#allocation0], 24
    %141 = vst.msk [vmem:[%s140] sm:$0x1] %vm139, %v138
    %s142 = scalar_lea.vmem %s0, 17
    %v143 = vld [vmem:[%s142] sm:$0x1]
    %144 = vrot.lane.b32.xlu0 %v143, 67
    %v145 = vpop.permute.xlu0 %144
    %vm146 = vcmask 704024
    %s147 = scalar_lea.vmem [#allocation0], 16
    %148 = vst.msk [vmem:[%s147] sm:$0x1] %vm146, %v145
    %s149 = scalar_lea.vmem %s0, 42
    %v150 = vld [vmem:[%s149] sm:$0x1]
    %151 = vrot.lane.b32.xlu0 %v150, 63
    %v152 = vpop.permute.xlu0 %151
    %vm153 = vcmask 671224
    %s154 = scalar_lea.vmem [#allocation0], 40
    %155 = vst.msk [vmem:[%s154] sm:$0x1] %vm153, %v152
    %s156 = scalar_lea.vmem %s0, 10
    %v157 = vld [vmem:[%s156] sm:$0x1]
    %158 = vrot.lane.b32.xlu0 %v157, 62
    %v159 = vpop.permute.xlu0 %158
    %vm160 = vcmask 663024
    %s161 = scalar_lea.vmem [#allocation0], 8
    %162 = vst.msk [vmem:[%s161] sm:$0x1] %vm160, %v159
    %s163 = scalar_lea.vmem %s0, 35
    %v164 = vld [vmem:[%s163] sm:$0x1]
    %165 = vrot.lane.b32.xlu0 %v164, 58
    %v166 = vpop.permute.xlu0 %165
    %vm167 = vcmask 630224
    %s168 = scalar_lea.vmem [#allocation0], 32
    %169 = vst.msk [vmem:[%s168] sm:$0x1] %vm167, %v166
    %s170 = scalar_lea.vmem %s0, 3
    %v171 = vld [vmem:[%s170] sm:$0x1]
    %172 = vrot.lane.b32.xlu0 %v171, 57
    %v173 = vpop.permute.xlu0 %172
    %vm174 = vcmask 622024
    %175 = vst.msk [vmem:[#allocation0] sm:$0x1] %vm174, %v173
    %s176 = scalar_lea.vmem %s0, 28
    %v177 = vld [vmem:[%s176] sm:$0x1]
    %178 = vrot.lane.b32.xlu0 %v177, 53
    %v179 = vpop.permute.xlu0 %178
    %vm180 = vcmask 589224
    %s181 = scalar_lea.vmem [#allocation0], 24
    %182 = vst.msk [vmem:[%s181] sm:$0x1] %vm180, %v179
    %s183 = scalar_lea.vmem %s0, 16
    %v184 = vld [vmem:[%s183] sm:$0x1]
    %185 = vrot.lane.b32.xlu0 %v184, 48
    %v186 = vpop.permute.xlu0 %185
    %vm187 = vcmask 548224
    %s188 = scalar_lea.vmem [#allocation0], 16
    %189 = vst.msk [vmem:[%s188] sm:$0x1] %vm187, %v186
    %s190 = scalar_lea.vmem %s0, 41
    %v191 = vld [vmem:[%s190] sm:$0x1]
    %192 = vrot.lane.b32.xlu0 %v191, 44
    %v193 = vpop.permute.xlu0 %192
    %vm194 = vcmask 515424
    %s195 = scalar_lea.vmem [#allocation0], 40
    %196 = vst.msk [vmem:[%s195] sm:$0x1] %vm194, %v193
    %s197 = scalar_lea.vmem %s0, 9
    %v198 = vld [vmem:[%s197] sm:$0x1]
    %199 = vrot.lane.b32.xlu0 %v198, 43
    %v200 = vpop.permute.xlu0 %199
    %vm201 = vcmask 507224
    %s202 = scalar_lea.vmem [#allocation0], 8
    %203 = vst.msk [vmem:[%s202] sm:$0x1] %vm201, %v200
    %s204 = scalar_lea.vmem %s0, 34
    %v205 = vld [vmem:[%s204] sm:$0x1]
    %206 = vrot.lane.b32.xlu0 %v205, 39
    %v207 = vpop.permute.xlu0 %206
    %vm208 = vcmask 474424
    %s209 = scalar_lea.vmem [#allocation0], 32
    %210 = vst.msk [vmem:[%s209] sm:$0x1] %vm208, %v207
    %s211 = scalar_lea.vmem %s0, 2
    %v212 = vld [vmem:[%s211] sm:$0x1]
    %213 = vrot.lane.b32.xlu0 %v212, 38
    %v214 = vpop.permute.xlu0 %213
    %vm215 = vcmask 466224
    %216 = vst.msk [vmem:[#allocation0] sm:$0x1] %vm215, %v214
    %s217 = scalar_lea.vmem %s0, 27
    %v218 = vld [vmem:[%s217] sm:$0x1]
    %219 = vrot.lane.b32.xlu0 %v218, 34
    %v220 = vpop.permute.xlu0 %219
    %vm221 = vcmask 433424
    %s222 = scalar_lea.vmem [#allocation0], 24
    %223 = vst.msk [vmem:[%s222] sm:$0x1] %vm221, %v220
    %s224 = scalar_lea.vmem %s0, 15
    %v225 = vld [vmem:[%s224] sm:$0x1]
    %226 = vrot.lane.b32.xlu0 %v225, 29
    %v227 = vpop.permute.xlu0 %226
    %vm228 = vcmask 392424
    %s229 = scalar_lea.vmem [#allocation0], 16
    %230 = vst.msk [vmem:[%s229] sm:$0x1] %vm228, %v227
    %s231 = scalar_lea.vmem %s0, 40
    %v232 = vld [vmem:[%s231] sm:$0x1]
    %233 = vrot.lane.b32.xlu0 %v232, 25
    %v234 = vpop.permute.xlu0 %233
    %vm235 = vcmask 359624
    %s236 = scalar_lea.vmem [#allocation0], 40
    %237 = vst.msk [vmem:[%s236] sm:$0x1] %vm235, %v234
    %s238 = scalar_lea.vmem %s0, 8
    %v239 = vld [vmem:[%s238] sm:$0x1]
    %240 = vrot.lane.b32.xlu0 %v239, 24
    %v241 = vpop.permute.xlu0 %240
    %vm242 = vcmask 351424
    %s243 = scalar_lea.vmem [#allocation0], 8
    %244 = vst.msk [vmem:[%s243] sm:$0x1] %vm242, %v241
    %s245 = scalar_lea.vmem %s0, 33
    %v246 = vld [vmem:[%s245] sm:$0x1]
    %247 = vrot.lane.b32.xlu0 %v246, 20
    %v248 = vpop.permute.xlu0 %247
    %vm249 = vcmask 318624
    %s250 = scalar_lea.vmem [#allocation0], 32
    %251 = vst.msk [vmem:[%s250] sm:$0x1] %vm249, %v248
    %s252 = scalar_lea.vmem %s0, 1
    %v253 = vld [vmem:[%s252] sm:$0x1]
    %254 = vrot.lane.b32.xlu0 %v253, 19
    %v255 = vpop.permute.xlu0 %254
    %vm256 = vcmask 310424
    %257 = vst.msk [vmem:[#allocation0] sm:$0x1] %vm256, %v255
    %s258 = scalar_lea.vmem %s0, 26
    %v259 = vld [vmem:[%s258] sm:$0x1]
    %260 = vrot.lane.b32.xlu0 %v259, 15
    %v261 = vpop.permute.xlu0 %260
    %vm262 = vcmask 277624
    %s263 = scalar_lea.vmem [#allocation0], 24
    %264 = vst.msk [vmem:[%s263] sm:$0x1] %vm262, %v261
    %s265 = scalar_lea.vmem %s0, 14
    %v266 = vld [vmem:[%s265] sm:$0x1]
    %267 = vrot.lane.b32.xlu0 %v266, 10
    %v268 = vpop.permute.xlu0 %267
    %vm269 = vcmask 236624
    %s270 = scalar_lea.vmem [#allocation0], 16
    %271 = vst.msk [vmem:[%s270] sm:$0x1] %vm269, %v268
    %s272 = scalar_lea.vmem %s0, 39
    %v273 = vld [vmem:[%s272] sm:$0x1]
    %274 = vrot.lane.b32.xlu0 %v273, 6
    %v275 = vpop.permute.xlu0 %274
    %vm276 = vcmask 203824
    %s277 = scalar_lea.vmem [#allocation0], 40
    %278 = vst.msk [vmem:[%s277] sm:$0x1] %vm276, %v275
    %s279 = scalar_lea.vmem %s0, 7
    %v280 = vld [vmem:[%s279] sm:$0x1]
    %281 = vrot.lane.b32.xlu0 %v280, 5
    %v282 = vpop.permute.xlu0 %281
    %vm283 = vcmask 195624
    %s284 = scalar_lea.vmem [#allocation0], 8
    %285 = vst.msk [vmem:[%s284] sm:$0x1] %vm283, %v282
    %s286 = scalar_lea.vmem %s0, 32
    %v287 = vld [vmem:[%s286] sm:$0x1]
    %288 = vrot.lane.b32.xlu0 %v287, 1
    %v289 = vpop.permute.xlu0 %288
    %vm290 = vcmask 162824
    %s291 = scalar_lea.vmem [#allocation0], 32
    %292 = vst.msk [vmem:[%s291] sm:$0x1] %vm290, %v289
    %s294 = sshllo.u32 0, 1
    %v296 = vld [vmem:[#allocation0] sm:%s294]
    %s297 = sshllo.u32 0, 1
    %298 = vst [vmem:[%s1] sm:%s297] %v296
    %s299 = scalar_lea.vmem [#allocation0], 8
    %v300 = vld [vmem:[%s299] sm:%s294]
    %s301 = sshllo.u32 0, 1
    %s302 = scalar_lea.vmem %s1, 1
    %303 = vst [vmem:[%s302] sm:%s301] %v300
    %s304 = scalar_lea.vmem [#allocation0], 16
    %v305 = vld [vmem:[%s304] sm:%s294]
    %s306 = sshllo.u32 0, 1
    %s307 = smul.addr 1, 2
    %s308 = scalar_lea.vmem %s1, %s307
    %309 = vst [vmem:[%s308] sm:%s306] %v305
    %s310 = scalar_lea.vmem [#allocation0], 24
    %v311 = vld [vmem:[%s310] sm:%s294]
    %s312 = sshllo.u32 0, 1
    %s313 = smul.addr 1, 3
    %s314 = scalar_lea.vmem %s1, %s313
    %315 = vst [vmem:[%s314] sm:%s312] %v311
    %s316 = scalar_lea.vmem [#allocation0], 32
    %v317 = vld [vmem:[%s316] sm:%s294]
    %s318 = sshllo.u32 0, 1
    %s319 = smul.addr 1, 4
    %s320 = scalar_lea.vmem %s1, %s319
    %321 = vst [vmem:[%s320] sm:%s318] %v317
    %s322 = scalar_lea.vmem [#allocation0], 40
    %v323 = vld [vmem:[%s322] sm:%s294]
    %s324 = sshllo.u32 0, 1
    %s325 = smul.addr 1, 5
    %s326 = scalar_lea.vmem %s1, %s325
    %327 = vst [vmem:[%s326] sm:%s324] %v323

// kernel: tile.6
$region0: #{tile.6}
  #allocation0 [shape = 's32[1]{0}', space=sflag, size = 0x4, scoped, tag = 'scoped memory for tile.6']
  %s0 = inlined_call_operand.vmem [shape: f32[361], index: 0, kind: input, shape index: {}]
  %s1 = inlined_call_operand.vmem [shape: f32[2,361], index: 1, kind: output, shape index: {}]
  // Predicated region
  $region2: #{tile.6} parent=0 // pred_check
    _
  $region3: #{tile.6} parent=0 // pred_check_branch
    %3 = sbr.rel (0) target = $region5
  $region4: #{tile.6} parent=0 // pred_region
    _
  $region5: #{tile.6} parent=0 // pred_fallthru
    _
  %v4 = vld [vmem:[%s0] ss:$0 sm:$0xff]
  %5 = vst [vmem:[%s1] sm:$0x3] %v4
  %s6 = scalar_lea.vmem %s0, 1
  %v7 = vld [vmem:[%s6] ss:$0 sm:$0xff]
  %s8 = scalar_lea.vmem %s1, 2
  %9 = vst [vmem:[%s8] sm:$0x3] %v7
  %s10 = scalar_lea.vmem %s0, 2
  %v11 = vld [vmem:[%s10] ss:$0 sm:$0xff]
  %s12 = scalar_lea.vmem %s1, 4
  %13 = vst [vmem:[%s12] sm:$0x3] %v11

// kernel: tile.7
$region0: #{tile.7}
  %s0 = inlined_call_operand.vmem [shape: f32[2,361], index: 0, kind: input, shape index: {}]
  %s1 = inlined_call_operand.vmem [shape: f32[1,722], index: 1, kind: output, shape index: {}]
  $region1: #{tile.7} parent=0
    #allocation0 [shape = 'u8[24576]{0}', space=vmem, size = 0x6000, scoped, tag = 'scoped mem for output reshape']
    #allocation1 [shape = 'u8[12288]{0}', space=vmem, size = 0x3000, scoped, tag = 'scoped mem for input reshape']
    %s3 = sshllo.u32 0, 2
    %s4 = smul.addr 2, 2
    %s5 = scalar_lea.vmem %s0, %s4
    %v6 = vld [vmem:[%s5] sm:%s3]
    %s7 = scalar_lea.vmem [#allocation1], 16
    %8 = vst [vmem:[%s7] sm:%s3] %v6
    %s9 = scalar_lea.vmem %s0, 2
    %v10 = vld [vmem:[%s9] sm:%s3]
    %s11 = scalar_lea.vmem [#allocation1], 8
    %12 = vst [vmem:[%s11] sm:%s3] %v10
    %v13 = vld [vmem:[%s0] sm:%s3]
    %14 = vst [vmem:[#allocation1] sm:%s3] %v13
    %s15 = scalar_lea.vmem [#allocation1], 16
    %v16 = vld [vmem:[%s15] sm:$0x1]
    %vm17 = vcmask 859136
    %s18 = scalar_lea.vmem [#allocation0], 16
    %19 = vst.msk [vmem:[%s18] sm:$0x1] %vm17, %v16
    %s20 = smov 3
    %v21 = vld [vmem:[#allocation1] ss:$8 sm:%s20]
    %22 = vst [vmem:[#allocation0] ss:$8 sm:$0x3] %v21
    %s23 = scalar_lea.vmem [#allocation1], 17
    %v24 = vld [vmem:[%s23] sm:$0x1]
    %s25 = scalar_lea.vmem [#allocation1], 17
    %s26 = smov 3
    %v27 = vld [vmem:[%s25] ss:$-16 sm:%s26]
    %s28 = scalar_lea.vmem [#allocation1], 7
    %v29 = vld [vmem:[%s28] sm:$0x4]
    %vm30 = vcmask 1042434
    %v31 = vsel %vm30, %v29, %v27
    %vm32 = vcmask 187392
    %v33 = vsel %vm32, %v31, %v24
    %34 = vrot.lane.b32.xlu0 %v33, 105
    %v35 = vpop.permute.xlu0 %34
    %vm36 = vcmask 670720
    %s37 = scalar_lea.vmem [#allocation0], 40
    %38 = vst.msk [vmem:[%s37] sm:$0x1] %vm36, %v35
    %vm39 = vcmask 1048392
    %s40 = scalar_lea.vmem [#allocation0], 32
    %41 = vst.msk [vmem:[%s40] ss:$-16 sm:$0x3] %vm39, %v35
    %s42 = scalar_lea.vmem [#allocation0], 22
    %43 = vst.msk [vmem:[%s42] sm:$0x4] %vm39, %v35
    %s44 = scalar_lea.vmem [#allocation1], 9
    %s45 = smov 3
    %v46 = vld [vmem:[%s44] ss:$-8 sm:%s45]
    %47 = vrot.lane.b32.xlu0 %v46, 105
    %v48 = vpop.permute.xlu0 %47
    %vm49 = vcmask 859136
    %s50 = scalar_lea.vmem [#allocation0], 32
    %51 = vst.msk [vmem:[%s50] ss:$-8 sm:$0x3] %vm49, %v48
    %s53 = sshllo.u32 0, 1
    %v55 = vld [vmem:[#allocation0] sm:%s53]
    %s56 = sshllo.u32 0, 1
    %57 = vst [vmem:[%s1] sm:%s56] %v55
    %s58 = scalar_lea.vmem [#allocation0], 8
    %v59 = vld [vmem:[%s58] sm:%s53]
    %s60 = sshllo.u32 0, 1
    %s61 = scalar_lea.vmem %s1, 1
    %62 = vst [vmem:[%s61] sm:%s60] %v59
    %s63 = scalar_lea.vmem [#allocation0], 16
    %v64 = vld [vmem:[%s63] sm:%s53]
    %s65 = sshllo.u32 0, 1
    %s66 = smul.addr 1, 2
    %s67 = scalar_lea.vmem %s1, %s66
    %68 = vst [vmem:[%s67] sm:%s65] %v64
    %s69 = scalar_lea.vmem [#allocation0], 24
    %v70 = vld [vmem:[%s69] sm:%s53]
    %s71 = sshllo.u32 0, 1
    %s72 = smul.addr 1, 3
    %s73 = scalar_lea.vmem %s1, %s72
    %74 = vst [vmem:[%s73] sm:%s71] %v70
    %s75 = scalar_lea.vmem [#allocation0], 32
    %v76 = vld [vmem:[%s75] sm:%s53]
    %s77 = sshllo.u32 0, 1
    %s78 = smul.addr 1, 4
    %s79 = scalar_lea.vmem %s1, %s78
    %80 = vst [vmem:[%s79] sm:%s77] %v76
    %s81 = scalar_lea.vmem [#allocation0], 40
    %v82 = vld [vmem:[%s81] sm:%s53]
    %s83 = sshllo.u32 0, 1
    %s84 = smul.addr 1, 5
    %s85 = scalar_lea.vmem %s1, %s84
    %86 = vst [vmem:[%s85] sm:%s83] %v82

// kernel: model_forward.1
$region0: #{model_forward.1}
  #allocation0 [shape = 'u32[]', space=smem, size = 0x4, offset = 0x4, fixed_abs, tag = 'smem constant byte address 0x4 - core index']
  #allocation1 [shape = 'u32[144,128]{1,0:T(1,128)}', space=vmem, size = 0x12000, scoped, tag = 'internal scratch']
  #allocation2 [shape = 'f32[2,4372]{1,0:T(2,128)}', space=vmem, size = 0x8c00, scoped, tag = 'scratch operand']
  #allocation3 [shape = 'f32[54,2888]{1,0:T(8,128)}', space=vmem, size = 0xa1000, scoped, tag = 'scratch operand']
  %s0 = inlined_call_operand.vmem [shape: f32[27,722], index: 0, kind: input, shape index: {}]
  %s1 = inlined_call_operand.vmem [shape: f32[4,27], index: 1, kind: input, shape index: {}]
  %s2 = inlined_call_operand.vmem [shape: f32[4,1], index: 2, kind: input, shape index: {}]
  %s3 = inlined_call_operand.vmem [shape: f32[1,722], index: 3, kind: input, shape index: {}]
  %s4 = inlined_call_operand.vmem [shape: f32[5,54], index: 4, kind: input, shape index: {}]
  %s5 = inlined_call_operand.vmem [shape: f32[5,1], index: 5, kind: input, shape index: {}]
  %s6 = inlined_call_operand.vmem [shape: f32[5,2888], index: 6, kind: output, shape index: {}]
  %s7 = sld [smem:[#allocation0]]
  $region34: #{model_forward.1} parent=0
    _
  %s9 = ssub.s32 1, %s7
  %s10 = scalar_select 0, %s9, %s7
  // Predicated region
  $region2: #{model_forward.1} parent=0 // pred_check
    _
  $region3: #{model_forward.1} parent=0 // pred_check_branch
    %12 = sbr.rel (0) target = $region5
  $region4: #{model_forward.1} parent=0 // pred_region
    _
  $region5: #{model_forward.1} parent=0 // pred_fallthru
    _
  // Predicated region
  $region6: #{model_forward.1} parent=0 // pred_check
    _
  $region7: #{model_forward.1} parent=0 // pred_check_branch
    %14 = sbr.rel (0) target = $region9
  $region8: #{model_forward.1} parent=0 // pred_region
    _
  $region9: #{model_forward.1} parent=0 // pred_fallthru
    _
  // Predicated region
  $region10: #{model_forward.1} parent=0 // pred_check
    _
  $region11: #{model_forward.1} parent=0 // pred_check_branch
    %16 = sbr.rel (0) target = $region13
  $region12: #{model_forward.1} parent=0 // pred_region
    _
  $region13: #{model_forward.1} parent=0 // pred_fallthru
    _
  // Predicated region
  $region14: #{model_forward.1} parent=0 // pred_check
    _
  $region15: #{model_forward.1} parent=0 // pred_check_branch
    %18 = sbr.rel (0) target = $region17
  $region16: #{model_forward.1} parent=0 // pred_region
    _
  $region17: #{model_forward.1} parent=0 // pred_fallthru
    _
  // Predicated region
  $region18: #{model_forward.1} parent=0 // pred_check
    _
  $region19: #{model_forward.1} parent=0 // pred_check_branch
    %20 = sbr.rel (0) target = $region21
  $region20: #{model_forward.1} parent=0 // pred_region
    _
  $region21: #{model_forward.1} parent=0 // pred_fallthru
    _
  // Predicated region
  $region22: #{model_forward.1} parent=0 // pred_check
    _
  $region23: #{model_forward.1} parent=0 // pred_check_branch
    %22 = sbr.rel (0) target = $region25
  $region24: #{model_forward.1} parent=0 // pred_region
    _
  $region25: #{model_forward.1} parent=0 // pred_fallthru
    _
  %v23 = vld [vmem:[%s1] sm:$0xf]
  %v24 = vld [vmem:[%s0] sm:$0xff]
  %v25 = vld [vmem:[%s0 + $0x8] sm:$0xff]
  %v26 = vld [vmem:[%s0 + $0x10] sm:$0xff]
  %v27 = vld [vmem:[%s0 + $0x18] sm:$0xff]
  %v28 = vld [vmem:[%s0 + $0x20] sm:$0xff]
  %v29 = vld [vmem:[%s0 + $0x28] sm:$0xff]
  %v30 = vld [vmem:[%s0 + $0x30] sm:$0xff]
  %v31 = vld [vmem:[%s0 + $0x38] sm:$0xff]
  %v32 = vld [vmem:[%s0 + $0x40] sm:$0xff]
  %v33 = vld [vmem:[%s0 + $0x48] sm:$0xff]
  %v34 = vld [vmem:[%s0 + $0x50] sm:$0xff]
  %v35 = vld [vmem:[%s0 + $0x58] sm:$0xff]
  %v36 = vld [vmem:[%s0 + $0x60] sm:$0xff]
  %v37 = vld [vmem:[%s0 + $0x68] sm:$0xff]
  %v38 = vld [vmem:[%s0 + $0x70] sm:$0xff]
  %v39 = vld [vmem:[%s0 + $0x78] sm:$0xff]
  %v40 = vld [vmem:[%s0 + $0x80] sm:$0xff]
  %v41 = vld [vmem:[%s0 + $0x88] sm:$0xff]
  %v42 = vld [vmem:[%s0 + $0x90] sm:$0x7]
  %v43 = vld [vmem:[%s0 + $0x98] sm:$0x7]
  %v44 = vld [vmem:[%s0 + $0xa0] sm:$0x7]
  %v45 = vld [vmem:[%s0 + $0xa8] sm:$0x7]
  %v46 = vld [vmem:[%s0 + $0xb0] sm:$0x7]
  %v47 = vld [vmem:[%s0 + $0xb8] sm:$0x7]
  %v48 = vld [vmem:[%s2] sm:$0xf]
  %50 = vset.pattern.permute.xlu0 0
  %51 = vperm.xlu0 %50, %v48
  %v52 = vpop.permute.xlu0 %51
  %vm54 = vcmask 220160
  %v56 = vsel %vm54, %v23, 0
  %vm58 = vcmask 1042432
  %v60 = vsel %vm58, %v42, 0
  %v63 = vsel %vm58, %v43, 0
  %v66 = vsel %vm58, %v44, 0
  %v69 = vsel %vm58, %v45, 0
  %v72 = vsel %vm58, %v46, 0
  %v75 = vsel %vm58, %v47, 0
  %v77 = vand.u32 %v25, 4294901760
  %78 = vmatprep.subr.mxu0 %v77
  %v79 = vand.u32 %v24, 4294901760
  %80 = vmatpush1.msra.mxu0 %v79
  %v81 = vand.u32 %v31, 4294901760
  %82 = vmatprep.subr.mxu0 %v81
  %v83 = vand.u32 %v30, 4294901760
  %84 = vmatpush1.msra.mxu0 %v83
  %v85 = vand.u32 %v37, 4294901760
  %86 = vmatprep.subr.mxu0 %v85
  %v87 = vand.u32 %v36, 4294901760
  %88 = vmatpush1.msra.mxu0 %v87
  %v89 = vand.u32 %v63, 4294901760
  %90 = vmatprep.subr.mxu0 %v89
  %v91 = vand.u32 %v60, 4294901760
  %92 = vmatpush1.msra.mxu0 %v91
  %93 = vmatprep.subr.mxu0 0.0
  %94 = vmatpush1.msra.mxu0 0.0
  %95 = vmatprep.subr.mxu0 0.0
  %96 = vmatpush1.msra.mxu0 0.0
  %97 = vmatprep.subr.mxu0 0.0
  %98 = vmatpush1.msra.mxu0 0.0
  %99 = vmatprep.subr.mxu0 0.0
  %100 = vmatpush1.msra.mxu0 0.0
  %101 = vmatprep.subr.mxu0 0.0
  %102 = vmatpush1.msra.mxu0 0.0
  %103 = vmatprep.subr.mxu0 0.0
  %104 = vmatpush1.msra.mxu0 0.0
  %105 = vmatprep.subr.mxu0 0.0
  %106 = vmatpush1.msra.mxu0 0.0
  %107 = vmatprep.subr.mxu0 0.0
  %108 = vmatpush1.msra.mxu0 0.0
  %109 = vmatprep.subr.mxu0 0.0
  %110 = vmatpush1.msra.mxu0 0.0
  %111 = vmatprep.subr.mxu0 0.0
  %112 = vmatpush1.msra.mxu0 0.0
  %113 = vmatprep.subr.mxu0 0.0
  %114 = vmatpush1.msra.mxu0 0.0
  %115 = vmatprep.subr.mxu0 0.0
  %116 = vmatpush1.msra.mxu0 0.0
  %117 = vmatprep.subr.mxu0 0.0
  %118 = vmatpush1.msra.mxu0 0.0
  %119 = vmatprep.subr.mxu0 0.0
  %120 = vmatpush1.msra.mxu0 0.0
  %121 = vmatprep.subr.mxu0 0.0
  %122 = vmatpush1.msra.mxu0 0.0
  %123 = vmatprep.subr.mxu0 0.0
  %124 = vmatpush1.msra.mxu0 0.0
  %125 = vmatprep.subr.mxu0 0.0
  %126 = vmatpush1.msra.mxu0 0.0
  %127 = vmatprep.subr.mxu0 0.0
  %128 = vmatpush1.msra.mxu0 0.0
  %129 = vmatprep.subr.mxu0 0.0
  %130 = vmatpush1.msra.mxu0 0.0
  %131 = vmatprep.subr.mxu0 0.0
  %132 = vmatpush1.msra.mxu0 0.0
  %133 = vmatprep.subr.mxu0 0.0
  %134 = vmatpush1.msra.mxu0 0.0
  %135 = vmatprep.subr.mxu0 0.0
  %136 = vmatpush1.msra.mxu0 0.0
  %137 = vmatprep.subr.mxu0 0.0
  %138 = vmatpush1.msra.mxu0 0.0
  %139 = vmatprep.subr.mxu0 0.0
  %140 = vmatpush1.msra.mxu0 0.0
  %141 = vmatprep.subr.mxu0 0.0
  %142 = vmatpush1.msra.mxu0 0.0
  %143 = vmatprep.subr.mxu0 0.0
  %144 = vmatpush1.msra.mxu0 0.0
  %145 = vmatprep.subr.mxu0 0.0
  %146 = vmatpush1.msra.mxu0 0.0
  %147 = vmatprep.subr.mxu0 0.0
  %148 = vmatpush1.msra.mxu0 0.0
  %149 = vmatprep.mubr.f32.mxu0 0.0
  %v150 = vand.u32 %v56, 4294901760
  %v151 = vsub.f32 %v56, %v150
  %v152 = vand.u32 %v151, 4294901760
  %v153 = vsub.f32 %v151, %v152
  %v154 = vand.u32 %v153, 4294901760
  %155 = vmatmul.mubr.f32.gmra.mrb[0].mxu0 %v154
  %v156 = vpop.f32.mrb[0].mxu0
  %v157 = vadd.f32 %v52, %v156
  %v158 = vpop.f32.mrb[0].mxu0
  %v159 = vadd.f32 %v52, %v158
  %160 = vdwg.mxu0
  %v161 = vand.u32 %v25, 4294901760
  %v162 = vsub.f32 %v25, %v161
  %v163 = vand.u32 %v162, 4294901760
  %v164 = vsub.f32 %v162, %v163
  %v165 = vand.u32 %v164, 4294901760
  %166 = vmatprep.subr.mxu0 %v165
  %v167 = vand.u32 %v24, 4294901760
  %v168 = vsub.f32 %v24, %v167
  %v169 = vand.u32 %v168, 4294901760
  %v170 = vsub.f32 %v168, %v169
  %v171 = vand.u32 %v170, 4294901760
  %172 = vmatpush1.msra.mxu0 %v171
  %v173 = vand.u32 %v31, 4294901760
  %v174 = vsub.f32 %v31, %v173
  %v175 = vand.u32 %v174, 4294901760
  %v176 = vsub.f32 %v174, %v175
  %v177 = vand.u32 %v176, 4294901760
  %178 = vmatprep.subr.mxu0 %v177
  %v179 = vand.u32 %v30, 4294901760
  %v180 = vsub.f32 %v30, %v179
  %v181 = vand.u32 %v180, 4294901760
  %v182 = vsub.f32 %v180, %v181
  %v183 = vand.u32 %v182, 4294901760
  %184 = vmatpush1.msra.mxu0 %v183
  %v185 = vand.u32 %v37, 4294901760
  %v186 = vsub.f32 %v37, %v185
  %v187 = vand.u32 %v186, 4294901760
  %v188 = vsub.f32 %v186, %v187
  %v189 = vand.u32 %v188, 4294901760
  %190 = vmatprep.subr.mxu0 %v189
  %v191 = vand.u32 %v36, 4294901760
  %v192 = vsub.f32 %v36, %v191
  %v193 = vand.u32 %v192, 4294901760
  %v194 = vsub.f32 %v192, %v193
  %v195 = vand.u32 %v194, 4294901760
  %196 = vmatpush1.msra.mxu0 %v195
  %v197 = vand.u32 %v63, 4294901760
  %v198 = vsub.f32 %v63, %v197
  %v199 = vand.u32 %v198, 4294901760
  %v200 = vsub.f32 %v198, %v199
  %v201 = vand.u32 %v200, 4294901760
  %202 = vmatprep.subr.mxu0 %v201
  %v203 = vand.u32 %v60, 4294901760
  %v204 = vsub.f32 %v60, %v203
  %v205 = vand.u32 %v204, 4294901760
  %v206 = vsub.f32 %v204, %v205
  %v207 = vand.u32 %v206, 4294901760
  %208 = vmatpush1.msra.mxu0 %v207
  %209 = vmatprep.subr.mxu0 0.0
  %210 = vmatpush1.msra.mxu0 0.0
  %211 = vmatprep.subr.mxu0 0.0
  %212 = vmatpush1.msra.mxu0 0.0
  %213 = vmatprep.subr.mxu0 0.0
  %214 = vmatpush1.msra.mxu0 0.0
  %215 = vmatprep.subr.mxu0 0.0
  %216 = vmatpush1.msra.mxu0 0.0
  %217 = vmatprep.subr.mxu0 0.0
  %218 = vmatpush1.msra.mxu0 0.0
  %219 = vmatprep.subr.mxu0 0.0
  %220 = vmatpush1.msra.mxu0 0.0
  %221 = vmatprep.subr.mxu0 0.0
  %222 = vmatpush1.msra.mxu0 0.0
  %223 = vmatprep.subr.mxu0 0.0
  %224 = vmatpush1.msra.mxu0 0.0
  %225 = vmatprep.subr.mxu0 0.0
  %226 = vmatpush1.msra.mxu0 0.0
  %227 = vmatprep.subr.mxu0 0.0
  %228 = vmatpush1.msra.mxu0 0.0
  %229 = vmatprep.subr.mxu0 0.0
  %230 = vmatpush1.msra.mxu0 0.0
  %231 = vmatprep.subr.mxu0 0.0
  %232 = vmatpush1.msra.mxu0 0.0
  %233 = vmatprep.subr.mxu0 0.0
  %234 = vmatpush1.msra.mxu0 0.0
  %235 = vmatprep.subr.mxu0 0.0
  %236 = vmatpush1.msra.mxu0 0.0
  %237 = vmatprep.subr.mxu0 0.0
  %238 = vmatpush1.msra.mxu0 0.0
  %239 = vmatprep.subr.mxu0 0.0
  %240 = vmatpush1.msra.mxu0 0.0
  %241 = vmatprep.subr.mxu0 0.0
  %242 = vmatpush1.msra.mxu0 0.0
  %243 = vmatprep.subr.mxu0 0.0
  %244 = vmatpush1.msra.mxu0 0.0
  %245 = vmatprep.subr.mxu0 0.0
  %246 = vmatpush1.msra.mxu0 0.0
  %247 = vmatprep.subr.mxu0 0.0
  %248 = vmatpush1.msra.mxu0 0.0
  %249 = vmatprep.subr.mxu0 0.0
  %250 = vmatpush1.msra.mxu0 0.0
  %251 = vmatprep.subr.mxu0 0.0
  %252 = vmatpush1.msra.mxu0 0.0
  %253 = vmatprep.subr.mxu0 0.0
  %254 = vmatpush1.msra.mxu0 0.0
  %255 = vmatprep.subr.mxu0 0.0
  %256 = vmatpush1.msra.mxu0 0.0
  %257 = vmatprep.subr.mxu0 0.0
  %258 = vmatpush1.msra.mxu0 0.0
  %259 = vmatprep.subr.mxu0 0.0
  %260 = vmatpush1.msra.mxu0 0.0
  %261 = vmatprep.subr.mxu0 0.0
  %262 = vmatpush1.msra.mxu0 0.0
  %263 = vmatprep.subr.mxu0 0.0
  %264 = vmatpush1.msra.mxu0 0.0
  %265 = vmatprep.mubr.f32.mxu0 0.0
  %v266 = vand.u32 %v56, 4294901760
  %267 = vmatmul.mubr.f32.gmra.mrb[0].mxu0 %v266
  %v268 = vpop.f32.mrb[0].mxu0
  %v269 = vadd.f32 %v157, %v268
  %v270 = vpop.f32.mrb[0].mxu0
  %v271 = vadd.f32 %v159, %v270
  %272 = vdwg.mxu0
  %v273 = vand.u32 %v25, 4294901760
  %v274 = vsub.f32 %v25, %v273
  %275 = vmatprep.subr.mxu0 %v274
  %v276 = vand.u32 %v24, 4294901760
  %v277 = vsub.f32 %v24, %v276
  %278 = vmatpush1.msra.mxu0 %v277
  %v279 = vand.u32 %v31, 4294901760
  %v280 = vsub.f32 %v31, %v279
  %281 = vmatprep.subr.mxu0 %v280
  %v282 = vand.u32 %v30, 4294901760
  %v283 = vsub.f32 %v30, %v282
  %284 = vmatpush1.msra.mxu0 %v283
  %v285 = vand.u32 %v37, 4294901760
  %v286 = vsub.f32 %v37, %v285
  %287 = vmatprep.subr.mxu0 %v286
  %v288 = vand.u32 %v36, 4294901760
  %v289 = vsub.f32 %v36, %v288
  %290 = vmatpush1.msra.mxu0 %v289
  %v291 = vand.u32 %v63, 4294901760
  %v292 = vsub.f32 %v63, %v291
  %293 = vmatprep.subr.mxu0 %v292
  %v294 = vand.u32 %v60, 4294901760
  %v295 = vsub.f32 %v60, %v294
  %296 = vmatpush1.msra.mxu0 %v295
  %297 = vmatprep.subr.mxu0 0.0
  %298 = vmatpush1.msra.mxu0 0.0
  %299 = vmatprep.subr.mxu0 0.0
  %300 = vmatpush1.msra.mxu0 0.0
  %301 = vmatprep.subr.mxu0 0.0
  %302 = vmatpush1.msra.mxu0 0.0
  %303 = vmatprep.subr.mxu0 0.0
  %304 = vmatpush1.msra.mxu0 0.0
  %305 = vmatprep.subr.mxu0 0.0
  %306 = vmatpush1.msra.mxu0 0.0
  %307 = vmatprep.subr.mxu0 0.0
  %308 = vmatpush1.msra.mxu0 0.0
  %309 = vmatprep.subr.mxu0 0.0
  %310 = vmatpush1.msra.mxu0 0.0
  %311 = vmatprep.subr.mxu0 0.0
  %312 = vmatpush1.msra.mxu0 0.0
  %313 = vmatprep.subr.mxu0 0.0
  %314 = vmatpush1.msra.mxu0 0.0
  %315 = vmatprep.subr.mxu0 0.0
  %316 = vmatpush1.msra.mxu0 0.0
  %317 = vmatprep.subr.mxu0 0.0
  %318 = vmatpush1.msra.mxu0 0.0
  %319 = vmatprep.subr.mxu0 0.0
  %320 = vmatpush1.msra.mxu0 0.0
  %321 = vmatprep.subr.mxu0 0.0
  %322 = vmatpush1.msra.mxu0 0.0
  %323 = vmatprep.subr.mxu0 0.0
  %324 = vmatpush1.msra.mxu0 0.0
  %325 = vmatprep.subr.mxu0 0.0
  %326 = vmatpush1.msra.mxu0 0.0
  %327 = vmatprep.subr.mxu0 0.0
  %328 = vmatpush1.msra.mxu0 0.0
  %329 = vmatprep.subr.mxu0 0.0
  %330 = vmatpush1.msra.mxu0 0.0
  %331 = vmatprep.subr.mxu0 0.0
  %332 = vmatpush1.msra.mxu0 0.0
  %333 = vmatprep.subr.mxu0 0.0
  %334 = vmatpush1.msra.mxu0 0.0
  %335 = vmatprep.subr.mxu0 0.0
  %336 = vmatpush1.msra.mxu0 0.0
  %337 = vmatprep.subr.mxu0 0.0
  %338 = vmatpush1.msra.mxu0 0.0
  %339 = vmatprep.subr.mxu0 0.0
  %340 = vmatpush1.msra.mxu0 0.0
  %341 = vmatprep.subr.mxu0 0.0
  %342 = vmatpush1.msra.mxu0 0.0
  %343 = vmatprep.subr.mxu0 0.0
  %344 = vmatpush1.msra.mxu0 0.0
  %345 = vmatprep.subr.mxu0 0.0
  %346 = vmatpush1.msra.mxu0 0.0
  %347 = vmatprep.subr.mxu0 0.0
  %348 = vmatpush1.msra.mxu0 0.0
  %349 = vmatprep.subr.mxu0 0.0
  %350 = vmatpush1.msra.mxu0 0.0
  %351 = vmatprep.subr.mxu0 0.0
  %352 = vmatpush1.msra.mxu0 0.0
  %353 = vmatprep.mubr.f32.mxu0 0.0
  %v354 = vand.u32 %v56, 4294901760
  %v355 = vsub.f32 %v56, %v354
  %356 = vmatmul.mubr.f32.gmra.mrb[0].mxu0 %v355
  %v357 = vpop.f32.mrb[0].mxu0
  %v358 = vadd.f32 %v269, %v357
  %v359 = vpop.f32.mrb[0].mxu0
  %v360 = vadd.f32 %v271, %v359
  %361 = vdwg.mxu0
  %v362 = vand.u32 %v25, 4294901760
  %363 = vmatprep.subr.mxu0 %v362
  %v364 = vand.u32 %v24, 4294901760
  %365 = vmatpush1.msra.mxu0 %v364
  %v366 = vand.u32 %v31, 4294901760
  %367 = vmatprep.subr.mxu0 %v366
  %v368 = vand.u32 %v30, 4294901760
  %369 = vmatpush1.msra.mxu0 %v368
  %v370 = vand.u32 %v37, 4294901760
  %371 = vmatprep.subr.mxu0 %v370
  %v372 = vand.u32 %v36, 4294901760
  %373 = vmatpush1.msra.mxu0 %v372
  %v374 = vand.u32 %v63, 4294901760
  %375 = vmatprep.subr.mxu0 %v374
  %v376 = vand.u32 %v60, 4294901760
  %377 = vmatpush1.msra.mxu0 %v376
  %378 = vmatprep.subr.mxu0 0.0
  %379 = vmatpush1.msra.mxu0 0.0
  %380 = vmatprep.subr.mxu0 0.0
  %381 = vmatpush1.msra.mxu0 0.0
  %382 = vmatprep.subr.mxu0 0.0
  %383 = vmatpush1.msra.mxu0 0.0
  %384 = vmatprep.subr.mxu0 0.0
  %385 = vmatpush1.msra.mxu0 0.0
  %386 = vmatprep.subr.mxu0 0.0
  %387 = vmatpush1.msra.mxu0 0.0
  %388 = vmatprep.subr.mxu0 0.0
  %389 = vmatpush1.msra.mxu0 0.0
  %390 = vmatprep.subr.mxu0 0.0
  %391 = vmatpush1.msra.mxu0 0.0
  %392 = vmatprep.subr.mxu0 0.0
  %393 = vmatpush1.msra.mxu0 0.0
  %394 = vmatprep.subr.mxu0 0.0
  %395 = vmatpush1.msra.mxu0 0.0
  %396 = vmatprep.subr.mxu0 0.0
  %397 = vmatpush1.msra.mxu0 0.0
  %398 = vmatprep.subr.mxu0 0.0
  %399 = vmatpush1.msra.mxu0 0.0
  %400 = vmatprep.subr.mxu0 0.0
  %401 = vmatpush1.msra.mxu0 0.0
  %402 = vmatprep.subr.mxu0 0.0
  %403 = vmatpush1.msra.mxu0 0.0
  %404 = vmatprep.subr.mxu0 0.0
  %405 = vmatpush1.msra.mxu0 0.0
  %406 = vmatprep.subr.mxu0 0.0
  %407 = vmatpush1.msra.mxu0 0.0
  %408 = vmatprep.subr.mxu0 0.0
  %409 = vmatpush1.msra.mxu0 0.0
  %410 = vmatprep.subr.mxu0 0.0
  %411 = vmatpush1.msra.mxu0 0.0
  %412 = vmatprep.subr.mxu0 0.0
  %413 = vmatpush1.msra.mxu0 0.0
  %414 = vmatprep.subr.mxu0 0.0
  %415 = vmatpush1.msra.mxu0 0.0
  %416 = vmatprep.subr.mxu0 0.0
  %417 = vmatpush1.msra.mxu0 0.0
  %418 = vmatprep.subr.mxu0 0.0
  %419 = vmatpush1.msra.mxu0 0.0
  %420 = vmatprep.subr.mxu0 0.0
  %421 = vmatpush1.msra.mxu0 0.0
  %422 = vmatprep.subr.mxu0 0.0
  %423 = vmatpush1.msra.mxu0 0.0
  %424 = vmatprep.subr.mxu0 0.0
  %425 = vmatpush1.msra.mxu0 0.0
  %426 = vmatprep.subr.mxu0 0.0
  %427 = vmatpush1.msra.mxu0 0.0
  %428 = vmatprep.subr.mxu0 0.0
  %429 = vmatpush1.msra.mxu0 0.0
  %430 = vmatprep.subr.mxu0 0.0
  %431 = vmatpush1.msra.mxu0 0.0
  %432 = vmatprep.subr.mxu0 0.0
  %433 = vmatpush1.msra.mxu0 0.0
  %434 = vmatprep.mubr.f32.mxu0 0.0
  %v435 = vand.u32 %v56, 4294901760
  %v436 = vsub.f32 %v56, %v435
  %v437 = vand.u32 %v436, 4294901760
  %438 = vmatmul.mubr.f32.gmra.mrb[0].mxu0 %v437
  %v439 = vpop.f32.mrb[0].mxu0
  %v440 = vadd.f32 %v358, %v439
  %v441 = vpop.f32.mrb[0].mxu0
  %v442 = vadd.f32 %v360, %v441
  %443 = vdwg.mxu0
  %v444 = vand.u32 %v25, 4294901760
  %v445 = vsub.f32 %v25, %v444
  %v446 = vand.u32 %v445, 4294901760
  %447 = vmatprep.subr.mxu0 %v446
  %v448 = vand.u32 %v24, 4294901760
  %v449 = vsub.f32 %v24, %v448
  %v450 = vand.u32 %v449, 4294901760
  %451 = vmatpush1.msra.mxu0 %v450
  %v452 = vand.u32 %v31, 4294901760
  %v453 = vsub.f32 %v31, %v452
  %v454 = vand.u32 %v453, 4294901760
  %455 = vmatprep.subr.mxu0 %v454
  %v456 = vand.u32 %v30, 4294901760
  %v457 = vsub.f32 %v30, %v456
  %v458 = vand.u32 %v457, 4294901760
  %459 = vmatpush1.msra.mxu0 %v458
  %v460 = vand.u32 %v37, 4294901760
  %v461 = vsub.f32 %v37, %v460
  %v462 = vand.u32 %v461, 4294901760
  %463 = vmatprep.subr.mxu0 %v462
  %v464 = vand.u32 %v36, 4294901760
  %v465 = vsub.f32 %v36, %v464
  %v466 = vand.u32 %v465, 4294901760
  %467 = vmatpush1.msra.mxu0 %v466
  %v468 = vand.u32 %v63, 4294901760
  %v469 = vsub.f32 %v63, %v468
  %v470 = vand.u32 %v469, 4294901760
  %471 = vmatprep.subr.mxu0 %v470
  %v472 = vand.u32 %v60, 4294901760
  %v473 = vsub.f32 %v60, %v472
  %v474 = vand.u32 %v473, 4294901760
  %475 = vmatpush1.msra.mxu0 %v474
  %476 = vmatprep.subr.mxu0 0.0
  %477 = vmatpush1.msra.mxu0 0.0
  %478 = vmatprep.subr.mxu0 0.0
  %479 = vmatpush1.msra.mxu0 0.0
  %480 = vmatprep.subr.mxu0 0.0
  %481 = vmatpush1.msra.mxu0 0.0
  %482 = vmatprep.subr.mxu0 0.0
  %483 = vmatpush1.msra.mxu0 0.0
  %484 = vmatprep.subr.mxu0 0.0
  %485 = vmatpush1.msra.mxu0 0.0
  %486 = vmatprep.subr.mxu0 0.0
  %487 = vmatpush1.msra.mxu0 0.0
  %488 = vmatprep.subr.mxu0 0.0
  %489 = vmatpush1.msra.mxu0 0.0
  %490 = vmatprep.subr.mxu0 0.0
  %491 = vmatpush1.msra.mxu0 0.0
  %492 = vmatprep.subr.mxu0 0.0
  %493 = vmatpush1.msra.mxu0 0.0
  %494 = vmatprep.subr.mxu0 0.0
  %495 = vmatpush1.msra.mxu0 0.0
  %496 = vmatprep.subr.mxu0 0.0
  %497 = vmatpush1.msra.mxu0 0.0
  %498 = vmatprep.subr.mxu0 0.0
  %499 = vmatpush1.msra.mxu0 0.0
  %500 = vmatprep.subr.mxu0 0.0
  %501 = vmatpush1.msra.mxu0 0.0
  %502 = vmatprep.subr.mxu0 0.0
  %503 = vmatpush1.msra.mxu0 0.0
  %504 = vmatprep.subr.mxu0 0.0
  %505 = vmatpush1.msra.mxu0 0.0
  %506 = vmatprep.subr.mxu0 0.0
  %507 = vmatpush1.msra.mxu0 0.0
  %508 = vmatprep.subr.mxu0 0.0
  %509 = vmatpush1.msra.mxu0 0.0
  %510 = vmatprep.subr.mxu0 0.0
  %511 = vmatpush1.msra.mxu0 0.0
  %512 = vmatprep.subr.mxu0 0.0
  %513 = vmatpush1.msra.mxu0 0.0
  %514 = vmatprep.subr.mxu0 0.0
  %515 = vmatpush1.msra.mxu0 0.0
  %516 = vmatprep.subr.mxu0 0.0
  %517 = vmatpush1.msra.mxu0 0.0
  %518 = vmatprep.subr.mxu0 0.0
  %519 = vmatpush1.msra.mxu0 0.0
  %520 = vmatprep.subr.mxu0 0.0
  %521 = vmatpush1.msra.mxu0 0.0
  %522 = vmatprep.subr.mxu0 0.0
  %523 = vmatpush1.msra.mxu0 0.0
  %524 = vmatprep.subr.mxu0 0.0
  %525 = vmatpush1.msra.mxu0 0.0
  %526 = vmatprep.subr.mxu0 0.0
  %527 = vmatpush1.msra.mxu0 0.0
  %528 = vmatprep.subr.mxu0 0.0
  %529 = vmatpush1.msra.mxu0 0.0
  %530 = vmatprep.subr.mxu0 0.0
  %531 = vmatpush1.msra.mxu0 0.0
  %532 = vmatprep.mubr.f32.mxu0 0.0
  %v533 = vand.u32 %v56, 4294901760
  %534 = vmatmul.mubr.f32.gmra.mrb[0].mxu0 %v533
  %v535 = vpop.f32.mrb[0].mxu0
  %v536 = vadd.f32 %v440, %v535
  %v537 = vpop.f32.mrb[0].mxu0
  %v538 = vadd.f32 %v442, %v537
  %539 = vdwg.mxu0
  %v540 = vand.u32 %v25, 4294901760
  %541 = vmatprep.subr.mxu0 %v540
  %v542 = vand.u32 %v24, 4294901760
  %543 = vmatpush1.msra.mxu0 %v542
  %v544 = vand.u32 %v31, 4294901760
  %545 = vmatprep.subr.mxu0 %v544
  %v546 = vand.u32 %v30, 4294901760
  %547 = vmatpush1.msra.mxu0 %v546
  %v548 = vand.u32 %v37, 4294901760
  %549 = vmatprep.subr.mxu0 %v548
  %v550 = vand.u32 %v36, 4294901760
  %551 = vmatpush1.msra.mxu0 %v550
  %v552 = vand.u32 %v63, 4294901760
  %553 = vmatprep.subr.mxu0 %v552
  %v554 = vand.u32 %v60, 4294901760
  %555 = vmatpush1.msra.mxu0 %v554
  %556 = vmatprep.subr.mxu0 0.0
  %557 = vmatpush1.msra.mxu0 0.0
  %558 = vmatprep.subr.mxu0 0.0
  %559 = vmatpush1.msra.mxu0 0.0
  %560 = vmatprep.subr.mxu0 0.0
  %561 = vmatpush1.msra.mxu0 0.0
  %562 = vmatprep.subr.mxu0 0.0
  %563 = vmatpush1.msra.mxu0 0.0
  %564 = vmatprep.subr.mxu0 0.0
  %565 = vmatpush1.msra.mxu0 0.0
  %566 = vmatprep.subr.mxu0 0.0
  %567 = vmatpush1.msra.mxu0 0.0
  %568 = vmatprep.subr.mxu0 0.0
  %569 = vmatpush1.msra.mxu0 0.0
  %570 = vmatprep.subr.mxu0 0.0
  %571 = vmatpush1.msra.mxu0 0.0
  %572 = vmatprep.subr.mxu0 0.0
  %573 = vmatpush1.msra.mxu0 0.0
  %574 = vmatprep.subr.mxu0 0.0
  %575 = vmatpush1.msra.mxu0 0.0
  %576 = vmatprep.subr.mxu0 0.0
  %577 = vmatpush1.msra.mxu0 0.0
  %578 = vmatprep.subr.mxu0 0.0
  %579 = vmatpush1.msra.mxu0 0.0
  %580 = vmatprep.subr.mxu0 0.0
  %581 = vmatpush1.msra.mxu0 0.0
  %582 = vmatprep.subr.mxu0 0.0
  %583 = vmatpush1.msra.mxu0 0.0
  %584 = vmatprep.subr.mxu0 0.0
  %585 = vmatpush1.msra.mxu0 0.0
  %586 = vmatprep.subr.mxu0 0.0
  %587 = vmatpush1.msra.mxu0 0.0
  %588 = vmatprep.subr.mxu0 0.0
  %589 = vmatpush1.msra.mxu0 0.0
  %590 = vmatprep.subr.mxu0 0.0
  %591 = vmatpush1.msra.mxu0 0.0
  %592 = vmatprep.subr.mxu0 0.0
  %593 = vmatpush1.msra.mxu0 0.0
  %594 = vmatprep.subr.mxu0 0.0
  %595 = vmatpush1.msra.mxu0 0.0
  %596 = vmatprep.subr.mxu0 0.0
  %597 = vmatpush1.msra.mxu0 0.0
  %598 = vmatprep.subr.mxu0 0.0
  %599 = vmatpush1.msra.mxu0 0.0
  %600 = vmatprep.subr.mxu0 0.0
  %601 = vmatpush1.msra.mxu0 0.0
  %602 = vmatprep.subr.mxu0 0.0
  %603 = vmatpush1.msra.mxu0 0.0
  %604 = vmatprep.subr.mxu0 0.0
  %605 = vmatpush1.msra.mxu0 0.0
  %606 = vmatprep.subr.mxu0 0.0
  %607 = vmatpush1.msra.mxu0 0.0
  %608 = vmatprep.subr.mxu0 0.0
  %609 = vmatpush1.msra.mxu0 0.0
  %610 = vmatprep.subr.mxu0 0.0
  %611 = vmatpush1.msra.mxu0 0.0
  %612 = vmatprep.mubr.f32.mxu0 0.0
  %v613 = vand.u32 %v56, 4294901760
  %614 = vmatmul.mubr.f32.gmra.mrb[0].mxu0 %v613
  %v615 = vpop.f32.mrb[0].mxu0
  %v616 = vadd.f32 %v536, %v615
  %v617 = vpop.f32.mrb[0].mxu0
  %v618 = vadd.f32 %v538, %v617
  %619 = vdwg.mxu0
  %v620 = vand.u32 %v27, 4294901760
  %621 = vmatprep.subr.mxu0 %v620
  %v622 = vand.u32 %v26, 4294901760
  %623 = vmatpush1.msra.mxu0 %v622
  %v624 = vand.u32 %v33, 4294901760
  %625 = vmatprep.subr.mxu0 %v624
  %v626 = vand.u32 %v32, 4294901760
  %627 = vmatpush1.msra.mxu0 %v626
  %v628 = vand.u32 %v39, 4294901760
  %629 = vmatprep.subr.mxu0 %v628
  %v630 = vand.u32 %v38, 4294901760
  %631 = vmatpush1.msra.mxu0 %v630
  %v632 = vand.u32 %v69, 4294901760
  %633 = vmatprep.subr.mxu0 %v632
  %v634 = vand.u32 %v66, 4294901760
  %635 = vmatpush1.msra.mxu0 %v634
  %636 = vmatprep.subr.mxu0 0.0
  %637 = vmatpush1.msra.mxu0 0.0
  %638 = vmatprep.subr.mxu0 0.0
  %639 = vmatpush1.msra.mxu0 0.0
  %640 = vmatprep.subr.mxu0 0.0
  %641 = vmatpush1.msra.mxu0 0.0
  %642 = vmatprep.subr.mxu0 0.0
  %643 = vmatpush1.msra.mxu0 0.0
  %644 = vmatprep.subr.mxu0 0.0
  %645 = vmatpush1.msra.mxu0 0.0
  %646 = vmatprep.subr.mxu0 0.0
  %647 = vmatpush1.msra.mxu0 0.0
  %648 = vmatprep.subr.mxu0 0.0
  %649 = vmatpush1.msra.mxu0 0.0
  %650 = vmatprep.subr.mxu0 0.0
  %651 = vmatpush1.msra.mxu0 0.0
  %652 = vmatprep.subr.mxu0 0.0
  %653 = vmatpush1.msra.mxu0 0.0
  %654 = vmatprep.subr.mxu0 0.0
  %655 = vmatpush1.msra.mxu0 0.0
  %656 = vmatprep.subr.mxu0 0.0
  %657 = vmatpush1.msra.mxu0 0.0
  %658 = vmatprep.subr.mxu0 0.0
  %659 = vmatpush1.msra.mxu0 0.0
  %660 = vmatprep.subr.mxu0 0.0
  %661 = vmatpush1.msra.mxu0 0.0
  %662 = vmatprep.subr.mxu0 0.0
  %663 = vmatpush1.msra.mxu0 0.0
  %664 = vmatprep.subr.mxu0 0.0
  %665 = vmatpush1.msra.mxu0 0.0
  %666 = vmatprep.subr.mxu0 0.0
  %667 = vmatpush1.msra.mxu0 0.0
  %668 = vmatprep.subr.mxu0 0.0
  %669 = vmatpush1.msra.mxu0 0.0
  %670 = vmatprep.subr.mxu0 0.0
  %671 = vmatpush1.msra.mxu0 0.0
  %672 = vmatprep.subr.mxu0 0.0
  %673 = vmatpush1.msra.mxu0 0.0
  %674 = vmatprep.subr.mxu0 0.0
  %675 = vmatpush1.msra.mxu0 0.0
  %676 = vmatprep.subr.mxu0 0.0
  %677 = vmatpush1.msra.mxu0 0.0
  %678 = vmatprep.subr.mxu0 0.0
  %679 = vmatpush1.msra.mxu0 0.0
  %680 = vmatprep.subr.mxu0 0.0
  %681 = vmatpush1.msra.mxu0 0.0
  %682 = vmatprep.subr.mxu0 0.0
  %683 = vmatpush1.msra.mxu0 0.0
  %684 = vmatprep.subr.mxu0 0.0
  %685 = vmatpush1.msra.mxu0 0.0
  %686 = vmatprep.subr.mxu0 0.0
  %687 = vmatpush1.msra.mxu0 0.0
  %688 = vmatprep.subr.mxu0 0.0
  %689 = vmatpush1.msra.mxu0 0.0
  %690 = vmatprep.subr.mxu0 0.0
  %691 = vmatpush1.msra.mxu0 0.0
  %692 = vmatprep.mubr.f32.mxu0 0.0
  %v693 = vand.u32 %v56, 4294901760
  %v694 = vsub.f32 %v56, %v693
  %v695 = vand.u32 %v694, 4294901760
  %v696 = vsub.f32 %v694, %v695
  %v697 = vand.u32 %v696, 4294901760
  %698 = vmatmul.mubr.f32.gmra.mrb[0].mxu0 %v697
  %v699 = vpop.f32.mrb[0].mxu0
  %v700 = vadd.f32 %v52, %v699
  %v701 = vpop.f32.mrb[0].mxu0
  %v702 = vadd.f32 %v52, %v701
  %703 = vdwg.mxu0
  %v704 = vand.u32 %v27, 4294901760
  %v705 = vsub.f32 %v27, %v704
  %v706 = vand.u32 %v705, 4294901760
  %v707 = vsub.f32 %v705, %v706
  %v708 = vand.u32 %v707, 4294901760
  %709 = vmatprep.subr.mxu0 %v708
  %v710 = vand.u32 %v26, 4294901760
  %v711 = vsub.f32 %v26, %v710
  %v712 = vand.u32 %v711, 4294901760
  %v713 = vsub.f32 %v711, %v712
  %v714 = vand.u32 %v713, 4294901760
  %715 = vmatpush1.msra.mxu0 %v714
  %v716 = vand.u32 %v33, 4294901760
  %v717 = vsub.f32 %v33, %v716
  %v718 = vand.u32 %v717, 4294901760
  %v719 = vsub.f32 %v717, %v718
  %v720 = vand.u32 %v719, 4294901760
  %721 = vmatprep.subr.mxu0 %v720
  %v722 = vand.u32 %v32, 4294901760
  %v723 = vsub.f32 %v32, %v722
  %v724 = vand.u32 %v723, 4294901760
  %v725 = vsub.f32 %v723, %v724
  %v726 = vand.u32 %v725, 4294901760
  %727 = vmatpush1.msra.mxu0 %v726
  %v728 = vand.u32 %v39, 4294901760
  %v729 = vsub.f32 %v39, %v728
  %v730 = vand.u32 %v729, 4294901760
  %v731 = vsub.f32 %v729, %v730
  %v732 = vand.u32 %v731, 4294901760
  %733 = vmatprep.subr.mxu0 %v732
  %v734 = vand.u32 %v38, 4294901760
  %v735 = vsub.f32 %v38, %v734
  %v736 = vand.u32 %v735, 4294901760
  %v737 = vsub.f32 %v735, %v736
  %v738 = vand.u32 %v737, 4294901760
  %739 = vmatpush1.msra.mxu0 %v738
  %v740 = vand.u32 %v69, 4294901760
  %v741 = vsub.f32 %v69, %v740
  %v742 = vand.u32 %v741, 4294901760
  %v743 = vsub.f32 %v741, %v742
  %v744 = vand.u32 %v743, 4294901760
  %745 = vmatprep.subr.mxu0 %v744
  %v746 = vand.u32 %v66, 4294901760
  %v747 = vsub.f32 %v66, %v746
  %v748 = vand.u32 %v747, 4294901760
  %v749 = vsub.f32 %v747, %v748
  %v750 = vand.u32 %v749, 4294901760
  %751 = vmatpush1.msra.mxu0 %v750
  %752 = vmatprep.subr.mxu0 0.0
  %753 = vmatpush1.msra.mxu0 0.0
  %754 = vmatprep.subr.mxu0 0.0
  %755 = vmatpush1.msra.mxu0 0.0
  %756 = vmatprep.subr.mxu0 0.0
  %757 = vmatpush1.msra.mxu0 0.0
  %758 = vmatprep.subr.mxu0 0.0
  %759 = vmatpush1.msra.mxu0 0.0
  %760 = vmatprep.subr.mxu0 0.0
  %761 = vmatpush1.msra.mxu0 0.0
  %762 = vmatprep.subr.mxu0 0.0
  %763 = vmatpush1.msra.mxu0 0.0
  %764 = vmatprep.subr.mxu0 0.0
  %765 = vmatpush1.msra.mxu0 0.0
  %766 = vmatprep.subr.mxu0 0.0
  %767 = vmatpush1.msra.mxu0 0.0
  %768 = vmatprep.subr.mxu0 0.0
  %769 = vmatpush1.msra.mxu0 0.0
  %770 = vmatprep.subr.mxu0 0.0
  %771 = vmatpush1.msra.mxu0 0.0
  %772 = vmatprep.subr.mxu0 0.0
  %773 = vmatpush1.msra.mxu0 0.0
  %774 = vmatprep.subr.mxu0 0.0
  %775 = vmatpush1.msra.mxu0 0.0
  %776 = vmatprep.subr.mxu0 0.0
  %777 = vmatpush1.msra.mxu0 0.0
  %778 = vmatprep.subr.mxu0 0.0
  %779 = vmatpush1.msra.mxu0 0.0
  %780 = vmatprep.subr.mxu0 0.0
  %781 = vmatpush1.msra.mxu0 0.0
  %782 = vmatprep.subr.mxu0 0.0
  %783 = vmatpush1.msra.mxu0 0.0
  %784 = vmatprep.subr.mxu0 0.0
  %785 = vmatpush1.msra.mxu0 0.0
  %786 = vmatprep.subr.mxu0 0.0
  %787 = vmatpush1.msra.mxu0 0.0
  %788 = vmatprep.subr.mxu0 0.0
  %789 = vmatpush1.msra.mxu0 0.0
  %790 = vmatprep.subr.mxu0 0.0
  %791 = vmatpush1.msra.mxu0 0.0
  %792 = vmatprep.subr.mxu0 0.0
  %793 = vmatpush1.msra.mxu0 0.0
  %794 = vmatprep.subr.mxu0 0.0
  %795 = vmatpush1.msra.mxu0 0.0
  %796 = vmatprep.subr.mxu0 0.0
  %797 = vmatpush1.msra.mxu0 0.0
  %798 = vmatprep.subr.mxu0 0.0
  %799 = vmatpush1.msra.mxu0 0.0
  %800 = vmatprep.subr.mxu0 0.0
  %801 = vmatpush1.msra.mxu0 0.0
  %802 = vmatprep.subr.mxu0 0.0
  %803 = vmatpush1.msra.mxu0 0.0
  %804 = vmatprep.subr.mxu0 0.0
  %805 = vmatpush1.msra.mxu0 0.0
  %806 = vmatprep.subr.mxu0 0.0
  %807 = vmatpush1.msra.mxu0 0.0
  %808 = vmatprep.mubr.f32.mxu0 0.0
  %v809 = vand.u32 %v56, 4294901760
  %810 = vmatmul.mubr.f32.gmra.mrb[0].mxu0 %v809
  %v811 = vpop.f32.mrb[0].mxu0
  %v812 = vadd.f32 %v700, %v811
  %v813 = vpop.f32.mrb[0].mxu0
  %v814 = vadd.f32 %v702, %v813
  %815 = vdwg.mxu0
  %v816 = vand.u32 %v27, 4294901760
  %v817 = vsub.f32 %v27, %v816
  %818 = vmatprep.subr.mxu0 %v817
  %v819 = vand.u32 %v26, 4294901760
  %v820 = vsub.f32 %v26, %v819
  %821 = vmatpush1.msra.mxu0 %v820
  %v822 = vand.u32 %v33, 4294901760
  %v823 = vsub.f32 %v33, %v822
  %824 = vmatprep.subr.mxu0 %v823
  %v825 = vand.u32 %v32, 4294901760
  %v826 = vsub.f32 %v32, %v825
  %827 = vmatpush1.msra.mxu0 %v826
  %v828 = vand.u32 %v39, 4294901760
  %v829 = vsub.f32 %v39, %v828
  %830 = vmatprep.subr.mxu0 %v829
  %v831 = vand.u32 %v38, 4294901760
  %v832 = vsub.f32 %v38, %v831
  %833 = vmatpush1.msra.mxu0 %v832
  %v834 = vand.u32 %v69, 4294901760
  %v835 = vsub.f32 %v69, %v834
  %836 = vmatprep.subr.mxu0 %v835
  %v837 = vand.u32 %v66, 4294901760
  %v838 = vsub.f32 %v66, %v837
  %839 = vmatpush1.msra.mxu0 %v838
  %840 = vmatprep.subr.mxu0 0.0
  %841 = vmatpush1.msra.mxu0 0.0
  %842 = vmatprep.subr.mxu0 0.0
  %843 = vmatpush1.msra.mxu0 0.0
  %844 = vmatprep.subr.mxu0 0.0
  %845 = vmatpush1.msra.mxu0 0.0
  %846 = vmatprep.subr.mxu0 0.0
  %847 = vmatpush1.msra.mxu0 0.0
  %848 = vmatprep.subr.mxu0 0.0
  %849 = vmatpush1.msra.mxu0 0.0
  %850 = vmatprep.subr.mxu0 0.0
  %851 = vmatpush1.msra.mxu0 0.0
  %852 = vmatprep.subr.mxu0 0.0
  %853 = vmatpush1.msra.mxu0 0.0
  %854 = vmatprep.subr.mxu0 0.0
  %855 = vmatpush1.msra.mxu0 0.0
  %856 = vmatprep.subr.mxu0 0.0
  %857 = vmatpush1.msra.mxu0 0.0
  %858 = vmatprep.subr.mxu0 0.0
  %859 = vmatpush1.msra.mxu0 0.0
  %860 = vmatprep.subr.mxu0 0.0
  %861 = vmatpush1.msra.mxu0 0.0
  %862 = vmatprep.subr.mxu0 0.0
  %863 = vmatpush1.msra.mxu0 0.0
  %864 = vmatprep.subr.mxu0 0.0
  %865 = vmatpush1.msra.mxu0 0.0
  %866 = vmatprep.subr.mxu0 0.0
  %867 = vmatpush1.msra.mxu0 0.0
  %868 = vmatprep.subr.mxu0 0.0
  %869 = vmatpush1.msra.mxu0 0.0
  %870 = vmatprep.subr.mxu0 0.0
  %871 = vmatpush1.msra.mxu0 0.0
  %872 = vmatprep.subr.mxu0 0.0
  %873 = vmatpush1.msra.mxu0 0.0
  %874 = vmatprep.subr.mxu0 0.0
  %875 = vmatpush1.msra.mxu0 0.0
  %876 = vmatprep.subr.mxu0 0.0
  %877 = vmatpush1.msra.mxu0 0.0
  %878 = vmatprep.subr.mxu0 0.0
  %879 = vmatpush1.msra.mxu0 0.0
  %880 = vmatprep.subr.mxu0 0.0
  %881 = vmatpush1.msra.mxu0 0.0
  %882 = vmatprep.subr.mxu0 0.0
  %883 = vmatpush1.msra.mxu0 0.0
  %884 = vmatprep.subr.mxu0 0.0
  %885 = vmatpush1.msra.mxu0 0.0
  %886 = vmatprep.subr.mxu0 0.0
  %887 = vmatpush1.msra.mxu0 0.0
  %888 = vmatprep.subr.mxu0 0.0
  %889 = vmatpush1.msra.mxu0 0.0
  %890 = vmatprep.subr.mxu0 0.0
  %891 = vmatpush1.msra.mxu0 0.0
  %892 = vmatprep.subr.mxu0 0.0
  %893 = vmatpush1.msra.mxu0 0.0
  %894 = vmatprep.subr.mxu0 0.0
  %895 = vmatpush1.msra.mxu0 0.0
  %896 = vmatprep.mubr.f32.mxu0 0.0
  %v897 = vand.u32 %v56, 4294901760
  %v898 = vsub.f32 %v56, %v897
  %899 = vmatmul.mubr.f32.gmra.mrb[0].mxu0 %v898
  %v900 = vpop.f32.mrb[0].mxu0
  %v901 = vadd.f32 %v812, %v900
  %v902 = vpop.f32.mrb[0].mxu0
  %v903 = vadd.f32 %v814, %v902
  %904 = vdwg.mxu0
  %v905 = vand.u32 %v27, 4294901760
  %906 = vmatprep.subr.mxu0 %v905
  %v907 = vand.u32 %v26, 4294901760
  %908 = vmatpush1.msra.mxu0 %v907
  %v909 = vand.u32 %v33, 4294901760
  %910 = vmatprep.subr.mxu0 %v909
  %v911 = vand.u32 %v32, 4294901760
  %912 = vmatpush1.msra.mxu0 %v911
  %v913 = vand.u32 %v39, 4294901760
  %914 = vmatprep.subr.mxu0 %v913
  %v915 = vand.u32 %v38, 4294901760
  %916 = vmatpush1.msra.mxu0 %v915
  %v917 = vand.u32 %v69, 4294901760
  %918 = vmatprep.subr.mxu0 %v917
  %v919 = vand.u32 %v66, 4294901760
  %920 = vmatpush1.msra.mxu0 %v919
  %921 = vmatprep.subr.mxu0 0.0
  %922 = vmatpush1.msra.mxu0 0.0
  %923 = vmatprep.subr.mxu0 0.0
  %924 = vmatpush1.msra.mxu0 0.0
  %925 = vmatprep.subr.mxu0 0.0
  %926 = vmatpush1.msra.mxu0 0.0
  %927 = vmatprep.subr.mxu0 0.0
  %928 = vmatpush1.msra.mxu0 0.0
  %929 = vmatprep.subr.mxu0 0.0
  %930 = vmatpush1.msra.mxu0 0.0
  %931 = vmatprep.subr.mxu0 0.0
  %932 = vmatpush1.msra.mxu0 0.0
  %933 = vmatprep.subr.mxu0 0.0
  %934 = vmatpush1.msra.mxu0 0.0
  %935 = vmatprep.subr.mxu0 0.0
  %936 = vmatpush1.msra.mxu0 0.0
  %937 = vmatprep.subr.mxu0 0.0
  %938 = vmatpush1.msra.mxu0 0.0
  %939 = vmatprep.subr.mxu0 0.0
  %940 = vmatpush1.msra.mxu0 0.0
  %941 = vmatprep.subr.mxu0 0.0
  %942 = vmatpush1.msra.mxu0 0.0
  %943 = vmatprep.subr.mxu0 0.0
  %944 = vmatpush1.msra.mxu0 0.0
  %945 = vmatprep.subr.mxu0 0.0
  %946 = vmatpush1.msra.mxu0 0.0
  %947 = vmatprep.subr.mxu0 0.0
  %948 = vmatpush1.msra.mxu0 0.0
  %949 = vmatprep.subr.mxu0 0.0
  %950 = vmatpush1.msra.mxu0 0.0
  %951 = vmatprep.subr.mxu0 0.0
  %952 = vmatpush1.msra.mxu0 0.0
  %953 = vmatprep.subr.mxu0 0.0
  %954 = vmatpush1.msra.mxu0 0.0
  %955 = vmatprep.subr.mxu0 0.0
  %956 = vmatpush1.msra.mxu0 0.0
  %957 = vmatprep.subr.mxu0 0.0
  %958 = vmatpush1.msra.mxu0 0.0
  %959 = vmatprep.subr.mxu0 0.0
  %960 = vmatpush1.msra.mxu0 0.0
  %961 = vmatprep.subr.mxu0 0.0
  %962 = vmatpush1.msra.mxu0 0.0
  %963 = vmatprep.subr.mxu0 0.0
  %964 = vmatpush1.msra.mxu0 0.0
  %965 = vmatprep.subr.mxu0 0.0
  %966 = vmatpush1.msra.mxu0 0.0
  %967 = vmatprep.subr.mxu0 0.0
  %968 = vmatpush1.msra.mxu0 0.0
  %969 = vmatprep.subr.mxu0 0.0
  %970 = vmatpush1.msra.mxu0 0.0
  %971 = vmatprep.subr.mxu0 0.0
  %972 = vmatpush1.msra.mxu0 0.0
  %973 = vmatprep.subr.mxu0 0.0
  %974 = vmatpush1.msra.mxu0 0.0
  %975 = vmatprep.subr.mxu0 0.0
  %976 = vmatpush1.msra.mxu0 0.0
  %977 = vmatprep.mubr.f32.mxu0 0.0
  %v978 = vand.u32 %v56, 4294901760
  %v979 = vsub.f32 %v56, %v978
  %v980 = vand.u32 %v979, 4294901760
  %981 = vmatmul.mubr.f32.gmra.mrb[0].mxu0 %v980
  %v982 = vpop.f32.mrb[0].mxu0
  %v983 = vadd.f32 %v901, %v982
  %v984 = vpop.f32.mrb[0].mxu0
  %v985 = vadd.f32 %v903, %v984
  %986 = vdwg.mxu0
  %v987 = vand.u32 %v27, 4294901760
  %v988 = vsub.f32 %v27, %v987
  %v989 = vand.u32 %v988, 4294901760
  %990 = vmatprep.subr.mxu0 %v989
  %v991 = vand.u32 %v26, 4294901760
  %v992 = vsub.f32 %v26, %v991
  %v993 = vand.u32 %v992, 4294901760
  %994 = vmatpush1.msra.mxu0 %v993
  %v995 = vand.u32 %v33, 4294901760
  %v996 = vsub.f32 %v33, %v995
  %v997 = vand.u32 %v996, 4294901760
  %998 = vmatprep.subr.mxu0 %v997
  %v999 = vand.u32 %v32, 4294901760
  %v1000 = vsub.f32 %v32, %v999
  %v1001 = vand.u32 %v1000, 4294901760
  %1002 = vmatpush1.msra.mxu0 %v1001
  %v1003 = vand.u32 %v39, 4294901760
  %v1004 = vsub.f32 %v39, %v1003
  %v1005 = vand.u32 %v1004, 4294901760
  %1006 = vmatprep.subr.mxu0 %v1005
  %v1007 = vand.u32 %v38, 4294901760
  %v1008 = vsub.f32 %v38, %v1007
  %v1009 = vand.u32 %v1008, 4294901760
  %1010 = vmatpush1.msra.mxu0 %v1009
  %v1011 = vand.u32 %v69, 4294901760
  %v1012 = vsub.f32 %v69, %v1011
  %v1013 = vand.u32 %v1012, 4294901760
  %1014 = vmatprep.subr.mxu0 %v1013
  %v1015 = vand.u32 %v66, 4294901760
  %v1016 = vsub.f32 %v66, %v1015
  %v1017 = vand.u32 %v1016, 4294901760
  %1018 = vmatpush1.msra.mxu0 %v1017
  %1019 = vmatprep.subr.mxu0 0.0
  %1020 = vmatpush1.msra.mxu0 0.0
  %1021 = vmatprep.subr.mxu0 0.0
  %1022 = vmatpush1.msra.mxu0 0.0
  %1023 = vmatprep.subr.mxu0 0.0
  %1024 = vmatpush1.msra.mxu0 0.0
  %1025 = vmatprep.subr.mxu0 0.0
  %1026 = vmatpush1.msra.mxu0 0.0
  %1027 = vmatprep.subr.mxu0 0.0
  %1028 = vmatpush1.msra.mxu0 0.0
  %1029 = vmatprep.subr.mxu0 0.0
  %1030 = vmatpush1.msra.mxu0 0.0
  %1031 = vmatprep.subr.mxu0 0.0
  %1032 = vmatpush1.msra.mxu0 0.0
  %1033 = vmatprep.subr.mxu0 0.0
  %1034 = vmatpush1.msra.mxu0 0.0
  %1035 = vmatprep.subr.mxu0 0.0
  %1036 = vmatpush1.msra.mxu0 0.0
  %1037 = vmatprep.subr.mxu0 0.0
  %1038 = vmatpush1.msra.mxu0 0.0
  %1039 = vmatprep.subr.mxu0 0.0
  %1040 = vmatpush1.msra.mxu0 0.0
  %1041 = vmatprep.subr.mxu0 0.0
  %1042 = vmatpush1.msra.mxu0 0.0
  %1043 = vmatprep.subr.mxu0 0.0
  %1044 = vmatpush1.msra.mxu0 0.0
  %1045 = vmatprep.subr.mxu0 0.0
  %1046 = vmatpush1.msra.mxu0 0.0
  %1047 = vmatprep.subr.mxu0 0.0
  %1048 = vmatpush1.msra.mxu0 0.0
  %1049 = vmatprep.subr.mxu0 0.0
  %1050 = vmatpush1.msra.mxu0 0.0
  %1051 = vmatprep.subr.mxu0 0.0
  %1052 = vmatpush1.msra.mxu0 0.0
  %1053 = vmatprep.subr.mxu0 0.0
  %1054 = vmatpush1.msra.mxu0 0.0
  %1055 = vmatprep.subr.mxu0 0.0
  %1056 = vmatpush1.msra.mxu0 0.0
  %1057 = vmatprep.subr.mxu0 0.0
  %1058 = vmatpush1.msra.mxu0 0.0
  %1059 = vmatprep.subr.mxu0 0.0
  %1060 = vmatpush1.msra.mxu0 0.0
  %1061 = vmatprep.subr.mxu0 0.0
  %1062 = vmatpush1.msra.mxu0 0.0
  %1063 = vmatprep.subr.mxu0 0.0
  %1064 = vmatpush1.msra.mxu0 0.0
  %1065 = vmatprep.subr.mxu0 0.0
  %1066 = vmatpush1.msra.mxu0 0.0
  %1067 = vmatprep.subr.mxu0 0.0
  %1068 = vmatpush1.msra.mxu0 0.0
  %1069 = vmatprep.subr.mxu0 0.0
  %1070 = vmatpush1.msra.mxu0 0.0
  %1071 = vmatprep.subr.mxu0 0.0
  %1072 = vmatpush1.msra.mxu0 0.0
  %1073 = vmatprep.subr.mxu0 0.0
  %1074 = vmatpush1.msra.mxu0 0.0
  %1075 = vmatprep.mubr.f32.mxu0 0.0
  %v1076 = vand.u32 %v56, 4294901760
  %1077 = vmatmul.mubr.f32.gmra.mrb[0].mxu0 %v1076
  %v1078 = vpop.f32.mrb[0].mxu0
  %v1079 = vadd.f32 %v983, %v1078
  %v1080 = vpop.f32.mrb[0].mxu0
  %v1081 = vadd.f32 %v985, %v1080
  %1082 = vdwg.mxu0
  %v1083 = vand.u32 %v27, 4294901760
  %1084 = vmatprep.subr.mxu0 %v1083
  %v1085 = vand.u32 %v26, 4294901760
  %1086 = vmatpush1.msra.mxu0 %v1085
  %v1087 = vand.u32 %v33, 4294901760
  %1088 = vmatprep.subr.mxu0 %v1087
  %v1089 = vand.u32 %v32, 4294901760
  %1090 = vmatpush1.msra.mxu0 %v1089
  %v1091 = vand.u32 %v39, 4294901760
  %1092 = vmatprep.subr.mxu0 %v1091
  %v1093 = vand.u32 %v38, 4294901760
  %1094 = vmatpush1.msra.mxu0 %v1093
  %v1095 = vand.u32 %v69, 4294901760
  %1096 = vmatprep.subr.mxu0 %v1095
  %v1097 = vand.u32 %v66, 4294901760
  %1098 = vmatpush1.msra.mxu0 %v1097
  %1099 = vmatprep.subr.mxu0 0.0
  %1100 = vmatpush1.msra.mxu0 0.0
  %1101 = vmatprep.subr.mxu0 0.0
  %1102 = vmatpush1.msra.mxu0 0.0
  %1103 = vmatprep.subr.mxu0 0.0
  %1104 = vmatpush1.msra.mxu0 0.0
  %1105 = vmatprep.subr.mxu0 0.0
  %1106 = vmatpush1.msra.mxu0 0.0
  %1107 = vmatprep.subr.mxu0 0.0
  %1108 = vmatpush1.msra.mxu0 0.0
  %1109 = vmatprep.subr.mxu0 0.0
  %1110 = vmatpush1.msra.mxu0 0.0
  %1111 = vmatprep.subr.mxu0 0.0
  %1112 = vmatpush1.msra.mxu0 0.0
  %1113 = vmatprep.subr.mxu0 0.0
  %1114 = vmatpush1.msra.mxu0 0.0
  %1115 = vmatprep.subr.mxu0 0.0
  %1116 = vmatpush1.msra.mxu0 0.0
  %1117 = vmatprep.subr.mxu0 0.0
  %1118 = vmatpush1.msra.mxu0 0.0
  %1119 = vmatprep.subr.mxu0 0.0
  %1120 = vmatpush1.msra.mxu0 0.0
  %1121 = vmatprep.subr.mxu0 0.0
  %1122 = vmatpush1.msra.mxu0 0.0
  %1123 = vmatprep.subr.mxu0 0.0
  %1124 = vmatpush1.msra.mxu0 0.0
  %1125 = vmatprep.subr.mxu0 0.0
  %1126 = vmatpush1.msra.mxu0 0.0
  %1127 = vmatprep.subr.mxu0 0.0
  %1128 = vmatpush1.msra.mxu0 0.0
  %1129 = vmatprep.subr.mxu0 0.0
  %1130 = vmatpush1.msra.mxu0 0.0
  %1131 = vmatprep.subr.mxu0 0.0
  %1132 = vmatpush1.msra.mxu0 0.0
  %1133 = vmatprep.subr.mxu0 0.0
  %1134 = vmatpush1.msra.mxu0 0.0
  %1135 = vmatprep.subr.mxu0 0.0
  %1136 = vmatpush1.msra.mxu0 0.0
  %1137 = vmatprep.subr.mxu0 0.0
  %1138 = vmatpush1.msra.mxu0 0.0
  %1139 = vmatprep.subr.mxu0 0.0
  %1140 = vmatpush1.msra.mxu0 0.0
  %1141 = vmatprep.subr.mxu0 0.0
  %1142 = vmatpush1.msra.mxu0 0.0
  %1143 = vmatprep.subr.mxu0 0.0
  %1144 = vmatpush1.msra.mxu0 0.0
  %1145 = vmatprep.subr.mxu0 0.0
  %1146 = vmatpush1.msra.mxu0 0.0
  %1147 = vmatprep.subr.mxu0 0.0
  %1148 = vmatpush1.msra.mxu0 0.0
  %1149 = vmatprep.subr.mxu0 0.0
  %1150 = vmatpush1.msra.mxu0 0.0
  %1151 = vmatprep.subr.mxu0 0.0
  %1152 = vmatpush1.msra.mxu0 0.0
  %1153 = vmatprep.subr.mxu0 0.0
  %1154 = vmatpush1.msra.mxu0 0.0
  %1155 = vmatprep.mubr.f32.mxu0 0.0
  %v1156 = vand.u32 %v56, 4294901760
  %1157 = vmatmul.mubr.f32.gmra.mrb[0].mxu0 %v1156
  %v1158 = vpop.f32.mrb[0].mxu0
  %v1159 = vadd.f32 %v1079, %v1158
  %v1160 = vpop.f32.mrb[0].mxu0
  %v1161 = vadd.f32 %v1081, %v1160
  %1162 = vdwg.mxu0
  %v1163 = vand.u32 %v29, 4294901760
  %1164 = vmatprep.subr.mxu0 %v1163
  %v1165 = vand.u32 %v28, 4294901760
  %1166 = vmatpush1.msra.mxu0 %v1165
  %v1167 = vand.u32 %v35, 4294901760
  %1168 = vmatprep.subr.mxu0 %v1167
  %v1169 = vand.u32 %v34, 4294901760
  %1170 = vmatpush1.msra.mxu0 %v1169
  %v1171 = vand.u32 %v41, 4294901760
  %1172 = vmatprep.subr.mxu0 %v1171
  %v1173 = vand.u32 %v40, 4294901760
  %1174 = vmatpush1.msra.mxu0 %v1173
  %v1175 = vand.u32 %v75, 4294901760
  %1176 = vmatprep.subr.mxu0 %v1175
  %v1177 = vand.u32 %v72, 4294901760
  %1178 = vmatpush1.msra.mxu0 %v1177
  %1179 = vmatprep.subr.mxu0 0.0
  %1180 = vmatpush1.msra.mxu0 0.0
  %1181 = vmatprep.subr.mxu0 0.0
  %1182 = vmatpush1.msra.mxu0 0.0
  %1183 = vmatprep.subr.mxu0 0.0
  %1184 = vmatpush1.msra.mxu0 0.0
  %1185 = vmatprep.subr.mxu0 0.0
  %1186 = vmatpush1.msra.mxu0 0.0
  %1187 = vmatprep.subr.mxu0 0.0
  %1188 = vmatpush1.msra.mxu0 0.0
  %1189 = vmatprep.subr.mxu0 0.0
  %1190 = vmatpush1.msra.mxu0 0.0
  %1191 = vmatprep.subr.mxu0 0.0
  %1192 = vmatpush1.msra.mxu0 0.0
  %1193 = vmatprep.subr.mxu0 0.0
  %1194 = vmatpush1.msra.mxu0 0.0
  %1195 = vmatprep.subr.mxu0 0.0
  %1196 = vmatpush1.msra.mxu0 0.0
  %1197 = vmatprep.subr.mxu0 0.0
  %1198 = vmatpush1.msra.mxu0 0.0
  %1199 = vmatprep.subr.mxu0 0.0
  %1200 = vmatpush1.msra.mxu0 0.0
  %1201 = vmatprep.subr.mxu0 0.0
  %1202 = vmatpush1.msra.mxu0 0.0
  %1203 = vmatprep.subr.mxu0 0.0
  %1204 = vmatpush1.msra.mxu0 0.0
  %1205 = vmatprep.subr.mxu0 0.0
  %1206 = vmatpush1.msra.mxu0 0.0
  %1207 = vmatprep.subr.mxu0 0.0
  %1208 = vmatpush1.msra.mxu0 0.0
  %1209 = vmatprep.subr.mxu0 0.0
  %1210 = vmatpush1.msra.mxu0 0.0
  %1211 = vmatprep.subr.mxu0 0.0
  %1212 = vmatpush1.msra.mxu0 0.0
  %1213 = vmatprep.subr.mxu0 0.0
  %1214 = vmatpush1.msra.mxu0 0.0
  %1215 = vmatprep.subr.mxu0 0.0
  %1216 = vmatpush1.msra.mxu0 0.0
  %1217 = vmatprep.subr.mxu0 0.0
  %1218 = vmatpush1.msra.mxu0 0.0
  %1219 = vmatprep.subr.mxu0 0.0
  %1220 = vmatpush1.msra.mxu0 0.0
  %1221 = vmatprep.subr.mxu0 0.0
  %1222 = vmatpush1.msra.mxu0 0.0
  %1223 = vmatprep.subr.mxu0 0.0
  %1224 = vmatpush1.msra.mxu0 0.0
  %1225 = vmatprep.subr.mxu0 0.0
  %1226 = vmatpush1.msra.mxu0 0.0
  %1227 = vmatprep.subr.mxu0 0.0
  %1228 = vmatpush1.msra.mxu0 0.0
  %1229 = vmatprep.subr.mxu0 0.0
  %1230 = vmatpush1.msra.mxu0 0.0
  %1231 = vmatprep.subr.mxu0 0.0
  %1232 = vmatpush1.msra.mxu0 0.0
  %1233 = vmatprep.subr.mxu0 0.0
  %1234 = vmatpush1.msra.mxu0 0.0
  %1235 = vmatprep.mubr.f32.mxu0 0.0
  %v1236 = vand.u32 %v56, 4294901760
  %v1237 = vsub.f32 %v56, %v1236
  %v1238 = vand.u32 %v1237, 4294901760
  %v1239 = vsub.f32 %v1237, %v1238
  %v1240 = vand.u32 %v1239, 4294901760
  %1241 = vmatmul.mubr.f32.gmra.mrb[0].mxu0 %v1240
  %v1242 = vpop.f32.mrb[0].mxu0
  %v1243 = vadd.f32 %v52, %v1242
  %v1244 = vpop.f32.mrb[0].mxu0
  %v1245 = vadd.f32 %v52, %v1244
  %1246 = vdwg.mxu0
  %v1247 = vand.u32 %v29, 4294901760
  %v1248 = vsub.f32 %v29, %v1247
  %v1249 = vand.u32 %v1248, 4294901760
  %v1250 = vsub.f32 %v1248, %v1249
  %v1251 = vand.u32 %v1250, 4294901760
  %1252 = vmatprep.subr.mxu0 %v1251
  %v1253 = vand.u32 %v28, 4294901760
  %v1254 = vsub.f32 %v28, %v1253
  %v1255 = vand.u32 %v1254, 4294901760
  %v1256 = vsub.f32 %v1254, %v1255
  %v1257 = vand.u32 %v1256, 4294901760
  %1258 = vmatpush1.msra.mxu0 %v1257
  %v1259 = vand.u32 %v35, 4294901760
  %v1260 = vsub.f32 %v35, %v1259
  %v1261 = vand.u32 %v1260, 4294901760
  %v1262 = vsub.f32 %v1260, %v1261
  %v1263 = vand.u32 %v1262, 4294901760
  %1264 = vmatprep.subr.mxu0 %v1263
  %v1265 = vand.u32 %v34, 4294901760
  %v1266 = vsub.f32 %v34, %v1265
  %v1267 = vand.u32 %v1266, 4294901760
  %v1268 = vsub.f32 %v1266, %v1267
  %v1269 = vand.u32 %v1268, 4294901760
  %1270 = vmatpush1.msra.mxu0 %v1269
  %v1271 = vand.u32 %v41, 4294901760
  %v1272 = vsub.f32 %v41, %v1271
  %v1273 = vand.u32 %v1272, 4294901760
  %v1274 = vsub.f32 %v1272, %v1273
  %v1275 = vand.u32 %v1274, 4294901760
  %1276 = vmatprep.subr.mxu0 %v1275
  %v1277 = vand.u32 %v40, 4294901760
  %v1278 = vsub.f32 %v40, %v1277
  %v1279 = vand.u32 %v1278, 4294901760
  %v1280 = vsub.f32 %v1278, %v1279
  %v1281 = vand.u32 %v1280, 4294901760
  %1282 = vmatpush1.msra.mxu0 %v1281
  %v1283 = vand.u32 %v75, 4294901760
  %v1284 = vsub.f32 %v75, %v1283
  %v1285 = vand.u32 %v1284, 4294901760
  %v1286 = vsub.f32 %v1284, %v1285
  %v1287 = vand.u32 %v1286, 4294901760
  %1288 = vmatprep.subr.mxu0 %v1287
  %v1289 = vand.u32 %v72, 4294901760
  %v1290 = vsub.f32 %v72, %v1289
  %v1291 = vand.u32 %v1290, 4294901760
  %v1292 = vsub.f32 %v1290, %v1291
  %v1293 = vand.u32 %v1292, 4294901760
  %1294 = vmatpush1.msra.mxu0 %v1293
  %1295 = vmatprep.subr.mxu0 0.0
  %1296 = vmatpush1.msra.mxu0 0.0
  %1297 = vmatprep.subr.mxu0 0.0
  %1298 = vmatpush1.msra.mxu0 0.0
  %1299 = vmatprep.subr.mxu0 0.0
  %1300 = vmatpush1.msra.mxu0 0.0
  %1301 = vmatprep.subr.mxu0 0.0
  %1302 = vmatpush1.msra.mxu0 0.0
  %1303 = vmatprep.subr.mxu0 0.0
  %1304 = vmatpush1.msra.mxu0 0.0
  %1305 = vmatprep.subr.mxu0 0.0
  %1306 = vmatpush1.msra.mxu0 0.0
  %1307 = vmatprep.subr.mxu0 0.0
  %1308 = vmatpush1.msra.mxu0 0.0
  %1309 = vmatprep.subr.mxu0 0.0
  %1310 = vmatpush1.msra.mxu0 0.0
  %1311 = vmatprep.subr.mxu0 0.0
  %1312 = vmatpush1.msra.mxu0 0.0
  %1313 = vmatprep.subr.mxu0 0.0
  %1314 = vmatpush1.msra.mxu0 0.0
  %1315 = vmatprep.subr.mxu0 0.0
  %1316 = vmatpush1.msra.mxu0 0.0
  %1317 = vmatprep.subr.mxu0 0.0
  %1318 = vmatpush1.msra.mxu0 0.0
  %1319 = vmatprep.subr.mxu0 0.0
  %1320 = vmatpush1.msra.mxu0 0.0
  %1321 = vmatprep.subr.mxu0 0.0
  %1322 = vmatpush1.msra.mxu0 0.0
  %1323 = vmatprep.subr.mxu0 0.0
  %1324 = vmatpush1.msra.mxu0 0.0
  %1325 = vmatprep.subr.mxu0 0.0
  %1326 = vmatpush1.msra.mxu0 0.0
  %1327 = vmatprep.subr.mxu0 0.0
  %1328 = vmatpush1.msra.mxu0 0.0
  %1329 = vmatprep.subr.mxu0 0.0
  %1330 = vmatpush1.msra.mxu0 0.0
  %1331 = vmatprep.subr.mxu0 0.0
  %1332 = vmatpush1.msra.mxu0 0.0
  %1333 = vmatprep.subr.mxu0 0.0
  %1334 = vmatpush1.msra.mxu0 0.0
  %1335 = vmatprep.subr.mxu0 0.0
  %1336 = vmatpush1.msra.mxu0 0.0
  %1337 = vmatprep.subr.mxu0 0.0
  %1338 = vmatpush1.msra.mxu0 0.0
  %1339 = vmatprep.subr.mxu0 0.0
  %1340 = vmatpush1.msra.mxu0 0.0
  %1341 = vmatprep.subr.mxu0 0.0
  %1342 = vmatpush1.msra.mxu0 0.0
  %1343 = vmatprep.subr.mxu0 0.0
  %1344 = vmatpush1.msra.mxu0 0.0
  %1345 = vmatprep.subr.mxu0 0.0
  %1346 = vmatpush1.msra.mxu0 0.0
  %1347 = vmatprep.subr.mxu0 0.0
  %1348 = vmatpush1.msra.mxu0 0.0
  %1349 = vmatprep.subr.mxu0 0.0
  %1350 = vmatpush1.msra.mxu0 0.0
  %1351 = vmatprep.mubr.f32.mxu0 0.0
  %v1352 = vand.u32 %v56, 4294901760
  %1353 = vmatmul.mubr.f32.gmra.mrb[0].mxu0 %v1352
  %v1354 = vpop.f32.mrb[0].mxu0
  %v1355 = vadd.f32 %v1243, %v1354
  %v1356 = vpop.f32.mrb[0].mxu0
  %v1357 = vadd.f32 %v1245, %v1356
  %1358 = vdwg.mxu0
  %v1359 = vand.u32 %v29, 4294901760
  %v1360 = vsub.f32 %v29, %v1359
  %1361 = vmatprep.subr.mxu0 %v1360
  %v1362 = vand.u32 %v28, 4294901760
  %v1363 = vsub.f32 %v28, %v1362
  %1364 = vmatpush1.msra.mxu0 %v1363
  %v1365 = vand.u32 %v35, 4294901760
  %v1366 = vsub.f32 %v35, %v1365
  %1367 = vmatprep.subr.mxu0 %v1366
  %v1368 = vand.u32 %v34, 4294901760
  %v1369 = vsub.f32 %v34, %v1368
  %1370 = vmatpush1.msra.mxu0 %v1369
  %v1371 = vand.u32 %v41, 4294901760
  %v1372 = vsub.f32 %v41, %v1371
  %1373 = vmatprep.subr.mxu0 %v1372
  %v1374 = vand.u32 %v40, 4294901760
  %v1375 = vsub.f32 %v40, %v1374
  %1376 = vmatpush1.msra.mxu0 %v1375
  %v1377 = vand.u32 %v75, 4294901760
  %v1378 = vsub.f32 %v75, %v1377
  %1379 = vmatprep.subr.mxu0 %v1378
  %v1380 = vand.u32 %v72, 4294901760
  %v1381 = vsub.f32 %v72, %v1380
  %1382 = vmatpush1.msra.mxu0 %v1381
  %1383 = vmatprep.subr.mxu0 0.0
  %1384 = vmatpush1.msra.mxu0 0.0
  %1385 = vmatprep.subr.mxu0 0.0
  %1386 = vmatpush1.msra.mxu0 0.0
  %1387 = vmatprep.subr.mxu0 0.0
  %1388 = vmatpush1.msra.mxu0 0.0
  %1389 = vmatprep.subr.mxu0 0.0
  %1390 = vmatpush1.msra.mxu0 0.0
  %1391 = vmatprep.subr.mxu0 0.0
  %1392 = vmatpush1.msra.mxu0 0.0
  %1393 = vmatprep.subr.mxu0 0.0
  %1394 = vmatpush1.msra.mxu0 0.0
  %1395 = vmatprep.subr.mxu0 0.0
  %1396 = vmatpush1.msra.mxu0 0.0
  %1397 = vmatprep.subr.mxu0 0.0
  %1398 = vmatpush1.msra.mxu0 0.0
  %1399 = vmatprep.subr.mxu0 0.0
  %1400 = vmatpush1.msra.mxu0 0.0
  %1401 = vmatprep.subr.mxu0 0.0
  %1402 = vmatpush1.msra.mxu0 0.0
  %1403 = vmatprep.subr.mxu0 0.0
  %1404 = vmatpush1.msra.mxu0 0.0
  %1405 = vmatprep.subr.mxu0 0.0
  %1406 = vmatpush1.msra.mxu0 0.0
  %1407 = vmatprep.subr.mxu0 0.0
  %1408 = vmatpush1.msra.mxu0 0.0
  %1409 = vmatprep.subr.mxu0 0.0
  %1410 = vmatpush1.msra.mxu0 0.0
  %1411 = vmatprep.subr.mxu0 0.0
  %1412 = vmatpush1.msra.mxu0 0.0
  %1413 = vmatprep.subr.mxu0 0.0
  %1414 = vmatpush1.msra.mxu0 0.0
  %1415 = vmatprep.subr.mxu0 0.0
  %1416 = vmatpush1.msra.mxu0 0.0
  %1417 = vmatprep.subr.mxu0 0.0
  %1418 = vmatpush1.msra.mxu0 0.0
  %1419 = vmatprep.subr.mxu0 0.0
  %1420 = vmatpush1.msra.mxu0 0.0
  %1421 = vmatprep.subr.mxu0 0.0
  %1422 = vmatpush1.msra.mxu0 0.0
  %1423 = vmatprep.subr.mxu0 0.0
  %1424 = vmatpush1.msra.mxu0 0.0
  %1425 = vmatprep.subr.mxu0 0.0
  %1426 = vmatpush1.msra.mxu0 0.0
  %1427 = vmatprep.subr.mxu0 0.0
  %1428 = vmatpush1.msra.mxu0 0.0
  %1429 = vmatprep.subr.mxu0 0.0
  %1430 = vmatpush1.msra.mxu0 0.0
  %1431 = vmatprep.subr.mxu0 0.0
  %1432 = vmatpush1.msra.mxu0 0.0
  %1433 = vmatprep.subr.mxu0 0.0
  %1434 = vmatpush1.msra.mxu0 0.0
  %1435 = vmatprep.subr.mxu0 0.0
  %1436 = vmatpush1.msra.mxu0 0.0
  %1437 = vmatprep.subr.mxu0 0.0
  %1438 = vmatpush1.msra.mxu0 0.0
  %1439 = vmatprep.mubr.f32.mxu0 0.0
  %v1440 = vand.u32 %v56, 4294901760
  %v1441 = vsub.f32 %v56, %v1440
  %1442 = vmatmul.mubr.f32.gmra.mrb[0].mxu0 %v1441
  %v1443 = vpop.f32.mrb[0].mxu0
  %v1444 = vadd.f32 %v1355, %v1443
  %v1445 = vpop.f32.mrb[0].mxu0
  %v1446 = vadd.f32 %v1357, %v1445
  %1447 = vdwg.mxu0
  %v1448 = vand.u32 %v29, 4294901760
  %1449 = vmatprep.subr.mxu0 %v1448
  %v1450 = vand.u32 %v28, 4294901760
  %1451 = vmatpush1.msra.mxu0 %v1450
  %v1452 = vand.u32 %v35, 4294901760
  %1453 = vmatprep.subr.mxu0 %v1452
  %v1454 = vand.u32 %v34, 4294901760
  %1455 = vmatpush1.msra.mxu0 %v1454
  %v1456 = vand.u32 %v41, 4294901760
  %1457 = vmatprep.subr.mxu0 %v1456
  %v1458 = vand.u32 %v40, 4294901760
  %1459 = vmatpush1.msra.mxu0 %v1458
  %v1460 = vand.u32 %v75, 4294901760
  %1461 = vmatprep.subr.mxu0 %v1460
  %v1462 = vand.u32 %v72, 4294901760
  %1463 = vmatpush1.msra.mxu0 %v1462
  %1464 = vmatprep.subr.mxu0 0.0
  %1465 = vmatpush1.msra.mxu0 0.0
  %1466 = vmatprep.subr.mxu0 0.0
  %1467 = vmatpush1.msra.mxu0 0.0
  %1468 = vmatprep.subr.mxu0 0.0
  %1469 = vmatpush1.msra.mxu0 0.0
  %1470 = vmatprep.subr.mxu0 0.0
  %1471 = vmatpush1.msra.mxu0 0.0
  %1472 = vmatprep.subr.mxu0 0.0
  %1473 = vmatpush1.msra.mxu0 0.0
  %1474 = vmatprep.subr.mxu0 0.0
  %1475 = vmatpush1.msra.mxu0 0.0
  %1476 = vmatprep.subr.mxu0 0.0
  %1477 = vmatpush1.msra.mxu0 0.0
  %1478 = vmatprep.subr.mxu0 0.0
  %1479 = vmatpush1.msra.mxu0 0.0
  %1480 = vmatprep.subr.mxu0 0.0
  %1481 = vmatpush1.msra.mxu0 0.0
  %1482 = vmatprep.subr.mxu0 0.0
  %1483 = vmatpush1.msra.mxu0 0.0
  %1484 = vmatprep.subr.mxu0 0.0
  %1485 = vmatpush1.msra.mxu0 0.0
  %1486 = vmatprep.subr.mxu0 0.0
  %1487 = vmatpush1.msra.mxu0 0.0
  %1488 = vmatprep.subr.mxu0 0.0
  %1489 = vmatpush1.msra.mxu0 0.0
  %1490 = vmatprep.subr.mxu0 0.0
  %1491 = vmatpush1.msra.mxu0 0.0
  %1492 = vmatprep.subr.mxu0 0.0
  %1493 = vmatpush1.msra.mxu0 0.0
  %1494 = vmatprep.subr.mxu0 0.0
  %1495 = vmatpush1.msra.mxu0 0.0
  %1496 = vmatprep.subr.mxu0 0.0
  %1497 = vmatpush1.msra.mxu0 0.0
  %1498 = vmatprep.subr.mxu0 0.0
  %1499 = vmatpush1.msra.mxu0 0.0
  %1500 = vmatprep.subr.mxu0 0.0
  %1501 = vmatpush1.msra.mxu0 0.0
  %1502 = vmatprep.subr.mxu0 0.0
  %1503 = vmatpush1.msra.mxu0 0.0
  %1504 = vmatprep.subr.mxu0 0.0
  %1505 = vmatpush1.msra.mxu0 0.0
  %1506 = vmatprep.subr.mxu0 0.0
  %1507 = vmatpush1.msra.mxu0 0.0
  %1508 = vmatprep.subr.mxu0 0.0
  %1509 = vmatpush1.msra.mxu0 0.0
  %1510 = vmatprep.subr.mxu0 0.0
  %1511 = vmatpush1.msra.mxu0 0.0
  %1512 = vmatprep.subr.mxu0 0.0
  %1513 = vmatpush1.msra.mxu0 0.0
  %1514 = vmatprep.subr.mxu0 0.0
  %1515 = vmatpush1.msra.mxu0 0.0
  %1516 = vmatprep.subr.mxu0 0.0
  %1517 = vmatpush1.msra.mxu0 0.0
  %1518 = vmatprep.subr.mxu0 0.0
  %1519 = vmatpush1.msra.mxu0 0.0
  %1520 = vmatprep.mubr.f32.mxu0 0.0
  %v1521 = vand.u32 %v56, 4294901760
  %v1522 = vsub.f32 %v56, %v1521
  %v1523 = vand.u32 %v1522, 4294901760
  %1524 = vmatmul.mubr.f32.gmra.mrb[0].mxu0 %v1523
  %v1525 = vpop.f32.mrb[0].mxu0
  %v1526 = vadd.f32 %v1444, %v1525
  %v1527 = vpop.f32.mrb[0].mxu0
  %v1528 = vadd.f32 %v1446, %v1527
  %1529 = vdwg.mxu0
  %v1530 = vand.u32 %v29, 4294901760
  %v1531 = vsub.f32 %v29, %v1530
  %v1532 = vand.u32 %v1531, 4294901760
  %1533 = vmatprep.subr.mxu0 %v1532
  %v1534 = vand.u32 %v28, 4294901760
  %v1535 = vsub.f32 %v28, %v1534
  %v1536 = vand.u32 %v1535, 4294901760
  %1537 = vmatpush1.msra.mxu0 %v1536
  %v1538 = vand.u32 %v35, 4294901760
  %v1539 = vsub.f32 %v35, %v1538
  %v1540 = vand.u32 %v1539, 4294901760
  %1541 = vmatprep.subr.mxu0 %v1540
  %v1542 = vand.u32 %v34, 4294901760
  %v1543 = vsub.f32 %v34, %v1542
  %v1544 = vand.u32 %v1543, 4294901760
  %1545 = vmatpush1.msra.mxu0 %v1544
  %v1546 = vand.u32 %v41, 4294901760
  %v1547 = vsub.f32 %v41, %v1546
  %v1548 = vand.u32 %v1547, 4294901760
  %1549 = vmatprep.subr.mxu0 %v1548
  %v1550 = vand.u32 %v40, 4294901760
  %v1551 = vsub.f32 %v40, %v1550
  %v1552 = vand.u32 %v1551, 4294901760
  %1553 = vmatpush1.msra.mxu0 %v1552
  %v1554 = vand.u32 %v75, 4294901760
  %v1555 = vsub.f32 %v75, %v1554
  %v1556 = vand.u32 %v1555, 4294901760
  %1557 = vmatprep.subr.mxu0 %v1556
  %v1558 = vand.u32 %v72, 4294901760
  %v1559 = vsub.f32 %v72, %v1558
  %v1560 = vand.u32 %v1559, 4294901760
  %1561 = vmatpush1.msra.mxu0 %v1560
  %1562 = vmatprep.subr.mxu0 0.0
  %1563 = vmatpush1.msra.mxu0 0.0
  %1564 = vmatprep.subr.mxu0 0.0
  %1565 = vmatpush1.msra.mxu0 0.0
  %1566 = vmatprep.subr.mxu0 0.0
  %1567 = vmatpush1.msra.mxu0 0.0
  %1568 = vmatprep.subr.mxu0 0.0
  %1569 = vmatpush1.msra.mxu0 0.0
  %1570 = vmatprep.subr.mxu0 0.0
  %1571 = vmatpush1.msra.mxu0 0.0
  %1572 = vmatprep.subr.mxu0 0.0
  %1573 = vmatpush1.msra.mxu0 0.0
  %1574 = vmatprep.subr.mxu0 0.0
  %1575 = vmatpush1.msra.mxu0 0.0
  %1576 = vmatprep.subr.mxu0 0.0
  %1577 = vmatpush1.msra.mxu0 0.0
  %1578 = vmatprep.subr.mxu0 0.0
  %1579 = vmatpush1.msra.mxu0 0.0
  %1580 = vmatprep.subr.mxu0 0.0
  %1581 = vmatpush1.msra.mxu0 0.0
  %1582 = vmatprep.subr.mxu0 0.0
  %1583 = vmatpush1.msra.mxu0 0.0
  %1584 = vmatprep.subr.mxu0 0.0
  %1585 = vmatpush1.msra.mxu0 0.0
  %1586 = vmatprep.subr.mxu0 0.0
  %1587 = vmatpush1.msra.mxu0 0.0
  %1588 = vmatprep.subr.mxu0 0.0
  %1589 = vmatpush1.msra.mxu0 0.0
  %1590 = vmatprep.subr.mxu0 0.0
  %1591 = vmatpush1.msra.mxu0 0.0
  %1592 = vmatprep.subr.mxu0 0.0
  %1593 = vmatpush1.msra.mxu0 0.0
  %1594 = vmatprep.subr.mxu0 0.0
  %1595 = vmatpush1.msra.mxu0 0.0
  %1596 = vmatprep.subr.mxu0 0.0
  %1597 = vmatpush1.msra.mxu0 0.0
  %1598 = vmatprep.subr.mxu0 0.0
  %1599 = vmatpush1.msra.mxu0 0.0
  %1600 = vmatprep.subr.mxu0 0.0
  %1601 = vmatpush1.msra.mxu0 0.0
  %1602 = vmatprep.subr.mxu0 0.0
  %1603 = vmatpush1.msra.mxu0 0.0
  %1604 = vmatprep.subr.mxu0 0.0
  %1605 = vmatpush1.msra.mxu0 0.0
  %1606 = vmatprep.subr.mxu0 0.0
  %1607 = vmatpush1.msra.mxu0 0.0
  %1608 = vmatprep.subr.mxu0 0.0
  %1609 = vmatpush1.msra.mxu0 0.0
  %1610 = vmatprep.subr.mxu0 0.0
  %1611 = vmatpush1.msra.mxu0 0.0
  %1612 = vmatprep.subr.mxu0 0.0
  %1613 = vmatpush1.msra.mxu0 0.0
  %1614 = vmatprep.subr.mxu0 0.0
  %1615 = vmatpush1.msra.mxu0 0.0
  %1616 = vmatprep.subr.mxu0 0.0
  %1617 = vmatpush1.msra.mxu0 0.0
  %1618 = vmatprep.mubr.f32.mxu0 0.0
  %v1619 = vand.u32 %v56, 4294901760
  %1620 = vmatmul.mubr.f32.gmra.mrb[0].mxu0 %v1619
  %v1621 = vpop.f32.mrb[0].mxu0
  %v1622 = vadd.f32 %v1526, %v1621
  %v1623 = vpop.f32.mrb[0].mxu0
  %v1624 = vadd.f32 %v1528, %v1623
  %1625 = vdwg.mxu0
  %v1626 = vand.u32 %v29, 4294901760
  %1627 = vmatprep.subr.mxu0 %v1626
  %v1628 = vand.u32 %v28, 4294901760
  %1629 = vmatpush1.msra.mxu0 %v1628
  %v1630 = vand.u32 %v35, 4294901760
  %1631 = vmatprep.subr.mxu0 %v1630
  %v1632 = vand.u32 %v34, 4294901760
  %1633 = vmatpush1.msra.mxu0 %v1632
  %v1634 = vand.u32 %v41, 4294901760
  %1635 = vmatprep.subr.mxu0 %v1634
  %v1636 = vand.u32 %v40, 4294901760
  %1637 = vmatpush1.msra.mxu0 %v1636
  %v1638 = vand.u32 %v75, 4294901760
  %1639 = vmatprep.subr.mxu0 %v1638
  %v1640 = vand.u32 %v72, 4294901760
  %1641 = vmatpush1.msra.mxu0 %v1640
  %1642 = vmatprep.subr.mxu0 0.0
  %1643 = vmatpush1.msra.mxu0 0.0
  %1644 = vmatprep.subr.mxu0 0.0
  %1645 = vmatpush1.msra.mxu0 0.0
  %1646 = vmatprep.subr.mxu0 0.0
  %1647 = vmatpush1.msra.mxu0 0.0
  %1648 = vmatprep.subr.mxu0 0.0
  %1649 = vmatpush1.msra.mxu0 0.0
  %1650 = vmatprep.subr.mxu0 0.0
  %1651 = vmatpush1.msra.mxu0 0.0
  %1652 = vmatprep.subr.mxu0 0.0
  %1653 = vmatpush1.msra.mxu0 0.0
  %1654 = vmatprep.subr.mxu0 0.0
  %1655 = vmatpush1.msra.mxu0 0.0
  %1656 = vmatprep.subr.mxu0 0.0
  %1657 = vmatpush1.msra.mxu0 0.0
  %1658 = vmatprep.subr.mxu0 0.0
  %1659 = vmatpush1.msra.mxu0 0.0
  %1660 = vmatprep.subr.mxu0 0.0
  %1661 = vmatpush1.msra.mxu0 0.0
  %1662 = vmatprep.subr.mxu0 0.0
  %1663 = vmatpush1.msra.mxu0 0.0
  %1664 = vmatprep.subr.mxu0 0.0
  %1665 = vmatpush1.msra.mxu0 0.0
  %1666 = vmatprep.subr.mxu0 0.0
  %1667 = vmatpush1.msra.mxu0 0.0
  %1668 = vmatprep.subr.mxu0 0.0
  %1669 = vmatpush1.msra.mxu0 0.0
  %1670 = vmatprep.subr.mxu0 0.0
  %1671 = vmatpush1.msra.mxu0 0.0
  %1672 = vmatprep.subr.mxu0 0.0
  %1673 = vmatpush1.msra.mxu0 0.0
  %1674 = vmatprep.subr.mxu0 0.0
  %1675 = vmatpush1.msra.mxu0 0.0
  %1676 = vmatprep.subr.mxu0 0.0
  %1677 = vmatpush1.msra.mxu0 0.0
  %1678 = vmatprep.subr.mxu0 0.0
  %1679 = vmatpush1.msra.mxu0 0.0
  %1680 = vmatprep.subr.mxu0 0.0
  %1681 = vmatpush1.msra.mxu0 0.0
  %1682 = vmatprep.subr.mxu0 0.0
  %1683 = vmatpush1.msra.mxu0 0.0
  %1684 = vmatprep.subr.mxu0 0.0
  %1685 = vmatpush1.msra.mxu0 0.0
  %1686 = vmatprep.subr.mxu0 0.0
  %1687 = vmatpush1.msra.mxu0 0.0
  %1688 = vmatprep.subr.mxu0 0.0
  %1689 = vmatpush1.msra.mxu0 0.0
  %1690 = vmatprep.subr.mxu0 0.0
  %1691 = vmatpush1.msra.mxu0 0.0
  %1692 = vmatprep.subr.mxu0 0.0
  %1693 = vmatpush1.msra.mxu0 0.0
  %1694 = vmatprep.subr.mxu0 0.0
  %1695 = vmatpush1.msra.mxu0 0.0
  %1696 = vmatprep.subr.mxu0 0.0
  %1697 = vmatpush1.msra.mxu0 0.0
  %1698 = vmatprep.mubr.f32.mxu0 0.0
  %v1699 = vand.u32 %v56, 4294901760
  %1700 = vmatmul.mubr.f32.gmra.mrb[0].mxu0 %v1699
  %v1701 = vpop.f32.mrb[0].mxu0
  %v1702 = vadd.f32 %v1622, %v1701
  %v1703 = vpop.f32.mrb[0].mxu0
  %v1704 = vadd.f32 %v1624, %v1703
  %1705 = vdwg.mxu0
  %v1706 = vmax.f32 %v616, -9.662e+37
  %v1707 = vmax.f32 %v618, -9.662e+37
  %v1708 = vmax.f32 %v1159, -9.662e+37
  %v1709 = vmax.f32 %v1161, -9.662e+37
  %v1710 = vmax.f32 %v1702, -9.662e+37
  %v1711 = vmax.f32 %v1704, -9.662e+37
  %v1712 = vmin.f32 %v1706, 6.687e+37
  %v1713 = vmin.f32 %v1707, 6.687e+37
  %v1714 = vmin.f32 %v1708, 6.687e+37
  %v1715 = vmin.f32 %v1709, 6.687e+37
  %v1716 = vmin.f32 %v1710, 6.687e+37
  %v1717 = vmin.f32 %v1711, 6.687e+37
  %v1718 = vld [vmem:[%s3] sm:$0x3f]
  %v1720 = vlaneseq
  %v1721 = vshrl.u32 %v1720, 7
  %v1722 = vsub.s32 0, %v1721
  %v1723 = vrot.slane %v1718, %v1722
  %v1724 = vlaneseq
  %v1725 = vshrl.u32 %v1724, 7
  %v1726 = vsub.s32 1, %v1725
  %v1727 = vrot.slane %v1718, %v1726
  %v1728 = vlaneseq
  %v1729 = vshrl.u32 %v1728, 7
  %v1730 = vsub.s32 2, %v1729
  %v1731 = vrot.slane %v1718, %v1730
  %v1732 = vlaneseq
  %v1733 = vshrl.u32 %v1732, 7
  %v1734 = vsub.s32 3, %v1733
  %v1735 = vrot.slane %v1718, %v1734
  %v1736 = vlaneseq
  %v1737 = vshrl.u32 %v1736, 7
  %v1738 = vsub.s32 4, %v1737
  %v1739 = vrot.slane %v1718, %v1738
  %v1740 = vlaneseq
  %v1741 = vshrl.u32 %v1740, 7
  %v1742 = vsub.s32 5, %v1741
  %v1743 = vrot.slane %v1718, %v1742
  %v1750 = vmul.f32 %v1712, %v1723
  %v1751 = vmul.f32 %v1713, %v1727
  %v1752 = vmul.f32 %v1714, %v1731
  %v1753 = vmul.f32 %v1715, %v1735
  %v1754 = vmul.f32 %v1716, %v1739
  %v1755 = vmul.f32 %v1717, %v1743
  %1756 = vst [vmem:[#allocation2] sm:$0xff] 0.0
  %1757 = vst [vmem:[#allocation2 + $0x8] sm:$0xff] 0.0
  %1758 = vst [vmem:[#allocation2 + $0x10] sm:$0xff] 0.0
  %1759 = vst [vmem:[#allocation2 + $0x18] sm:$0xff] 0.0
  %1760 = vst [vmem:[#allocation2 + $0x20] sm:$0xff] 0.0
  %1761 = vst [vmem:[#allocation2 + $0x28] sm:$0xff] 0.0
  %1762 = vst [vmem:[#allocation2 + $0x30] sm:$0xff] 0.0
  %1763 = vst [vmem:[#allocation2 + $0x38] sm:$0xff] 0.0
  %vm1764 = vcmask 1041408
  %vm1765 = vcmask 1043458
  %vm1766 = vmor %vm1765, %vm1764
  %vm1767 = vcmask 160772
  %vm1768 = vmor %vm1767, %vm1766
  %1769 = vst.msk [vmem:[#allocation2 + $0x40] sm:$0x3f] %vm1768, 0.0
  %v1776 = vcombine.low %v1750, %v1751
  %v1777 = vcombine.low %v1752, %v1753
  %v1778 = vcombine.low %v1754, %v1755
  %v1780 = vunpack.c.l.s4 1966171168
  %v1781 = vunpack.c.0.s8 %v1780
  %v1782 = vlaneseq
  %v1783 = vshrl.u32 %v1782, 7
  %v1784 = vsub.s32 %v1781, %v1783
  %v1785 = vrot.slane %v1776, %v1784
  %v1787 = vunpack.c.l.s4 1966171168
  %v1788 = vunpack.c.0.s8 %v1787
  %v1789 = vlaneseq
  %v1790 = vshrl.u32 %v1789, 7
  %v1791 = vsub.s32 %v1788, %v1790
  %v1792 = vrot.slane %v1777, %v1791
  %v1794 = vunpack.c.l.s4 1966171168
  %v1795 = vunpack.c.0.s8 %v1794
  %v1796 = vlaneseq
  %v1797 = vshrl.u32 %v1796, 7
  %v1798 = vsub.s32 %v1795, %v1797
  %v1799 = vrot.slane %v1778, %v1798
  %v1800 = vcombine.low %v1785, %v1792
  %v1802 = vunpack.c.l.s4 1966171168
  %v1803 = vunpack.c.0.s8 %v1802
  %v1804 = vlaneseq
  %v1805 = vshrl.u32 %v1804, 7
  %v1806 = vsub.s32 %v1803, %v1805
  %v1807 = vrot.slane %v1800, %v1806
  %v1809 = vunpack.c.l.s4 1966171168
  %v1810 = vunpack.c.0.s8 %v1809
  %v1811 = vlaneseq
  %v1812 = vshrl.u32 %v1811, 7
  %v1813 = vsub.s32 %v1810, %v1812
  %v1814 = vrot.slane %v1799, %v1813
  %v1815 = vcombine.low %v1807, %v1814
  %1816 = vrot.lane.b32.xlu0 %v1815, 76
  %v1817 = vpop.permute.xlu0 %1816
  %v1818 = vrot.slane %v1817, 7
  %vm1819 = vcmask 621568
  %v1820 = vsel %vm1819, %v1818, %v1817
  %v1822 = vlaneseq
  %vm1823 = vcmp.ge.s32.totalorder %v1822, 76
  %vm1824 = vcmp.lt.s32.totalorder %v1822, 798
  %vm1825 = vmand %vm1823, %vm1824
  %s1826 = scalar_lea.vmem [#allocation2], 22
  %1827 = vst.msk [vmem:[%s1826] ss:$2 sm:$0x7f] %vm1825, %v1820
  %v1828 = vcombine.high %v1785, %v1792
  %v1829 = vcombine.high %v1799, %v1799
  %v1831 = vunpack.c.l.s4 1966171168
  %v1832 = vunpack.c.0.s8 %v1831
  %v1833 = vlaneseq
  %v1834 = vshrl.u32 %v1833, 7
  %v1835 = vsub.s32 %v1832, %v1834
  %v1836 = vrot.slane %v1828, %v1835
  %v1838 = vunpack.c.l.s4 1966171168
  %v1839 = vunpack.c.0.s8 %v1838
  %v1840 = vlaneseq
  %v1841 = vshrl.u32 %v1840, 7
  %v1842 = vsub.s32 %v1839, %v1841
  %v1843 = vrot.slane %v1829, %v1842
  %v1844 = vcombine.low %v1836, %v1843
  %1845 = vrot.lane.b32.xlu0 %v1844, 30
  %v1846 = vpop.permute.xlu0 %1845
  %v1847 = vrot.slane %v1846, 7
  %vm1848 = vcmask 244736
  %v1849 = vsel %vm1848, %v1847, %v1846
  %vm1851 = vcmp.ge.s32.totalorder %v1822, 30
  %vm1852 = vcmp.lt.s32.totalorder %v1822, 752
  %vm1853 = vmand %vm1851, %vm1852
  %s1854 = scalar_lea.vmem [#allocation2], 34
  %1855 = vst.msk [vmem:[%s1854] ss:$2 sm:$0x3f] %vm1853, %v1849
  %v1856 = vcombine.high %v1807, %v1814
  %1857 = vrot.lane.b32.xlu0 %v1856, 76
  %v1858 = vpop.permute.xlu0 %1857
  %v1859 = vrot.slane %v1858, 7
  %v1860 = vsel %vm1819, %v1859, %v1858
  %s1862 = scalar_lea.vmem [#allocation2], 23
  %1863 = vst.msk [vmem:[%s1862] ss:$2 sm:$0x7f] %vm1825, %v1860
  %v1864 = vcombine.high %v1836, %v1843
  %1865 = vrot.lane.b32.xlu0 %v1864, 30
  %v1866 = vpop.permute.xlu0 %1865
  %v1867 = vrot.slane %v1866, 7
  %v1868 = vsel %vm1848, %v1867, %v1866
  %s1870 = scalar_lea.vmem [#allocation2], 35
  %1871 = vst.msk [vmem:[%s1870] ss:$2 sm:$0x3f] %vm1853, %v1868
  %v1872 = vld [vmem:[#allocation2] ss:$2 sm:$0xff]
  %s1873 = scalar_lea.vmem [#allocation2], 16
  %v1874 = vld [vmem:[%s1873] ss:$2 sm:$0xff]
  %s1875 = scalar_lea.vmem [#allocation2], 32
  %v1876 = vld [vmem:[%s1875] ss:$2 sm:$0x7f]
  %1877 = vst [vmem:[#allocation3] ss:$8 sm:$0xf] %v1872
  %1878 = vst [vmem:[#allocation3] ss:$8 sm:$0xf0] %v1872
  %s1879 = scalar_lea.vmem [#allocation3], 64
  %1880 = vst [vmem:[%s1879] ss:$8 sm:$0xf] %v1874
  %1881 = vst [vmem:[%s1879] ss:$8 sm:$0xf0] %v1874
  %vm1882 = vcmp.ge.s32.totalorder %v1822, 0
  %vm1883 = vcmp.lt.s32.totalorder %v1822, 840
  %vm1884 = vmand %vm1882, %vm1883
  %s1885 = scalar_lea.vmem [#allocation3], 128
  %1886 = vst.msk [vmem:[%s1885] ss:$8 sm:$0xf] %vm1884, %v1876
  %1887 = vst.msk [vmem:[%s1885] ss:$8 sm:$0x70] %vm1884, %v1876
  %v1888 = vld [vmem:[#allocation2] ss:$2 sm:$0xff]
  %v1889 = vld [vmem:[%s1873] ss:$2 sm:$0xff]
  %v1890 = vld [vmem:[%s1875] ss:$2 sm:$0x7f]
  %1894 = vrot.lane.b32.xlu0 %v1888, 127
  %v1895 = vpop.permute.xlu0 %1894
  %1896 = vrot.lane.b32.xlu0 %v1889, 127
  %v1897 = vpop.permute.xlu0 %1896
  %1898 = vrot.lane.b32.xlu0 %v1890, 127
  %v1899 = vpop.permute.xlu0 %1898
  %v1900 = vrot.slane %v1895, 1
  %v1901 = vrot.slane %v1897, 1
  %v1902 = vrot.slane %v1899, 1
  %vm1903 = vcmask 1046528
  %v1904 = vsel %vm1903, %v1900, %v1901
  %vm1905 = vcmask 1039360
  %v1906 = vsel %vm1905, %v1895, %v1904
  %v1907 = vsel %vm1903, %v1901, %v1902
  %v1908 = vsel %vm1905, %v1897, %v1907
  %v1909 = vsel %vm1905, %v1899, %v1902
  %s1913 = scalar_lea.vmem [#allocation3], 1
  %1914 = vst [vmem:[%s1913] ss:$8 sm:$0xf] %v1906
  %1915 = vst [vmem:[%s1913] ss:$8 sm:$0xf0] %v1906
  %s1916 = scalar_lea.vmem [#allocation3], 65
  %1917 = vst [vmem:[%s1916] ss:$8 sm:$0xf] %v1908
  %1918 = vst [vmem:[%s1916] ss:$8 sm:$0xf0] %v1908
  %s1919 = scalar_lea.vmem [#allocation3], 129
  %1920 = vst.msk [vmem:[%s1919] ss:$8 sm:$0xf] %vm1884, %v1909
  %1921 = vst.msk [vmem:[%s1919] ss:$8 sm:$0x70] %vm1884, %v1909
  %v1922 = vld [vmem:[#allocation2] ss:$2 sm:$0xff]
  %v1923 = vld [vmem:[%s1873] ss:$2 sm:$0xff]
  %v1924 = vld [vmem:[%s1875] ss:$2 sm:$0x7f]
  %1928 = vrot.lane.b32.xlu0 %v1922, 126
  %v1929 = vpop.permute.xlu0 %1928
  %1930 = vrot.lane.b32.xlu0 %v1923, 126
  %v1931 = vpop.permute.xlu0 %1930
  %1932 = vrot.lane.b32.xlu0 %v1924, 126
  %v1933 = vpop.permute.xlu0 %1932
  %v1934 = vrot.slane %v1929, 1
  %v1935 = vrot.slane %v1931, 1
  %v1936 = vrot.slane %v1933, 1
  %v1937 = vsel %vm1903, %v1934, %v1935
  %vm1938 = vcmask 1031168
  %v1939 = vsel %vm1938, %v1929, %v1937
  %v1940 = vsel %vm1903, %v1935, %v1936
  %v1941 = vsel %vm1938, %v1931, %v1940
  %v1942 = vsel %vm1938, %v1933, %v1936
  %s1946 = scalar_lea.vmem [#allocation3], 2
  %1947 = vst [vmem:[%s1946] ss:$8 sm:$0xf] %v1939
  %1948 = vst [vmem:[%s1946] ss:$8 sm:$0xf0] %v1939
  %s1949 = scalar_lea.vmem [#allocation3], 66
  %1950 = vst [vmem:[%s1949] ss:$8 sm:$0xf] %v1941
  %1951 = vst [vmem:[%s1949] ss:$8 sm:$0xf0] %v1941
  %s1952 = scalar_lea.vmem [#allocation3], 130
  %1953 = vst.msk [vmem:[%s1952] ss:$8 sm:$0xf] %vm1884, %v1942
  %1954 = vst.msk [vmem:[%s1952] ss:$8 sm:$0x70] %vm1884, %v1942
  %v1955 = vld [vmem:[#allocation2] ss:$2 sm:$0xff]
  %v1956 = vld [vmem:[%s1873] ss:$2 sm:$0xff]
  %v1957 = vld [vmem:[%s1875] ss:$2 sm:$0x7f]
  %1961 = vrot.lane.b32.xlu0 %v1955, 109
  %v1962 = vpop.permute.xlu0 %1961
  %1963 = vrot.lane.b32.xlu0 %v1956, 109
  %v1964 = vpop.permute.xlu0 %1963
  %1965 = vrot.lane.b32.xlu0 %v1957, 109
  %v1966 = vpop.permute.xlu0 %1965
  %v1967 = vrot.slane %v1962, 1
  %v1968 = vrot.slane %v1964, 1
  %v1969 = vrot.slane %v1966, 1
  %v1970 = vsel %vm1903, %v1967, %v1968
  %vm1971 = vcmask 891904
  %v1972 = vsel %vm1971, %v1962, %v1970
  %v1973 = vsel %vm1903, %v1968, %v1969
  %v1974 = vsel %vm1971, %v1964, %v1973
  %v1975 = vsel %vm1971, %v1966, %v1969
  %s1979 = scalar_lea.vmem [#allocation3], 3
  %1980 = vst [vmem:[%s1979] ss:$8 sm:$0xf] %v1972
  %1981 = vst [vmem:[%s1979] ss:$8 sm:$0xf0] %v1972
  %s1982 = scalar_lea.vmem [#allocation3], 67
  %1983 = vst [vmem:[%s1982] ss:$8 sm:$0xf] %v1974
  %1984 = vst [vmem:[%s1982] ss:$8 sm:$0xf0] %v1974
  %s1985 = scalar_lea.vmem [#allocation3], 131
  %1986 = vst.msk [vmem:[%s1985] ss:$8 sm:$0xf] %vm1884, %v1975
  %1987 = vst.msk [vmem:[%s1985] ss:$8 sm:$0x70] %vm1884, %v1975
  %v1988 = vld [vmem:[#allocation2] ss:$2 sm:$0xff]
  %v1989 = vld [vmem:[%s1873] ss:$2 sm:$0xff]
  %v1990 = vld [vmem:[%s1875] ss:$2 sm:$0x7f]
  %1994 = vrot.lane.b32.xlu0 %v1988, 108
  %v1995 = vpop.permute.xlu0 %1994
  %1996 = vrot.lane.b32.xlu0 %v1989, 108
  %v1997 = vpop.permute.xlu0 %1996
  %1998 = vrot.lane.b32.xlu0 %v1990, 108
  %v1999 = vpop.permute.xlu0 %1998
  %v2000 = vrot.slane %v1995, 1
  %v2001 = vrot.slane %v1997, 1
  %v2002 = vrot.slane %v1999, 1
  %v2003 = vsel %vm1903, %v2000, %v2001
  %vm2004 = vcmask 883712
  %v2005 = vsel %vm2004, %v1995, %v2003
  %v2006 = vsel %vm1903, %v2001, %v2002
  %v2007 = vsel %vm2004, %v1997, %v2006
  %v2008 = vsel %vm2004, %v1999, %v2002
  %s2012 = scalar_lea.vmem [#allocation3], 4
  %2013 = vst [vmem:[%s2012] ss:$8 sm:$0xf] %v2005
  %2014 = vst [vmem:[%s2012] ss:$8 sm:$0xf0] %v2005
  %s2015 = scalar_lea.vmem [#allocation3], 68
  %2016 = vst [vmem:[%s2015] ss:$8 sm:$0xf] %v2007
  %2017 = vst [vmem:[%s2015] ss:$8 sm:$0xf0] %v2007
  %s2018 = scalar_lea.vmem [#allocation3], 132
  %2019 = vst.msk [vmem:[%s2018] ss:$8 sm:$0xf] %vm1884, %v2008
  %2020 = vst.msk [vmem:[%s2018] ss:$8 sm:$0x70] %vm1884, %v2008
  %v2021 = vld [vmem:[#allocation2] ss:$2 sm:$0xff]
  %v2022 = vld [vmem:[%s1873] ss:$2 sm:$0xff]
  %v2023 = vld [vmem:[%s1875] ss:$2 sm:$0x7f]
  %2027 = vrot.lane.b32.xlu0 %v2021, 107
  %v2028 = vpop.permute.xlu0 %2027
  %2029 = vrot.lane.b32.xlu0 %v2022, 107
  %v2030 = vpop.permute.xlu0 %2029
  %2031 = vrot.lane.b32.xlu0 %v2023, 107
  %v2032 = vpop.permute.xlu0 %2031
  %v2033 = vrot.slane %v2028, 1
  %v2034 = vrot.slane %v2030, 1
  %v2035 = vrot.slane %v2032, 1
  %v2036 = vsel %vm1903, %v2033, %v2034
  %vm2037 = vcmask 875520
  %v2038 = vsel %vm2037, %v2028, %v2036
  %v2039 = vsel %vm1903, %v2034, %v2035
  %v2040 = vsel %vm2037, %v2030, %v2039
  %v2041 = vsel %vm2037, %v2032, %v2035
  %s2045 = scalar_lea.vmem [#allocation3], 5
  %2046 = vst [vmem:[%s2045] ss:$8 sm:$0xf] %v2038
  %2047 = vst [vmem:[%s2045] ss:$8 sm:$0xf0] %v2038
  %s2048 = scalar_lea.vmem [#allocation3], 69
  %2049 = vst [vmem:[%s2048] ss:$8 sm:$0xf] %v2040
  %2050 = vst [vmem:[%s2048] ss:$8 sm:$0xf0] %v2040
  %s2051 = scalar_lea.vmem [#allocation3], 133
  %2052 = vst.msk [vmem:[%s2051] ss:$8 sm:$0xf] %vm1884, %v2041
  %2053 = vst.msk [vmem:[%s2051] ss:$8 sm:$0x70] %vm1884, %v2041
  %v2054 = vld [vmem:[#allocation2] ss:$2 sm:$0xff]
  %v2055 = vld [vmem:[%s1873] ss:$2 sm:$0xff]
  %v2056 = vld [vmem:[%s1875] ss:$2 sm:$0x7f]
  %2060 = vrot.lane.b32.xlu0 %v2054, 90
  %v2061 = vpop.permute.xlu0 %2060
  %2062 = vrot.lane.b32.xlu0 %v2055, 90
  %v2063 = vpop.permute.xlu0 %2062
  %2064 = vrot.lane.b32.xlu0 %v2056, 90
  %v2065 = vpop.permute.xlu0 %2064
  %v2066 = vrot.slane %v2061, 1
  %v2067 = vrot.slane %v2063, 1
  %v2068 = vrot.slane %v2065, 1
  %v2069 = vsel %vm1903, %v2066, %v2067
  %vm2070 = vcmask 736256
  %v2071 = vsel %vm2070, %v2061, %v2069
  %v2072 = vsel %vm1903, %v2067, %v2068
  %v2073 = vsel %vm2070, %v2063, %v2072
  %v2074 = vsel %vm2070, %v2065, %v2068
  %s2078 = scalar_lea.vmem [#allocation3], 6
  %2079 = vst [vmem:[%s2078] ss:$8 sm:$0xf] %v2071
  %2080 = vst [vmem:[%s2078] ss:$8 sm:$0xf0] %v2071
  %s2081 = scalar_lea.vmem [#allocation3], 70
  %2082 = vst [vmem:[%s2081] ss:$8 sm:$0xf] %v2073
  %2083 = vst [vmem:[%s2081] ss:$8 sm:$0xf0] %v2073
  %s2084 = scalar_lea.vmem [#allocation3], 134
  %2085 = vst.msk [vmem:[%s2084] ss:$8 sm:$0xf] %vm1884, %v2074
  %2086 = vst.msk [vmem:[%s2084] ss:$8 sm:$0x70] %vm1884, %v2074
  %v2087 = vld [vmem:[#allocation2] ss:$2 sm:$0xff]
  %v2088 = vld [vmem:[%s1873] ss:$2 sm:$0xff]
  %v2089 = vld [vmem:[%s1875] ss:$2 sm:$0x7f]
  %2093 = vrot.lane.b32.xlu0 %v2087, 89
  %v2094 = vpop.permute.xlu0 %2093
  %2095 = vrot.lane.b32.xlu0 %v2088, 89
  %v2096 = vpop.permute.xlu0 %2095
  %2097 = vrot.lane.b32.xlu0 %v2089, 89
  %v2098 = vpop.permute.xlu0 %2097
  %v2099 = vrot.slane %v2094, 1
  %v2100 = vrot.slane %v2096, 1
  %v2101 = vrot.slane %v2098, 1
  %v2102 = vsel %vm1903, %v2099, %v2100
  %vm2103 = vcmask 728064
  %v2104 = vsel %vm2103, %v2094, %v2102
  %v2105 = vsel %vm1903, %v2100, %v2101
  %v2106 = vsel %vm2103, %v2096, %v2105
  %v2107 = vsel %vm2103, %v2098, %v2101
  %s2111 = scalar_lea.vmem [#allocation3], 7
  %2112 = vst [vmem:[%s2111] ss:$8 sm:$0xf] %v2104
  %2113 = vst [vmem:[%s2111] ss:$8 sm:$0xf0] %v2104
  %s2114 = scalar_lea.vmem [#allocation3], 71
  %2115 = vst [vmem:[%s2114] ss:$8 sm:$0xf] %v2106
  %2116 = vst [vmem:[%s2114] ss:$8 sm:$0xf0] %v2106
  %s2117 = scalar_lea.vmem [#allocation3], 135
  %2118 = vst.msk [vmem:[%s2117] ss:$8 sm:$0xf] %vm1884, %v2107
  %2119 = vst.msk [vmem:[%s2117] ss:$8 sm:$0x70] %vm1884, %v2107
  %v2120 = vld [vmem:[#allocation2] ss:$2 sm:$0xff]
  %v2121 = vld [vmem:[%s1873] ss:$2 sm:$0xff]
  %v2122 = vld [vmem:[%s1875] ss:$2 sm:$0x7f]
  %2126 = vrot.lane.b32.xlu0 %v2120, 88
  %v2127 = vpop.permute.xlu0 %2126
  %2128 = vrot.lane.b32.xlu0 %v2121, 88
  %v2129 = vpop.permute.xlu0 %2128
  %2130 = vrot.lane.b32.xlu0 %v2122, 88
  %v2131 = vpop.permute.xlu0 %2130
  %v2132 = vrot.slane %v2127, 1
  %v2133 = vrot.slane %v2129, 1
  %v2134 = vrot.slane %v2131, 1
  %v2135 = vsel %vm1903, %v2132, %v2133
  %vm2136 = vcmask 719872
  %v2137 = vsel %vm2136, %v2127, %v2135
  %v2138 = vsel %vm1903, %v2133, %v2134
  %v2139 = vsel %vm2136, %v2129, %v2138
  %v2140 = vsel %vm2136, %v2131, %v2134
  %s2144 = scalar_lea.vmem [#allocation3], 184
  %2145 = vst [vmem:[%s2144] ss:$8 sm:$0xf] %v2137
  %2146 = vst [vmem:[%s2144] ss:$8 sm:$0xf0] %v2137
  %s2147 = scalar_lea.vmem [#allocation3], 248
  %2148 = vst [vmem:[%s2147] ss:$8 sm:$0xf] %v2139
  %2149 = vst [vmem:[%s2147] ss:$8 sm:$0xf0] %v2139
  %s2150 = scalar_lea.vmem [#allocation3], 312
  %2151 = vst.msk [vmem:[%s2150] ss:$8 sm:$0xf] %vm1884, %v2140
  %2152 = vst.msk [vmem:[%s2150] ss:$8 sm:$0x70] %vm1884, %v2140
  %s2153 = scalar_lea.vmem [#allocation2], 10
  %v2154 = vld [vmem:[%s2153] ss:$2 sm:$0xff]
  %s2155 = scalar_lea.vmem [#allocation2], 26
  %v2156 = vld [vmem:[%s2155] ss:$2 sm:$0xff]
  %s2157 = scalar_lea.vmem [#allocation2], 42
  %v2158 = vld [vmem:[%s2157] ss:$2 sm:$0xff]
  %2162 = vrot.lane.b32.xlu0 %v2154, 46
  %v2163 = vpop.permute.xlu0 %2162
  %2164 = vrot.lane.b32.xlu0 %v2156, 46
  %v2165 = vpop.permute.xlu0 %2164
  %2166 = vrot.lane.b32.xlu0 %v2158, 46
  %v2167 = vpop.permute.xlu0 %2166
  %v2168 = vrot.slane %v2163, 1
  %v2169 = vrot.slane %v2165, 1
  %v2170 = vrot.slane %v2167, 1
  %v2171 = vsel %vm1903, %v2168, %v2169
  %vm2172 = vcmask 375808
  %v2173 = vsel %vm2172, %v2163, %v2171
  %v2174 = vsel %vm1903, %v2169, %v2170
  %v2175 = vsel %vm2172, %v2165, %v2174
  %v2176 = vsel %vm2172, %v2167, %v2170
  %s2180 = scalar_lea.vmem [#allocation3], 185
  %2181 = vst [vmem:[%s2180] ss:$8 sm:$0xf] %v2173
  %2182 = vst [vmem:[%s2180] ss:$8 sm:$0xf0] %v2173
  %s2183 = scalar_lea.vmem [#allocation3], 249
  %2184 = vst [vmem:[%s2183] ss:$8 sm:$0xf] %v2175
  %2185 = vst [vmem:[%s2183] ss:$8 sm:$0xf0] %v2175
  %s2186 = scalar_lea.vmem [#allocation3], 313
  %2187 = vst.msk [vmem:[%s2186] ss:$8 sm:$0xf] %vm1884, %v2176
  %2188 = vst.msk [vmem:[%s2186] ss:$8 sm:$0x70] %vm1884, %v2176
  %v2189 = vld [vmem:[%s2153] ss:$2 sm:$0xff]
  %v2190 = vld [vmem:[%s2155] ss:$2 sm:$0xff]
  %v2191 = vld [vmem:[%s2157] ss:$2 sm:$0xff]
  %2195 = vrot.lane.b32.xlu0 %v2189, 45
  %v2196 = vpop.permute.xlu0 %2195
  %2197 = vrot.lane.b32.xlu0 %v2190, 45
  %v2198 = vpop.permute.xlu0 %2197
  %2199 = vrot.lane.b32.xlu0 %v2191, 45
  %v2200 = vpop.permute.xlu0 %2199
  %v2201 = vrot.slane %v2196, 1
  %v2202 = vrot.slane %v2198, 1
  %v2203 = vrot.slane %v2200, 1
  %v2204 = vsel %vm1903, %v2201, %v2202
  %vm2205 = vcmask 367616
  %v2206 = vsel %vm2205, %v2196, %v2204
  %v2207 = vsel %vm1903, %v2202, %v2203
  %v2208 = vsel %vm2205, %v2198, %v2207
  %v2209 = vsel %vm2205, %v2200, %v2203
  %s2213 = scalar_lea.vmem [#allocation3], 186
  %2214 = vst [vmem:[%s2213] ss:$8 sm:$0xf] %v2206
  %2215 = vst [vmem:[%s2213] ss:$8 sm:$0xf0] %v2206
  %s2216 = scalar_lea.vmem [#allocation3], 250
  %2217 = vst [vmem:[%s2216] ss:$8 sm:$0xf] %v2208
  %2218 = vst [vmem:[%s2216] ss:$8 sm:$0xf0] %v2208
  %s2219 = scalar_lea.vmem [#allocation3], 314
  %2220 = vst.msk [vmem:[%s2219] ss:$8 sm:$0xf] %vm1884, %v2209
  %2221 = vst.msk [vmem:[%s2219] ss:$8 sm:$0x70] %vm1884, %v2209
  %v2222 = vld [vmem:[%s2153] ss:$2 sm:$0xff]
  %v2223 = vld [vmem:[%s2155] ss:$2 sm:$0xff]
  %v2224 = vld [vmem:[%s2157] ss:$2 sm:$0xff]
  %2228 = vrot.lane.b32.xlu0 %v2222, 44
  %v2229 = vpop.permute.xlu0 %2228
  %2230 = vrot.lane.b32.xlu0 %v2223, 44
  %v2231 = vpop.permute.xlu0 %2230
  %2232 = vrot.lane.b32.xlu0 %v2224, 44
  %v2233 = vpop.permute.xlu0 %2232
  %v2234 = vrot.slane %v2229, 1
  %v2235 = vrot.slane %v2231, 1
  %v2236 = vrot.slane %v2233, 1
  %v2237 = vsel %vm1903, %v2234, %v2235
  %vm2238 = vcmask 359424
  %v2239 = vsel %vm2238, %v2229, %v2237
  %v2240 = vsel %vm1903, %v2235, %v2236
  %v2241 = vsel %vm2238, %v2231, %v2240
  %v2242 = vsel %vm2238, %v2233, %v2236
  %s2246 = scalar_lea.vmem [#allocation3], 187
  %2247 = vst [vmem:[%s2246] ss:$8 sm:$0xf] %v2239
  %2248 = vst [vmem:[%s2246] ss:$8 sm:$0xf0] %v2239
  %s2249 = scalar_lea.vmem [#allocation3], 251
  %2250 = vst [vmem:[%s2249] ss:$8 sm:$0xf] %v2241
  %2251 = vst [vmem:[%s2249] ss:$8 sm:$0xf0] %v2241
  %s2252 = scalar_lea.vmem [#allocation3], 315
  %2253 = vst.msk [vmem:[%s2252] ss:$8 sm:$0xf] %vm1884, %v2242
  %2254 = vst.msk [vmem:[%s2252] ss:$8 sm:$0x70] %vm1884, %v2242
  %v2255 = vld [vmem:[%s2153] ss:$2 sm:$0xff]
  %v2256 = vld [vmem:[%s2155] ss:$2 sm:$0xff]
  %v2257 = vld [vmem:[%s2157] ss:$2 sm:$0xff]
  %2261 = vrot.lane.b32.xlu0 %v2255, 27
  %v2262 = vpop.permute.xlu0 %2261
  %2263 = vrot.lane.b32.xlu0 %v2256, 27
  %v2264 = vpop.permute.xlu0 %2263
  %2265 = vrot.lane.b32.xlu0 %v2257, 27
  %v2266 = vpop.permute.xlu0 %2265
  %v2267 = vrot.slane %v2262, 1
  %v2268 = vrot.slane %v2264, 1
  %v2269 = vrot.slane %v2266, 1
  %v2270 = vsel %vm1903, %v2267, %v2268
  %v2271 = vsel %vm54, %v2262, %v2270
  %v2272 = vsel %vm1903, %v2268, %v2269
  %v2273 = vsel %vm54, %v2264, %v2272
  %v2274 = vsel %vm54, %v2266, %v2269
  %s2278 = scalar_lea.vmem [#allocation3], 188
  %2279 = vst [vmem:[%s2278] ss:$8 sm:$0xf] %v2271
  %2280 = vst [vmem:[%s2278] ss:$8 sm:$0xf0] %v2271
  %s2281 = scalar_lea.vmem [#allocation3], 252
  %2282 = vst [vmem:[%s2281] ss:$8 sm:$0xf] %v2273
  %2283 = vst [vmem:[%s2281] ss:$8 sm:$0xf0] %v2273
  %s2284 = scalar_lea.vmem [#allocation3], 316
  %2285 = vst.msk [vmem:[%s2284] ss:$8 sm:$0xf] %vm1884, %v2274
  %2286 = vst.msk [vmem:[%s2284] ss:$8 sm:$0x70] %vm1884, %v2274
  %v2287 = vld [vmem:[%s2153] ss:$2 sm:$0xff]
  %v2288 = vld [vmem:[%s2155] ss:$2 sm:$0xff]
  %v2289 = vld [vmem:[%s2157] ss:$2 sm:$0xff]
  %2293 = vrot.lane.b32.xlu0 %v2287, 26
  %v2294 = vpop.permute.xlu0 %2293
  %2295 = vrot.lane.b32.xlu0 %v2288, 26
  %v2296 = vpop.permute.xlu0 %2295
  %2297 = vrot.lane.b32.xlu0 %v2289, 26
  %v2298 = vpop.permute.xlu0 %2297
  %v2299 = vrot.slane %v2294, 1
  %v2300 = vrot.slane %v2296, 1
  %v2301 = vrot.slane %v2298, 1
  %v2302 = vsel %vm1903, %v2299, %v2300
  %vm2303 = vcmask 211968
  %v2304 = vsel %vm2303, %v2294, %v2302
  %v2305 = vsel %vm1903, %v2300, %v2301
  %v2306 = vsel %vm2303, %v2296, %v2305
  %v2307 = vsel %vm2303, %v2298, %v2301
  %s2311 = scalar_lea.vmem [#allocation3], 189
  %2312 = vst [vmem:[%s2311] ss:$8 sm:$0xf] %v2304
  %2313 = vst [vmem:[%s2311] ss:$8 sm:$0xf0] %v2304
  %s2314 = scalar_lea.vmem [#allocation3], 253
  %2315 = vst [vmem:[%s2314] ss:$8 sm:$0xf] %v2306
  %2316 = vst [vmem:[%s2314] ss:$8 sm:$0xf0] %v2306
  %s2317 = scalar_lea.vmem [#allocation3], 317
  %2318 = vst.msk [vmem:[%s2317] ss:$8 sm:$0xf] %vm1884, %v2307
  %2319 = vst.msk [vmem:[%s2317] ss:$8 sm:$0x70] %vm1884, %v2307
  %v2320 = vld [vmem:[%s2153] ss:$2 sm:$0xff]
  %v2321 = vld [vmem:[%s2155] ss:$2 sm:$0xff]
  %v2322 = vld [vmem:[%s2157] ss:$2 sm:$0xff]
  %2326 = vrot.lane.b32.xlu0 %v2320, 25
  %v2327 = vpop.permute.xlu0 %2326
  %2328 = vrot.lane.b32.xlu0 %v2321, 25
  %v2329 = vpop.permute.xlu0 %2328
  %2330 = vrot.lane.b32.xlu0 %v2322, 25
  %v2331 = vpop.permute.xlu0 %2330
  %v2332 = vrot.slane %v2327, 1
  %v2333 = vrot.slane %v2329, 1
  %v2334 = vrot.slane %v2331, 1
  %v2335 = vsel %vm1903, %v2332, %v2333
  %vm2336 = vcmask 203776
  %v2337 = vsel %vm2336, %v2327, %v2335
  %v2338 = vsel %vm1903, %v2333, %v2334
  %v2339 = vsel %vm2336, %v2329, %v2338
  %v2340 = vsel %vm2336, %v2331, %v2334
  %s2344 = scalar_lea.vmem [#allocation3], 190
  %2345 = vst [vmem:[%s2344] ss:$8 sm:$0xf] %v2337
  %2346 = vst [vmem:[%s2344] ss:$8 sm:$0xf0] %v2337
  %s2347 = scalar_lea.vmem [#allocation3], 254
  %2348 = vst [vmem:[%s2347] ss:$8 sm:$0xf] %v2339
  %2349 = vst [vmem:[%s2347] ss:$8 sm:$0xf0] %v2339
  %s2350 = scalar_lea.vmem [#allocation3], 318
  %2351 = vst.msk [vmem:[%s2350] ss:$8 sm:$0xf] %vm1884, %v2340
  %2352 = vst.msk [vmem:[%s2350] ss:$8 sm:$0x70] %vm1884, %v2340
  %v2353 = vld [vmem:[%s2153] ss:$2 sm:$0xff]
  %v2354 = vld [vmem:[%s2155] ss:$2 sm:$0xff]
  %v2355 = vld [vmem:[%s2157] ss:$2 sm:$0xff]
  %2359 = vrot.lane.b32.xlu0 %v2353, 8
  %v2360 = vpop.permute.xlu0 %2359
  %2361 = vrot.lane.b32.xlu0 %v2354, 8
  %v2362 = vpop.permute.xlu0 %2361
  %2363 = vrot.lane.b32.xlu0 %v2355, 8
  %v2364 = vpop.permute.xlu0 %2363
  %v2365 = vrot.slane %v2360, 1
  %v2366 = vrot.slane %v2362, 1
  %v2367 = vrot.slane %v2364, 1
  %v2368 = vsel %vm1903, %v2365, %v2366
  %vm2369 = vcmask 64512
  %v2370 = vsel %vm2369, %v2360, %v2368
  %v2371 = vsel %vm1903, %v2366, %v2367
  %v2372 = vsel %vm2369, %v2362, %v2371
  %v2373 = vsel %vm2369, %v2364, %v2367
  %s2377 = scalar_lea.vmem [#allocation3], 191
  %2378 = vst [vmem:[%s2377] ss:$8 sm:$0xf] %v2370
  %2379 = vst [vmem:[%s2377] ss:$8 sm:$0xf0] %v2370
  %s2380 = scalar_lea.vmem [#allocation3], 255
  %2381 = vst [vmem:[%s2380] ss:$8 sm:$0xf] %v2372
  %2382 = vst [vmem:[%s2380] ss:$8 sm:$0xf0] %v2372
  %s2383 = scalar_lea.vmem [#allocation3], 319
  %2384 = vst.msk [vmem:[%s2383] ss:$8 sm:$0xf] %vm1884, %v2373
  %2385 = vst.msk [vmem:[%s2383] ss:$8 sm:$0x70] %vm1884, %v2373
  %v2386 = vld [vmem:[%s2153] ss:$2 sm:$0xff]
  %v2387 = vld [vmem:[%s2155] ss:$2 sm:$0xff]
  %v2388 = vld [vmem:[%s2157] ss:$2 sm:$0xff]
  %2392 = vrot.lane.b32.xlu0 %v2386, 7
  %v2393 = vpop.permute.xlu0 %2392
  %2394 = vrot.lane.b32.xlu0 %v2387, 7
  %v2395 = vpop.permute.xlu0 %2394
  %2396 = vrot.lane.b32.xlu0 %v2388, 7
  %v2397 = vpop.permute.xlu0 %2396
  %v2398 = vrot.slane %v2393, 1
  %v2399 = vrot.slane %v2395, 1
  %v2400 = vrot.slane %v2397, 1
  %v2401 = vsel %vm1903, %v2398, %v2399
  %vm2402 = vcmask 56320
  %v2403 = vsel %vm2402, %v2393, %v2401
  %v2404 = vsel %vm1903, %v2399, %v2400
  %v2405 = vsel %vm2402, %v2395, %v2404
  %v2406 = vsel %vm2402, %v2397, %v2400
  %s2410 = scalar_lea.vmem [#allocation3], 368
  %2411 = vst [vmem:[%s2410] ss:$8 sm:$0xf] %v2403
  %2412 = vst [vmem:[%s2410] ss:$8 sm:$0xf0] %v2403
  %s2413 = scalar_lea.vmem [#allocation3], 432
  %2414 = vst [vmem:[%s2413] ss:$8 sm:$0xf] %v2405
  %2415 = vst [vmem:[%s2413] ss:$8 sm:$0xf0] %v2405
  %s2416 = scalar_lea.vmem [#allocation3], 496
  %2417 = vst.msk [vmem:[%s2416] ss:$8 sm:$0xf] %vm1884, %v2406
  %2418 = vst.msk [vmem:[%s2416] ss:$8 sm:$0x70] %vm1884, %v2406
  %v2419 = vld [vmem:[%s2153] ss:$2 sm:$0xff]
  %v2420 = vld [vmem:[%s2155] ss:$2 sm:$0xff]
  %v2421 = vld [vmem:[%s2157] ss:$2 sm:$0xff]
  %2425 = vrot.lane.b32.xlu0 %v2419, 6
  %v2426 = vpop.permute.xlu0 %2425
  %2427 = vrot.lane.b32.xlu0 %v2420, 6
  %v2428 = vpop.permute.xlu0 %2427
  %2429 = vrot.lane.b32.xlu0 %v2421, 6
  %v2430 = vpop.permute.xlu0 %2429
  %v2431 = vrot.slane %v2426, 1
  %v2432 = vrot.slane %v2428, 1
  %v2433 = vrot.slane %v2430, 1
  %v2434 = vsel %vm1903, %v2431, %v2432
  %vm2435 = vcmask 48128
  %v2436 = vsel %vm2435, %v2426, %v2434
  %v2437 = vsel %vm1903, %v2432, %v2433
  %v2438 = vsel %vm2435, %v2428, %v2437
  %v2439 = vsel %vm2435, %v2430, %v2433
  %s2443 = scalar_lea.vmem [#allocation3], 369
  %2444 = vst [vmem:[%s2443] ss:$8 sm:$0xf] %v2436
  %2445 = vst [vmem:[%s2443] ss:$8 sm:$0xf0] %v2436
  %s2446 = scalar_lea.vmem [#allocation3], 433
  %2447 = vst [vmem:[%s2446] ss:$8 sm:$0xf] %v2438
  %2448 = vst [vmem:[%s2446] ss:$8 sm:$0xf0] %v2438
  %s2449 = scalar_lea.vmem [#allocation3], 497
  %2450 = vst.msk [vmem:[%s2449] ss:$8 sm:$0xf] %vm1884, %v2439
  %2451 = vst.msk [vmem:[%s2449] ss:$8 sm:$0x70] %vm1884, %v2439
  %v2452 = vld [vmem:[%s1826] ss:$2 sm:$0xff]
  %s2453 = scalar_lea.vmem [#allocation2], 38
  %v2454 = vld [vmem:[%s2453] ss:$2 sm:$0xff]
  %s2455 = scalar_lea.vmem [#allocation2], 54
  %v2456 = vld [vmem:[%s2455] ss:$2 sm:$0x7f]
  %2460 = vrot.lane.b32.xlu0 %v2452, 92
  %v2461 = vpop.permute.xlu0 %2460
  %2462 = vrot.lane.b32.xlu0 %v2454, 92
  %v2463 = vpop.permute.xlu0 %2462
  %2464 = vrot.lane.b32.xlu0 %v2456, 92
  %v2465 = vpop.permute.xlu0 %2464
  %v2466 = vrot.slane %v2461, 1
  %v2467 = vrot.slane %v2463, 1
  %v2468 = vrot.slane %v2465, 1
  %v2469 = vsel %vm1903, %v2466, %v2467
  %vm2470 = vcmask 752640
  %v2471 = vsel %vm2470, %v2461, %v2469
  %v2472 = vsel %vm1903, %v2467, %v2468
  %v2473 = vsel %vm2470, %v2463, %v2472
  %v2474 = vsel %vm2470, %v2465, %v2468
  %s2478 = scalar_lea.vmem [#allocation3], 370
  %2479 = vst [vmem:[%s2478] ss:$8 sm:$0xf] %v2471
  %2480 = vst [vmem:[%s2478] ss:$8 sm:$0xf0] %v2471
  %s2481 = scalar_lea.vmem [#allocation3], 434
  %2482 = vst [vmem:[%s2481] ss:$8 sm:$0xf] %v2473
  %2483 = vst [vmem:[%s2481] ss:$8 sm:$0xf0] %v2473
  %s2484 = scalar_lea.vmem [#allocation3], 498
  %2485 = vst.msk [vmem:[%s2484] ss:$8 sm:$0xf] %vm1884, %v2474
  %2486 = vst.msk [vmem:[%s2484] ss:$8 sm:$0x70] %vm1884, %v2474
  %v2487 = vld [vmem:[%s1826] ss:$2 sm:$0xff]
  %v2488 = vld [vmem:[%s2453] ss:$2 sm:$0xff]
  %v2489 = vld [vmem:[%s2455] ss:$2 sm:$0x7f]
  %2493 = vrot.lane.b32.xlu0 %v2487, 91
  %v2494 = vpop.permute.xlu0 %2493
  %2495 = vrot.lane.b32.xlu0 %v2488, 91
  %v2496 = vpop.permute.xlu0 %2495
  %2497 = vrot.lane.b32.xlu0 %v2489, 91
  %v2498 = vpop.permute.xlu0 %2497
  %v2499 = vrot.slane %v2494, 1
  %v2500 = vrot.slane %v2496, 1
  %v2501 = vrot.slane %v2498, 1
  %v2502 = vsel %vm1903, %v2499, %v2500
  %vm2503 = vcmask 744448
  %v2504 = vsel %vm2503, %v2494, %v2502
  %v2505 = vsel %vm1903, %v2500, %v2501
  %v2506 = vsel %vm2503, %v2496, %v2505
  %v2507 = vsel %vm2503, %v2498, %v2501
  %s2511 = scalar_lea.vmem [#allocation3], 371
  %2512 = vst [vmem:[%s2511] ss:$8 sm:$0xf] %v2504
  %2513 = vst [vmem:[%s2511] ss:$8 sm:$0xf0] %v2504
  %s2514 = scalar_lea.vmem [#allocation3], 435
  %2515 = vst [vmem:[%s2514] ss:$8 sm:$0xf] %v2506
  %2516 = vst [vmem:[%s2514] ss:$8 sm:$0xf0] %v2506
  %s2517 = scalar_lea.vmem [#allocation3], 499
  %2518 = vst.msk [vmem:[%s2517] ss:$8 sm:$0xf] %vm1884, %v2507
  %2519 = vst.msk [vmem:[%s2517] ss:$8 sm:$0x70] %vm1884, %v2507
  %v2520 = vld [vmem:[%s1826] ss:$2 sm:$0xff]
  %v2521 = vld [vmem:[%s2453] ss:$2 sm:$0xff]
  %v2522 = vld [vmem:[%s2455] ss:$2 sm:$0x7f]
  %2526 = vrot.lane.b32.xlu0 %v2520, 90
  %v2527 = vpop.permute.xlu0 %2526
  %2528 = vrot.lane.b32.xlu0 %v2521, 90
  %v2529 = vpop.permute.xlu0 %2528
  %2530 = vrot.lane.b32.xlu0 %v2522, 90
  %v2531 = vpop.permute.xlu0 %2530
  %v2532 = vrot.slane %v2527, 1
  %v2533 = vrot.slane %v2529, 1
  %v2534 = vrot.slane %v2531, 1
  %v2535 = vsel %vm1903, %v2532, %v2533
  %v2536 = vsel %vm2070, %v2527, %v2535
  %v2537 = vsel %vm1903, %v2533, %v2534
  %v2538 = vsel %vm2070, %v2529, %v2537
  %v2539 = vsel %vm2070, %v2531, %v2534
  %s2543 = scalar_lea.vmem [#allocation3], 372
  %2544 = vst [vmem:[%s2543] ss:$8 sm:$0xf] %v2536
  %2545 = vst [vmem:[%s2543] ss:$8 sm:$0xf0] %v2536
  %s2546 = scalar_lea.vmem [#allocation3], 436
  %2547 = vst [vmem:[%s2546] ss:$8 sm:$0xf] %v2538
  %2548 = vst [vmem:[%s2546] ss:$8 sm:$0xf0] %v2538
  %s2549 = scalar_lea.vmem [#allocation3], 500
  %2550 = vst.msk [vmem:[%s2549] ss:$8 sm:$0xf] %vm1884, %v2539
  %2551 = vst.msk [vmem:[%s2549] ss:$8 sm:$0x70] %vm1884, %v2539
  %v2552 = vld [vmem:[%s1826] ss:$2 sm:$0xff]
  %v2553 = vld [vmem:[%s2453] ss:$2 sm:$0xff]
  %v2554 = vld [vmem:[%s2455] ss:$2 sm:$0x7f]
  %2558 = vrot.lane.b32.xlu0 %v2552, 73
  %v2559 = vpop.permute.xlu0 %2558
  %2560 = vrot.lane.b32.xlu0 %v2553, 73
  %v2561 = vpop.permute.xlu0 %2560
  %2562 = vrot.lane.b32.xlu0 %v2554, 73
  %v2563 = vpop.permute.xlu0 %2562
  %v2564 = vrot.slane %v2559, 1
  %v2565 = vrot.slane %v2561, 1
  %v2566 = vrot.slane %v2563, 1
  %v2567 = vsel %vm1903, %v2564, %v2565
  %vm2568 = vcmask 596992
  %v2569 = vsel %vm2568, %v2559, %v2567
  %v2570 = vsel %vm1903, %v2565, %v2566
  %v2571 = vsel %vm2568, %v2561, %v2570
  %v2572 = vsel %vm2568, %v2563, %v2566
  %s2576 = scalar_lea.vmem [#allocation3], 373
  %2577 = vst [vmem:[%s2576] ss:$8 sm:$0xf] %v2569
  %2578 = vst [vmem:[%s2576] ss:$8 sm:$0xf0] %v2569
  %s2579 = scalar_lea.vmem [#allocation3], 437
  %2580 = vst [vmem:[%s2579] ss:$8 sm:$0xf] %v2571
  %2581 = vst [vmem:[%s2579] ss:$8 sm:$0xf0] %v2571
  %s2582 = scalar_lea.vmem [#allocation3], 501
  %2583 = vst.msk [vmem:[%s2582] ss:$8 sm:$0xf] %vm1884, %v2572
  %2584 = vst.msk [vmem:[%s2582] ss:$8 sm:$0x70] %vm1884, %v2572
  %v2585 = vld [vmem:[%s1826] ss:$2 sm:$0xff]
  %v2586 = vld [vmem:[%s2453] ss:$2 sm:$0xff]
  %v2587 = vld [vmem:[%s2455] ss:$2 sm:$0xff]
  %2591 = vrot.lane.b32.xlu0 %v2585, 72
  %v2592 = vpop.permute.xlu0 %2591
  %2593 = vrot.lane.b32.xlu0 %v2586, 72
  %v2594 = vpop.permute.xlu0 %2593
  %2595 = vrot.lane.b32.xlu0 %v2587, 72
  %v2596 = vpop.permute.xlu0 %2595
  %v2597 = vrot.slane %v2592, 1
  %v2598 = vrot.slane %v2594, 1
  %v2599 = vrot.slane %v2596, 1
  %v2600 = vsel %vm1903, %v2597, %v2598
  %vm2601 = vcmask 588800
  %v2602 = vsel %vm2601, %v2592, %v2600
  %v2603 = vsel %vm1903, %v2598, %v2599
  %v2604 = vsel %vm2601, %v2594, %v2603
  %v2605 = vsel %vm2601, %v2596, %v2599
  %s2609 = scalar_lea.vmem [#allocation3], 374
  %2610 = vst [vmem:[%s2609] ss:$8 sm:$0xf] %v2602
  %2611 = vst [vmem:[%s2609] ss:$8 sm:$0xf0] %v2602
  %s2612 = scalar_lea.vmem [#allocation3], 438
  %2613 = vst [vmem:[%s2612] ss:$8 sm:$0xf] %v2604
  %2614 = vst [vmem:[%s2612] ss:$8 sm:$0xf0] %v2604
  %s2615 = scalar_lea.vmem [#allocation3], 502
  %2616 = vst.msk [vmem:[%s2615] ss:$8 sm:$0xf] %vm1884, %v2605
  %2617 = vst.msk [vmem:[%s2615] ss:$8 sm:$0x70] %vm1884, %v2605
  %v2618 = vld [vmem:[%s1826] ss:$2 sm:$0xff]
  %v2619 = vld [vmem:[%s2453] ss:$2 sm:$0xff]
  %v2620 = vld [vmem:[%s2455] ss:$2 sm:$0xff]
  %2624 = vrot.lane.b32.xlu0 %v2618, 71
  %v2625 = vpop.permute.xlu0 %2624
  %2626 = vrot.lane.b32.xlu0 %v2619, 71
  %v2627 = vpop.permute.xlu0 %2626
  %2628 = vrot.lane.b32.xlu0 %v2620, 71
  %v2629 = vpop.permute.xlu0 %2628
  %v2630 = vrot.slane %v2625, 1
  %v2631 = vrot.slane %v2627, 1
  %v2632 = vrot.slane %v2629, 1
  %v2633 = vsel %vm1903, %v2630, %v2631
  %vm2634 = vcmask 580608
  %v2635 = vsel %vm2634, %v2625, %v2633
  %v2636 = vsel %vm1903, %v2631, %v2632
  %v2637 = vsel %vm2634, %v2627, %v2636
  %v2638 = vsel %vm2634, %v2629, %v2632
  %s2642 = scalar_lea.vmem [#allocation3], 375
  %2643 = vst [vmem:[%s2642] ss:$8 sm:$0xf] %v2635
  %2644 = vst [vmem:[%s2642] ss:$8 sm:$0xf0] %v2635
  %s2645 = scalar_lea.vmem [#allocation3], 439
  %2646 = vst [vmem:[%s2645] ss:$8 sm:$0xf] %v2637
  %2647 = vst [vmem:[%s2645] ss:$8 sm:$0xf0] %v2637
  %s2648 = scalar_lea.vmem [#allocation3], 503
  %2649 = vst.msk [vmem:[%s2648] ss:$8 sm:$0xf] %vm1884, %v2638
  %2650 = vst.msk [vmem:[%s2648] ss:$8 sm:$0x70] %vm1884, %v2638
  %v2651 = vld [vmem:[%s1826] ss:$2 sm:$0xff]
  %v2652 = vld [vmem:[%s2453] ss:$2 sm:$0xff]
  %v2653 = vld [vmem:[%s2455] ss:$2 sm:$0xff]
  %2657 = vrot.lane.b32.xlu0 %v2651, 54
  %v2658 = vpop.permute.xlu0 %2657
  %2659 = vrot.lane.b32.xlu0 %v2652, 54
  %v2660 = vpop.permute.xlu0 %2659
  %2661 = vrot.lane.b32.xlu0 %v2653, 54
  %v2662 = vpop.permute.xlu0 %2661
  %v2663 = vrot.slane %v2658, 1
  %v2664 = vrot.slane %v2660, 1
  %v2665 = vrot.slane %v2662, 1
  %v2666 = vsel %vm1903, %v2663, %v2664
  %vm2667 = vcmask 441344
  %v2668 = vsel %vm2667, %v2658, %v2666
  %v2669 = vsel %vm1903, %v2664, %v2665
  %v2670 = vsel %vm2667, %v2660, %v2669
  %v2671 = vsel %vm2667, %v2662, %v2665
  %s2675 = scalar_lea.vmem [#allocation3], 552
  %2676 = vst [vmem:[%s2675] ss:$8 sm:$0xf] %v2668
  %2677 = vst [vmem:[%s2675] ss:$8 sm:$0xf0] %v2668
  %s2678 = scalar_lea.vmem [#allocation3], 616
  %2679 = vst [vmem:[%s2678] ss:$8 sm:$0xf] %v2670
  %2680 = vst [vmem:[%s2678] ss:$8 sm:$0xf0] %v2670
  %s2681 = scalar_lea.vmem [#allocation3], 680
  %2682 = vst.msk [vmem:[%s2681] ss:$8 sm:$0xf] %vm1884, %v2671
  %2683 = vst.msk [vmem:[%s2681] ss:$8 sm:$0x70] %vm1884, %v2671
  %v2684 = vld [vmem:[%s1826] ss:$2 sm:$0xff]
  %v2685 = vld [vmem:[%s2453] ss:$2 sm:$0xff]
  %v2686 = vld [vmem:[%s2455] ss:$2 sm:$0xff]
  %2690 = vrot.lane.b32.xlu0 %v2684, 53
  %v2691 = vpop.permute.xlu0 %2690
  %2692 = vrot.lane.b32.xlu0 %v2685, 53
  %v2693 = vpop.permute.xlu0 %2692
  %2694 = vrot.lane.b32.xlu0 %v2686, 53
  %v2695 = vpop.permute.xlu0 %2694
  %v2696 = vrot.slane %v2691, 1
  %v2697 = vrot.slane %v2693, 1
  %v2698 = vrot.slane %v2695, 1
  %v2699 = vsel %vm1903, %v2696, %v2697
  %vm2700 = vcmask 433152
  %v2701 = vsel %vm2700, %v2691, %v2699
  %v2702 = vsel %vm1903, %v2697, %v2698
  %v2703 = vsel %vm2700, %v2693, %v2702
  %v2704 = vsel %vm2700, %v2695, %v2698
  %s2708 = scalar_lea.vmem [#allocation3], 553
  %2709 = vst [vmem:[%s2708] ss:$8 sm:$0xf] %v2701
  %2710 = vst [vmem:[%s2708] ss:$8 sm:$0xf0] %v2701
  %s2711 = scalar_lea.vmem [#allocation3], 617
  %2712 = vst [vmem:[%s2711] ss:$8 sm:$0xf] %v2703
  %2713 = vst [vmem:[%s2711] ss:$8 sm:$0xf0] %v2703
  %s2714 = scalar_lea.vmem [#allocation3], 681
  %2715 = vst.msk [vmem:[%s2714] ss:$8 sm:$0xf] %vm1884, %v2704
  %2716 = vst.msk [vmem:[%s2714] ss:$8 sm:$0x70] %vm1884, %v2704
  %v2717 = vld [vmem:[%s1826] ss:$2 sm:$0xff]
  %v2718 = vld [vmem:[%s2453] ss:$2 sm:$0xff]
  %v2719 = vld [vmem:[%s2455] ss:$2 sm:$0xff]
  %2723 = vrot.lane.b32.xlu0 %v2717, 52
  %v2724 = vpop.permute.xlu0 %2723
  %2725 = vrot.lane.b32.xlu0 %v2718, 52
  %v2726 = vpop.permute.xlu0 %2725
  %2727 = vrot.lane.b32.xlu0 %v2719, 52
  %v2728 = vpop.permute.xlu0 %2727
  %v2729 = vrot.slane %v2724, 1
  %v2730 = vrot.slane %v2726, 1
  %v2731 = vrot.slane %v2728, 1
  %v2732 = vsel %vm1903, %v2729, %v2730
  %vm2733 = vcmask 424960
  %v2734 = vsel %vm2733, %v2724, %v2732
  %v2735 = vsel %vm1903, %v2730, %v2731
  %v2736 = vsel %vm2733, %v2726, %v2735
  %v2737 = vsel %vm2733, %v2728, %v2731
  %s2741 = scalar_lea.vmem [#allocation3], 554
  %2742 = vst [vmem:[%s2741] ss:$8 sm:$0xf] %v2734
  %2743 = vst [vmem:[%s2741] ss:$8 sm:$0xf0] %v2734
  %s2744 = scalar_lea.vmem [#allocation3], 618
  %2745 = vst [vmem:[%s2744] ss:$8 sm:$0xf] %v2736
  %2746 = vst [vmem:[%s2744] ss:$8 sm:$0xf0] %v2736
  %s2747 = scalar_lea.vmem [#allocation3], 682
  %2748 = vst.msk [vmem:[%s2747] ss:$8 sm:$0xf] %vm1884, %v2737
  %2749 = vst.msk [vmem:[%s2747] ss:$8 sm:$0x70] %vm1884, %v2737
  %s2750 = scalar_lea.vmem [#allocation2], 1
  %v2751 = vld [vmem:[%s2750] ss:$2 sm:$0xff]
  %s2752 = scalar_lea.vmem [#allocation2], 17
  %v2753 = vld [vmem:[%s2752] ss:$2 sm:$0xff]
  %s2754 = scalar_lea.vmem [#allocation2], 33
  %v2755 = vld [vmem:[%s2754] ss:$2 sm:$0x7f]
  %s2756 = scalar_lea.vmem [#allocation3], 555
  %2757 = vst [vmem:[%s2756] ss:$8 sm:$0xf] %v2751
  %2758 = vst [vmem:[%s2756] ss:$8 sm:$0xf0] %v2751
  %s2759 = scalar_lea.vmem [#allocation3], 619
  %2760 = vst [vmem:[%s2759] ss:$8 sm:$0xf] %v2753
  %2761 = vst [vmem:[%s2759] ss:$8 sm:$0xf0] %v2753
  %s2762 = scalar_lea.vmem [#allocation3], 683
  %2763 = vst.msk [vmem:[%s2762] ss:$8 sm:$0xf] %vm1884, %v2755
  %2764 = vst.msk [vmem:[%s2762] ss:$8 sm:$0x70] %vm1884, %v2755
  %v2765 = vld [vmem:[%s2750] ss:$2 sm:$0xff]
  %v2766 = vld [vmem:[%s2752] ss:$2 sm:$0xff]
  %v2767 = vld [vmem:[%s2754] ss:$2 sm:$0x7f]
  %2771 = vrot.lane.b32.xlu0 %v2765, 127
  %v2772 = vpop.permute.xlu0 %2771
  %2773 = vrot.lane.b32.xlu0 %v2766, 127
  %v2774 = vpop.permute.xlu0 %2773
  %2775 = vrot.lane.b32.xlu0 %v2767, 127
  %v2776 = vpop.permute.xlu0 %2775
  %v2777 = vrot.slane %v2772, 1
  %v2778 = vrot.slane %v2774, 1
  %v2779 = vrot.slane %v2776, 1
  %v2780 = vsel %vm1903, %v2777, %v2778
  %v2781 = vsel %vm1905, %v2772, %v2780
  %v2782 = vsel %vm1903, %v2778, %v2779
  %v2783 = vsel %vm1905, %v2774, %v2782
  %v2784 = vsel %vm1905, %v2776, %v2779
  %s2788 = scalar_lea.vmem [#allocation3], 556
  %2789 = vst [vmem:[%s2788] ss:$8 sm:$0xf] %v2781
  %2790 = vst [vmem:[%s2788] ss:$8 sm:$0xf0] %v2781
  %s2791 = scalar_lea.vmem [#allocation3], 620
  %2792 = vst [vmem:[%s2791] ss:$8 sm:$0xf] %v2783
  %2793 = vst [vmem:[%s2791] ss:$8 sm:$0xf0] %v2783
  %s2794 = scalar_lea.vmem [#allocation3], 684
  %2795 = vst.msk [vmem:[%s2794] ss:$8 sm:$0xf] %vm1884, %v2784
  %2796 = vst.msk [vmem:[%s2794] ss:$8 sm:$0x70] %vm1884, %v2784
  %v2797 = vld [vmem:[%s2750] ss:$2 sm:$0xff]
  %v2798 = vld [vmem:[%s2752] ss:$2 sm:$0xff]
  %v2799 = vld [vmem:[%s2754] ss:$2 sm:$0x7f]
  %2803 = vrot.lane.b32.xlu0 %v2797, 126
  %v2804 = vpop.permute.xlu0 %2803
  %2805 = vrot.lane.b32.xlu0 %v2798, 126
  %v2806 = vpop.permute.xlu0 %2805
  %2807 = vrot.lane.b32.xlu0 %v2799, 126
  %v2808 = vpop.permute.xlu0 %2807
  %v2809 = vrot.slane %v2804, 1
  %v2810 = vrot.slane %v2806, 1
  %v2811 = vrot.slane %v2808, 1
  %v2812 = vsel %vm1903, %v2809, %v2810
  %v2813 = vsel %vm1938, %v2804, %v2812
  %v2814 = vsel %vm1903, %v2810, %v2811
  %v2815 = vsel %vm1938, %v2806, %v2814
  %v2816 = vsel %vm1938, %v2808, %v2811
  %s2820 = scalar_lea.vmem [#allocation3], 557
  %2821 = vst [vmem:[%s2820] ss:$8 sm:$0xf] %v2813
  %2822 = vst [vmem:[%s2820] ss:$8 sm:$0xf0] %v2813
  %s2823 = scalar_lea.vmem [#allocation3], 621
  %2824 = vst [vmem:[%s2823] ss:$8 sm:$0xf] %v2815
  %2825 = vst [vmem:[%s2823] ss:$8 sm:$0xf0] %v2815
  %s2826 = scalar_lea.vmem [#allocation3], 685
  %2827 = vst.msk [vmem:[%s2826] ss:$8 sm:$0xf] %vm1884, %v2816
  %2828 = vst.msk [vmem:[%s2826] ss:$8 sm:$0x70] %vm1884, %v2816
  %v2829 = vld [vmem:[%s2750] ss:$2 sm:$0xff]
  %v2830 = vld [vmem:[%s2752] ss:$2 sm:$0xff]
  %v2831 = vld [vmem:[%s2754] ss:$2 sm:$0x7f]
  %2835 = vrot.lane.b32.xlu0 %v2829, 109
  %v2836 = vpop.permute.xlu0 %2835
  %2837 = vrot.lane.b32.xlu0 %v2830, 109
  %v2838 = vpop.permute.xlu0 %2837
  %2839 = vrot.lane.b32.xlu0 %v2831, 109
  %v2840 = vpop.permute.xlu0 %2839
  %v2841 = vrot.slane %v2836, 1
  %v2842 = vrot.slane %v2838, 1
  %v2843 = vrot.slane %v2840, 1
  %v2844 = vsel %vm1903, %v2841, %v2842
  %v2845 = vsel %vm1971, %v2836, %v2844
  %v2846 = vsel %vm1903, %v2842, %v2843
  %v2847 = vsel %vm1971, %v2838, %v2846
  %v2848 = vsel %vm1971, %v2840, %v2843
  %s2852 = scalar_lea.vmem [#allocation3], 558
  %2853 = vst [vmem:[%s2852] ss:$8 sm:$0xf] %v2845
  %2854 = vst [vmem:[%s2852] ss:$8 sm:$0xf0] %v2845
  %s2855 = scalar_lea.vmem [#allocation3], 622
  %2856 = vst [vmem:[%s2855] ss:$8 sm:$0xf] %v2847
  %2857 = vst [vmem:[%s2855] ss:$8 sm:$0xf0] %v2847
  %s2858 = scalar_lea.vmem [#allocation3], 686
  %2859 = vst.msk [vmem:[%s2858] ss:$8 sm:$0xf] %vm1884, %v2848
  %2860 = vst.msk [vmem:[%s2858] ss:$8 sm:$0x70] %vm1884, %v2848
  %v2861 = vld [vmem:[%s2750] ss:$2 sm:$0xff]
  %v2862 = vld [vmem:[%s2752] ss:$2 sm:$0xff]
  %v2863 = vld [vmem:[%s2754] ss:$2 sm:$0x7f]
  %2867 = vrot.lane.b32.xlu0 %v2861, 108
  %v2868 = vpop.permute.xlu0 %2867
  %2869 = vrot.lane.b32.xlu0 %v2862, 108
  %v2870 = vpop.permute.xlu0 %2869
  %2871 = vrot.lane.b32.xlu0 %v2863, 108
  %v2872 = vpop.permute.xlu0 %2871
  %v2873 = vrot.slane %v2868, 1
  %v2874 = vrot.slane %v2870, 1
  %v2875 = vrot.slane %v2872, 1
  %v2876 = vsel %vm1903, %v2873, %v2874
  %v2877 = vsel %vm2004, %v2868, %v2876
  %v2878 = vsel %vm1903, %v2874, %v2875
  %v2879 = vsel %vm2004, %v2870, %v2878
  %v2880 = vsel %vm2004, %v2872, %v2875
  %s2884 = scalar_lea.vmem [#allocation3], 559
  %2885 = vst [vmem:[%s2884] ss:$8 sm:$0xf] %v2877
  %2886 = vst [vmem:[%s2884] ss:$8 sm:$0xf0] %v2877
  %s2887 = scalar_lea.vmem [#allocation3], 623
  %2888 = vst [vmem:[%s2887] ss:$8 sm:$0xf] %v2879
  %2889 = vst [vmem:[%s2887] ss:$8 sm:$0xf0] %v2879
  %s2890 = scalar_lea.vmem [#allocation3], 687
  %2891 = vst.msk [vmem:[%s2890] ss:$8 sm:$0xf] %vm1884, %v2880
  %2892 = vst.msk [vmem:[%s2890] ss:$8 sm:$0x70] %vm1884, %v2880
  %v2893 = vld [vmem:[%s2750] ss:$2 sm:$0xff]
  %v2894 = vld [vmem:[%s2752] ss:$2 sm:$0xff]
  %v2895 = vld [vmem:[%s2754] ss:$2 sm:$0x7f]
  %2899 = vrot.lane.b32.xlu0 %v2893, 107
  %v2900 = vpop.permute.xlu0 %2899
  %2901 = vrot.lane.b32.xlu0 %v2894, 107
  %v2902 = vpop.permute.xlu0 %2901
  %2903 = vrot.lane.b32.xlu0 %v2895, 107
  %v2904 = vpop.permute.xlu0 %2903
  %v2905 = vrot.slane %v2900, 1
  %v2906 = vrot.slane %v2902, 1
  %v2907 = vrot.slane %v2904, 1
  %v2908 = vsel %vm1903, %v2905, %v2906
  %v2909 = vsel %vm2037, %v2900, %v2908
  %v2910 = vsel %vm1903, %v2906, %v2907
  %v2911 = vsel %vm2037, %v2902, %v2910
  %v2912 = vsel %vm2037, %v2904, %v2907
  %s2916 = scalar_lea.vmem [#allocation3], 736
  %2917 = vst [vmem:[%s2916] ss:$8 sm:$0xf] %v2909
  %2918 = vst [vmem:[%s2916] ss:$8 sm:$0xf0] %v2909
  %s2919 = scalar_lea.vmem [#allocation3], 800
  %2920 = vst [vmem:[%s2919] ss:$8 sm:$0xf] %v2911
  %2921 = vst [vmem:[%s2919] ss:$8 sm:$0xf0] %v2911
  %s2922 = scalar_lea.vmem [#allocation3], 864
  %2923 = vst.msk [vmem:[%s2922] ss:$8 sm:$0xf] %vm1884, %v2912
  %2924 = vst.msk [vmem:[%s2922] ss:$8 sm:$0x70] %vm1884, %v2912
  %v2925 = vld [vmem:[%s2750] ss:$2 sm:$0xff]
  %v2926 = vld [vmem:[%s2752] ss:$2 sm:$0xff]
  %v2927 = vld [vmem:[%s2754] ss:$2 sm:$0x7f]
  %2931 = vrot.lane.b32.xlu0 %v2925, 90
  %v2932 = vpop.permute.xlu0 %2931
  %2933 = vrot.lane.b32.xlu0 %v2926, 90
  %v2934 = vpop.permute.xlu0 %2933
  %2935 = vrot.lane.b32.xlu0 %v2927, 90
  %v2936 = vpop.permute.xlu0 %2935
  %v2937 = vrot.slane %v2932, 1
  %v2938 = vrot.slane %v2934, 1
  %v2939 = vrot.slane %v2936, 1
  %v2940 = vsel %vm1903, %v2937, %v2938
  %v2941 = vsel %vm2070, %v2932, %v2940
  %v2942 = vsel %vm1903, %v2938, %v2939
  %v2943 = vsel %vm2070, %v2934, %v2942
  %v2944 = vsel %vm2070, %v2936, %v2939
  %s2948 = scalar_lea.vmem [#allocation3], 737
  %2949 = vst [vmem:[%s2948] ss:$8 sm:$0xf] %v2941
  %2950 = vst [vmem:[%s2948] ss:$8 sm:$0xf0] %v2941
  %s2951 = scalar_lea.vmem [#allocation3], 801
  %2952 = vst [vmem:[%s2951] ss:$8 sm:$0xf] %v2943
  %2953 = vst [vmem:[%s2951] ss:$8 sm:$0xf0] %v2943
  %s2954 = scalar_lea.vmem [#allocation3], 865
  %2955 = vst.msk [vmem:[%s2954] ss:$8 sm:$0xf] %vm1884, %v2944
  %2956 = vst.msk [vmem:[%s2954] ss:$8 sm:$0x70] %vm1884, %v2944
  %v2957 = vld [vmem:[%s2750] ss:$2 sm:$0xff]
  %v2958 = vld [vmem:[%s2752] ss:$2 sm:$0xff]
  %v2959 = vld [vmem:[%s2754] ss:$2 sm:$0x7f]
  %2963 = vrot.lane.b32.xlu0 %v2957, 89
  %v2964 = vpop.permute.xlu0 %2963
  %2965 = vrot.lane.b32.xlu0 %v2958, 89
  %v2966 = vpop.permute.xlu0 %2965
  %2967 = vrot.lane.b32.xlu0 %v2959, 89
  %v2968 = vpop.permute.xlu0 %2967
  %v2969 = vrot.slane %v2964, 1
  %v2970 = vrot.slane %v2966, 1
  %v2971 = vrot.slane %v2968, 1
  %v2972 = vsel %vm1903, %v2969, %v2970
  %v2973 = vsel %vm2103, %v2964, %v2972
  %v2974 = vsel %vm1903, %v2970, %v2971
  %v2975 = vsel %vm2103, %v2966, %v2974
  %v2976 = vsel %vm2103, %v2968, %v2971
  %s2980 = scalar_lea.vmem [#allocation3], 738
  %2981 = vst [vmem:[%s2980] ss:$8 sm:$0xf] %v2973
  %2982 = vst [vmem:[%s2980] ss:$8 sm:$0xf0] %v2973
  %s2983 = scalar_lea.vmem [#allocation3], 802
  %2984 = vst [vmem:[%s2983] ss:$8 sm:$0xf] %v2975
  %2985 = vst [vmem:[%s2983] ss:$8 sm:$0xf0] %v2975
  %s2986 = scalar_lea.vmem [#allocation3], 866
  %2987 = vst.msk [vmem:[%s2986] ss:$8 sm:$0xf] %vm1884, %v2976
  %2988 = vst.msk [vmem:[%s2986] ss:$8 sm:$0x70] %vm1884, %v2976
  %v2989 = vld [vmem:[%s2750] ss:$2 sm:$0xff]
  %v2990 = vld [vmem:[%s2752] ss:$2 sm:$0xff]
  %v2991 = vld [vmem:[%s2754] ss:$2 sm:$0x7f]
  %2995 = vrot.lane.b32.xlu0 %v2989, 88
  %v2996 = vpop.permute.xlu0 %2995
  %2997 = vrot.lane.b32.xlu0 %v2990, 88
  %v2998 = vpop.permute.xlu0 %2997
  %2999 = vrot.lane.b32.xlu0 %v2991, 88
  %v3000 = vpop.permute.xlu0 %2999
  %v3001 = vrot.slane %v2996, 1
  %v3002 = vrot.slane %v2998, 1
  %v3003 = vrot.slane %v3000, 1
  %v3004 = vsel %vm1903, %v3001, %v3002
  %v3005 = vsel %vm2136, %v2996, %v3004
  %v3006 = vsel %vm1903, %v3002, %v3003
  %v3007 = vsel %vm2136, %v2998, %v3006
  %v3008 = vsel %vm2136, %v3000, %v3003
  %s3012 = scalar_lea.vmem [#allocation3], 739
  %3013 = vst [vmem:[%s3012] ss:$8 sm:$0xf] %v3005
  %3014 = vst [vmem:[%s3012] ss:$8 sm:$0xf0] %v3005
  %s3015 = scalar_lea.vmem [#allocation3], 803
  %3016 = vst [vmem:[%s3015] ss:$8 sm:$0xf] %v3007
  %3017 = vst [vmem:[%s3015] ss:$8 sm:$0xf0] %v3007
  %s3018 = scalar_lea.vmem [#allocation3], 867
  %3019 = vst.msk [vmem:[%s3018] ss:$8 sm:$0xf] %vm1884, %v3008
  %3020 = vst.msk [vmem:[%s3018] ss:$8 sm:$0x70] %vm1884, %v3008
  %s3021 = scalar_lea.vmem [#allocation2], 11
  %v3022 = vld [vmem:[%s3021] ss:$2 sm:$0xff]
  %s3023 = scalar_lea.vmem [#allocation2], 27
  %v3024 = vld [vmem:[%s3023] ss:$2 sm:$0xff]
  %s3025 = scalar_lea.vmem [#allocation2], 43
  %v3026 = vld [vmem:[%s3025] ss:$2 sm:$0xff]
  %3030 = vrot.lane.b32.xlu0 %v3022, 46
  %v3031 = vpop.permute.xlu0 %3030
  %3032 = vrot.lane.b32.xlu0 %v3024, 46
  %v3033 = vpop.permute.xlu0 %3032
  %3034 = vrot.lane.b32.xlu0 %v3026, 46
  %v3035 = vpop.permute.xlu0 %3034
  %v3036 = vrot.slane %v3031, 1
  %v3037 = vrot.slane %v3033, 1
  %v3038 = vrot.slane %v3035, 1
  %v3039 = vsel %vm1903, %v3036, %v3037
  %v3040 = vsel %vm2172, %v3031, %v3039
  %v3041 = vsel %vm1903, %v3037, %v3038
  %v3042 = vsel %vm2172, %v3033, %v3041
  %v3043 = vsel %vm2172, %v3035, %v3038
  %s3047 = scalar_lea.vmem [#allocation3], 740
  %3048 = vst [vmem:[%s3047] ss:$8 sm:$0xf] %v3040
  %3049 = vst [vmem:[%s3047] ss:$8 sm:$0xf0] %v3040
  %s3050 = scalar_lea.vmem [#allocation3], 804
  %3051 = vst [vmem:[%s3050] ss:$8 sm:$0xf] %v3042
  %3052 = vst [vmem:[%s3050] ss:$8 sm:$0xf0] %v3042
  %s3053 = scalar_lea.vmem [#allocation3], 868
  %3054 = vst.msk [vmem:[%s3053] ss:$8 sm:$0xf] %vm1884, %v3043
  %3055 = vst.msk [vmem:[%s3053] ss:$8 sm:$0x70] %vm1884, %v3043
  %v3056 = vld [vmem:[%s3021] ss:$2 sm:$0xff]
  %v3057 = vld [vmem:[%s3023] ss:$2 sm:$0xff]
  %v3058 = vld [vmem:[%s3025] ss:$2 sm:$0xff]
  %3062 = vrot.lane.b32.xlu0 %v3056, 45
  %v3063 = vpop.permute.xlu0 %3062
  %3064 = vrot.lane.b32.xlu0 %v3057, 45
  %v3065 = vpop.permute.xlu0 %3064
  %3066 = vrot.lane.b32.xlu0 %v3058, 45
  %v3067 = vpop.permute.xlu0 %3066
  %v3068 = vrot.slane %v3063, 1
  %v3069 = vrot.slane %v3065, 1
  %v3070 = vrot.slane %v3067, 1
  %v3071 = vsel %vm1903, %v3068, %v3069
  %v3072 = vsel %vm2205, %v3063, %v3071
  %v3073 = vsel %vm1903, %v3069, %v3070
  %v3074 = vsel %vm2205, %v3065, %v3073
  %v3075 = vsel %vm2205, %v3067, %v3070
  %s3079 = scalar_lea.vmem [#allocation3], 741
  %3080 = vst [vmem:[%s3079] ss:$8 sm:$0xf] %v3072
  %3081 = vst [vmem:[%s3079] ss:$8 sm:$0xf0] %v3072
  %s3082 = scalar_lea.vmem [#allocation3], 805
  %3083 = vst [vmem:[%s3082] ss:$8 sm:$0xf] %v3074
  %3084 = vst [vmem:[%s3082] ss:$8 sm:$0xf0] %v3074
  %s3085 = scalar_lea.vmem [#allocation3], 869
  %3086 = vst.msk [vmem:[%s3085] ss:$8 sm:$0xf] %vm1884, %v3075
  %3087 = vst.msk [vmem:[%s3085] ss:$8 sm:$0x70] %vm1884, %v3075
  %v3088 = vld [vmem:[%s3021] ss:$2 sm:$0xff]
  %v3089 = vld [vmem:[%s3023] ss:$2 sm:$0xff]
  %v3090 = vld [vmem:[%s3025] ss:$2 sm:$0xff]
  %3094 = vrot.lane.b32.xlu0 %v3088, 44
  %v3095 = vpop.permute.xlu0 %3094
  %3096 = vrot.lane.b32.xlu0 %v3089, 44
  %v3097 = vpop.permute.xlu0 %3096
  %3098 = vrot.lane.b32.xlu0 %v3090, 44
  %v3099 = vpop.permute.xlu0 %3098
  %v3100 = vrot.slane %v3095, 1
  %v3101 = vrot.slane %v3097, 1
  %v3102 = vrot.slane %v3099, 1
  %v3103 = vsel %vm1903, %v3100, %v3101
  %v3104 = vsel %vm2238, %v3095, %v3103
  %v3105 = vsel %vm1903, %v3101, %v3102
  %v3106 = vsel %vm2238, %v3097, %v3105
  %v3107 = vsel %vm2238, %v3099, %v3102
  %s3111 = scalar_lea.vmem [#allocation3], 742
  %3112 = vst [vmem:[%s3111] ss:$8 sm:$0xf] %v3104
  %3113 = vst [vmem:[%s3111] ss:$8 sm:$0xf0] %v3104
  %s3114 = scalar_lea.vmem [#allocation3], 806
  %3115 = vst [vmem:[%s3114] ss:$8 sm:$0xf] %v3106
  %3116 = vst [vmem:[%s3114] ss:$8 sm:$0xf0] %v3106
  %s3117 = scalar_lea.vmem [#allocation3], 870
  %3118 = vst.msk [vmem:[%s3117] ss:$8 sm:$0xf] %vm1884, %v3107
  %3119 = vst.msk [vmem:[%s3117] ss:$8 sm:$0x70] %vm1884, %v3107
  %v3120 = vld [vmem:[%s3021] ss:$2 sm:$0xff]
  %v3121 = vld [vmem:[%s3023] ss:$2 sm:$0xff]
  %v3122 = vld [vmem:[%s3025] ss:$2 sm:$0xff]
  %3126 = vrot.lane.b32.xlu0 %v3120, 27
  %v3127 = vpop.permute.xlu0 %3126
  %3128 = vrot.lane.b32.xlu0 %v3121, 27
  %v3129 = vpop.permute.xlu0 %3128
  %3130 = vrot.lane.b32.xlu0 %v3122, 27
  %v3131 = vpop.permute.xlu0 %3130
  %v3132 = vrot.slane %v3127, 1
  %v3133 = vrot.slane %v3129, 1
  %v3134 = vrot.slane %v3131, 1
  %v3135 = vsel %vm1903, %v3132, %v3133
  %v3136 = vsel %vm54, %v3127, %v3135
  %v3137 = vsel %vm1903, %v3133, %v3134
  %v3138 = vsel %vm54, %v3129, %v3137
  %v3139 = vsel %vm54, %v3131, %v3134
  %s3143 = scalar_lea.vmem [#allocation3], 743
  %3144 = vst [vmem:[%s3143] ss:$8 sm:$0xf] %v3136
  %3145 = vst [vmem:[%s3143] ss:$8 sm:$0xf0] %v3136
  %s3146 = scalar_lea.vmem [#allocation3], 807
  %3147 = vst [vmem:[%s3146] ss:$8 sm:$0xf] %v3138
  %3148 = vst [vmem:[%s3146] ss:$8 sm:$0xf0] %v3138
  %s3149 = scalar_lea.vmem [#allocation3], 871
  %3150 = vst.msk [vmem:[%s3149] ss:$8 sm:$0xf] %vm1884, %v3139
  %3151 = vst.msk [vmem:[%s3149] ss:$8 sm:$0x70] %vm1884, %v3139
  %v3152 = vld [vmem:[%s3021] ss:$2 sm:$0xff]
  %v3153 = vld [vmem:[%s3023] ss:$2 sm:$0xff]
  %v3154 = vld [vmem:[%s3025] ss:$2 sm:$0xff]
  %3158 = vrot.lane.b32.xlu0 %v3152, 26
  %v3159 = vpop.permute.xlu0 %3158
  %3160 = vrot.lane.b32.xlu0 %v3153, 26
  %v3161 = vpop.permute.xlu0 %3160
  %3162 = vrot.lane.b32.xlu0 %v3154, 26
  %v3163 = vpop.permute.xlu0 %3162
  %v3164 = vrot.slane %v3159, 1
  %v3165 = vrot.slane %v3161, 1
  %v3166 = vrot.slane %v3163, 1
  %v3167 = vsel %vm1903, %v3164, %v3165
  %v3168 = vsel %vm2303, %v3159, %v3167
  %v3169 = vsel %vm1903, %v3165, %v3166
  %v3170 = vsel %vm2303, %v3161, %v3169
  %v3171 = vsel %vm2303, %v3163, %v3166
  %s3175 = scalar_lea.vmem [#allocation3], 920
  %3176 = vst [vmem:[%s3175] ss:$8 sm:$0xf] %v3168
  %3177 = vst [vmem:[%s3175] ss:$8 sm:$0xf0] %v3168
  %s3178 = scalar_lea.vmem [#allocation3], 984
  %3179 = vst [vmem:[%s3178] ss:$8 sm:$0xf] %v3170
  %3180 = vst [vmem:[%s3178] ss:$8 sm:$0xf0] %v3170
  %s3181 = scalar_lea.vmem [#allocation3], 1048
  %3182 = vst.msk [vmem:[%s3181] ss:$8 sm:$0xf] %vm1884, %v3171
  %3183 = vst.msk [vmem:[%s3181] ss:$8 sm:$0x70] %vm1884, %v3171
  %v3184 = vld [vmem:[%s3021] ss:$2 sm:$0xff]
  %v3185 = vld [vmem:[%s3023] ss:$2 sm:$0xff]
  %v3186 = vld [vmem:[%s3025] ss:$2 sm:$0xff]
  %3190 = vrot.lane.b32.xlu0 %v3184, 25
  %v3191 = vpop.permute.xlu0 %3190
  %3192 = vrot.lane.b32.xlu0 %v3185, 25
  %v3193 = vpop.permute.xlu0 %3192
  %3194 = vrot.lane.b32.xlu0 %v3186, 25
  %v3195 = vpop.permute.xlu0 %3194
  %v3196 = vrot.slane %v3191, 1
  %v3197 = vrot.slane %v3193, 1
  %v3198 = vrot.slane %v3195, 1
  %v3199 = vsel %vm1903, %v3196, %v3197
  %v3200 = vsel %vm2336, %v3191, %v3199
  %v3201 = vsel %vm1903, %v3197, %v3198
  %v3202 = vsel %vm2336, %v3193, %v3201
  %v3203 = vsel %vm2336, %v3195, %v3198
  %s3207 = scalar_lea.vmem [#allocation3], 921
  %3208 = vst [vmem:[%s3207] ss:$8 sm:$0xf] %v3200
  %3209 = vst [vmem:[%s3207] ss:$8 sm:$0xf0] %v3200
  %s3210 = scalar_lea.vmem [#allocation3], 985
  %3211 = vst [vmem:[%s3210] ss:$8 sm:$0xf] %v3202
  %3212 = vst [vmem:[%s3210] ss:$8 sm:$0xf0] %v3202
  %s3213 = scalar_lea.vmem [#allocation3], 1049
  %3214 = vst.msk [vmem:[%s3213] ss:$8 sm:$0xf] %vm1884, %v3203
  %3215 = vst.msk [vmem:[%s3213] ss:$8 sm:$0x70] %vm1884, %v3203
  %v3216 = vld [vmem:[%s3021] ss:$2 sm:$0xff]
  %v3217 = vld [vmem:[%s3023] ss:$2 sm:$0xff]
  %v3218 = vld [vmem:[%s3025] ss:$2 sm:$0xff]
  %3222 = vrot.lane.b32.xlu0 %v3216, 8
  %v3223 = vpop.permute.xlu0 %3222
  %3224 = vrot.lane.b32.xlu0 %v3217, 8
  %v3225 = vpop.permute.xlu0 %3224
  %3226 = vrot.lane.b32.xlu0 %v3218, 8
  %v3227 = vpop.permute.xlu0 %3226
  %v3228 = vrot.slane %v3223, 1
  %v3229 = vrot.slane %v3225, 1
  %v3230 = vrot.slane %v3227, 1
  %v3231 = vsel %vm1903, %v3228, %v3229
  %v3232 = vsel %vm2369, %v3223, %v3231
  %v3233 = vsel %vm1903, %v3229, %v3230
  %v3234 = vsel %vm2369, %v3225, %v3233
  %v3235 = vsel %vm2369, %v3227, %v3230
  %s3239 = scalar_lea.vmem [#allocation3], 922
  %3240 = vst [vmem:[%s3239] ss:$8 sm:$0xf] %v3232
  %3241 = vst [vmem:[%s3239] ss:$8 sm:$0xf0] %v3232
  %s3242 = scalar_lea.vmem [#allocation3], 986
  %3243 = vst [vmem:[%s3242] ss:$8 sm:$0xf] %v3234
  %3244 = vst [vmem:[%s3242] ss:$8 sm:$0xf0] %v3234
  %s3245 = scalar_lea.vmem [#allocation3], 1050
  %3246 = vst.msk [vmem:[%s3245] ss:$8 sm:$0xf] %vm1884, %v3235
  %3247 = vst.msk [vmem:[%s3245] ss:$8 sm:$0x70] %vm1884, %v3235
  %v3248 = vld [vmem:[%s3021] ss:$2 sm:$0xff]
  %v3249 = vld [vmem:[%s3023] ss:$2 sm:$0xff]
  %v3250 = vld [vmem:[%s3025] ss:$2 sm:$0xff]
  %3254 = vrot.lane.b32.xlu0 %v3248, 7
  %v3255 = vpop.permute.xlu0 %3254
  %3256 = vrot.lane.b32.xlu0 %v3249, 7
  %v3257 = vpop.permute.xlu0 %3256
  %3258 = vrot.lane.b32.xlu0 %v3250, 7
  %v3259 = vpop.permute.xlu0 %3258
  %v3260 = vrot.slane %v3255, 1
  %v3261 = vrot.slane %v3257, 1
  %v3262 = vrot.slane %v3259, 1
  %v3263 = vsel %vm1903, %v3260, %v3261
  %v3264 = vsel %vm2402, %v3255, %v3263
  %v3265 = vsel %vm1903, %v3261, %v3262
  %v3266 = vsel %vm2402, %v3257, %v3265
  %v3267 = vsel %vm2402, %v3259, %v3262
  %s3271 = scalar_lea.vmem [#allocation3], 923
  %3272 = vst [vmem:[%s3271] ss:$8 sm:$0xf] %v3264
  %3273 = vst [vmem:[%s3271] ss:$8 sm:$0xf0] %v3264
  %s3274 = scalar_lea.vmem [#allocation3], 987
  %3275 = vst [vmem:[%s3274] ss:$8 sm:$0xf] %v3266
  %3276 = vst [vmem:[%s3274] ss:$8 sm:$0xf0] %v3266
  %s3277 = scalar_lea.vmem [#allocation3], 1051
  %3278 = vst.msk [vmem:[%s3277] ss:$8 sm:$0xf] %vm1884, %v3267
  %3279 = vst.msk [vmem:[%s3277] ss:$8 sm:$0x70] %vm1884, %v3267
  %v3280 = vld [vmem:[%s3021] ss:$2 sm:$0xff]
  %v3281 = vld [vmem:[%s3023] ss:$2 sm:$0xff]
  %v3282 = vld [vmem:[%s3025] ss:$2 sm:$0xff]
  %3286 = vrot.lane.b32.xlu0 %v3280, 6
  %v3287 = vpop.permute.xlu0 %3286
  %3288 = vrot.lane.b32.xlu0 %v3281, 6
  %v3289 = vpop.permute.xlu0 %3288
  %3290 = vrot.lane.b32.xlu0 %v3282, 6
  %v3291 = vpop.permute.xlu0 %3290
  %v3292 = vrot.slane %v3287, 1
  %v3293 = vrot.slane %v3289, 1
  %v3294 = vrot.slane %v3291, 1
  %v3295 = vsel %vm1903, %v3292, %v3293
  %v3296 = vsel %vm2435, %v3287, %v3295
  %v3297 = vsel %vm1903, %v3293, %v3294
  %v3298 = vsel %vm2435, %v3289, %v3297
  %v3299 = vsel %vm2435, %v3291, %v3294
  %s3303 = scalar_lea.vmem [#allocation3], 924
  %3304 = vst [vmem:[%s3303] ss:$8 sm:$0xf] %v3296
  %3305 = vst [vmem:[%s3303] ss:$8 sm:$0xf0] %v3296
  %s3306 = scalar_lea.vmem [#allocation3], 988
  %3307 = vst [vmem:[%s3306] ss:$8 sm:$0xf] %v3298
  %3308 = vst [vmem:[%s3306] ss:$8 sm:$0xf0] %v3298
  %s3309 = scalar_lea.vmem [#allocation3], 1052
  %3310 = vst.msk [vmem:[%s3309] ss:$8 sm:$0xf] %vm1884, %v3299
  %3311 = vst.msk [vmem:[%s3309] ss:$8 sm:$0x70] %vm1884, %v3299
  %v3312 = vld [vmem:[%s1862] ss:$2 sm:$0xff]
  %s3313 = scalar_lea.vmem [#allocation2], 39
  %v3314 = vld [vmem:[%s3313] ss:$2 sm:$0xff]
  %s3315 = scalar_lea.vmem [#allocation2], 55
  %v3316 = vld [vmem:[%s3315] ss:$2 sm:$0x7f]
  %3320 = vrot.lane.b32.xlu0 %v3312, 92
  %v3321 = vpop.permute.xlu0 %3320
  %3322 = vrot.lane.b32.xlu0 %v3314, 92
  %v3323 = vpop.permute.xlu0 %3322
  %3324 = vrot.lane.b32.xlu0 %v3316, 92
  %v3325 = vpop.permute.xlu0 %3324
  %v3326 = vrot.slane %v3321, 1
  %v3327 = vrot.slane %v3323, 1
  %v3328 = vrot.slane %v3325, 1
  %v3329 = vsel %vm1903, %v3326, %v3327
  %v3330 = vsel %vm2470, %v3321, %v3329
  %v3331 = vsel %vm1903, %v3327, %v3328
  %v3332 = vsel %vm2470, %v3323, %v3331
  %v3333 = vsel %vm2470, %v3325, %v3328
  %s3337 = scalar_lea.vmem [#allocation3], 925
  %3338 = vst [vmem:[%s3337] ss:$8 sm:$0xf] %v3330
  %3339 = vst [vmem:[%s3337] ss:$8 sm:$0xf0] %v3330
  %s3340 = scalar_lea.vmem [#allocation3], 989
  %3341 = vst [vmem:[%s3340] ss:$8 sm:$0xf] %v3332
  %3342 = vst [vmem:[%s3340] ss:$8 sm:$0xf0] %v3332
  %s3343 = scalar_lea.vmem [#allocation3], 1053
  %3344 = vst.msk [vmem:[%s3343] ss:$8 sm:$0xf] %vm1884, %v3333
  %3345 = vst.msk [vmem:[%s3343] ss:$8 sm:$0x70] %vm1884, %v3333
  %v3346 = vld [vmem:[%s1862] ss:$2 sm:$0xff]
  %v3347 = vld [vmem:[%s3313] ss:$2 sm:$0xff]
  %v3348 = vld [vmem:[%s3315] ss:$2 sm:$0x7f]
  %3352 = vrot.lane.b32.xlu0 %v3346, 91
  %v3353 = vpop.permute.xlu0 %3352
  %3354 = vrot.lane.b32.xlu0 %v3347, 91
  %v3355 = vpop.permute.xlu0 %3354
  %3356 = vrot.lane.b32.xlu0 %v3348, 91
  %v3357 = vpop.permute.xlu0 %3356
  %v3358 = vrot.slane %v3353, 1
  %v3359 = vrot.slane %v3355, 1
  %v3360 = vrot.slane %v3357, 1
  %v3361 = vsel %vm1903, %v3358, %v3359
  %v3362 = vsel %vm2503, %v3353, %v3361
  %v3363 = vsel %vm1903, %v3359, %v3360
  %v3364 = vsel %vm2503, %v3355, %v3363
  %v3365 = vsel %vm2503, %v3357, %v3360
  %s3369 = scalar_lea.vmem [#allocation3], 926
  %3370 = vst [vmem:[%s3369] ss:$8 sm:$0xf] %v3362
  %3371 = vst [vmem:[%s3369] ss:$8 sm:$0xf0] %v3362
  %s3372 = scalar_lea.vmem [#allocation3], 990
  %3373 = vst [vmem:[%s3372] ss:$8 sm:$0xf] %v3364
  %3374 = vst [vmem:[%s3372] ss:$8 sm:$0xf0] %v3364
  %s3375 = scalar_lea.vmem [#allocation3], 1054
  %3376 = vst.msk [vmem:[%s3375] ss:$8 sm:$0xf] %vm1884, %v3365
  %3377 = vst.msk [vmem:[%s3375] ss:$8 sm:$0x70] %vm1884, %v3365
  %v3378 = vld [vmem:[%s1862] ss:$2 sm:$0xff]
  %v3379 = vld [vmem:[%s3313] ss:$2 sm:$0xff]
  %v3380 = vld [vmem:[%s3315] ss:$2 sm:$0x7f]
  %3384 = vrot.lane.b32.xlu0 %v3378, 90
  %v3385 = vpop.permute.xlu0 %3384
  %3386 = vrot.lane.b32.xlu0 %v3379, 90
  %v3387 = vpop.permute.xlu0 %3386
  %3388 = vrot.lane.b32.xlu0 %v3380, 90
  %v3389 = vpop.permute.xlu0 %3388
  %v3390 = vrot.slane %v3385, 1
  %v3391 = vrot.slane %v3387, 1
  %v3392 = vrot.slane %v3389, 1
  %v3393 = vsel %vm1903, %v3390, %v3391
  %v3394 = vsel %vm2070, %v3385, %v3393
  %v3395 = vsel %vm1903, %v3391, %v3392
  %v3396 = vsel %vm2070, %v3387, %v3395
  %v3397 = vsel %vm2070, %v3389, %v3392
  %s3401 = scalar_lea.vmem [#allocation3], 927
  %3402 = vst [vmem:[%s3401] ss:$8 sm:$0xf] %v3394
  %3403 = vst [vmem:[%s3401] ss:$8 sm:$0xf0] %v3394
  %s3404 = scalar_lea.vmem [#allocation3], 991
  %3405 = vst [vmem:[%s3404] ss:$8 sm:$0xf] %v3396
  %3406 = vst [vmem:[%s3404] ss:$8 sm:$0xf0] %v3396
  %s3407 = scalar_lea.vmem [#allocation3], 1055
  %3408 = vst.msk [vmem:[%s3407] ss:$8 sm:$0xf] %vm1884, %v3397
  %3409 = vst.msk [vmem:[%s3407] ss:$8 sm:$0x70] %vm1884, %v3397
  %v3410 = vld [vmem:[%s1862] ss:$2 sm:$0xff]
  %v3411 = vld [vmem:[%s3313] ss:$2 sm:$0xff]
  %v3412 = vld [vmem:[%s3315] ss:$2 sm:$0x7f]
  %3416 = vrot.lane.b32.xlu0 %v3410, 73
  %v3417 = vpop.permute.xlu0 %3416
  %3418 = vrot.lane.b32.xlu0 %v3411, 73
  %v3419 = vpop.permute.xlu0 %3418
  %3420 = vrot.lane.b32.xlu0 %v3412, 73
  %v3421 = vpop.permute.xlu0 %3420
  %v3422 = vrot.slane %v3417, 1
  %v3423 = vrot.slane %v3419, 1
  %v3424 = vrot.slane %v3421, 1
  %v3425 = vsel %vm1903, %v3422, %v3423
  %v3426 = vsel %vm2568, %v3417, %v3425
  %v3427 = vsel %vm1903, %v3423, %v3424
  %v3428 = vsel %vm2568, %v3419, %v3427
  %v3429 = vsel %vm2568, %v3421, %v3424
  %s3433 = scalar_lea.vmem [#allocation3], 1104
  %3434 = vst [vmem:[%s3433] ss:$8 sm:$0xf] %v3426
  %3435 = vst [vmem:[%s3433] ss:$8 sm:$0xf0] %v3426
  %s3436 = scalar_lea.vmem [#allocation3], 1168
  %3437 = vst [vmem:[%s3436] ss:$8 sm:$0xf] %v3428
  %3438 = vst [vmem:[%s3436] ss:$8 sm:$0xf0] %v3428
  %s3439 = scalar_lea.vmem [#allocation3], 1232
  %3440 = vst.msk [vmem:[%s3439] ss:$8 sm:$0xf] %vm1884, %v3429
  %3441 = vst.msk [vmem:[%s3439] ss:$8 sm:$0x70] %vm1884, %v3429
  %v3442 = vld [vmem:[%s1862] ss:$2 sm:$0xff]
  %v3443 = vld [vmem:[%s3313] ss:$2 sm:$0xff]
  %v3444 = vld [vmem:[%s3315] ss:$2 sm:$0xff]
  %3448 = vrot.lane.b32.xlu0 %v3442, 72
  %v3449 = vpop.permute.xlu0 %3448
  %3450 = vrot.lane.b32.xlu0 %v3443, 72
  %v3451 = vpop.permute.xlu0 %3450
  %3452 = vrot.lane.b32.xlu0 %v3444, 72
  %v3453 = vpop.permute.xlu0 %3452
  %v3454 = vrot.slane %v3449, 1
  %v3455 = vrot.slane %v3451, 1
  %v3456 = vrot.slane %v3453, 1
  %v3457 = vsel %vm1903, %v3454, %v3455
  %v3458 = vsel %vm2601, %v3449, %v3457
  %v3459 = vsel %vm1903, %v3455, %v3456
  %v3460 = vsel %vm2601, %v3451, %v3459
  %v3461 = vsel %vm2601, %v3453, %v3456
  %s3465 = scalar_lea.vmem [#allocation3], 1105
  %3466 = vst [vmem:[%s3465] ss:$8 sm:$0xf] %v3458
  %3467 = vst [vmem:[%s3465] ss:$8 sm:$0xf0] %v3458
  %s3468 = scalar_lea.vmem [#allocation3], 1169
  %3469 = vst [vmem:[%s3468] ss:$8 sm:$0xf] %v3460
  %3470 = vst [vmem:[%s3468] ss:$8 sm:$0xf0] %v3460
  %s3471 = scalar_lea.vmem [#allocation3], 1233
  %3472 = vst.msk [vmem:[%s3471] ss:$8 sm:$0xf] %vm1884, %v3461
  %3473 = vst.msk [vmem:[%s3471] ss:$8 sm:$0x70] %vm1884, %v3461
  %v3474 = vld [vmem:[%s1862] ss:$2 sm:$0xff]
  %v3475 = vld [vmem:[%s3313] ss:$2 sm:$0xff]
  %v3476 = vld [vmem:[%s3315] ss:$2 sm:$0xff]
  %3480 = vrot.lane.b32.xlu0 %v3474, 71
  %v3481 = vpop.permute.xlu0 %3480
  %3482 = vrot.lane.b32.xlu0 %v3475, 71
  %v3483 = vpop.permute.xlu0 %3482
  %3484 = vrot.lane.b32.xlu0 %v3476, 71
  %v3485 = vpop.permute.xlu0 %3484
  %v3486 = vrot.slane %v3481, 1
  %v3487 = vrot.slane %v3483, 1
  %v3488 = vrot.slane %v3485, 1
  %v3489 = vsel %vm1903, %v3486, %v3487
  %v3490 = vsel %vm2634, %v3481, %v3489
  %v3491 = vsel %vm1903, %v3487, %v3488
  %v3492 = vsel %vm2634, %v3483, %v3491
  %v3493 = vsel %vm2634, %v3485, %v3488
  %s3497 = scalar_lea.vmem [#allocation3], 1106
  %3498 = vst [vmem:[%s3497] ss:$8 sm:$0xf] %v3490
  %3499 = vst [vmem:[%s3497] ss:$8 sm:$0xf0] %v3490
  %s3500 = scalar_lea.vmem [#allocation3], 1170
  %3501 = vst [vmem:[%s3500] ss:$8 sm:$0xf] %v3492
  %3502 = vst [vmem:[%s3500] ss:$8 sm:$0xf0] %v3492
  %s3503 = scalar_lea.vmem [#allocation3], 1234
  %3504 = vst.msk [vmem:[%s3503] ss:$8 sm:$0xf] %vm1884, %v3493
  %3505 = vst.msk [vmem:[%s3503] ss:$8 sm:$0x70] %vm1884, %v3493
  %v3506 = vld [vmem:[%s1862] ss:$2 sm:$0xff]
  %v3507 = vld [vmem:[%s3313] ss:$2 sm:$0xff]
  %v3508 = vld [vmem:[%s3315] ss:$2 sm:$0xff]
  %3512 = vrot.lane.b32.xlu0 %v3506, 54
  %v3513 = vpop.permute.xlu0 %3512
  %3514 = vrot.lane.b32.xlu0 %v3507, 54
  %v3515 = vpop.permute.xlu0 %3514
  %3516 = vrot.lane.b32.xlu0 %v3508, 54
  %v3517 = vpop.permute.xlu0 %3516
  %v3518 = vrot.slane %v3513, 1
  %v3519 = vrot.slane %v3515, 1
  %v3520 = vrot.slane %v3517, 1
  %v3521 = vsel %vm1903, %v3518, %v3519
  %v3522 = vsel %vm2667, %v3513, %v3521
  %v3523 = vsel %vm1903, %v3519, %v3520
  %v3524 = vsel %vm2667, %v3515, %v3523
  %v3525 = vsel %vm2667, %v3517, %v3520
  %s3529 = scalar_lea.vmem [#allocation3], 1107
  %3530 = vst [vmem:[%s3529] ss:$8 sm:$0xf] %v3522
  %3531 = vst [vmem:[%s3529] ss:$8 sm:$0xf0] %v3522
  %s3532 = scalar_lea.vmem [#allocation3], 1171
  %3533 = vst [vmem:[%s3532] ss:$8 sm:$0xf] %v3524
  %3534 = vst [vmem:[%s3532] ss:$8 sm:$0xf0] %v3524
  %s3535 = scalar_lea.vmem [#allocation3], 1235
  %3536 = vst.msk [vmem:[%s3535] ss:$8 sm:$0xf] %vm1884, %v3525
  %3537 = vst.msk [vmem:[%s3535] ss:$8 sm:$0x70] %vm1884, %v3525
  %v3538 = vld [vmem:[%s1862] ss:$2 sm:$0xff]
  %v3539 = vld [vmem:[%s3313] ss:$2 sm:$0xff]
  %v3540 = vld [vmem:[%s3315] ss:$2 sm:$0xff]
  %3544 = vrot.lane.b32.xlu0 %v3538, 53
  %v3545 = vpop.permute.xlu0 %3544
  %3546 = vrot.lane.b32.xlu0 %v3539, 53
  %v3547 = vpop.permute.xlu0 %3546
  %3548 = vrot.lane.b32.xlu0 %v3540, 53
  %v3549 = vpop.permute.xlu0 %3548
  %v3550 = vrot.slane %v3545, 1
  %v3551 = vrot.slane %v3547, 1
  %v3552 = vrot.slane %v3549, 1
  %v3553 = vsel %vm1903, %v3550, %v3551
  %v3554 = vsel %vm2700, %v3545, %v3553
  %v3555 = vsel %vm1903, %v3551, %v3552
  %v3556 = vsel %vm2700, %v3547, %v3555
  %v3557 = vsel %vm2700, %v3549, %v3552
  %s3561 = scalar_lea.vmem [#allocation3], 1108
  %3562 = vst [vmem:[%s3561] ss:$8 sm:$0xf] %v3554
  %3563 = vst [vmem:[%s3561] ss:$8 sm:$0xf0] %v3554
  %s3564 = scalar_lea.vmem [#allocation3], 1172
  %3565 = vst [vmem:[%s3564] ss:$8 sm:$0xf] %v3556
  %3566 = vst [vmem:[%s3564] ss:$8 sm:$0xf0] %v3556
  %s3567 = scalar_lea.vmem [#allocation3], 1236
  %3568 = vst.msk [vmem:[%s3567] ss:$8 sm:$0xf] %vm1884, %v3557
  %3569 = vst.msk [vmem:[%s3567] ss:$8 sm:$0x70] %vm1884, %v3557
  %v3570 = vld [vmem:[%s1862] ss:$2 sm:$0xff]
  %v3571 = vld [vmem:[%s3313] ss:$2 sm:$0xff]
  %v3572 = vld [vmem:[%s3315] ss:$2 sm:$0xff]
  %3576 = vrot.lane.b32.xlu0 %v3570, 52
  %v3577 = vpop.permute.xlu0 %3576
  %3578 = vrot.lane.b32.xlu0 %v3571, 52
  %v3579 = vpop.permute.xlu0 %3578
  %3580 = vrot.lane.b32.xlu0 %v3572, 52
  %v3581 = vpop.permute.xlu0 %3580
  %v3582 = vrot.slane %v3577, 1
  %v3583 = vrot.slane %v3579, 1
  %v3584 = vrot.slane %v3581, 1
  %v3585 = vsel %vm1903, %v3582, %v3583
  %v3586 = vsel %vm2733, %v3577, %v3585
  %v3587 = vsel %vm1903, %v3583, %v3584
  %v3588 = vsel %vm2733, %v3579, %v3587
  %v3589 = vsel %vm2733, %v3581, %v3584
  %s3593 = scalar_lea.vmem [#allocation3], 1109
  %3594 = vst [vmem:[%s3593] ss:$8 sm:$0xf] %v3586
  %3595 = vst [vmem:[%s3593] ss:$8 sm:$0xf0] %v3586
  %s3596 = scalar_lea.vmem [#allocation3], 1173
  %3597 = vst [vmem:[%s3596] ss:$8 sm:$0xf] %v3588
  %3598 = vst [vmem:[%s3596] ss:$8 sm:$0xf0] %v3588
  %s3599 = scalar_lea.vmem [#allocation3], 1237
  %3600 = vst.msk [vmem:[%s3599] ss:$8 sm:$0xf] %vm1884, %v3589
  %3601 = vst.msk [vmem:[%s3599] ss:$8 sm:$0x70] %vm1884, %v3589
  %v3602 = vld [vmem:[%s4] sm:$0x1f]
  %v3603 = vld [vmem:[#allocation3] sm:$0xff]
  %v3604 = vld [vmem:[#allocation3 + $0x8] sm:$0xff]
  %v3605 = vld [vmem:[#allocation3 + $0x10] sm:$0xff]
  %v3606 = vld [vmem:[#allocation3 + $0x18] sm:$0xff]
  %v3607 = vld [vmem:[#allocation3 + $0x20] sm:$0xff]
  %v3608 = vld [vmem:[#allocation3 + $0x28] sm:$0xff]
  %v3609 = vld [vmem:[#allocation3 + $0x30] sm:$0xff]
  %v3610 = vld [vmem:[#allocation3 + $0x38] sm:$0xff]
  %v3611 = vld [vmem:[#allocation3 + $0x40] sm:$0xff]
  %v3612 = vld [vmem:[#allocation3 + $0x48] sm:$0xff]
  %v3613 = vld [vmem:[#allocation3 + $0x50] sm:$0xff]
  %v3614 = vld [vmem:[#allocation3 + $0x58] sm:$0xff]
  %v3615 = vld [vmem:[#allocation3 + $0x60] sm:$0xff]
  %v3616 = vld [vmem:[#allocation3 + $0x68] sm:$0xff]
  %v3617 = vld [vmem:[#allocation3 + $0x70] sm:$0xff]
  %v3618 = vld [vmem:[#allocation3 + $0x78] sm:$0xff]
  %v3619 = vld [vmem:[#allocation3 + $0x80] sm:$0xff]
  %v3620 = vld [vmem:[#allocation3 + $0x88] sm:$0xff]
  %v3621 = vld [vmem:[#allocation3 + $0x90] sm:$0xff]
  %v3622 = vld [vmem:[#allocation3 + $0x98] sm:$0xff]
  %v3623 = vld [vmem:[#allocation3 + $0xa0] sm:$0xff]
  %v3624 = vld [vmem:[#allocation3 + $0xa8] sm:$0xff]
  %v3625 = vld [vmem:[#allocation3 + $0xb0] sm:$0xff]
  %v3626 = vld [vmem:[#allocation3 + $0xb8] sm:$0xff]
  %v3627 = vld [vmem:[#allocation3 + $0xc0] sm:$0xff]
  %v3628 = vld [vmem:[#allocation3 + $0xc8] sm:$0xff]
  %v3629 = vld [vmem:[#allocation3 + $0xd0] sm:$0xff]
  %v3630 = vld [vmem:[#allocation3 + $0xd8] sm:$0xff]
  %v3631 = vld [vmem:[#allocation3 + $0xe0] sm:$0xff]
  %v3632 = vld [vmem:[#allocation3 + $0xe8] sm:$0xff]
  %v3633 = vld [vmem:[#allocation3 + $0xf0] sm:$0xff]
  %v3634 = vld [vmem:[#allocation3 + $0xf8] sm:$0xff]
  %v3635 = vld [vmem:[#allocation3 + $0x100] sm:$0xff]
  %v3636 = vld [vmem:[#allocation3 + $0x108] sm:$0xff]
  %v3637 = vld [vmem:[#allocation3 + $0x110] sm:$0xff]
  %v3638 = vld [vmem:[#allocation3 + $0x118] sm:$0xff]
  %v3639 = vld [vmem:[#allocation3 + $0x120] sm:$0xff]
  %v3640 = vld [vmem:[#allocation3 + $0x128] sm:$0xff]
  %v3641 = vld [vmem:[#allocation3 + $0x130] sm:$0xff]
  %v3642 = vld [vmem:[#allocation3 + $0x138] sm:$0xff]
  %v3643 = vld [vmem:[#allocation3 + $0x140] sm:$0xff]
  %v3644 = vld [vmem:[#allocation3 + $0x148] sm:$0xff]
  %v3645 = vld [vmem:[#allocation3 + $0x150] sm:$0xff]
  %v3646 = vld [vmem:[#allocation3 + $0x158] sm:$0xff]
  %v3647 = vld [vmem:[#allocation3 + $0x160] sm:$0xff]
  %v3648 = vld [vmem:[#allocation3 + $0x168] sm:$0xff]
  %v3649 = vld [vmem:[#allocation3 + $0x170] sm:$0xff]
  %v3650 = vld [vmem:[#allocation3 + $0x178] sm:$0xff]
  %v3651 = vld [vmem:[#allocation3 + $0x180] sm:$0xff]
  %v3652 = vld [vmem:[#allocation3 + $0x188] sm:$0xff]
  %v3653 = vld [vmem:[#allocation3 + $0x190] sm:$0xff]
  %v3654 = vld [vmem:[#allocation3 + $0x198] sm:$0xff]
  %v3655 = vld [vmem:[#allocation3 + $0x1a0] sm:$0xff]
  %v3656 = vld [vmem:[#allocation3 + $0x1a8] sm:$0xff]
  %v3657 = vld [vmem:[#allocation3 + $0x1b0] sm:$0xff]
  %v3658 = vld [vmem:[#allocation3 + $0x1b8] sm:$0xff]
  %v3659 = vld [vmem:[#allocation3 + $0x1c0] sm:$0xff]
  %v3660 = vld [vmem:[#allocation3 + $0x1c8] sm:$0xff]
  %v3661 = vld [vmem:[#allocation3 + $0x1d0] sm:$0xff]
  %v3662 = vld [vmem:[#allocation3 + $0x1d8] sm:$0xff]
  %v3663 = vld [vmem:[#allocation3 + $0x1e0] sm:$0xff]
  %v3664 = vld [vmem:[#allocation3 + $0x1e8] sm:$0xff]
  %v3665 = vld [vmem:[#allocation3 + $0x1f0] sm:$0xff]
  %v3666 = vld [vmem:[#allocation3 + $0x1f8] sm:$0xff]
  %v3667 = vld [vmem:[#allocation3 + $0x200] sm:$0xff]
  %v3668 = vld [vmem:[#allocation3 + $0x208] sm:$0xff]
  %v3669 = vld [vmem:[#allocation3 + $0x210] sm:$0xff]
  %v3670 = vld [vmem:[#allocation3 + $0x218] sm:$0xff]
  %v3671 = vld [vmem:[#allocation3 + $0x220] sm:$0xff]
  %v3672 = vld [vmem:[#allocation3 + $0x228] sm:$0xff]
  %v3673 = vld [vmem:[#allocation3 + $0x230] sm:$0xff]
  %v3674 = vld [vmem:[#allocation3 + $0x238] sm:$0xff]
  %v3675 = vld [vmem:[#allocation3 + $0x240] sm:$0xff]
  %v3676 = vld [vmem:[#allocation3 + $0x248] sm:$0xff]
  %v3677 = vld [vmem:[#allocation3 + $0x250] sm:$0xff]
  %v3678 = vld [vmem:[#allocation3 + $0x258] sm:$0xff]
  %v3679 = vld [vmem:[#allocation3 + $0x260] sm:$0xff]
  %v3680 = vld [vmem:[#allocation3 + $0x268] sm:$0xff]
  %v3681 = vld [vmem:[#allocation3 + $0x270] sm:$0xff]
  %v3682 = vld [vmem:[#allocation3 + $0x278] sm:$0xff]
  %v3683 = vld [vmem:[#allocation3 + $0x280] sm:$0xff]
  %v3684 = vld [vmem:[#allocation3 + $0x288] sm:$0xff]
  %v3685 = vld [vmem:[#allocation3 + $0x290] sm:$0xff]
  %v3686 = vld [vmem:[#allocation3 + $0x298] sm:$0xff]
  %v3687 = vld [vmem:[#allocation3 + $0x2a0] sm:$0xff]
  %v3688 = vld [vmem:[#allocation3 + $0x2a8] sm:$0xff]
  %v3689 = vld [vmem:[#allocation3 + $0x2b0] sm:$0xff]
  %v3690 = vld [vmem:[#allocation3 + $0x2b8] sm:$0xff]
  %v3691 = vld [vmem:[#allocation3 + $0x2c0] sm:$0xff]
  %v3692 = vld [vmem:[#allocation3 + $0x2c8] sm:$0xff]
  %v3693 = vld [vmem:[#allocation3 + $0x2d0] sm:$0xff]
  %v3694 = vld [vmem:[#allocation3 + $0x2d8] sm:$0xff]
  %v3695 = vld [vmem:[#allocation3 + $0x2e0] sm:$0xff]
  %v3696 = vld [vmem:[#allocation3 + $0x2e8] sm:$0xff]
  %v3697 = vld [vmem:[#allocation3 + $0x2f0] sm:$0xff]
  %v3698 = vld [vmem:[#allocation3 + $0x2f8] sm:$0xff]
  %v3699 = vld [vmem:[#allocation3 + $0x300] sm:$0xff]
  %v3700 = vld [vmem:[#allocation3 + $0x308] sm:$0xff]
  %v3701 = vld [vmem:[#allocation3 + $0x310] sm:$0xff]
  %v3702 = vld [vmem:[#allocation3 + $0x318] sm:$0xff]
  %v3703 = vld [vmem:[#allocation3 + $0x320] sm:$0xff]
  %v3704 = vld [vmem:[#allocation3 + $0x328] sm:$0xff]
  %v3705 = vld [vmem:[#allocation3 + $0x330] sm:$0xff]
  %v3706 = vld [vmem:[#allocation3 + $0x338] sm:$0xff]
  %v3707 = vld [vmem:[#allocation3 + $0x340] sm:$0xff]
  %v3708 = vld [vmem:[#allocation3 + $0x348] sm:$0xff]
  %v3709 = vld [vmem:[#allocation3 + $0x350] sm:$0xff]
  %v3710 = vld [vmem:[#allocation3 + $0x358] sm:$0xff]
  %v3711 = vld [vmem:[#allocation3 + $0x360] sm:$0xff]
  %v3712 = vld [vmem:[#allocation3 + $0x368] sm:$0xff]
  %v3713 = vld [vmem:[#allocation3 + $0x370] sm:$0xff]
  %v3714 = vld [vmem:[#allocation3 + $0x378] sm:$0xff]
  %v3715 = vld [vmem:[#allocation3 + $0x380] sm:$0xff]
  %v3716 = vld [vmem:[#allocation3 + $0x388] sm:$0xff]
  %v3717 = vld [vmem:[#allocation3 + $0x390] sm:$0xff]
  %v3718 = vld [vmem:[#allocation3 + $0x398] sm:$0xff]
  %v3719 = vld [vmem:[#allocation3 + $0x3a0] sm:$0xff]
  %v3720 = vld [vmem:[#allocation3 + $0x3a8] sm:$0xff]
  %v3721 = vld [vmem:[#allocation3 + $0x3b0] sm:$0xff]
  %v3722 = vld [vmem:[#allocation3 + $0x3b8] sm:$0xff]
  %v3723 = vld [vmem:[#allocation3 + $0x3c0] sm:$0xff]
  %v3724 = vld [vmem:[#allocation3 + $0x3c8] sm:$0xff]
  %v3725 = vld [vmem:[#allocation3 + $0x3d0] sm:$0xff]
  %v3726 = vld [vmem:[#allocation3 + $0x3d8] sm:$0xff]
  %v3727 = vld [vmem:[#allocation3 + $0x3e0] sm:$0xff]
  %v3728 = vld [vmem:[#allocation3 + $0x3e8] sm:$0xff]
  %v3729 = vld [vmem:[#allocation3 + $0x3f0] sm:$0xff]
  %v3730 = vld [vmem:[#allocation3 + $0x3f8] sm:$0xff]
  %v3731 = vld [vmem:[#allocation3 + $0x400] sm:$0xff]
  %v3732 = vld [vmem:[#allocation3 + $0x408] sm:$0xff]
  %v3733 = vld [vmem:[#allocation3 + $0x410] sm:$0xff]
  %v3734 = vld [vmem:[#allocation3 + $0x418] sm:$0xff]
  %v3735 = vld [vmem:[#allocation3 + $0x420] sm:$0xff]
  %v3736 = vld [vmem:[#allocation3 + $0x428] sm:$0xff]
  %v3737 = vld [vmem:[#allocation3 + $0x430] sm:$0xff]
  %v3738 = vld [vmem:[#allocation3 + $0x438] sm:$0xff]
  %v3739 = vld [vmem:[#allocation3 + $0x440] sm:$0xff]
  %v3740 = vld [vmem:[#allocation3 + $0x448] sm:$0xff]
  %v3741 = vld [vmem:[#allocation3 + $0x450] sm:$0x3f]
  %v3742 = vld [vmem:[#allocation3 + $0x458] sm:$0x3f]
  %v3743 = vld [vmem:[#allocation3 + $0x460] sm:$0x3f]
  %v3744 = vld [vmem:[#allocation3 + $0x468] sm:$0x3f]
  %v3745 = vld [vmem:[#allocation3 + $0x470] sm:$0x3f]
  %v3746 = vld [vmem:[#allocation3 + $0x478] sm:$0x3f]
  %v3747 = vld [vmem:[#allocation3 + $0x480] sm:$0x3f]
  %v3748 = vld [vmem:[#allocation3 + $0x488] sm:$0x3f]
  %v3749 = vld [vmem:[#allocation3 + $0x490] sm:$0x3f]
  %v3750 = vld [vmem:[#allocation3 + $0x498] sm:$0x3f]
  %v3751 = vld [vmem:[#allocation3 + $0x4a0] sm:$0x3f]
  %v3752 = vld [vmem:[#allocation3 + $0x4a8] sm:$0x3f]
  %v3753 = vld [vmem:[#allocation3 + $0x4b0] sm:$0x3f]
  %v3754 = vld [vmem:[#allocation3 + $0x4b8] sm:$0x3f]
  %v3755 = vld [vmem:[#allocation3 + $0x4c0] sm:$0x3f]
  %v3756 = vld [vmem:[#allocation3 + $0x4c8] sm:$0x3f]
  %v3757 = vld [vmem:[#allocation3 + $0x4d0] sm:$0x3f]
  %v3758 = vld [vmem:[#allocation3 + $0x4d8] sm:$0x3f]
  %v3759 = vld [vmem:[#allocation3 + $0x4e0] sm:$0x3f]
  %v3760 = vld [vmem:[#allocation3 + $0x4e8] sm:$0x3f]
  %v3761 = vld [vmem:[#allocation3 + $0x4f0] sm:$0x3f]
  %v3762 = vld [vmem:[#allocation3 + $0x4f8] sm:$0x3f]
  %v3763 = vld [vmem:[#allocation3 + $0x500] sm:$0x3f]
  %v3764 = vld [vmem:[%s5] sm:$0x1f]
  %3766 = vset.pattern.permute.xlu0 0
  %3767 = vperm.xlu0 %3766, %v3764
  %v3768 = vpop.permute.xlu0 %3767
  %v3771 = vsel %vm2667, %v3602, 0
  %vm3773 = vcmask 1045504
  %v3775 = vsel %vm3773, %v3741, 0
  %v3778 = vsel %vm3773, %v3742, 0
  %v3781 = vsel %vm3773, %v3743, 0
  %v3784 = vsel %vm3773, %v3744, 0
  %v3787 = vsel %vm3773, %v3745, 0
  %v3790 = vsel %vm3773, %v3746, 0
  %v3793 = vsel %vm3773, %v3747, 0
  %v3796 = vsel %vm3773, %v3748, 0
  %v3799 = vsel %vm3773, %v3749, 0
  %v3802 = vsel %vm3773, %v3750, 0
  %v3805 = vsel %vm3773, %v3751, 0
  %v3808 = vsel %vm3773, %v3752, 0
  %v3811 = vsel %vm3773, %v3753, 0
  %v3814 = vsel %vm3773, %v3754, 0
  %v3817 = vsel %vm3773, %v3755, 0
  %v3820 = vsel %vm3773, %v3756, 0
  %v3823 = vsel %vm3773, %v3757, 0
  %v3826 = vsel %vm3773, %v3758, 0
  %v3829 = vsel %vm3773, %v3759, 0
  %v3832 = vsel %vm3773, %v3760, 0
  %v3835 = vsel %vm3773, %v3761, 0
  %v3838 = vsel %vm3773, %v3762, 0
  %v3841 = vsel %vm3773, %v3763, 0
  %v3843 = vand.u32 %v3604, 4294901760
  %3844 = vmatprep.subr.mxu0 %v3843
  %v3845 = vand.u32 %v3603, 4294901760
  %3846 = vmatpush1.msra.mxu0 %v3845
  %v3847 = vand.u32 %v3627, 4294901760
  %3848 = vmatprep.subr.mxu0 %v3847
  %v3849 = vand.u32 %v3626, 4294901760
  %3850 = vmatpush1.msra.mxu0 %v3849
  %v3851 = vand.u32 %v3650, 4294901760
  %3852 = vmatprep.subr.mxu0 %v3851
  %v3853 = vand.u32 %v3649, 4294901760
  %3854 = vmatpush1.msra.mxu0 %v3853
  %v3855 = vand.u32 %v3673, 4294901760
  %3856 = vmatprep.subr.mxu0 %v3855
  %v3857 = vand.u32 %v3672, 4294901760
  %3858 = vmatpush1.msra.mxu0 %v3857
  %v3859 = vand.u32 %v3696, 4294901760
  %3860 = vmatprep.subr.mxu0 %v3859
  %v3861 = vand.u32 %v3695, 4294901760
  %3862 = vmatpush1.msra.mxu0 %v3861
  %v3863 = vand.u32 %v3719, 4294901760
  %3864 = vmatprep.subr.mxu0 %v3863
  %v3865 = vand.u32 %v3718, 4294901760
  %3866 = vmatpush1.msra.mxu0 %v3865
  %v3867 = vand.u32 %v3778, 4294901760
  %3868 = vmatprep.subr.mxu0 %v3867
  %v3869 = vand.u32 %v3775, 4294901760
  %3870 = vmatpush1.msra.mxu0 %v3869
  %3871 = vmatprep.subr.mxu0 0.0
  %3872 = vmatpush1.msra.mxu0 0.0
  %3873 = vmatprep.subr.mxu0 0.0
  %3874 = vmatpush1.msra.mxu0 0.0
  %3875 = vmatprep.subr.mxu0 0.0
  %3876 = vmatpush1.msra.mxu0 0.0
  %3877 = vmatprep.subr.mxu0 0.0
  %3878 = vmatpush1.msra.mxu0 0.0
  %3879 = vmatprep.subr.mxu0 0.0
  %3880 = vmatpush1.msra.mxu0 0.0
  %3881 = vmatprep.subr.mxu0 0.0
  %3882 = vmatpush1.msra.mxu0 0.0
  %3883 = vmatprep.subr.mxu0 0.0
  %3884 = vmatpush1.msra.mxu0 0.0
  %3885 = vmatprep.subr.mxu0 0.0
  %3886 = vmatpush1.msra.mxu0 0.0
  %3887 = vmatprep.subr.mxu0 0.0
  %3888 = vmatpush1.msra.mxu0 0.0
  %3889 = vmatprep.subr.mxu0 0.0
  %3890 = vmatpush1.msra.mxu0 0.0
  %3891 = vmatprep.subr.mxu0 0.0
  %3892 = vmatpush1.msra.mxu0 0.0
  %3893 = vmatprep.subr.mxu0 0.0
  %3894 = vmatpush1.msra.mxu0 0.0
  %3895 = vmatprep.subr.mxu0 0.0
  %3896 = vmatpush1.msra.mxu0 0.0
  %3897 = vmatprep.subr.mxu0 0.0
  %3898 = vmatpush1.msra.mxu0 0.0
  %3899 = vmatprep.subr.mxu0 0.0
  %3900 = vmatpush1.msra.mxu0 0.0
  %3901 = vmatprep.subr.mxu0 0.0
  %3902 = vmatpush1.msra.mxu0 0.0
  %3903 = vmatprep.subr.mxu0 0.0
  %3904 = vmatpush1.msra.mxu0 0.0
  %3905 = vmatprep.subr.mxu0 0.0
  %3906 = vmatpush1.msra.mxu0 0.0
  %3907 = vmatprep.subr.mxu0 0.0
  %3908 = vmatpush1.msra.mxu0 0.0
  %3909 = vmatprep.subr.mxu0 0.0
  %3910 = vmatpush1.msra.mxu0 0.0
  %3911 = vmatprep.subr.mxu0 0.0
  %3912 = vmatpush1.msra.mxu0 0.0
  %3913 = vmatprep.subr.mxu0 0.0
  %3914 = vmatpush1.msra.mxu0 0.0
  %3915 = vmatprep.subr.mxu0 0.0
  %3916 = vmatpush1.msra.mxu0 0.0
  %3917 = vmatprep.subr.mxu0 0.0
  %3918 = vmatpush1.msra.mxu0 0.0
  %3919 = vmatprep.subr.mxu0 0.0
  %3920 = vmatpush1.msra.mxu0 0.0
  %3921 = vmatprep.mubr.f32.mxu0 0.0
  %v3922 = vand.u32 %v3771, 4294901760
  %v3923 = vsub.f32 %v3771, %v3922
  %v3924 = vand.u32 %v3923, 4294901760
  %v3925 = vsub.f32 %v3923, %v3924
  %v3926 = vand.u32 %v3925, 4294901760
  %3927 = vmatmul.mubr.f32.gmra.mrb[0].mxu0 %v3926
  %v3928 = vpop.f32.mrb[0].mxu0
  %v3929 = vadd.f32 %v3768, %v3928
  %v3930 = vpop.f32.mrb[0].mxu0
  %v3931 = vadd.f32 %v3768, %v3930
  %3932 = vdwg.mxu0
  %v3933 = vand.u32 %v3604, 4294901760
  %v3934 = vsub.f32 %v3604, %v3933
  %v3935 = vand.u32 %v3934, 4294901760
  %v3936 = vsub.f32 %v3934, %v3935
  %v3937 = vand.u32 %v3936, 4294901760
  %3938 = vmatprep.subr.mxu0 %v3937
  %v3939 = vand.u32 %v3603, 4294901760
  %v3940 = vsub.f32 %v3603, %v3939
  %v3941 = vand.u32 %v3940, 4294901760
  %v3942 = vsub.f32 %v3940, %v3941
  %v3943 = vand.u32 %v3942, 4294901760
  %3944 = vmatpush1.msra.mxu0 %v3943
  %v3945 = vand.u32 %v3627, 4294901760
  %v3946 = vsub.f32 %v3627, %v3945
  %v3947 = vand.u32 %v3946, 4294901760
  %v3948 = vsub.f32 %v3946, %v3947
  %v3949 = vand.u32 %v3948, 4294901760
  %3950 = vmatprep.subr.mxu0 %v3949
  %v3951 = vand.u32 %v3626, 4294901760
  %v3952 = vsub.f32 %v3626, %v3951
  %v3953 = vand.u32 %v3952, 4294901760
  %v3954 = vsub.f32 %v3952, %v3953
  %v3955 = vand.u32 %v3954, 4294901760
  %3956 = vmatpush1.msra.mxu0 %v3955
  %v3957 = vand.u32 %v3650, 4294901760
  %v3958 = vsub.f32 %v3650, %v3957
  %v3959 = vand.u32 %v3958, 4294901760
  %v3960 = vsub.f32 %v3958, %v3959
  %v3961 = vand.u32 %v3960, 4294901760
  %3962 = vmatprep.subr.mxu0 %v3961
  %v3963 = vand.u32 %v3649, 4294901760
  %v3964 = vsub.f32 %v3649, %v3963
  %v3965 = vand.u32 %v3964, 4294901760
  %v3966 = vsub.f32 %v3964, %v3965
  %v3967 = vand.u32 %v3966, 4294901760
  %3968 = vmatpush1.msra.mxu0 %v3967
  %v3969 = vand.u32 %v3673, 4294901760
  %v3970 = vsub.f32 %v3673, %v3969
  %v3971 = vand.u32 %v3970, 4294901760
  %v3972 = vsub.f32 %v3970, %v3971
  %v3973 = vand.u32 %v3972, 4294901760
  %3974 = vmatprep.subr.mxu0 %v3973
  %v3975 = vand.u32 %v3672, 4294901760
  %v3976 = vsub.f32 %v3672, %v3975
  %v3977 = vand.u32 %v3976, 4294901760
  %v3978 = vsub.f32 %v3976, %v3977
  %v3979 = vand.u32 %v3978, 4294901760
  %3980 = vmatpush1.msra.mxu0 %v3979
  %v3981 = vand.u32 %v3696, 4294901760
  %v3982 = vsub.f32 %v3696, %v3981
  %v3983 = vand.u32 %v3982, 4294901760
  %v3984 = vsub.f32 %v3982, %v3983
  %v3985 = vand.u32 %v3984, 4294901760
  %3986 = vmatprep.subr.mxu0 %v3985
  %v3987 = vand.u32 %v3695, 4294901760
  %v3988 = vsub.f32 %v3695, %v3987
  %v3989 = vand.u32 %v3988, 4294901760
  %v3990 = vsub.f32 %v3988, %v3989
  %v3991 = vand.u32 %v3990, 4294901760
  %3992 = vmatpush1.msra.mxu0 %v3991
  %v3993 = vand.u32 %v3719, 4294901760
  %v3994 = vsub.f32 %v3719, %v3993
  %v3995 = vand.u32 %v3994, 4294901760
  %v3996 = vsub.f32 %v3994, %v3995
  %v3997 = vand.u32 %v3996, 4294901760
  %3998 = vmatprep.subr.mxu0 %v3997
  %v3999 = vand.u32 %v3718, 4294901760
  %v4000 = vsub.f32 %v3718, %v3999
  %v4001 = vand.u32 %v4000, 4294901760
  %v4002 = vsub.f32 %v4000, %v4001
  %v4003 = vand.u32 %v4002, 4294901760
  %4004 = vmatpush1.msra.mxu0 %v4003
  %v4005 = vand.u32 %v3778, 4294901760
  %v4006 = vsub.f32 %v3778, %v4005
  %v4007 = vand.u32 %v4006, 4294901760
  %v4008 = vsub.f32 %v4006, %v4007
  %v4009 = vand.u32 %v4008, 4294901760
  %4010 = vmatprep.subr.mxu0 %v4009
  %v4011 = vand.u32 %v3775, 4294901760
  %v4012 = vsub.f32 %v3775, %v4011
  %v4013 = vand.u32 %v4012, 4294901760
  %v4014 = vsub.f32 %v4012, %v4013
  %v4015 = vand.u32 %v4014, 4294901760
  %4016 = vmatpush1.msra.mxu0 %v4015
  %4017 = vmatprep.subr.mxu0 0.0
  %4018 = vmatpush1.msra.mxu0 0.0
  %4019 = vmatprep.subr.mxu0 0.0
  %4020 = vmatpush1.msra.mxu0 0.0
  %4021 = vmatprep.subr.mxu0 0.0
  %4022 = vmatpush1.msra.mxu0 0.0
  %4023 = vmatprep.subr.mxu0 0.0
  %4024 = vmatpush1.msra.mxu0 0.0
  %4025 = vmatprep.subr.mxu0 0.0
  %4026 = vmatpush1.msra.mxu0 0.0
  %4027 = vmatprep.subr.mxu0 0.0
  %4028 = vmatpush1.msra.mxu0 0.0
  %4029 = vmatprep.subr.mxu0 0.0
  %4030 = vmatpush1.msra.mxu0 0.0
  %4031 = vmatprep.subr.mxu0 0.0
  %4032 = vmatpush1.msra.mxu0 0.0
  %4033 = vmatprep.subr.mxu0 0.0
  %4034 = vmatpush1.msra.mxu0 0.0
  %4035 = vmatprep.subr.mxu0 0.0
  %4036 = vmatpush1.msra.mxu0 0.0
  %4037 = vmatprep.subr.mxu0 0.0
  %4038 = vmatpush1.msra.mxu0 0.0
  %4039 = vmatprep.subr.mxu0 0.0
  %4040 = vmatpush1.msra.mxu0 0.0
  %4041 = vmatprep.subr.mxu0 0.0
  %4042 = vmatpush1.msra.mxu0 0.0
  %4043 = vmatprep.subr.mxu0 0.0
  %4044 = vmatpush1.msra.mxu0 0.0
  %4045 = vmatprep.subr.mxu0 0.0
  %4046 = vmatpush1.msra.mxu0 0.0
  %4047 = vmatprep.subr.mxu0 0.0
  %4048 = vmatpush1.msra.mxu0 0.0
  %4049 = vmatprep.subr.mxu0 0.0
  %4050 = vmatpush1.msra.mxu0 0.0
  %4051 = vmatprep.subr.mxu0 0.0
  %4052 = vmatpush1.msra.mxu0 0.0
  %4053 = vmatprep.subr.mxu0 0.0
  %4054 = vmatpush1.msra.mxu0 0.0
  %4055 = vmatprep.subr.mxu0 0.0
  %4056 = vmatpush1.msra.mxu0 0.0
  %4057 = vmatprep.subr.mxu0 0.0
  %4058 = vmatpush1.msra.mxu0 0.0
  %4059 = vmatprep.subr.mxu0 0.0
  %4060 = vmatpush1.msra.mxu0 0.0
  %4061 = vmatprep.subr.mxu0 0.0
  %4062 = vmatpush1.msra.mxu0 0.0
  %4063 = vmatprep.subr.mxu0 0.0
  %4064 = vmatpush1.msra.mxu0 0.0
  %4065 = vmatprep.subr.mxu0 0.0
  %4066 = vmatpush1.msra.mxu0 0.0
  %4067 = vmatprep.mubr.f32.mxu0 0.0
  %v4068 = vand.u32 %v3771, 4294901760
  %4069 = vmatmul.mubr.f32.gmra.mrb[0].mxu0 %v4068
  %v4070 = vpop.f32.mrb[0].mxu0
  %v4071 = vadd.f32 %v3929, %v4070
  %v4072 = vpop.f32.mrb[0].mxu0
  %v4073 = vadd.f32 %v3931, %v4072
  %4074 = vdwg.mxu0
  %v4075 = vand.u32 %v3604, 4294901760
  %v4076 = vsub.f32 %v3604, %v4075
  %4077 = vmatprep.subr.mxu0 %v4076
  %v4078 = vand.u32 %v3603, 4294901760
  %v4079 = vsub.f32 %v3603, %v4078
  %4080 = vmatpush1.msra.mxu0 %v4079
  %v4081 = vand.u32 %v3627, 4294901760
  %v4082 = vsub.f32 %v3627, %v4081
  %4083 = vmatprep.subr.mxu0 %v4082
  %v4084 = vand.u32 %v3626, 4294901760
  %v4085 = vsub.f32 %v3626, %v4084
  %4086 = vmatpush1.msra.mxu0 %v4085
  %v4087 = vand.u32 %v3650, 4294901760
  %v4088 = vsub.f32 %v3650, %v4087
  %4089 = vmatprep.subr.mxu0 %v4088
  %v4090 = vand.u32 %v3649, 4294901760
  %v4091 = vsub.f32 %v3649, %v4090
  %4092 = vmatpush1.msra.mxu0 %v4091
  %v4093 = vand.u32 %v3673, 4294901760
  %v4094 = vsub.f32 %v3673, %v4093
  %4095 = vmatprep.subr.mxu0 %v4094
  %v4096 = vand.u32 %v3672, 4294901760
  %v4097 = vsub.f32 %v3672, %v4096
  %4098 = vmatpush1.msra.mxu0 %v4097
  %v4099 = vand.u32 %v3696, 4294901760
  %v4100 = vsub.f32 %v3696, %v4099
  %4101 = vmatprep.subr.mxu0 %v4100
  %v4102 = vand.u32 %v3695, 4294901760
  %v4103 = vsub.f32 %v3695, %v4102
  %4104 = vmatpush1.msra.mxu0 %v4103
  %v4105 = vand.u32 %v3719, 4294901760
  %v4106 = vsub.f32 %v3719, %v4105
  %4107 = vmatprep.subr.mxu0 %v4106
  %v4108 = vand.u32 %v3718, 4294901760
  %v4109 = vsub.f32 %v3718, %v4108
  %4110 = vmatpush1.msra.mxu0 %v4109
  %v4111 = vand.u32 %v3778, 4294901760
  %v4112 = vsub.f32 %v3778, %v4111
  %4113 = vmatprep.subr.mxu0 %v4112
  %v4114 = vand.u32 %v3775, 4294901760
  %v4115 = vsub.f32 %v3775, %v4114
  %4116 = vmatpush1.msra.mxu0 %v4115
  %4117 = vmatprep.subr.mxu0 0.0
  %4118 = vmatpush1.msra.mxu0 0.0
  %4119 = vmatprep.subr.mxu0 0.0
  %4120 = vmatpush1.msra.mxu0 0.0
  %4121 = vmatprep.subr.mxu0 0.0
  %4122 = vmatpush1.msra.mxu0 0.0
  %4123 = vmatprep.subr.mxu0 0.0
  %4124 = vmatpush1.msra.mxu0 0.0
  %4125 = vmatprep.subr.mxu0 0.0
  %4126 = vmatpush1.msra.mxu0 0.0
  %4127 = vmatprep.subr.mxu0 0.0
  %4128 = vmatpush1.msra.mxu0 0.0
  %4129 = vmatprep.subr.mxu0 0.0
  %4130 = vmatpush1.msra.mxu0 0.0
  %4131 = vmatprep.subr.mxu0 0.0
  %4132 = vmatpush1.msra.mxu0 0.0
  %4133 = vmatprep.subr.mxu0 0.0
  %4134 = vmatpush1.msra.mxu0 0.0
  %4135 = vmatprep.subr.mxu0 0.0
  %4136 = vmatpush1.msra.mxu0 0.0
  %4137 = vmatprep.subr.mxu0 0.0
  %4138 = vmatpush1.msra.mxu0 0.0
  %4139 = vmatprep.subr.mxu0 0.0
  %4140 = vmatpush1.msra.mxu0 0.0
  %4141 = vmatprep.subr.mxu0 0.0
  %4142 = vmatpush1.msra.mxu0 0.0
  %4143 = vmatprep.subr.mxu0 0.0
  %4144 = vmatpush1.msra.mxu0 0.0
  %4145 = vmatprep.subr.mxu0 0.0
  %4146 = vmatpush1.msra.mxu0 0.0
  %4147 = vmatprep.subr.mxu0 0.0
  %4148 = vmatpush1.msra.mxu0 0.0
  %4149 = vmatprep.subr.mxu0 0.0
  %4150 = vmatpush1.msra.mxu0 0.0
  %4151 = vmatprep.subr.mxu0 0.0
  %4152 = vmatpush1.msra.mxu0 0.0
  %4153 = vmatprep.subr.mxu0 0.0
  %4154 = vmatpush1.msra.mxu0 0.0
  %4155 = vmatprep.subr.mxu0 0.0
  %4156 = vmatpush1.msra.mxu0 0.0
  %4157 = vmatprep.subr.mxu0 0.0
  %4158 = vmatpush1.msra.mxu0 0.0
  %4159 = vmatprep.subr.mxu0 0.0
  %4160 = vmatpush1.msra.mxu0 0.0
  %4161 = vmatprep.subr.mxu0 0.0
  %4162 = vmatpush1.msra.mxu0 0.0
  %4163 = vmatprep.subr.mxu0 0.0
  %4164 = vmatpush1.msra.mxu0 0.0
  %4165 = vmatprep.subr.mxu0 0.0
  %4166 = vmatpush1.msra.mxu0 0.0
  %4167 = vmatprep.mubr.f32.mxu0 0.0
  %v4168 = vand.u32 %v3771, 4294901760
  %v4169 = vsub.f32 %v3771, %v4168
  %4170 = vmatmul.mubr.f32.gmra.mrb[0].mxu0 %v4169
  %v4171 = vpop.f32.mrb[0].mxu0
  %v4172 = vadd.f32 %v4071, %v4171
  %v4173 = vpop.f32.mrb[0].mxu0
  %v4174 = vadd.f32 %v4073, %v4173
  %4175 = vdwg.mxu0
  %v4176 = vand.u32 %v3604, 4294901760
  %4177 = vmatprep.subr.mxu0 %v4176
  %v4178 = vand.u32 %v3603, 4294901760
  %4179 = vmatpush1.msra.mxu0 %v4178
  %v4180 = vand.u32 %v3627, 4294901760
  %4181 = vmatprep.subr.mxu0 %v4180
  %v4182 = vand.u32 %v3626, 4294901760
  %4183 = vmatpush1.msra.mxu0 %v4182
  %v4184 = vand.u32 %v3650, 4294901760
  %4185 = vmatprep.subr.mxu0 %v4184
  %v4186 = vand.u32 %v3649, 4294901760
  %4187 = vmatpush1.msra.mxu0 %v4186
  %v4188 = vand.u32 %v3673, 4294901760
  %4189 = vmatprep.subr.mxu0 %v4188
  %v4190 = vand.u32 %v3672, 4294901760
  %4191 = vmatpush1.msra.mxu0 %v4190
  %v4192 = vand.u32 %v3696, 4294901760
  %4193 = vmatprep.subr.mxu0 %v4192
  %v4194 = vand.u32 %v3695, 4294901760
  %4195 = vmatpush1.msra.mxu0 %v4194
  %v4196 = vand.u32 %v3719, 4294901760
  %4197 = vmatprep.subr.mxu0 %v4196
  %v4198 = vand.u32 %v3718, 4294901760
  %4199 = vmatpush1.msra.mxu0 %v4198
  %v4200 = vand.u32 %v3778, 4294901760
  %4201 = vmatprep.subr.mxu0 %v4200
  %v4202 = vand.u32 %v3775, 4294901760
  %4203 = vmatpush1.msra.mxu0 %v4202
  %4204 = vmatprep.subr.mxu0 0.0
  %4205 = vmatpush1.msra.mxu0 0.0
  %4206 = vmatprep.subr.mxu0 0.0
  %4207 = vmatpush1.msra.mxu0 0.0
  %4208 = vmatprep.subr.mxu0 0.0
  %4209 = vmatpush1.msra.mxu0 0.0
  %4210 = vmatprep.subr.mxu0 0.0
  %4211 = vmatpush1.msra.mxu0 0.0
  %4212 = vmatprep.subr.mxu0 0.0
  %4213 = vmatpush1.msra.mxu0 0.0
  %4214 = vmatprep.subr.mxu0 0.0
  %4215 = vmatpush1.msra.mxu0 0.0
  %4216 = vmatprep.subr.mxu0 0.0
  %4217 = vmatpush1.msra.mxu0 0.0
  %4218 = vmatprep.subr.mxu0 0.0
  %4219 = vmatpush1.msra.mxu0 0.0
  %4220 = vmatprep.subr.mxu0 0.0
  %4221 = vmatpush1.msra.mxu0 0.0
  %4222 = vmatprep.subr.mxu0 0.0
  %4223 = vmatpush1.msra.mxu0 0.0
  %4224 = vmatprep.subr.mxu0 0.0
  %4225 = vmatpush1.msra.mxu0 0.0
  %4226 = vmatprep.subr.mxu0 0.0
  %4227 = vmatpush1.msra.mxu0 0.0
  %4228 = vmatprep.subr.mxu0 0.0
  %4229 = vmatpush1.msra.mxu0 0.0
  %4230 = vmatprep.subr.mxu0 0.0
  %4231 = vmatpush1.msra.mxu0 0.0
  %4232 = vmatprep.subr.mxu0 0.0
  %4233 = vmatpush1.msra.mxu0 0.0
  %4234 = vmatprep.subr.mxu0 0.0
  %4235 = vmatpush1.msra.mxu0 0.0
  %4236 = vmatprep.subr.mxu0 0.0
  %4237 = vmatpush1.msra.mxu0 0.0
  %4238 = vmatprep.subr.mxu0 0.0
  %4239 = vmatpush1.msra.mxu0 0.0
  %4240 = vmatprep.subr.mxu0 0.0
  %4241 = vmatpush1.msra.mxu0 0.0
  %4242 = vmatprep.subr.mxu0 0.0
  %4243 = vmatpush1.msra.mxu0 0.0
  %4244 = vmatprep.subr.mxu0 0.0
  %4245 = vmatpush1.msra.mxu0 0.0
  %4246 = vmatprep.subr.mxu0 0.0
  %4247 = vmatpush1.msra.mxu0 0.0
  %4248 = vmatprep.subr.mxu0 0.0
  %4249 = vmatpush1.msra.mxu0 0.0
  %4250 = vmatprep.subr.mxu0 0.0
  %4251 = vmatpush1.msra.mxu0 0.0
  %4252 = vmatprep.subr.mxu0 0.0
  %4253 = vmatpush1.msra.mxu0 0.0
  %4254 = vmatprep.mubr.f32.mxu0 0.0
  %v4255 = vand.u32 %v3771, 4294901760
  %v4256 = vsub.f32 %v3771, %v4255
  %v4257 = vand.u32 %v4256, 4294901760
  %4258 = vmatmul.mubr.f32.gmra.mrb[0].mxu0 %v4257
  %v4259 = vpop.f32.mrb[0].mxu0
  %v4260 = vadd.f32 %v4172, %v4259
  %v4261 = vpop.f32.mrb[0].mxu0
  %v4262 = vadd.f32 %v4174, %v4261
  %4263 = vdwg.mxu0
  %v4264 = vand.u32 %v3604, 4294901760
  %v4265 = vsub.f32 %v3604, %v4264
  %v4266 = vand.u32 %v4265, 4294901760
  %4267 = vmatprep.subr.mxu0 %v4266
  %v4268 = vand.u32 %v3603, 4294901760
  %v4269 = vsub.f32 %v3603, %v4268
  %v4270 = vand.u32 %v4269, 4294901760
  %4271 = vmatpush1.msra.mxu0 %v4270
  %v4272 = vand.u32 %v3627, 4294901760
  %v4273 = vsub.f32 %v3627, %v4272
  %v4274 = vand.u32 %v4273, 4294901760
  %4275 = vmatprep.subr.mxu0 %v4274
  %v4276 = vand.u32 %v3626, 4294901760
  %v4277 = vsub.f32 %v3626, %v4276
  %v4278 = vand.u32 %v4277, 4294901760
  %4279 = vmatpush1.msra.mxu0 %v4278
  %v4280 = vand.u32 %v3650, 4294901760
  %v4281 = vsub.f32 %v3650, %v4280
  %v4282 = vand.u32 %v4281, 4294901760
  %4283 = vmatprep.subr.mxu0 %v4282
  %v4284 = vand.u32 %v3649, 4294901760
  %v4285 = vsub.f32 %v3649, %v4284
  %v4286 = vand.u32 %v4285, 4294901760
  %4287 = vmatpush1.msra.mxu0 %v4286
  %v4288 = vand.u32 %v3673, 4294901760
  %v4289 = vsub.f32 %v3673, %v4288
  %v4290 = vand.u32 %v4289, 4294901760
  %4291 = vmatprep.subr.mxu0 %v4290
  %v4292 = vand.u32 %v3672, 4294901760
  %v4293 = vsub.f32 %v3672, %v4292
  %v4294 = vand.u32 %v4293, 4294901760
  %4295 = vmatpush1.msra.mxu0 %v4294
  %v4296 = vand.u32 %v3696, 4294901760
  %v4297 = vsub.f32 %v3696, %v4296
  %v4298 = vand.u32 %v4297, 4294901760
  %4299 = vmatprep.subr.mxu0 %v4298
  %v4300 = vand.u32 %v3695, 4294901760
  %v4301 = vsub.f32 %v3695, %v4300
  %v4302 = vand.u32 %v4301, 4294901760
  %4303 = vmatpush1.msra.mxu0 %v4302
  %v4304 = vand.u32 %v3719, 4294901760
  %v4305 = vsub.f32 %v3719, %v4304
  %v4306 = vand.u32 %v4305, 4294901760
  %4307 = vmatprep.subr.mxu0 %v4306
  %v4308 = vand.u32 %v3718, 4294901760
  %v4309 = vsub.f32 %v3718, %v4308
  %v4310 = vand.u32 %v4309, 4294901760
  %4311 = vmatpush1.msra.mxu0 %v4310
  %v4312 = vand.u32 %v3778, 4294901760
  %v4313 = vsub.f32 %v3778, %v4312
  %v4314 = vand.u32 %v4313, 4294901760
  %4315 = vmatprep.subr.mxu0 %v4314
  %v4316 = vand.u32 %v3775, 4294901760
  %v4317 = vsub.f32 %v3775, %v4316
  %v4318 = vand.u32 %v4317, 4294901760
  %4319 = vmatpush1.msra.mxu0 %v4318
  %4320 = vmatprep.subr.mxu0 0.0
  %4321 = vmatpush1.msra.mxu0 0.0
  %4322 = vmatprep.subr.mxu0 0.0
  %4323 = vmatpush1.msra.mxu0 0.0
  %4324 = vmatprep.subr.mxu0 0.0
  %4325 = vmatpush1.msra.mxu0 0.0
  %4326 = vmatprep.subr.mxu0 0.0
  %4327 = vmatpush1.msra.mxu0 0.0
  %4328 = vmatprep.subr.mxu0 0.0
  %4329 = vmatpush1.msra.mxu0 0.0
  %4330 = vmatprep.subr.mxu0 0.0
  %4331 = vmatpush1.msra.mxu0 0.0
  %4332 = vmatprep.subr.mxu0 0.0
  %4333 = vmatpush1.msra.mxu0 0.0
  %4334 = vmatprep.subr.mxu0 0.0
  %4335 = vmatpush1.msra.mxu0 0.0
  %4336 = vmatprep.subr.mxu0 0.0
  %4337 = vmatpush1.msra.mxu0 0.0
  %4338 = vmatprep.subr.mxu0 0.0
  %4339 = vmatpush1.msra.mxu0 0.0
  %4340 = vmatprep.subr.mxu0 0.0
  %4341 = vmatpush1.msra.mxu0 0.0
  %4342 = vmatprep.subr.mxu0 0.0
  %4343 = vmatpush1.msra.mxu0 0.0
  %4344 = vmatprep.subr.mxu0 0.0
  %4345 = vmatpush1.msra.mxu0 0.0
  %4346 = vmatprep.subr.mxu0 0.0
  %4347 = vmatpush1.msra.mxu0 0.0
  %4348 = vmatprep.subr.mxu0 0.0
  %4349 = vmatpush1.msra.mxu0 0.0
  %4350 = vmatprep.subr.mxu0 0.0
  %4351 = vmatpush1.msra.mxu0 0.0
  %4352 = vmatprep.subr.mxu0 0.0
  %4353 = vmatpush1.msra.mxu0 0.0
  %4354 = vmatprep.subr.mxu0 0.0
  %4355 = vmatpush1.msra.mxu0 0.0
  %4356 = vmatprep.subr.mxu0 0.0
  %4357 = vmatpush1.msra.mxu0 0.0
  %4358 = vmatprep.subr.mxu0 0.0
  %4359 = vmatpush1.msra.mxu0 0.0
  %4360 = vmatprep.subr.mxu0 0.0
  %4361 = vmatpush1.msra.mxu0 0.0
  %4362 = vmatprep.subr.mxu0 0.0
  %4363 = vmatpush1.msra.mxu0 0.0
  %4364 = vmatprep.subr.mxu0 0.0
  %4365 = vmatpush1.msra.mxu0 0.0
  %4366 = vmatprep.subr.mxu0 0.0
  %4367 = vmatpush1.msra.mxu0 0.0
  %4368 = vmatprep.subr.mxu0 0.0
  %4369 = vmatpush1.msra.mxu0 0.0
  %4370 = vmatprep.mubr.f32.mxu0 0.0
  %v4371 = vand.u32 %v3771, 4294901760
  %4372 = vmatmul.mubr.f32.gmra.mrb[0].mxu0 %v4371
  %v4373 = vpop.f32.mrb[0].mxu0
  %v4374 = vadd.f32 %v4260, %v4373
  %v4375 = vpop.f32.mrb[0].mxu0
  %v4376 = vadd.f32 %v4262, %v4375
  %4377 = vdwg.mxu0
  %v4378 = vand.u32 %v3604, 4294901760
  %4379 = vmatprep.subr.mxu0 %v4378
  %v4380 = vand.u32 %v3603, 4294901760
  %4381 = vmatpush1.msra.mxu0 %v4380
  %v4382 = vand.u32 %v3627, 4294901760
  %4383 = vmatprep.subr.mxu0 %v4382
  %v4384 = vand.u32 %v3626, 4294901760
  %4385 = vmatpush1.msra.mxu0 %v4384
  %v4386 = vand.u32 %v3650, 4294901760
  %4387 = vmatprep.subr.mxu0 %v4386
  %v4388 = vand.u32 %v3649, 4294901760
  %4389 = vmatpush1.msra.mxu0 %v4388
  %v4390 = vand.u32 %v3673, 4294901760
  %4391 = vmatprep.subr.mxu0 %v4390
  %v4392 = vand.u32 %v3672, 4294901760
  %4393 = vmatpush1.msra.mxu0 %v4392
  %v4394 = vand.u32 %v3696, 4294901760
  %4395 = vmatprep.subr.mxu0 %v4394
  %v4396 = vand.u32 %v3695, 4294901760
  %4397 = vmatpush1.msra.mxu0 %v4396
  %v4398 = vand.u32 %v3719, 4294901760
  %4399 = vmatprep.subr.mxu0 %v4398
  %v4400 = vand.u32 %v3718, 4294901760
  %4401 = vmatpush1.msra.mxu0 %v4400
  %v4402 = vand.u32 %v3778, 4294901760
  %4403 = vmatprep.subr.mxu0 %v4402
  %v4404 = vand.u32 %v3775, 4294901760
  %4405 = vmatpush1.msra.mxu0 %v4404
  %4406 = vmatprep.subr.mxu0 0.0
  %4407 = vmatpush1.msra.mxu0 0.0
  %4408 = vmatprep.subr.mxu0 0.0
  %4409 = vmatpush1.msra.mxu0 0.0
  %4410 = vmatprep.subr.mxu0 0.0
  %4411 = vmatpush1.msra.mxu0 0.0
  %4412 = vmatprep.subr.mxu0 0.0
  %4413 = vmatpush1.msra.mxu0 0.0
  %4414 = vmatprep.subr.mxu0 0.0
  %4415 = vmatpush1.msra.mxu0 0.0
  %4416 = vmatprep.subr.mxu0 0.0
  %4417 = vmatpush1.msra.mxu0 0.0
  %4418 = vmatprep.subr.mxu0 0.0
  %4419 = vmatpush1.msra.mxu0 0.0
  %4420 = vmatprep.subr.mxu0 0.0
  %4421 = vmatpush1.msra.mxu0 0.0
  %4422 = vmatprep.subr.mxu0 0.0
  %4423 = vmatpush1.msra.mxu0 0.0
  %4424 = vmatprep.subr.mxu0 0.0
  %4425 = vmatpush1.msra.mxu0 0.0
  %4426 = vmatprep.subr.mxu0 0.0
  %4427 = vmatpush1.msra.mxu0 0.0
  %4428 = vmatprep.subr.mxu0 0.0
  %4429 = vmatpush1.msra.mxu0 0.0
  %4430 = vmatprep.subr.mxu0 0.0
  %4431 = vmatpush1.msra.mxu0 0.0
  %4432 = vmatprep.subr.mxu0 0.0
  %4433 = vmatpush1.msra.mxu0 0.0
  %4434 = vmatprep.subr.mxu0 0.0
  %4435 = vmatpush1.msra.mxu0 0.0
  %4436 = vmatprep.subr.mxu0 0.0
  %4437 = vmatpush1.msra.mxu0 0.0
  %4438 = vmatprep.subr.mxu0 0.0
  %4439 = vmatpush1.msra.mxu0 0.0
  %4440 = vmatprep.subr.mxu0 0.0
  %4441 = vmatpush1.msra.mxu0 0.0
  %4442 = vmatprep.subr.mxu0 0.0
  %4443 = vmatpush1.msra.mxu0 0.0
  %4444 = vmatprep.subr.mxu0 0.0
  %4445 = vmatpush1.msra.mxu0 0.0
  %4446 = vmatprep.subr.mxu0 0.0
  %4447 = vmatpush1.msra.mxu0 0.0
  %4448 = vmatprep.subr.mxu0 0.0
  %4449 = vmatpush1.msra.mxu0 0.0
  %4450 = vmatprep.subr.mxu0 0.0
  %4451 = vmatpush1.msra.mxu0 0.0
  %4452 = vmatprep.subr.mxu0 0.0
  %4453 = vmatpush1.msra.mxu0 0.0
  %4454 = vmatprep.subr.mxu0 0.0
  %4455 = vmatpush1.msra.mxu0 0.0
  %4456 = vmatprep.mubr.f32.mxu0 0.0
  %v4457 = vand.u32 %v3771, 4294901760
  %4458 = vmatmul.mubr.f32.gmra.mrb[0].mxu0 %v4457
  %v4459 = vpop.f32.mrb[0].mxu0
  %v4460 = vadd.f32 %v4374, %v4459
  %v4461 = vpop.f32.mrb[0].mxu0
  %v4462 = vadd.f32 %v4376, %v4461
  %4463 = vdwg.mxu0
  %v4464 = vand.u32 %v3606, 4294901760
  %4465 = vmatprep.subr.mxu0 %v4464
  %v4466 = vand.u32 %v3605, 4294901760
  %4467 = vmatpush1.msra.mxu0 %v4466
  %v4468 = vand.u32 %v3629, 4294901760
  %4469 = vmatprep.subr.mxu0 %v4468
  %v4470 = vand.u32 %v3628, 4294901760
  %4471 = vmatpush1.msra.mxu0 %v4470
  %v4472 = vand.u32 %v3652, 4294901760
  %4473 = vmatprep.subr.mxu0 %v4472
  %v4474 = vand.u32 %v3651, 4294901760
  %4475 = vmatpush1.msra.mxu0 %v4474
  %v4476 = vand.u32 %v3675, 4294901760
  %4477 = vmatprep.subr.mxu0 %v4476
  %v4478 = vand.u32 %v3674, 4294901760
  %4479 = vmatpush1.msra.mxu0 %v4478
  %v4480 = vand.u32 %v3698, 4294901760
  %4481 = vmatprep.subr.mxu0 %v4480
  %v4482 = vand.u32 %v3697, 4294901760
  %4483 = vmatpush1.msra.mxu0 %v4482
  %v4484 = vand.u32 %v3721, 4294901760
  %4485 = vmatprep.subr.mxu0 %v4484
  %v4486 = vand.u32 %v3720, 4294901760
  %4487 = vmatpush1.msra.mxu0 %v4486
  %v4488 = vand.u32 %v3784, 4294901760
  %4489 = vmatprep.subr.mxu0 %v4488
  %v4490 = vand.u32 %v3781, 4294901760
  %4491 = vmatpush1.msra.mxu0 %v4490
  %4492 = vmatprep.subr.mxu0 0.0
  %4493 = vmatpush1.msra.mxu0 0.0
  %4494 = vmatprep.subr.mxu0 0.0
  %4495 = vmatpush1.msra.mxu0 0.0
  %4496 = vmatprep.subr.mxu0 0.0
  %4497 = vmatpush1.msra.mxu0 0.0
  %4498 = vmatprep.subr.mxu0 0.0
  %4499 = vmatpush1.msra.mxu0 0.0
  %4500 = vmatprep.subr.mxu0 0.0
  %4501 = vmatpush1.msra.mxu0 0.0
  %4502 = vmatprep.subr.mxu0 0.0
  %4503 = vmatpush1.msra.mxu0 0.0
  %4504 = vmatprep.subr.mxu0 0.0
  %4505 = vmatpush1.msra.mxu0 0.0
  %4506 = vmatprep.subr.mxu0 0.0
  %4507 = vmatpush1.msra.mxu0 0.0
  %4508 = vmatprep.subr.mxu0 0.0
  %4509 = vmatpush1.msra.mxu0 0.0
  %4510 = vmatprep.subr.mxu0 0.0
  %4511 = vmatpush1.msra.mxu0 0.0
  %4512 = vmatprep.subr.mxu0 0.0
  %4513 = vmatpush1.msra.mxu0 0.0
  %4514 = vmatprep.subr.mxu0 0.0
  %4515 = vmatpush1.msra.mxu0 0.0
  %4516 = vmatprep.subr.mxu0 0.0
  %4517 = vmatpush1.msra.mxu0 0.0
  %4518 = vmatprep.subr.mxu0 0.0
  %4519 = vmatpush1.msra.mxu0 0.0
  %4520 = vmatprep.subr.mxu0 0.0
  %4521 = vmatpush1.msra.mxu0 0.0
  %4522 = vmatprep.subr.mxu0 0.0
  %4523 = vmatpush1.msra.mxu0 0.0
  %4524 = vmatprep.subr.mxu0 0.0
  %4525 = vmatpush1.msra.mxu0 0.0
  %4526 = vmatprep.subr.mxu0 0.0
  %4527 = vmatpush1.msra.mxu0 0.0
  %4528 = vmatprep.subr.mxu0 0.0
  %4529 = vmatpush1.msra.mxu0 0.0
  %4530 = vmatprep.subr.mxu0 0.0
  %4531 = vmatpush1.msra.mxu0 0.0
  %4532 = vmatprep.subr.mxu0 0.0
  %4533 = vmatpush1.msra.mxu0 0.0
  %4534 = vmatprep.subr.mxu0 0.0
  %4535 = vmatpush1.msra.mxu0 0.0
  %4536 = vmatprep.subr.mxu0 0.0
  %4537 = vmatpush1.msra.mxu0 0.0
  %4538 = vmatprep.subr.mxu0 0.0
  %4539 = vmatpush1.msra.mxu0 0.0
  %4540 = vmatprep.subr.mxu0 0.0
  %4541 = vmatpush1.msra.mxu0 0.0
  %4542 = vmatprep.mubr.f32.mxu0 0.0
  %v4543 = vand.u32 %v3771, 4294901760
  %v4544 = vsub.f32 %v3771, %v4543
  %v4545 = vand.u32 %v4544, 4294901760
  %v4546 = vsub.f32 %v4544, %v4545
  %v4547 = vand.u32 %v4546, 4294901760
  %4548 = vmatmul.mubr.f32.gmra.mrb[0].mxu0 %v4547
  %v4549 = vpop.f32.mrb[0].mxu0
  %v4550 = vadd.f32 %v3768, %v4549
  %v4551 = vpop.f32.mrb[0].mxu0
  %v4552 = vadd.f32 %v3768, %v4551
  %4553 = vdwg.mxu0
  %v4554 = vand.u32 %v3606, 4294901760
  %v4555 = vsub.f32 %v3606, %v4554
  %v4556 = vand.u32 %v4555, 4294901760
  %v4557 = vsub.f32 %v4555, %v4556
  %v4558 = vand.u32 %v4557, 4294901760
  %4559 = vmatprep.subr.mxu0 %v4558
  %v4560 = vand.u32 %v3605, 4294901760
  %v4561 = vsub.f32 %v3605, %v4560
  %v4562 = vand.u32 %v4561, 4294901760
  %v4563 = vsub.f32 %v4561, %v4562
  %v4564 = vand.u32 %v4563, 4294901760
  %4565 = vmatpush1.msra.mxu0 %v4564
  %v4566 = vand.u32 %v3629, 4294901760
  %v4567 = vsub.f32 %v3629, %v4566
  %v4568 = vand.u32 %v4567, 4294901760
  %v4569 = vsub.f32 %v4567, %v4568
  %v4570 = vand.u32 %v4569, 4294901760
  %4571 = vmatprep.subr.mxu0 %v4570
  %v4572 = vand.u32 %v3628, 4294901760
  %v4573 = vsub.f32 %v3628, %v4572
  %v4574 = vand.u32 %v4573, 4294901760
  %v4575 = vsub.f32 %v4573, %v4574
  %v4576 = vand.u32 %v4575, 4294901760
  %4577 = vmatpush1.msra.mxu0 %v4576
  %v4578 = vand.u32 %v3652, 4294901760
  %v4579 = vsub.f32 %v3652, %v4578
  %v4580 = vand.u32 %v4579, 4294901760
  %v4581 = vsub.f32 %v4579, %v4580
  %v4582 = vand.u32 %v4581, 4294901760
  %4583 = vmatprep.subr.mxu0 %v4582
  %v4584 = vand.u32 %v3651, 4294901760
  %v4585 = vsub.f32 %v3651, %v4584
  %v4586 = vand.u32 %v4585, 4294901760
  %v4587 = vsub.f32 %v4585, %v4586
  %v4588 = vand.u32 %v4587, 4294901760
  %4589 = vmatpush1.msra.mxu0 %v4588
  %v4590 = vand.u32 %v3675, 4294901760
  %v4591 = vsub.f32 %v3675, %v4590
  %v4592 = vand.u32 %v4591, 4294901760
  %v4593 = vsub.f32 %v4591, %v4592
  %v4594 = vand.u32 %v4593, 4294901760
  %4595 = vmatprep.subr.mxu0 %v4594
  %v4596 = vand.u32 %v3674, 4294901760
  %v4597 = vsub.f32 %v3674, %v4596
  %v4598 = vand.u32 %v4597, 4294901760
  %v4599 = vsub.f32 %v4597, %v4598
  %v4600 = vand.u32 %v4599, 4294901760
  %4601 = vmatpush1.msra.mxu0 %v4600
  %v4602 = vand.u32 %v3698, 4294901760
  %v4603 = vsub.f32 %v3698, %v4602
  %v4604 = vand.u32 %v4603, 4294901760
  %v4605 = vsub.f32 %v4603, %v4604
  %v4606 = vand.u32 %v4605, 4294901760
  %4607 = vmatprep.subr.mxu0 %v4606
  %v4608 = vand.u32 %v3697, 4294901760
  %v4609 = vsub.f32 %v3697, %v4608
  %v4610 = vand.u32 %v4609, 4294901760
  %v4611 = vsub.f32 %v4609, %v4610
  %v4612 = vand.u32 %v4611, 4294901760
  %4613 = vmatpush1.msra.mxu0 %v4612
  %v4614 = vand.u32 %v3721, 4294901760
  %v4615 = vsub.f32 %v3721, %v4614
  %v4616 = vand.u32 %v4615, 4294901760
  %v4617 = vsub.f32 %v4615, %v4616
  %v4618 = vand.u32 %v4617, 4294901760
  %4619 = vmatprep.subr.mxu0 %v4618
  %v4620 = vand.u32 %v3720, 4294901760
  %v4621 = vsub.f32 %v3720, %v4620
  %v4622 = vand.u32 %v4621, 4294901760
  %v4623 = vsub.f32 %v4621, %v4622
  %v4624 = vand.u32 %v4623, 4294901760
  %4625 = vmatpush1.msra.mxu0 %v4624
  %v4626 = vand.u32 %v3784, 4294901760
  %v4627 = vsub.f32 %v3784, %v4626
  %v4628 = vand.u32 %v4627, 4294901760
  %v4629 = vsub.f32 %v4627, %v4628
  %v4630 = vand.u32 %v4629, 4294901760
  %4631 = vmatprep.subr.mxu0 %v4630
  %v4632 = vand.u32 %v3781, 4294901760
  %v4633 = vsub.f32 %v3781, %v4632
  %v4634 = vand.u32 %v4633, 4294901760
  %v4635 = vsub.f32 %v4633, %v4634
  %v4636 = vand.u32 %v4635, 4294901760
  %4637 = vmatpush1.msra.mxu0 %v4636
  %4638 = vmatprep.subr.mxu0 0.0
  %4639 = vmatpush1.msra.mxu0 0.0
  %4640 = vmatprep.subr.mxu0 0.0
  %4641 = vmatpush1.msra.mxu0 0.0
  %4642 = vmatprep.subr.mxu0 0.0
  %4643 = vmatpush1.msra.mxu0 0.0
  %4644 = vmatprep.subr.mxu0 0.0
  %4645 = vmatpush1.msra.mxu0 0.0
  %4646 = vmatprep.subr.mxu0 0.0
  %4647 = vmatpush1.msra.mxu0 0.0
  %4648 = vmatprep.subr.mxu0 0.0
  %4649 = vmatpush1.msra.mxu0 0.0
  %4650 = vmatprep.subr.mxu0 0.0
  %4651 = vmatpush1.msra.mxu0 0.0
  %4652 = vmatprep.subr.mxu0 0.0
  %4653 = vmatpush1.msra.mxu0 0.0
  %4654 = vmatprep.subr.mxu0 0.0
  %4655 = vmatpush1.msra.mxu0 0.0
  %4656 = vmatprep.subr.mxu0 0.0
  %4657 = vmatpush1.msra.mxu0 0.0
  %4658 = vmatprep.subr.mxu0 0.0
  %4659 = vmatpush1.msra.mxu0 0.0
  %4660 = vmatprep.subr.mxu0 0.0
  %4661 = vmatpush1.msra.mxu0 0.0
  %4662 = vmatprep.subr.mxu0 0.0
  %4663 = vmatpush1.msra.mxu0 0.0
  %4664 = vmatprep.subr.mxu0 0.0
  %4665 = vmatpush1.msra.mxu0 0.0
  %4666 = vmatprep.subr.mxu0 0.0
  %4667 = vmatpush1.msra.mxu0 0.0
  %4668 = vmatprep.subr.mxu0 0.0
  %4669 = vmatpush1.msra.mxu0 0.0
  %4670 = vmatprep.subr.mxu0 0.0
  %4671 = vmatpush1.msra.mxu0 0.0
  %4672 = vmatprep.subr.mxu0 0.0
  %4673 = vmatpush1.msra.mxu0 0.0
  %4674 = vmatprep.subr.mxu0 0.0
  %4675 = vmatpush1.msra.mxu0 0.0
  %4676 = vmatprep.subr.mxu0 0.0
  %4677 = vmatpush1.msra.mxu0 0.0
  %4678 = vmatprep.subr.mxu0 0.0
  %4679 = vmatpush1.msra.mxu0 0.0
  %4680 = vmatprep.subr.mxu0 0.0
  %4681 = vmatpush1.msra.mxu0 0.0
  %4682 = vmatprep.subr.mxu0 0.0
  %4683 = vmatpush1.msra.mxu0 0.0
  %4684 = vmatprep.subr.mxu0 0.0
  %4685 = vmatpush1.msra.mxu0 0.0
  %4686 = vmatprep.subr.mxu0 0.0
  %4687 = vmatpush1.msra.mxu0 0.0
  %4688 = vmatprep.mubr.f32.mxu0 0.0
  %v4689 = vand.u32 %v3771, 4294901760
  %4690 = vmatmul.mubr.f32.gmra.mrb[0].mxu0 %v4689
  %v4691 = vpop.f32.mrb[0].mxu0
  %v4692 = vadd.f32 %v4550, %v4691
  %v4693 = vpop.f32.mrb[0].mxu0
  %v4694 = vadd.f32 %v4552, %v4693
  %4695 = vdwg.mxu0
  %v4696 = vand.u32 %v3606, 4294901760
  %v4697 = vsub.f32 %v3606, %v4696
  %4698 = vmatprep.subr.mxu0 %v4697
  %v4699 = vand.u32 %v3605, 4294901760
  %v4700 = vsub.f32 %v3605, %v4699
  %4701 = vmatpush1.msra.mxu0 %v4700
  %v4702 = vand.u32 %v3629, 4294901760
  %v4703 = vsub.f32 %v3629, %v4702
  %4704 = vmatprep.subr.mxu0 %v4703
  %v4705 = vand.u32 %v3628, 4294901760
  %v4706 = vsub.f32 %v3628, %v4705
  %4707 = vmatpush1.msra.mxu0 %v4706
  %v4708 = vand.u32 %v3652, 4294901760
  %v4709 = vsub.f32 %v3652, %v4708
  %4710 = vmatprep.subr.mxu0 %v4709
  %v4711 = vand.u32 %v3651, 4294901760
  %v4712 = vsub.f32 %v3651, %v4711
  %4713 = vmatpush1.msra.mxu0 %v4712
  %v4714 = vand.u32 %v3675, 4294901760
  %v4715 = vsub.f32 %v3675, %v4714
  %4716 = vmatprep.subr.mxu0 %v4715
  %v4717 = vand.u32 %v3674, 4294901760
  %v4718 = vsub.f32 %v3674, %v4717
  %4719 = vmatpush1.msra.mxu0 %v4718
  %v4720 = vand.u32 %v3698, 4294901760
  %v4721 = vsub.f32 %v3698, %v4720
  %4722 = vmatprep.subr.mxu0 %v4721
  %v4723 = vand.u32 %v3697, 4294901760
  %v4724 = vsub.f32 %v3697, %v4723
  %4725 = vmatpush1.msra.mxu0 %v4724
  %v4726 = vand.u32 %v3721, 4294901760
  %v4727 = vsub.f32 %v3721, %v4726
  %4728 = vmatprep.subr.mxu0 %v4727
  %v4729 = vand.u32 %v3720, 4294901760
  %v4730 = vsub.f32 %v3720, %v4729
  %4731 = vmatpush1.msra.mxu0 %v4730
  %v4732 = vand.u32 %v3784, 4294901760
  %v4733 = vsub.f32 %v3784, %v4732
  %4734 = vmatprep.subr.mxu0 %v4733
  %v4735 = vand.u32 %v3781, 4294901760
  %v4736 = vsub.f32 %v3781, %v4735
  %4737 = vmatpush1.msra.mxu0 %v4736
  %4738 = vmatprep.subr.mxu0 0.0
  %4739 = vmatpush1.msra.mxu0 0.0
  %4740 = vmatprep.subr.mxu0 0.0
  %4741 = vmatpush1.msra.mxu0 0.0
  %4742 = vmatprep.subr.mxu0 0.0
  %4743 = vmatpush1.msra.mxu0 0.0
  %4744 = vmatprep.subr.mxu0 0.0
  %4745 = vmatpush1.msra.mxu0 0.0
  %4746 = vmatprep.subr.mxu0 0.0
  %4747 = vmatpush1.msra.mxu0 0.0
  %4748 = vmatprep.subr.mxu0 0.0
  %4749 = vmatpush1.msra.mxu0 0.0
  %4750 = vmatprep.subr.mxu0 0.0
  %4751 = vmatpush1.msra.mxu0 0.0
  %4752 = vmatprep.subr.mxu0 0.0
  %4753 = vmatpush1.msra.mxu0 0.0
  %4754 = vmatprep.subr.mxu0 0.0
  %4755 = vmatpush1.msra.mxu0 0.0
  %4756 = vmatprep.subr.mxu0 0.0
  %4757 = vmatpush1.msra.mxu0 0.0
  %4758 = vmatprep.subr.mxu0 0.0
  %4759 = vmatpush1.msra.mxu0 0.0
  %4760 = vmatprep.subr.mxu0 0.0
  %4761 = vmatpush1.msra.mxu0 0.0
  %4762 = vmatprep.subr.mxu0 0.0
  %4763 = vmatpush1.msra.mxu0 0.0
  %4764 = vmatprep.subr.mxu0 0.0
  %4765 = vmatpush1.msra.mxu0 0.0
  %4766 = vmatprep.subr.mxu0 0.0
  %4767 = vmatpush1.msra.mxu0 0.0
  %4768 = vmatprep.subr.mxu0 0.0
  %4769 = vmatpush1.msra.mxu0 0.0
  %4770 = vmatprep.subr.mxu0 0.0
  %4771 = vmatpush1.msra.mxu0 0.0
  %4772 = vmatprep.subr.mxu0 0.0
  %4773 = vmatpush1.msra.mxu0 0.0
  %4774 = vmatprep.subr.mxu0 0.0
  %4775 = vmatpush1.msra.mxu0 0.0
  %4776 = vmatprep.subr.mxu0 0.0
  %4777 = vmatpush1.msra.mxu0 0.0
  %4778 = vmatprep.subr.mxu0 0.0
  %4779 = vmatpush1.msra.mxu0 0.0
  %4780 = vmatprep.subr.mxu0 0.0
  %4781 = vmatpush1.msra.mxu0 0.0
  %4782 = vmatprep.subr.mxu0 0.0
  %4783 = vmatpush1.msra.mxu0 0.0
  %4784 = vmatprep.subr.mxu0 0.0
  %4785 = vmatpush1.msra.mxu0 0.0
  %4786 = vmatprep.subr.mxu0 0.0
  %4787 = vmatpush1.msra.mxu0 0.0
  %4788 = vmatprep.mubr.f32.mxu0 0.0
  %v4789 = vand.u32 %v3771, 4294901760
  %v4790 = vsub.f32 %v3771, %v4789
  %4791 = vmatmul.mubr.f32.gmra.mrb[0].mxu0 %v4790
  %v4792 = vpop.f32.mrb[0].mxu0
  %v4793 = vadd.f32 %v4692, %v4792
  %v4794 = vpop.f32.mrb[0].mxu0
  %v4795 = vadd.f32 %v4694, %v4794
  %4796 = vdwg.mxu0
  %v4797 = vand.u32 %v3606, 4294901760
  %4798 = vmatprep.subr.mxu0 %v4797
  %v4799 = vand.u32 %v3605, 4294901760
  %4800 = vmatpush1.msra.mxu0 %v4799
  %v4801 = vand.u32 %v3629, 4294901760
  %4802 = vmatprep.subr.mxu0 %v4801
  %v4803 = vand.u32 %v3628, 4294901760
  %4804 = vmatpush1.msra.mxu0 %v4803
  %v4805 = vand.u32 %v3652, 4294901760
  %4806 = vmatprep.subr.mxu0 %v4805
  %v4807 = vand.u32 %v3651, 4294901760
  %4808 = vmatpush1.msra.mxu0 %v4807
  %v4809 = vand.u32 %v3675, 4294901760
  %4810 = vmatprep.subr.mxu0 %v4809
  %v4811 = vand.u32 %v3674, 4294901760
  %4812 = vmatpush1.msra.mxu0 %v4811
  %v4813 = vand.u32 %v3698, 4294901760
  %4814 = vmatprep.subr.mxu0 %v4813
  %v4815 = vand.u32 %v3697, 4294901760
  %4816 = vmatpush1.msra.mxu0 %v4815
  %v4817 = vand.u32 %v3721, 4294901760
  %4818 = vmatprep.subr.mxu0 %v4817
  %v4819 = vand.u32 %v3720, 4294901760
  %4820 = vmatpush1.msra.mxu0 %v4819
  %v4821 = vand.u32 %v3784, 4294901760
  %4822 = vmatprep.subr.mxu0 %v4821
  %v4823 = vand.u32 %v3781, 4294901760
  %4824 = vmatpush1.msra.mxu0 %v4823
  %4825 = vmatprep.subr.mxu0 0.0
  %4826 = vmatpush1.msra.mxu0 0.0
  %4827 = vmatprep.subr.mxu0 0.0
  %4828 = vmatpush1.msra.mxu0 0.0
  %4829 = vmatprep.subr.mxu0 0.0
  %4830 = vmatpush1.msra.mxu0 0.0
  %4831 = vmatprep.subr.mxu0 0.0
  %4832 = vmatpush1.msra.mxu0 0.0
  %4833 = vmatprep.subr.mxu0 0.0
  %4834 = vmatpush1.msra.mxu0 0.0
  %4835 = vmatprep.subr.mxu0 0.0
  %4836 = vmatpush1.msra.mxu0 0.0
  %4837 = vmatprep.subr.mxu0 0.0
  %4838 = vmatpush1.msra.mxu0 0.0
  %4839 = vmatprep.subr.mxu0 0.0
  %4840 = vmatpush1.msra.mxu0 0.0
  %4841 = vmatprep.subr.mxu0 0.0
  %4842 = vmatpush1.msra.mxu0 0.0
  %4843 = vmatprep.subr.mxu0 0.0
  %4844 = vmatpush1.msra.mxu0 0.0
  %4845 = vmatprep.subr.mxu0 0.0
  %4846 = vmatpush1.msra.mxu0 0.0
  %4847 = vmatprep.subr.mxu0 0.0
  %4848 = vmatpush1.msra.mxu0 0.0
  %4849 = vmatprep.subr.mxu0 0.0
  %4850 = vmatpush1.msra.mxu0 0.0
  %4851 = vmatprep.subr.mxu0 0.0
  %4852 = vmatpush1.msra.mxu0 0.0
  %4853 = vmatprep.subr.mxu0 0.0
  %4854 = vmatpush1.msra.mxu0 0.0
  %4855 = vmatprep.subr.mxu0 0.0
  %4856 = vmatpush1.msra.mxu0 0.0
  %4857 = vmatprep.subr.mxu0 0.0
  %4858 = vmatpush1.msra.mxu0 0.0
  %4859 = vmatprep.subr.mxu0 0.0
  %4860 = vmatpush1.msra.mxu0 0.0
  %4861 = vmatprep.subr.mxu0 0.0
  %4862 = vmatpush1.msra.mxu0 0.0
  %4863 = vmatprep.subr.mxu0 0.0
  %4864 = vmatpush1.msra.mxu0 0.0
  %4865 = vmatprep.subr.mxu0 0.0
  %4866 = vmatpush1.msra.mxu0 0.0
  %4867 = vmatprep.subr.mxu0 0.0
  %4868 = vmatpush1.msra.mxu0 0.0
  %4869 = vmatprep.subr.mxu0 0.0
  %4870 = vmatpush1.msra.mxu0 0.0
  %4871 = vmatprep.subr.mxu0 0.0
  %4872 = vmatpush1.msra.mxu0 0.0
  %4873 = vmatprep.subr.mxu0 0.0
  %4874 = vmatpush1.msra.mxu0 0.0
  %4875 = vmatprep.mubr.f32.mxu0 0.0
  %v4876 = vand.u32 %v3771, 4294901760
  %v4877 = vsub.f32 %v3771, %v4876
  %v4878 = vand.u32 %v4877, 4294901760
  %4879 = vmatmul.mubr.f32.gmra.mrb[0].mxu0 %v4878
  %v4880 = vpop.f32.mrb[0].mxu0
  %v4881 = vadd.f32 %v4793, %v4880
  %v4882 = vpop.f32.mrb[0].mxu0
  %v4883 = vadd.f32 %v4795, %v4882
  %4884 = vdwg.mxu0
  %v4885 = vand.u32 %v3606, 4294901760
  %v4886 = vsub.f32 %v3606, %v4885
  %v4887 = vand.u32 %v4886, 4294901760
  %4888 = vmatprep.subr.mxu0 %v4887
  %v4889 = vand.u32 %v3605, 4294901760
  %v4890 = vsub.f32 %v3605, %v4889
  %v4891 = vand.u32 %v4890, 4294901760
  %4892 = vmatpush1.msra.mxu0 %v4891
  %v4893 = vand.u32 %v3629, 4294901760
  %v4894 = vsub.f32 %v3629, %v4893
  %v4895 = vand.u32 %v4894, 4294901760
  %4896 = vmatprep.subr.mxu0 %v4895
  %v4897 = vand.u32 %v3628, 4294901760
  %v4898 = vsub.f32 %v3628, %v4897
  %v4899 = vand.u32 %v4898, 4294901760
  %4900 = vmatpush1.msra.mxu0 %v4899
  %v4901 = vand.u32 %v3652, 4294901760
  %v4902 = vsub.f32 %v3652, %v4901
  %v4903 = vand.u32 %v4902, 4294901760
  %4904 = vmatprep.subr.mxu0 %v4903
  %v4905 = vand.u32 %v3651, 4294901760
  %v4906 = vsub.f32 %v3651, %v4905
  %v4907 = vand.u32 %v4906, 4294901760
  %4908 = vmatpush1.msra.mxu0 %v4907
  %v4909 = vand.u32 %v3675, 4294901760
  %v4910 = vsub.f32 %v3675, %v4909
  %v4911 = vand.u32 %v4910, 4294901760
  %4912 = vmatprep.subr.mxu0 %v4911
  %v4913 = vand.u32 %v3674, 4294901760
  %v4914 = vsub.f32 %v3674, %v4913
  %v4915 = vand.u32 %v4914, 4294901760
  %4916 = vmatpush1.msra.mxu0 %v4915
  %v4917 = vand.u32 %v3698, 4294901760
  %v4918 = vsub.f32 %v3698, %v4917
  %v4919 = vand.u32 %v4918, 4294901760
  %4920 = vmatprep.subr.mxu0 %v4919
  %v4921 = vand.u32 %v3697, 4294901760
  %v4922 = vsub.f32 %v3697, %v4921
  %v4923 = vand.u32 %v4922, 4294901760
  %4924 = vmatpush1.msra.mxu0 %v4923
  %v4925 = vand.u32 %v3721, 4294901760
  %v4926 = vsub.f32 %v3721, %v4925
  %v4927 = vand.u32 %v4926, 4294901760
  %4928 = vmatprep.subr.mxu0 %v4927
  %v4929 = vand.u32 %v3720, 4294901760
  %v4930 = vsub.f32 %v3720, %v4929
  %v4931 = vand.u32 %v4930, 4294901760
  %4932 = vmatpush1.msra.mxu0 %v4931
  %v4933 = vand.u32 %v3784, 4294901760
  %v4934 = vsub.f32 %v3784, %v4933
  %v4935 = vand.u32 %v4934, 4294901760
  %4936 = vmatprep.subr.mxu0 %v4935
  %v4937 = vand.u32 %v3781, 4294901760
  %v4938 = vsub.f32 %v3781, %v4937
  %v4939 = vand.u32 %v4938, 4294901760
  %4940 = vmatpush1.msra.mxu0 %v4939
  %4941 = vmatprep.subr.mxu0 0.0
  %4942 = vmatpush1.msra.mxu0 0.0
  %4943 = vmatprep.subr.mxu0 0.0
  %4944 = vmatpush1.msra.mxu0 0.0
  %4945 = vmatprep.subr.mxu0 0.0
  %4946 = vmatpush1.msra.mxu0 0.0
  %4947 = vmatprep.subr.mxu0 0.0
  %4948 = vmatpush1.msra.mxu0 0.0
  %4949 = vmatprep.subr.mxu0 0.0
  %4950 = vmatpush1.msra.mxu0 0.0
  %4951 = vmatprep.subr.mxu0 0.0
  %4952 = vmatpush1.msra.mxu0 0.0
  %4953 = vmatprep.subr.mxu0 0.0
  %4954 = vmatpush1.msra.mxu0 0.0
  %4955 = vmatprep.subr.mxu0 0.0
  %4956 = vmatpush1.msra.mxu0 0.0
  %4957 = vmatprep.subr.mxu0 0.0
  %4958 = vmatpush1.msra.mxu0 0.0
  %4959 = vmatprep.subr.mxu0 0.0
  %4960 = vmatpush1.msra.mxu0 0.0
  %4961 = vmatprep.subr.mxu0 0.0
  %4962 = vmatpush1.msra.mxu0 0.0
  %4963 = vmatprep.subr.mxu0 0.0
  %4964 = vmatpush1.msra.mxu0 0.0
  %4965 = vmatprep.subr.mxu0 0.0
  %4966 = vmatpush1.msra.mxu0 0.0
  %4967 = vmatprep.subr.mxu0 0.0
  %4968 = vmatpush1.msra.mxu0 0.0
  %4969 = vmatprep.subr.mxu0 0.0
  %4970 = vmatpush1.msra.mxu0 0.0
  %4971 = vmatprep.subr.mxu0 0.0
  %4972 = vmatpush1.msra.mxu0 0.0
  %4973 = vmatprep.subr.mxu0 0.0
  %4974 = vmatpush1.msra.mxu0 0.0
  %4975 = vmatprep.subr.mxu0 0.0
  %4976 = vmatpush1.msra.mxu0 0.0
  %4977 = vmatprep.subr.mxu0 0.0
  %4978 = vmatpush1.msra.mxu0 0.0
  %4979 = vmatprep.subr.mxu0 0.0
  %4980 = vmatpush1.msra.mxu0 0.0
  %4981 = vmatprep.subr.mxu0 0.0
  %4982 = vmatpush1.msra.mxu0 0.0
  %4983 = vmatprep.subr.mxu0 0.0
  %4984 = vmatpush1.msra.mxu0 0.0
  %4985 = vmatprep.subr.mxu0 0.0
  %4986 = vmatpush1.msra.mxu0 0.0
  %4987 = vmatprep.subr.mxu0 0.0
  %4988 = vmatpush1.msra.mxu0 0.0
  %4989 = vmatprep.subr.mxu0 0.0
  %4990 = vmatpush1.msra.mxu0 0.0
  %4991 = vmatprep.mubr.f32.mxu0 0.0
  %v4992 = vand.u32 %v3771, 4294901760
  %4993 = vmatmul.mubr.f32.gmra.mrb[0].mxu0 %v4992
  %v4994 = vpop.f32.mrb[0].mxu0
  %v4995 = vadd.f32 %v4881, %v4994
  %v4996 = vpop.f32.mrb[0].mxu0
  %v4997 = vadd.f32 %v4883, %v4996
  %4998 = vdwg.mxu0
  %v4999 = vand.u32 %v3606, 4294901760
  %5000 = vmatprep.subr.mxu0 %v4999
  %v5001 = vand.u32 %v3605, 4294901760
  %5002 = vmatpush1.msra.mxu0 %v5001
  %v5003 = vand.u32 %v3629, 4294901760
  %5004 = vmatprep.subr.mxu0 %v5003
  %v5005 = vand.u32 %v3628, 4294901760
  %5006 = vmatpush1.msra.mxu0 %v5005
  %v5007 = vand.u32 %v3652, 4294901760
  %5008 = vmatprep.subr.mxu0 %v5007
  %v5009 = vand.u32 %v3651, 4294901760
  %5010 = vmatpush1.msra.mxu0 %v5009
  %v5011 = vand.u32 %v3675, 4294901760
  %5012 = vmatprep.subr.mxu0 %v5011
  %v5013 = vand.u32 %v3674, 4294901760
  %5014 = vmatpush1.msra.mxu0 %v5013
  %v5015 = vand.u32 %v3698, 4294901760
  %5016 = vmatprep.subr.mxu0 %v5015
  %v5017 = vand.u32 %v3697, 4294901760
  %5018 = vmatpush1.msra.mxu0 %v5017
  %v5019 = vand.u32 %v3721, 4294901760
  %5020 = vmatprep.subr.mxu0 %v5019
  %v5021 = vand.u32 %v3720, 4294901760
  %5022 = vmatpush1.msra.mxu0 %v5021
  %v5023 = vand.u32 %v3784, 4294901760
  %5024 = vmatprep.subr.mxu0 %v5023
  %v5025 = vand.u32 %v3781, 4294901760
  %5026 = vmatpush1.msra.mxu0 %v5025
  %5027 = vmatprep.subr.mxu0 0.0
  %5028 = vmatpush1.msra.mxu0 0.0
  %5029 = vmatprep.subr.mxu0 0.0
  %5030 = vmatpush1.msra.mxu0 0.0
  %5031 = vmatprep.subr.mxu0 0.0
  %5032 = vmatpush1.msra.mxu0 0.0
  %5033 = vmatprep.subr.mxu0 0.0
  %5034 = vmatpush1.msra.mxu0 0.0
  %5035 = vmatprep.subr.mxu0 0.0
  %5036 = vmatpush1.msra.mxu0 0.0
  %5037 = vmatprep.subr.mxu0 0.0
  %5038 = vmatpush1.msra.mxu0 0.0
  %5039 = vmatprep.subr.mxu0 0.0
  %5040 = vmatpush1.msra.mxu0 0.0
  %5041 = vmatprep.subr.mxu0 0.0
  %5042 = vmatpush1.msra.mxu0 0.0
  %5043 = vmatprep.subr.mxu0 0.0
  %5044 = vmatpush1.msra.mxu0 0.0
  %5045 = vmatprep.subr.mxu0 0.0
  %5046 = vmatpush1.msra.mxu0 0.0
  %5047 = vmatprep.subr.mxu0 0.0
  %5048 = vmatpush1.msra.mxu0 0.0
  %5049 = vmatprep.subr.mxu0 0.0
  %5050 = vmatpush1.msra.mxu0 0.0
  %5051 = vmatprep.subr.mxu0 0.0
  %5052 = vmatpush1.msra.mxu0 0.0
  %5053 = vmatprep.subr.mxu0 0.0
  %5054 = vmatpush1.msra.mxu0 0.0
  %5055 = vmatprep.subr.mxu0 0.0
  %5056 = vmatpush1.msra.mxu0 0.0
  %5057 = vmatprep.subr.mxu0 0.0
  %5058 = vmatpush1.msra.mxu0 0.0
  %5059 = vmatprep.subr.mxu0 0.0
  %5060 = vmatpush1.msra.mxu0 0.0
  %5061 = vmatprep.subr.mxu0 0.0
  %5062 = vmatpush1.msra.mxu0 0.0
  %5063 = vmatprep.subr.mxu0 0.0
  %5064 = vmatpush1.msra.mxu0 0.0
  %5065 = vmatprep.subr.mxu0 0.0
  %5066 = vmatpush1.msra.mxu0 0.0
  %5067 = vmatprep.subr.mxu0 0.0
  %5068 = vmatpush1.msra.mxu0 0.0
  %5069 = vmatprep.subr.mxu0 0.0
  %5070 = vmatpush1.msra.mxu0 0.0
  %5071 = vmatprep.subr.mxu0 0.0
  %5072 = vmatpush1.msra.mxu0 0.0
  %5073 = vmatprep.subr.mxu0 0.0
  %5074 = vmatpush1.msra.mxu0 0.0
  %5075 = vmatprep.subr.mxu0 0.0
  %5076 = vmatpush1.msra.mxu0 0.0
  %5077 = vmatprep.mubr.f32.mxu0 0.0
  %v5078 = vand.u32 %v3771, 4294901760
  %5079 = vmatmul.mubr.f32.gmra.mrb[0].mxu0 %v5078
  %v5080 = vpop.f32.mrb[0].mxu0
  %v5081 = vadd.f32 %v4995, %v5080
  %v5082 = vpop.f32.mrb[0].mxu0
  %v5083 = vadd.f32 %v4997, %v5082
  %5084 = vdwg.mxu0
  %v5085 = vand.u32 %v3608, 4294901760
  %5086 = vmatprep.subr.mxu0 %v5085
  %v5087 = vand.u32 %v3607, 4294901760
  %5088 = vmatpush1.msra.mxu0 %v5087
  %v5089 = vand.u32 %v3631, 4294901760
  %5090 = vmatprep.subr.mxu0 %v5089
  %v5091 = vand.u32 %v3630, 4294901760
  %5092 = vmatpush1.msra.mxu0 %v5091
  %v5093 = vand.u32 %v3654, 4294901760
  %5094 = vmatprep.subr.mxu0 %v5093
  %v5095 = vand.u32 %v3653, 4294901760
  %5096 = vmatpush1.msra.mxu0 %v5095
  %v5097 = vand.u32 %v3677, 4294901760
  %5098 = vmatprep.subr.mxu0 %v5097
  %v5099 = vand.u32 %v3676, 4294901760
  %5100 = vmatpush1.msra.mxu0 %v5099
  %v5101 = vand.u32 %v3700, 4294901760
  %5102 = vmatprep.subr.mxu0 %v5101
  %v5103 = vand.u32 %v3699, 4294901760
  %5104 = vmatpush1.msra.mxu0 %v5103
  %v5105 = vand.u32 %v3723, 4294901760
  %5106 = vmatprep.subr.mxu0 %v5105
  %v5107 = vand.u32 %v3722, 4294901760
  %5108 = vmatpush1.msra.mxu0 %v5107
  %v5109 = vand.u32 %v3790, 4294901760
  %5110 = vmatprep.subr.mxu0 %v5109
  %v5111 = vand.u32 %v3787, 4294901760
  %5112 = vmatpush1.msra.mxu0 %v5111
  %5113 = vmatprep.subr.mxu0 0.0
  %5114 = vmatpush1.msra.mxu0 0.0
  %5115 = vmatprep.subr.mxu0 0.0
  %5116 = vmatpush1.msra.mxu0 0.0
  %5117 = vmatprep.subr.mxu0 0.0
  %5118 = vmatpush1.msra.mxu0 0.0
  %5119 = vmatprep.subr.mxu0 0.0
  %5120 = vmatpush1.msra.mxu0 0.0
  %5121 = vmatprep.subr.mxu0 0.0
  %5122 = vmatpush1.msra.mxu0 0.0
  %5123 = vmatprep.subr.mxu0 0.0
  %5124 = vmatpush1.msra.mxu0 0.0
  %5125 = vmatprep.subr.mxu0 0.0
  %5126 = vmatpush1.msra.mxu0 0.0
  %5127 = vmatprep.subr.mxu0 0.0
  %5128 = vmatpush1.msra.mxu0 0.0
  %5129 = vmatprep.subr.mxu0 0.0
  %5130 = vmatpush1.msra.mxu0 0.0
  %5131 = vmatprep.subr.mxu0 0.0
  %5132 = vmatpush1.msra.mxu0 0.0
  %5133 = vmatprep.subr.mxu0 0.0
  %5134 = vmatpush1.msra.mxu0 0.0
  %5135 = vmatprep.subr.mxu0 0.0
  %5136 = vmatpush1.msra.mxu0 0.0
  %5137 = vmatprep.subr.mxu0 0.0
  %5138 = vmatpush1.msra.mxu0 0.0
  %5139 = vmatprep.subr.mxu0 0.0
  %5140 = vmatpush1.msra.mxu0 0.0
  %5141 = vmatprep.subr.mxu0 0.0
  %5142 = vmatpush1.msra.mxu0 0.0
  %5143 = vmatprep.subr.mxu0 0.0
  %5144 = vmatpush1.msra.mxu0 0.0
  %5145 = vmatprep.subr.mxu0 0.0
  %5146 = vmatpush1.msra.mxu0 0.0
  %5147 = vmatprep.subr.mxu0 0.0
  %5148 = vmatpush1.msra.mxu0 0.0
  %5149 = vmatprep.subr.mxu0 0.0
  %5150 = vmatpush1.msra.mxu0 0.0
  %5151 = vmatprep.subr.mxu0 0.0
  %5152 = vmatpush1.msra.mxu0 0.0
  %5153 = vmatprep.subr.mxu0 0.0
  %5154 = vmatpush1.msra.mxu0 0.0
  %5155 = vmatprep.subr.mxu0 0.0
  %5156 = vmatpush1.msra.mxu0 0.0
  %5157 = vmatprep.subr.mxu0 0.0
  %5158 = vmatpush1.msra.mxu0 0.0
  %5159 = vmatprep.subr.mxu0 0.0
  %5160 = vmatpush1.msra.mxu0 0.0
  %5161 = vmatprep.subr.mxu0 0.0
  %5162 = vmatpush1.msra.mxu0 0.0
  %5163 = vmatprep.mubr.f32.mxu0 0.0
  %v5164 = vand.u32 %v3771, 4294901760
  %v5165 = vsub.f32 %v3771, %v5164
  %v5166 = vand.u32 %v5165, 4294901760
  %v5167 = vsub.f32 %v5165, %v5166
  %v5168 = vand.u32 %v5167, 4294901760
  %5169 = vmatmul.mubr.f32.gmra.mrb[0].mxu0 %v5168
  %v5170 = vpop.f32.mrb[0].mxu0
  %v5171 = vadd.f32 %v3768, %v5170
  %v5172 = vpop.f32.mrb[0].mxu0
  %v5173 = vadd.f32 %v3768, %v5172
  %5174 = vdwg.mxu0
  %v5175 = vand.u32 %v3608, 4294901760
  %v5176 = vsub.f32 %v3608, %v5175
  %v5177 = vand.u32 %v5176, 4294901760
  %v5178 = vsub.f32 %v5176, %v5177
  %v5179 = vand.u32 %v5178, 4294901760
  %5180 = vmatprep.subr.mxu0 %v5179
  %v5181 = vand.u32 %v3607, 4294901760
  %v5182 = vsub.f32 %v3607, %v5181
  %v5183 = vand.u32 %v5182, 4294901760
  %v5184 = vsub.f32 %v5182, %v5183
  %v5185 = vand.u32 %v5184, 4294901760
  %5186 = vmatpush1.msra.mxu0 %v5185
  %v5187 = vand.u32 %v3631, 4294901760
  %v5188 = vsub.f32 %v3631, %v5187
  %v5189 = vand.u32 %v5188, 4294901760
  %v5190 = vsub.f32 %v5188, %v5189
  %v5191 = vand.u32 %v5190, 4294901760
  %5192 = vmatprep.subr.mxu0 %v5191
  %v5193 = vand.u32 %v3630, 4294901760
  %v5194 = vsub.f32 %v3630, %v5193
  %v5195 = vand.u32 %v5194, 4294901760
  %v5196 = vsub.f32 %v5194, %v5195
  %v5197 = vand.u32 %v5196, 4294901760
  %5198 = vmatpush1.msra.mxu0 %v5197
  %v5199 = vand.u32 %v3654, 4294901760
  %v5200 = vsub.f32 %v3654, %v5199
  %v5201 = vand.u32 %v5200, 4294901760
  %v5202 = vsub.f32 %v5200, %v5201
  %v5203 = vand.u32 %v5202, 4294901760
  %5204 = vmatprep.subr.mxu0 %v5203
  %v5205 = vand.u32 %v3653, 4294901760
  %v5206 = vsub.f32 %v3653, %v5205
  %v5207 = vand.u32 %v5206, 4294901760
  %v5208 = vsub.f32 %v5206, %v5207
  %v5209 = vand.u32 %v5208, 4294901760
  %5210 = vmatpush1.msra.mxu0 %v5209
  %v5211 = vand.u32 %v3677, 4294901760
  %v5212 = vsub.f32 %v3677, %v5211
  %v5213 = vand.u32 %v5212, 4294901760
  %v5214 = vsub.f32 %v5212, %v5213
  %v5215 = vand.u32 %v5214, 4294901760
  %5216 = vmatprep.subr.mxu0 %v5215
  %v5217 = vand.u32 %v3676, 4294901760
  %v5218 = vsub.f32 %v3676, %v5217
  %v5219 = vand.u32 %v5218, 4294901760
  %v5220 = vsub.f32 %v5218, %v5219
  %v5221 = vand.u32 %v5220, 4294901760
  %5222 = vmatpush1.msra.mxu0 %v5221
  %v5223 = vand.u32 %v3700, 4294901760
  %v5224 = vsub.f32 %v3700, %v5223
  %v5225 = vand.u32 %v5224, 4294901760
  %v5226 = vsub.f32 %v5224, %v5225
  %v5227 = vand.u32 %v5226, 4294901760
  %5228 = vmatprep.subr.mxu0 %v5227
  %v5229 = vand.u32 %v3699, 4294901760
  %v5230 = vsub.f32 %v3699, %v5229
  %v5231 = vand.u32 %v5230, 4294901760
  %v5232 = vsub.f32 %v5230, %v5231
  %v5233 = vand.u32 %v5232, 4294901760
  %5234 = vmatpush1.msra.mxu0 %v5233
  %v5235 = vand.u32 %v3723, 4294901760
  %v5236 = vsub.f32 %v3723, %v5235
  %v5237 = vand.u32 %v5236, 4294901760
  %v5238 = vsub.f32 %v5236, %v5237
  %v5239 = vand.u32 %v5238, 4294901760
  %5240 = vmatprep.subr.mxu0 %v5239
  %v5241 = vand.u32 %v3722, 4294901760
  %v5242 = vsub.f32 %v3722, %v5241
  %v5243 = vand.u32 %v5242, 4294901760
  %v5244 = vsub.f32 %v5242, %v5243
  %v5245 = vand.u32 %v5244, 4294901760
  %5246 = vmatpush1.msra.mxu0 %v5245
  %v5247 = vand.u32 %v3790, 4294901760
  %v5248 = vsub.f32 %v3790, %v5247
  %v5249 = vand.u32 %v5248, 4294901760
  %v5250 = vsub.f32 %v5248, %v5249
  %v5251 = vand.u32 %v5250, 4294901760
  %5252 = vmatprep.subr.mxu0 %v5251
  %v5253 = vand.u32 %v3787, 4294901760
  %v5254 = vsub.f32 %v3787, %v5253
  %v5255 = vand.u32 %v5254, 4294901760
  %v5256 = vsub.f32 %v5254, %v5255
  %v5257 = vand.u32 %v5256, 4294901760
  %5258 = vmatpush1.msra.mxu0 %v5257
  %5259 = vmatprep.subr.mxu0 0.0
  %5260 = vmatpush1.msra.mxu0 0.0
  %5261 = vmatprep.subr.mxu0 0.0
  %5262 = vmatpush1.msra.mxu0 0.0
  %5263 = vmatprep.subr.mxu0 0.0
  %5264 = vmatpush1.msra.mxu0 0.0
  %5265 = vmatprep.subr.mxu0 0.0
  %5266 = vmatpush1.msra.mxu0 0.0
  %5267 = vmatprep.subr.mxu0 0.0
  %5268 = vmatpush1.msra.mxu0 0.0
  %5269 = vmatprep.subr.mxu0 0.0
  %5270 = vmatpush1.msra.mxu0 0.0
  %5271 = vmatprep.subr.mxu0 0.0
  %5272 = vmatpush1.msra.mxu0 0.0
  %5273 = vmatprep.subr.mxu0 0.0
  %5274 = vmatpush1.msra.mxu0 0.0
  %5275 = vmatprep.subr.mxu0 0.0
  %5276 = vmatpush1.msra.mxu0 0.0
  %5277 = vmatprep.subr.mxu0 0.0
  %5278 = vmatpush1.msra.mxu0 0.0
  %5279 = vmatprep.subr.mxu0 0.0
  %5280 = vmatpush1.msra.mxu0 0.0
  %5281 = vmatprep.subr.mxu0 0.0
  %5282 = vmatpush1.msra.mxu0 0.0
  %5283 = vmatprep.subr.mxu0 0.0
  %5284 = vmatpush1.msra.mxu0 0.0
  %5285 = vmatprep.subr.mxu0 0.0
  %5286 = vmatpush1.msra.mxu0 0.0
  %5287 = vmatprep.subr.mxu0 0.0
  %5288 = vmatpush1.msra.mxu0 0.0
  %5289 = vmatprep.subr.mxu0 0.0
  %5290 = vmatpush1.msra.mxu0 0.0
  %5291 = vmatprep.subr.mxu0 0.0
  %5292 = vmatpush1.msra.mxu0 0.0
  %5293 = vmatprep.subr.mxu0 0.0
  %5294 = vmatpush1.msra.mxu0 0.0
  %5295 = vmatprep.subr.mxu0 0.0
  %5296 = vmatpush1.msra.mxu0 0.0
  %5297 = vmatprep.subr.mxu0 0.0
  %5298 = vmatpush1.msra.mxu0 0.0
  %5299 = vmatprep.subr.mxu0 0.0
  %5300 = vmatpush1.msra.mxu0 0.0
  %5301 = vmatprep.subr.mxu0 0.0
  %5302 = vmatpush1.msra.mxu0 0.0
  %5303 = vmatprep.subr.mxu0 0.0
  %5304 = vmatpush1.msra.mxu0 0.0
  %5305 = vmatprep.subr.mxu0 0.0
  %5306 = vmatpush1.msra.mxu0 0.0
  %5307 = vmatprep.subr.mxu0 0.0
  %5308 = vmatpush1.msra.mxu0 0.0
  %5309 = vmatprep.mubr.f32.mxu0 0.0
  %v5310 = vand.u32 %v3771, 4294901760
  %5311 = vmatmul.mubr.f32.gmra.mrb[0].mxu0 %v5310
  %v5312 = vpop.f32.mrb[0].mxu0
  %v5313 = vadd.f32 %v5171, %v5312
  %v5314 = vpop.f32.mrb[0].mxu0
  %v5315 = vadd.f32 %v5173, %v5314
  %5316 = vdwg.mxu0
  %v5317 = vand.u32 %v3608, 4294901760
  %v5318 = vsub.f32 %v3608, %v5317
  %5319 = vmatprep.subr.mxu0 %v5318
  %v5320 = vand.u32 %v3607, 4294901760
  %v5321 = vsub.f32 %v3607, %v5320
  %5322 = vmatpush1.msra.mxu0 %v5321
  %v5323 = vand.u32 %v3631, 4294901760
  %v5324 = vsub.f32 %v3631, %v5323
  %5325 = vmatprep.subr.mxu0 %v5324
  %v5326 = vand.u32 %v3630, 4294901760
  %v5327 = vsub.f32 %v3630, %v5326
  %5328 = vmatpush1.msra.mxu0 %v5327
  %v5329 = vand.u32 %v3654, 4294901760
  %v5330 = vsub.f32 %v3654, %v5329
  %5331 = vmatprep.subr.mxu0 %v5330
  %v5332 = vand.u32 %v3653, 4294901760
  %v5333 = vsub.f32 %v3653, %v5332
  %5334 = vmatpush1.msra.mxu0 %v5333
  %v5335 = vand.u32 %v3677, 4294901760
  %v5336 = vsub.f32 %v3677, %v5335
  %5337 = vmatprep.subr.mxu0 %v5336
  %v5338 = vand.u32 %v3676, 4294901760
  %v5339 = vsub.f32 %v3676, %v5338
  %5340 = vmatpush1.msra.mxu0 %v5339
  %v5341 = vand.u32 %v3700, 4294901760
  %v5342 = vsub.f32 %v3700, %v5341
  %5343 = vmatprep.subr.mxu0 %v5342
  %v5344 = vand.u32 %v3699, 4294901760
  %v5345 = vsub.f32 %v3699, %v5344
  %5346 = vmatpush1.msra.mxu0 %v5345
  %v5347 = vand.u32 %v3723, 4294901760
  %v5348 = vsub.f32 %v3723, %v5347
  %5349 = vmatprep.subr.mxu0 %v5348
  %v5350 = vand.u32 %v3722, 4294901760
  %v5351 = vsub.f32 %v3722, %v5350
  %5352 = vmatpush1.msra.mxu0 %v5351
  %v5353 = vand.u32 %v3790, 4294901760
  %v5354 = vsub.f32 %v3790, %v5353
  %5355 = vmatprep.subr.mxu0 %v5354
  %v5356 = vand.u32 %v3787, 4294901760
  %v5357 = vsub.f32 %v3787, %v5356
  %5358 = vmatpush1.msra.mxu0 %v5357
  %5359 = vmatprep.subr.mxu0 0.0
  %5360 = vmatpush1.msra.mxu0 0.0
  %5361 = vmatprep.subr.mxu0 0.0
  %5362 = vmatpush1.msra.mxu0 0.0
  %5363 = vmatprep.subr.mxu0 0.0
  %5364 = vmatpush1.msra.mxu0 0.0
  %5365 = vmatprep.subr.mxu0 0.0
  %5366 = vmatpush1.msra.mxu0 0.0
  %5367 = vmatprep.subr.mxu0 0.0
  %5368 = vmatpush1.msra.mxu0 0.0
  %5369 = vmatprep.subr.mxu0 0.0
  %5370 = vmatpush1.msra.mxu0 0.0
  %5371 = vmatprep.subr.mxu0 0.0
  %5372 = vmatpush1.msra.mxu0 0.0
  %5373 = vmatprep.subr.mxu0 0.0
  %5374 = vmatpush1.msra.mxu0 0.0
  %5375 = vmatprep.subr.mxu0 0.0
  %5376 = vmatpush1.msra.mxu0 0.0
  %5377 = vmatprep.subr.mxu0 0.0
  %5378 = vmatpush1.msra.mxu0 0.0
  %5379 = vmatprep.subr.mxu0 0.0
  %5380 = vmatpush1.msra.mxu0 0.0
  %5381 = vmatprep.subr.mxu0 0.0
  %5382 = vmatpush1.msra.mxu0 0.0
  %5383 = vmatprep.subr.mxu0 0.0
  %5384 = vmatpush1.msra.mxu0 0.0
  %5385 = vmatprep.subr.mxu0 0.0
  %5386 = vmatpush1.msra.mxu0 0.0
  %5387 = vmatprep.subr.mxu0 0.0
  %5388 = vmatpush1.msra.mxu0 0.0
  %5389 = vmatprep.subr.mxu0 0.0
  %5390 = vmatpush1.msra.mxu0 0.0
  %5391 = vmatprep.subr.mxu0 0.0
  %5392 = vmatpush1.msra.mxu0 0.0
  %5393 = vmatprep.subr.mxu0 0.0
  %5394 = vmatpush1.msra.mxu0 0.0
  %5395 = vmatprep.subr.mxu0 0.0
  %5396 = vmatpush1.msra.mxu0 0.0
  %5397 = vmatprep.subr.mxu0 0.0
  %5398 = vmatpush1.msra.mxu0 0.0
  %5399 = vmatprep.subr.mxu0 0.0
  %5400 = vmatpush1.msra.mxu0 0.0
  %5401 = vmatprep.subr.mxu0 0.0
  %5402 = vmatpush1.msra.mxu0 0.0
  %5403 = vmatprep.subr.mxu0 0.0
  %5404 = vmatpush1.msra.mxu0 0.0
  %5405 = vmatprep.subr.mxu0 0.0
  %5406 = vmatpush1.msra.mxu0 0.0
  %5407 = vmatprep.subr.mxu0 0.0
  %5408 = vmatpush1.msra.mxu0 0.0
  %5409 = vmatprep.mubr.f32.mxu0 0.0
  %v5410 = vand.u32 %v3771, 4294901760
  %v5411 = vsub.f32 %v3771, %v5410
  %5412 = vmatmul.mubr.f32.gmra.mrb[0].mxu0 %v5411
  %v5413 = vpop.f32.mrb[0].mxu0
  %v5414 = vadd.f32 %v5313, %v5413
  %v5415 = vpop.f32.mrb[0].mxu0
  %v5416 = vadd.f32 %v5315, %v5415
  %5417 = vdwg.mxu0
  %v5418 = vand.u32 %v3608, 4294901760
  %5419 = vmatprep.subr.mxu0 %v5418
  %v5420 = vand.u32 %v3607, 4294901760
  %5421 = vmatpush1.msra.mxu0 %v5420
  %v5422 = vand.u32 %v3631, 4294901760
  %5423 = vmatprep.subr.mxu0 %v5422
  %v5424 = vand.u32 %v3630, 4294901760
  %5425 = vmatpush1.msra.mxu0 %v5424
  %v5426 = vand.u32 %v3654, 4294901760
  %5427 = vmatprep.subr.mxu0 %v5426
  %v5428 = vand.u32 %v3653, 4294901760
  %5429 = vmatpush1.msra.mxu0 %v5428
  %v5430 = vand.u32 %v3677, 4294901760
  %5431 = vmatprep.subr.mxu0 %v5430
  %v5432 = vand.u32 %v3676, 4294901760
  %5433 = vmatpush1.msra.mxu0 %v5432
  %v5434 = vand.u32 %v3700, 4294901760
  %5435 = vmatprep.subr.mxu0 %v5434
  %v5436 = vand.u32 %v3699, 4294901760
  %5437 = vmatpush1.msra.mxu0 %v5436
  %v5438 = vand.u32 %v3723, 4294901760
  %5439 = vmatprep.subr.mxu0 %v5438
  %v5440 = vand.u32 %v3722, 4294901760
  %5441 = vmatpush1.msra.mxu0 %v5440
  %v5442 = vand.u32 %v3790, 4294901760
  %5443 = vmatprep.subr.mxu0 %v5442
  %v5444 = vand.u32 %v3787, 4294901760
  %5445 = vmatpush1.msra.mxu0 %v5444
  %5446 = vmatprep.subr.mxu0 0.0
  %5447 = vmatpush1.msra.mxu0 0.0
  %5448 = vmatprep.subr.mxu0 0.0
  %5449 = vmatpush1.msra.mxu0 0.0
  %5450 = vmatprep.subr.mxu0 0.0
  %5451 = vmatpush1.msra.mxu0 0.0
  %5452 = vmatprep.subr.mxu0 0.0
  %5453 = vmatpush1.msra.mxu0 0.0
  %5454 = vmatprep.subr.mxu0 0.0
  %5455 = vmatpush1.msra.mxu0 0.0
  %5456 = vmatprep.subr.mxu0 0.0
  %5457 = vmatpush1.msra.mxu0 0.0
  %5458 = vmatprep.subr.mxu0 0.0
  %5459 = vmatpush1.msra.mxu0 0.0
  %5460 = vmatprep.subr.mxu0 0.0
  %5461 = vmatpush1.msra.mxu0 0.0
  %5462 = vmatprep.subr.mxu0 0.0
  %5463 = vmatpush1.msra.mxu0 0.0
  %5464 = vmatprep.subr.mxu0 0.0
  %5465 = vmatpush1.msra.mxu0 0.0
  %5466 = vmatprep.subr.mxu0 0.0
  %5467 = vmatpush1.msra.mxu0 0.0
  %5468 = vmatprep.subr.mxu0 0.0
  %5469 = vmatpush1.msra.mxu0 0.0
  %5470 = vmatprep.subr.mxu0 0.0
  %5471 = vmatpush1.msra.mxu0 0.0
  %5472 = vmatprep.subr.mxu0 0.0
  %5473 = vmatpush1.msra.mxu0 0.0
  %5474 = vmatprep.subr.mxu0 0.0
  %5475 = vmatpush1.msra.mxu0 0.0
  %5476 = vmatprep.subr.mxu0 0.0
  %5477 = vmatpush1.msra.mxu0 0.0
  %5478 = vmatprep.subr.mxu0 0.0
  %5479 = vmatpush1.msra.mxu0 0.0
  %5480 = vmatprep.subr.mxu0 0.0
  %5481 = vmatpush1.msra.mxu0 0.0
  %5482 = vmatprep.subr.mxu0 0.0
  %5483 = vmatpush1.msra.mxu0 0.0
  %5484 = vmatprep.subr.mxu0 0.0
  %5485 = vmatpush1.msra.mxu0 0.0
  %5486 = vmatprep.subr.mxu0 0.0
  %5487 = vmatpush1.msra.mxu0 0.0
  %5488 = vmatprep.subr.mxu0 0.0
  %5489 = vmatpush1.msra.mxu0 0.0
  %5490 = vmatprep.subr.mxu0 0.0
  %5491 = vmatpush1.msra.mxu0 0.0
  %5492 = vmatprep.subr.mxu0 0.0
  %5493 = vmatpush1.msra.mxu0 0.0
  %5494 = vmatprep.subr.mxu0 0.0
  %5495 = vmatpush1.msra.mxu0 0.0
  %5496 = vmatprep.mubr.f32.mxu0 0.0
  %v5497 = vand.u32 %v3771, 4294901760
  %v5498 = vsub.f32 %v3771, %v5497
  %v5499 = vand.u32 %v5498, 4294901760
  %5500 = vmatmul.mubr.f32.gmra.mrb[0].mxu0 %v5499
  %v5501 = vpop.f32.mrb[0].mxu0
  %v5502 = vadd.f32 %v5414, %v5501
  %v5503 = vpop.f32.mrb[0].mxu0
  %v5504 = vadd.f32 %v5416, %v5503
  %5505 = vdwg.mxu0
  %v5506 = vand.u32 %v3608, 4294901760
  %v5507 = vsub.f32 %v3608, %v5506
  %v5508 = vand.u32 %v5507, 4294901760
  %5509 = vmatprep.subr.mxu0 %v5508
  %v5510 = vand.u32 %v3607, 4294901760
  %v5511 = vsub.f32 %v3607, %v5510
  %v5512 = vand.u32 %v5511, 4294901760
  %5513 = vmatpush1.msra.mxu0 %v5512
  %v5514 = vand.u32 %v3631, 4294901760
  %v5515 = vsub.f32 %v3631, %v5514
  %v5516 = vand.u32 %v5515, 4294901760
  %5517 = vmatprep.subr.mxu0 %v5516
  %v5518 = vand.u32 %v3630, 4294901760
  %v5519 = vsub.f32 %v3630, %v5518
  %v5520 = vand.u32 %v5519, 4294901760
  %5521 = vmatpush1.msra.mxu0 %v5520
  %v5522 = vand.u32 %v3654, 4294901760
  %v5523 = vsub.f32 %v3654, %v5522
  %v5524 = vand.u32 %v5523, 4294901760
  %5525 = vmatprep.subr.mxu0 %v5524
  %v5526 = vand.u32 %v3653, 4294901760
  %v5527 = vsub.f32 %v3653, %v5526
  %v5528 = vand.u32 %v5527, 4294901760
  %5529 = vmatpush1.msra.mxu0 %v5528
  %v5530 = vand.u32 %v3677, 4294901760
  %v5531 = vsub.f32 %v3677, %v5530
  %v5532 = vand.u32 %v5531, 4294901760
  %5533 = vmatprep.subr.mxu0 %v5532
  %v5534 = vand.u32 %v3676, 4294901760
  %v5535 = vsub.f32 %v3676, %v5534
  %v5536 = vand.u32 %v5535, 4294901760
  %5537 = vmatpush1.msra.mxu0 %v5536
  %v5538 = vand.u32 %v3700, 4294901760
  %v5539 = vsub.f32 %v3700, %v5538
  %v5540 = vand.u32 %v5539, 4294901760
  %5541 = vmatprep.subr.mxu0 %v5540
  %v5542 = vand.u32 %v3699, 4294901760
  %v5543 = vsub.f32 %v3699, %v5542
  %v5544 = vand.u32 %v5543, 4294901760
  %5545 = vmatpush1.msra.mxu0 %v5544
  %v5546 = vand.u32 %v3723, 4294901760
  %v5547 = vsub.f32 %v3723, %v5546
  %v5548 = vand.u32 %v5547, 4294901760
  %5549 = vmatprep.subr.mxu0 %v5548
  %v5550 = vand.u32 %v3722, 4294901760
  %v5551 = vsub.f32 %v3722, %v5550
  %v5552 = vand.u32 %v5551, 4294901760
  %5553 = vmatpush1.msra.mxu0 %v5552
  %v5554 = vand.u32 %v3790, 4294901760
  %v5555 = vsub.f32 %v3790, %v5554
  %v5556 = vand.u32 %v5555, 4294901760
  %5557 = vmatprep.subr.mxu0 %v5556
  %v5558 = vand.u32 %v3787, 4294901760
  %v5559 = vsub.f32 %v3787, %v5558
  %v5560 = vand.u32 %v5559, 4294901760
  %5561 = vmatpush1.msra.mxu0 %v5560
  %5562 = vmatprep.subr.mxu0 0.0
  %5563 = vmatpush1.msra.mxu0 0.0
  %5564 = vmatprep.subr.mxu0 0.0
  %5565 = vmatpush1.msra.mxu0 0.0
  %5566 = vmatprep.subr.mxu0 0.0
  %5567 = vmatpush1.msra.mxu0 0.0
  %5568 = vmatprep.subr.mxu0 0.0
  %5569 = vmatpush1.msra.mxu0 0.0
  %5570 = vmatprep.subr.mxu0 0.0
  %5571 = vmatpush1.msra.mxu0 0.0
  %5572 = vmatprep.subr.mxu0 0.0
  %5573 = vmatpush1.msra.mxu0 0.0
  %5574 = vmatprep.subr.mxu0 0.0
  %5575 = vmatpush1.msra.mxu0 0.0
  %5576 = vmatprep.subr.mxu0 0.0
  %5577 = vmatpush1.msra.mxu0 0.0
  %5578 = vmatprep.subr.mxu0 0.0
  %5579 = vmatpush1.msra.mxu0 0.0
  %5580 = vmatprep.subr.mxu0 0.0
  %5581 = vmatpush1.msra.mxu0 0.0
  %5582 = vmatprep.subr.mxu0 0.0
  %5583 = vmatpush1.msra.mxu0 0.0
  %5584 = vmatprep.subr.mxu0 0.0
  %5585 = vmatpush1.msra.mxu0 0.0
  %5586 = vmatprep.subr.mxu0 0.0
  %5587 = vmatpush1.msra.mxu0 0.0
  %5588 = vmatprep.subr.mxu0 0.0
  %5589 = vmatpush1.msra.mxu0 0.0
  %5590 = vmatprep.subr.mxu0 0.0
  %5591 = vmatpush1.msra.mxu0 0.0
  %5592 = vmatprep.subr.mxu0 0.0
  %5593 = vmatpush1.msra.mxu0 0.0
  %5594 = vmatprep.subr.mxu0 0.0
  %5595 = vmatpush1.msra.mxu0 0.0
  %5596 = vmatprep.subr.mxu0 0.0
  %5597 = vmatpush1.msra.mxu0 0.0
  %5598 = vmatprep.subr.mxu0 0.0
  %5599 = vmatpush1.msra.mxu0 0.0
  %5600 = vmatprep.subr.mxu0 0.0
  %5601 = vmatpush1.msra.mxu0 0.0
  %5602 = vmatprep.subr.mxu0 0.0
  %5603 = vmatpush1.msra.mxu0 0.0
  %5604 = vmatprep.subr.mxu0 0.0
  %5605 = vmatpush1.msra.mxu0 0.0
  %5606 = vmatprep.subr.mxu0 0.0
  %5607 = vmatpush1.msra.mxu0 0.0
  %5608 = vmatprep.subr.mxu0 0.0
  %5609 = vmatpush1.msra.mxu0 0.0
  %5610 = vmatprep.subr.mxu0 0.0
  %5611 = vmatpush1.msra.mxu0 0.0
  %5612 = vmatprep.mubr.f32.mxu0 0.0
  %v5613 = vand.u32 %v3771, 4294901760
  %5614 = vmatmul.mubr.f32.gmra.mrb[0].mxu0 %v5613
  %v5615 = vpop.f32.mrb[0].mxu0
  %v5616 = vadd.f32 %v5502, %v5615
  %v5617 = vpop.f32.mrb[0].mxu0
  %v5618 = vadd.f32 %v5504, %v5617
  %5619 = vdwg.mxu0
  %v5620 = vand.u32 %v3608, 4294901760
  %5621 = vmatprep.subr.mxu0 %v5620
  %v5622 = vand.u32 %v3607, 4294901760
  %5623 = vmatpush1.msra.mxu0 %v5622
  %v5624 = vand.u32 %v3631, 4294901760
  %5625 = vmatprep.subr.mxu0 %v5624
  %v5626 = vand.u32 %v3630, 4294901760
  %5627 = vmatpush1.msra.mxu0 %v5626
  %v5628 = vand.u32 %v3654, 4294901760
  %5629 = vmatprep.subr.mxu0 %v5628
  %v5630 = vand.u32 %v3653, 4294901760
  %5631 = vmatpush1.msra.mxu0 %v5630
  %v5632 = vand.u32 %v3677, 4294901760
  %5633 = vmatprep.subr.mxu0 %v5632
  %v5634 = vand.u32 %v3676, 4294901760
  %5635 = vmatpush1.msra.mxu0 %v5634
  %v5636 = vand.u32 %v3700, 4294901760
  %5637 = vmatprep.subr.mxu0 %v5636
  %v5638 = vand.u32 %v3699, 4294901760
  %5639 = vmatpush1.msra.mxu0 %v5638
  %v5640 = vand.u32 %v3723, 4294901760
  %5641 = vmatprep.subr.mxu0 %v5640
  %v5642 = vand.u32 %v3722, 4294901760
  %5643 = vmatpush1.msra.mxu0 %v5642
  %v5644 = vand.u32 %v3790, 4294901760
  %5645 = vmatprep.subr.mxu0 %v5644
  %v5646 = vand.u32 %v3787, 4294901760
  %5647 = vmatpush1.msra.mxu0 %v5646
  %5648 = vmatprep.subr.mxu0 0.0
  %5649 = vmatpush1.msra.mxu0 0.0
  %5650 = vmatprep.subr.mxu0 0.0
  %5651 = vmatpush1.msra.mxu0 0.0
  %5652 = vmatprep.subr.mxu0 0.0
  %5653 = vmatpush1.msra.mxu0 0.0
  %5654 = vmatprep.subr.mxu0 0.0
  %5655 = vmatpush1.msra.mxu0 0.0
  %5656 = vmatprep.subr.mxu0 0.0
  %5657 = vmatpush1.msra.mxu0 0.0
  %5658 = vmatprep.subr.mxu0 0.0
  %5659 = vmatpush1.msra.mxu0 0.0
  %5660 = vmatprep.subr.mxu0 0.0
  %5661 = vmatpush1.msra.mxu0 0.0
  %5662 = vmatprep.subr.mxu0 0.0
  %5663 = vmatpush1.msra.mxu0 0.0
  %5664 = vmatprep.subr.mxu0 0.0
  %5665 = vmatpush1.msra.mxu0 0.0
  %5666 = vmatprep.subr.mxu0 0.0
  %5667 = vmatpush1.msra.mxu0 0.0
  %5668 = vmatprep.subr.mxu0 0.0
  %5669 = vmatpush1.msra.mxu0 0.0
  %5670 = vmatprep.subr.mxu0 0.0
  %5671 = vmatpush1.msra.mxu0 0.0
  %5672 = vmatprep.subr.mxu0 0.0
  %5673 = vmatpush1.msra.mxu0 0.0
  %5674 = vmatprep.subr.mxu0 0.0
  %5675 = vmatpush1.msra.mxu0 0.0
  %5676 = vmatprep.subr.mxu0 0.0
  %5677 = vmatpush1.msra.mxu0 0.0
  %5678 = vmatprep.subr.mxu0 0.0
  %5679 = vmatpush1.msra.mxu0 0.0
  %5680 = vmatprep.subr.mxu0 0.0
  %5681 = vmatpush1.msra.mxu0 0.0
  %5682 = vmatprep.subr.mxu0 0.0
  %5683 = vmatpush1.msra.mxu0 0.0
  %5684 = vmatprep.subr.mxu0 0.0
  %5685 = vmatpush1.msra.mxu0 0.0
  %5686 = vmatprep.subr.mxu0 0.0
  %5687 = vmatpush1.msra.mxu0 0.0
  %5688 = vmatprep.subr.mxu0 0.0
  %5689 = vmatpush1.msra.mxu0 0.0
  %5690 = vmatprep.subr.mxu0 0.0
  %5691 = vmatpush1.msra.mxu0 0.0
  %5692 = vmatprep.subr.mxu0 0.0
  %5693 = vmatpush1.msra.mxu0 0.0
  %5694 = vmatprep.subr.mxu0 0.0
  %5695 = vmatpush1.msra.mxu0 0.0
  %5696 = vmatprep.subr.mxu0 0.0
  %5697 = vmatpush1.msra.mxu0 0.0
  %5698 = vmatprep.mubr.f32.mxu0 0.0
  %v5699 = vand.u32 %v3771, 4294901760
  %5700 = vmatmul.mubr.f32.gmra.mrb[0].mxu0 %v5699
  %v5701 = vpop.f32.mrb[0].mxu0
  %v5702 = vadd.f32 %v5616, %v5701
  %v5703 = vpop.f32.mrb[0].mxu0
  %v5704 = vadd.f32 %v5618, %v5703
  %5705 = vdwg.mxu0
  %v5706 = vand.u32 %v3610, 4294901760
  %5707 = vmatprep.subr.mxu0 %v5706
  %v5708 = vand.u32 %v3609, 4294901760
  %5709 = vmatpush1.msra.mxu0 %v5708
  %v5710 = vand.u32 %v3633, 4294901760
  %5711 = vmatprep.subr.mxu0 %v5710
  %v5712 = vand.u32 %v3632, 4294901760
  %5713 = vmatpush1.msra.mxu0 %v5712
  %v5714 = vand.u32 %v3656, 4294901760
  %5715 = vmatprep.subr.mxu0 %v5714
  %v5716 = vand.u32 %v3655, 4294901760
  %5717 = vmatpush1.msra.mxu0 %v5716
  %v5718 = vand.u32 %v3679, 4294901760
  %5719 = vmatprep.subr.mxu0 %v5718
  %v5720 = vand.u32 %v3678, 4294901760
  %5721 = vmatpush1.msra.mxu0 %v5720
  %v5722 = vand.u32 %v3702, 4294901760
  %5723 = vmatprep.subr.mxu0 %v5722
  %v5724 = vand.u32 %v3701, 4294901760
  %5725 = vmatpush1.msra.mxu0 %v5724
  %v5726 = vand.u32 %v3725, 4294901760
  %5727 = vmatprep.subr.mxu0 %v5726
  %v5728 = vand.u32 %v3724, 4294901760
  %5729 = vmatpush1.msra.mxu0 %v5728
  %v5730 = vand.u32 %v3796, 4294901760
  %5731 = vmatprep.subr.mxu0 %v5730
  %v5732 = vand.u32 %v3793, 4294901760
  %5733 = vmatpush1.msra.mxu0 %v5732
  %5734 = vmatprep.subr.mxu0 0.0
  %5735 = vmatpush1.msra.mxu0 0.0
  %5736 = vmatprep.subr.mxu0 0.0
  %5737 = vmatpush1.msra.mxu0 0.0
  %5738 = vmatprep.subr.mxu0 0.0
  %5739 = vmatpush1.msra.mxu0 0.0
  %5740 = vmatprep.subr.mxu0 0.0
  %5741 = vmatpush1.msra.mxu0 0.0
  %5742 = vmatprep.subr.mxu0 0.0
  %5743 = vmatpush1.msra.mxu0 0.0
  %5744 = vmatprep.subr.mxu0 0.0
  %5745 = vmatpush1.msra.mxu0 0.0
  %5746 = vmatprep.subr.mxu0 0.0
  %5747 = vmatpush1.msra.mxu0 0.0
  %5748 = vmatprep.subr.mxu0 0.0
  %5749 = vmatpush1.msra.mxu0 0.0
  %5750 = vmatprep.subr.mxu0 0.0
  %5751 = vmatpush1.msra.mxu0 0.0
  %5752 = vmatprep.subr.mxu0 0.0
  %5753 = vmatpush1.msra.mxu0 0.0
  %5754 = vmatprep.subr.mxu0 0.0
  %5755 = vmatpush1.msra.mxu0 0.0
  %5756 = vmatprep.subr.mxu0 0.0
  %5757 = vmatpush1.msra.mxu0 0.0
  %5758 = vmatprep.subr.mxu0 0.0
  %5759 = vmatpush1.msra.mxu0 0.0
  %5760 = vmatprep.subr.mxu0 0.0
  %5761 = vmatpush1.msra.mxu0 0.0
  %5762 = vmatprep.subr.mxu0 0.0
  %5763 = vmatpush1.msra.mxu0 0.0
  %5764 = vmatprep.subr.mxu0 0.0
  %5765 = vmatpush1.msra.mxu0 0.0
  %5766 = vmatprep.subr.mxu0 0.0
  %5767 = vmatpush1.msra.mxu0 0.0
  %5768 = vmatprep.subr.mxu0 0.0
  %5769 = vmatpush1.msra.mxu0 0.0
  %5770 = vmatprep.subr.mxu0 0.0
  %5771 = vmatpush1.msra.mxu0 0.0
  %5772 = vmatprep.subr.mxu0 0.0
  %5773 = vmatpush1.msra.mxu0 0.0
  %5774 = vmatprep.subr.mxu0 0.0
  %5775 = vmatpush1.msra.mxu0 0.0
  %5776 = vmatprep.subr.mxu0 0.0
  %5777 = vmatpush1.msra.mxu0 0.0
  %5778 = vmatprep.subr.mxu0 0.0
  %5779 = vmatpush1.msra.mxu0 0.0
  %5780 = vmatprep.subr.mxu0 0.0
  %5781 = vmatpush1.msra.mxu0 0.0
  %5782 = vmatprep.subr.mxu0 0.0
  %5783 = vmatpush1.msra.mxu0 0.0
  %5784 = vmatprep.mubr.f32.mxu0 0.0
  %v5785 = vand.u32 %v3771, 4294901760
  %v5786 = vsub.f32 %v3771, %v5785
  %v5787 = vand.u32 %v5786, 4294901760
  %v5788 = vsub.f32 %v5786, %v5787
  %v5789 = vand.u32 %v5788, 4294901760
  %5790 = vmatmul.mubr.f32.gmra.mrb[0].mxu0 %v5789
  %v5791 = vpop.f32.mrb[0].mxu0
  %v5792 = vadd.f32 %v3768, %v5791
  %v5793 = vpop.f32.mrb[0].mxu0
  %v5794 = vadd.f32 %v3768, %v5793
  %5795 = vdwg.mxu0
  %v5796 = vand.u32 %v3610, 4294901760
  %v5797 = vsub.f32 %v3610, %v5796
  %v5798 = vand.u32 %v5797, 4294901760
  %v5799 = vsub.f32 %v5797, %v5798
  %v5800 = vand.u32 %v5799, 4294901760
  %5801 = vmatprep.subr.mxu0 %v5800
  %v5802 = vand.u32 %v3609, 4294901760
  %v5803 = vsub.f32 %v3609, %v5802
  %v5804 = vand.u32 %v5803, 4294901760
  %v5805 = vsub.f32 %v5803, %v5804
  %v5806 = vand.u32 %v5805, 4294901760
  %5807 = vmatpush1.msra.mxu0 %v5806
  %v5808 = vand.u32 %v3633, 4294901760
  %v5809 = vsub.f32 %v3633, %v5808
  %v5810 = vand.u32 %v5809, 4294901760
  %v5811 = vsub.f32 %v5809, %v5810
  %v5812 = vand.u32 %v5811, 4294901760
  %5813 = vmatprep.subr.mxu0 %v5812
  %v5814 = vand.u32 %v3632, 4294901760
  %v5815 = vsub.f32 %v3632, %v5814
  %v5816 = vand.u32 %v5815, 4294901760
  %v5817 = vsub.f32 %v5815, %v5816
  %v5818 = vand.u32 %v5817, 4294901760
  %5819 = vmatpush1.msra.mxu0 %v5818
  %v5820 = vand.u32 %v3656, 4294901760
  %v5821 = vsub.f32 %v3656, %v5820
  %v5822 = vand.u32 %v5821, 4294901760
  %v5823 = vsub.f32 %v5821, %v5822
  %v5824 = vand.u32 %v5823, 4294901760
  %5825 = vmatprep.subr.mxu0 %v5824
  %v5826 = vand.u32 %v3655, 4294901760
  %v5827 = vsub.f32 %v3655, %v5826
  %v5828 = vand.u32 %v5827, 4294901760
  %v5829 = vsub.f32 %v5827, %v5828
  %v5830 = vand.u32 %v5829, 4294901760
  %5831 = vmatpush1.msra.mxu0 %v5830
  %v5832 = vand.u32 %v3679, 4294901760
  %v5833 = vsub.f32 %v3679, %v5832
  %v5834 = vand.u32 %v5833, 4294901760
  %v5835 = vsub.f32 %v5833, %v5834
  %v5836 = vand.u32 %v5835, 4294901760
  %5837 = vmatprep.subr.mxu0 %v5836
  %v5838 = vand.u32 %v3678, 4294901760
  %v5839 = vsub.f32 %v3678, %v5838
  %v5840 = vand.u32 %v5839, 4294901760
  %v5841 = vsub.f32 %v5839, %v5840
  %v5842 = vand.u32 %v5841, 4294901760
  %5843 = vmatpush1.msra.mxu0 %v5842
  %v5844 = vand.u32 %v3702, 4294901760
  %v5845 = vsub.f32 %v3702, %v5844
  %v5846 = vand.u32 %v5845, 4294901760
  %v5847 = vsub.f32 %v5845, %v5846
  %v5848 = vand.u32 %v5847, 4294901760
  %5849 = vmatprep.subr.mxu0 %v5848
  %v5850 = vand.u32 %v3701, 4294901760
  %v5851 = vsub.f32 %v3701, %v5850
  %v5852 = vand.u32 %v5851, 4294901760
  %v5853 = vsub.f32 %v5851, %v5852
  %v5854 = vand.u32 %v5853, 4294901760
  %5855 = vmatpush1.msra.mxu0 %v5854
  %v5856 = vand.u32 %v3725, 4294901760
  %v5857 = vsub.f32 %v3725, %v5856
  %v5858 = vand.u32 %v5857, 4294901760
  %v5859 = vsub.f32 %v5857, %v5858
  %v5860 = vand.u32 %v5859, 4294901760
  %5861 = vmatprep.subr.mxu0 %v5860
  %v5862 = vand.u32 %v3724, 4294901760
  %v5863 = vsub.f32 %v3724, %v5862
  %v5864 = vand.u32 %v5863, 4294901760
  %v5865 = vsub.f32 %v5863, %v5864
  %v5866 = vand.u32 %v5865, 4294901760
  %5867 = vmatpush1.msra.mxu0 %v5866
  %v5868 = vand.u32 %v3796, 4294901760
  %v5869 = vsub.f32 %v3796, %v5868
  %v5870 = vand.u32 %v5869, 4294901760
  %v5871 = vsub.f32 %v5869, %v5870
  %v5872 = vand.u32 %v5871, 4294901760
  %5873 = vmatprep.subr.mxu0 %v5872
  %v5874 = vand.u32 %v3793, 4294901760
  %v5875 = vsub.f32 %v3793, %v5874
  %v5876 = vand.u32 %v5875, 4294901760
  %v5877 = vsub.f32 %v5875, %v5876
  %v5878 = vand.u32 %v5877, 4294901760
  %5879 = vmatpush1.msra.mxu0 %v5878
  %5880 = vmatprep.subr.mxu0 0.0
  %5881 = vmatpush1.msra.mxu0 0.0
  %5882 = vmatprep.subr.mxu0 0.0
  %5883 = vmatpush1.msra.mxu0 0.0
  %5884 = vmatprep.subr.mxu0 0.0
  %5885 = vmatpush1.msra.mxu0 0.0
  %5886 = vmatprep.subr.mxu0 0.0
  %5887 = vmatpush1.msra.mxu0 0.0
  %5888 = vmatprep.subr.mxu0 0.0
  %5889 = vmatpush1.msra.mxu0 0.0
  %5890 = vmatprep.subr.mxu0 0.0
  %5891 = vmatpush1.msra.mxu0 0.0
  %5892 = vmatprep.subr.mxu0 0.0
  %5893 = vmatpush1.msra.mxu0 0.0
  %5894 = vmatprep.subr.mxu0 0.0
  %5895 = vmatpush1.msra.mxu0 0.0
  %5896 = vmatprep.subr.mxu0 0.0
  %5897 = vmatpush1.msra.mxu0 0.0
  %5898 = vmatprep.subr.mxu0 0.0
  %5899 = vmatpush1.msra.mxu0 0.0
  %5900 = vmatprep.subr.mxu0 0.0
  %5901 = vmatpush1.msra.mxu0 0.0
  %5902 = vmatprep.subr.mxu0 0.0
  %5903 = vmatpush1.msra.mxu0 0.0
  %5904 = vmatprep.subr.mxu0 0.0
  %5905 = vmatpush1.msra.mxu0 0.0
  %5906 = vmatprep.subr.mxu0 0.0
  %5907 = vmatpush1.msra.mxu0 0.0
  %5908 = vmatprep.subr.mxu0 0.0
  %5909 = vmatpush1.msra.mxu0 0.0
  %5910 = vmatprep.subr.mxu0 0.0
  %5911 = vmatpush1.msra.mxu0 0.0
  %5912 = vmatprep.subr.mxu0 0.0
  %5913 = vmatpush1.msra.mxu0 0.0
  %5914 = vmatprep.subr.mxu0 0.0
  %5915 = vmatpush1.msra.mxu0 0.0
  %5916 = vmatprep.subr.mxu0 0.0
  %5917 = vmatpush1.msra.mxu0 0.0
  %5918 = vmatprep.subr.mxu0 0.0
  %5919 = vmatpush1.msra.mxu0 0.0
  %5920 = vmatprep.subr.mxu0 0.0
  %5921 = vmatpush1.msra.mxu0 0.0
  %5922 = vmatprep.subr.mxu0 0.0
  %5923 = vmatpush1.msra.mxu0 0.0
  %5924 = vmatprep.subr.mxu0 0.0
  %5925 = vmatpush1.msra.mxu0 0.0
  %5926 = vmatprep.subr.mxu0 0.0
  %5927 = vmatpush1.msra.mxu0 0.0
  %5928 = vmatprep.subr.mxu0 0.0
  %5929 = vmatpush1.msra.mxu0 0.0
  %5930 = vmatprep.mubr.f32.mxu0 0.0
  %v5931 = vand.u32 %v3771, 4294901760
  %5932 = vmatmul.mubr.f32.gmra.mrb[0].mxu0 %v5931
  %v5933 = vpop.f32.mrb[0].mxu0
  %v5934 = vadd.f32 %v5792, %v5933
  %v5935 = vpop.f32.mrb[0].mxu0
  %v5936 = vadd.f32 %v5794, %v5935
  %5937 = vdwg.mxu0
  %v5938 = vand.u32 %v3610, 4294901760
  %v5939 = vsub.f32 %v3610, %v5938
  %5940 = vmatprep.subr.mxu0 %v5939
  %v5941 = vand.u32 %v3609, 4294901760
  %v5942 = vsub.f32 %v3609, %v5941
  %5943 = vmatpush1.msra.mxu0 %v5942
  %v5944 = vand.u32 %v3633, 4294901760
  %v5945 = vsub.f32 %v3633, %v5944
  %5946 = vmatprep.subr.mxu0 %v5945
  %v5947 = vand.u32 %v3632, 4294901760
  %v5948 = vsub.f32 %v3632, %v5947
  %5949 = vmatpush1.msra.mxu0 %v5948
  %v5950 = vand.u32 %v3656, 4294901760
  %v5951 = vsub.f32 %v3656, %v5950
  %5952 = vmatprep.subr.mxu0 %v5951
  %v5953 = vand.u32 %v3655, 4294901760
  %v5954 = vsub.f32 %v3655, %v5953
  %5955 = vmatpush1.msra.mxu0 %v5954
  %v5956 = vand.u32 %v3679, 4294901760
  %v5957 = vsub.f32 %v3679, %v5956
  %5958 = vmatprep.subr.mxu0 %v5957
  %v5959 = vand.u32 %v3678, 4294901760
  %v5960 = vsub.f32 %v3678, %v5959
  %5961 = vmatpush1.msra.mxu0 %v5960
  %v5962 = vand.u32 %v3702, 4294901760
  %v5963 = vsub.f32 %v3702, %v5962
  %5964 = vmatprep.subr.mxu0 %v5963
  %v5965 = vand.u32 %v3701, 4294901760
  %v5966 = vsub.f32 %v3701, %v5965
  %5967 = vmatpush1.msra.mxu0 %v5966
  %v5968 = vand.u32 %v3725, 4294901760
  %v5969 = vsub.f32 %v3725, %v5968
  %5970 = vmatprep.subr.mxu0 %v5969
  %v5971 = vand.u32 %v3724, 4294901760
  %v5972 = vsub.f32 %v3724, %v5971
  %5973 = vmatpush1.msra.mxu0 %v5972
  %v5974 = vand.u32 %v3796, 4294901760
  %v5975 = vsub.f32 %v3796, %v5974
  %5976 = vmatprep.subr.mxu0 %v5975
  %v5977 = vand.u32 %v3793, 4294901760
  %v5978 = vsub.f32 %v3793, %v5977
  %5979 = vmatpush1.msra.mxu0 %v5978
  %5980 = vmatprep.subr.mxu0 0.0
  %5981 = vmatpush1.msra.mxu0 0.0
  %5982 = vmatprep.subr.mxu0 0.0
  %5983 = vmatpush1.msra.mxu0 0.0
  %5984 = vmatprep.subr.mxu0 0.0
  %5985 = vmatpush1.msra.mxu0 0.0
  %5986 = vmatprep.subr.mxu0 0.0
  %5987 = vmatpush1.msra.mxu0 0.0
  %5988 = vmatprep.subr.mxu0 0.0
  %5989 = vmatpush1.msra.mxu0 0.0
  %5990 = vmatprep.subr.mxu0 0.0
  %5991 = vmatpush1.msra.mxu0 0.0
  %5992 = vmatprep.subr.mxu0 0.0
  %5993 = vmatpush1.msra.mxu0 0.0
  %5994 = vmatprep.subr.mxu0 0.0
  %5995 = vmatpush1.msra.mxu0 0.0
  %5996 = vmatprep.subr.mxu0 0.0
  %5997 = vmatpush1.msra.mxu0 0.0
  %5998 = vmatprep.subr.mxu0 0.0
  %5999 = vmatpush1.msra.mxu0 0.0
  %6000 = vmatprep.subr.mxu0 0.0
  %6001 = vmatpush1.msra.mxu0 0.0
  %6002 = vmatprep.subr.mxu0 0.0
  %6003 = vmatpush1.msra.mxu0 0.0
  %6004 = vmatprep.subr.mxu0 0.0
  %6005 = vmatpush1.msra.mxu0 0.0
  %6006 = vmatprep.subr.mxu0 0.0
  %6007 = vmatpush1.msra.mxu0 0.0
  %6008 = vmatprep.subr.mxu0 0.0
  %6009 = vmatpush1.msra.mxu0 0.0
  %6010 = vmatprep.subr.mxu0 0.0
  %6011 = vmatpush1.msra.mxu0 0.0
  %6012 = vmatprep.subr.mxu0 0.0
  %6013 = vmatpush1.msra.mxu0 0.0
  %6014 = vmatprep.subr.mxu0 0.0
  %6015 = vmatpush1.msra.mxu0 0.0
  %6016 = vmatprep.subr.mxu0 0.0
  %6017 = vmatpush1.msra.mxu0 0.0
  %6018 = vmatprep.subr.mxu0 0.0
  %6019 = vmatpush1.msra.mxu0 0.0
  %6020 = vmatprep.subr.mxu0 0.0
  %6021 = vmatpush1.msra.mxu0 0.0
  %6022 = vmatprep.subr.mxu0 0.0
  %6023 = vmatpush1.msra.mxu0 0.0
  %6024 = vmatprep.subr.mxu0 0.0
  %6025 = vmatpush1.msra.mxu0 0.0
  %6026 = vmatprep.subr.mxu0 0.0
  %6027 = vmatpush1.msra.mxu0 0.0
  %6028 = vmatprep.subr.mxu0 0.0
  %6029 = vmatpush1.msra.mxu0 0.0
  %6030 = vmatprep.mubr.f32.mxu0 0.0
  %v6031 = vand.u32 %v3771, 4294901760
  %v6032 = vsub.f32 %v3771, %v6031
  %6033 = vmatmul.mubr.f32.gmra.mrb[0].mxu0 %v6032
  %v6034 = vpop.f32.mrb[0].mxu0
  %v6035 = vadd.f32 %v5934, %v6034
  %v6036 = vpop.f32.mrb[0].mxu0
  %v6037 = vadd.f32 %v5936, %v6036
  %6038 = vdwg.mxu0
  %v6039 = vand.u32 %v3610, 4294901760
  %6040 = vmatprep.subr.mxu0 %v6039
  %v6041 = vand.u32 %v3609, 4294901760
  %6042 = vmatpush1.msra.mxu0 %v6041
  %v6043 = vand.u32 %v3633, 4294901760
  %6044 = vmatprep.subr.mxu0 %v6043
  %v6045 = vand.u32 %v3632, 4294901760
  %6046 = vmatpush1.msra.mxu0 %v6045
  %v6047 = vand.u32 %v3656, 4294901760
  %6048 = vmatprep.subr.mxu0 %v6047
  %v6049 = vand.u32 %v3655, 4294901760
  %6050 = vmatpush1.msra.mxu0 %v6049
  %v6051 = vand.u32 %v3679, 4294901760
  %6052 = vmatprep.subr.mxu0 %v6051
  %v6053 = vand.u32 %v3678, 4294901760
  %6054 = vmatpush1.msra.mxu0 %v6053
  %v6055 = vand.u32 %v3702, 4294901760
  %6056 = vmatprep.subr.mxu0 %v6055
  %v6057 = vand.u32 %v3701, 4294901760
  %6058 = vmatpush1.msra.mxu0 %v6057
  %v6059 = vand.u32 %v3725, 4294901760
  %6060 = vmatprep.subr.mxu0 %v6059
  %v6061 = vand.u32 %v3724, 4294901760
  %6062 = vmatpush1.msra.mxu0 %v6061
  %v6063 = vand.u32 %v3796, 4294901760
  %6064 = vmatprep.subr.mxu0 %v6063
  %v6065 = vand.u32 %v3793, 4294901760
  %6066 = vmatpush1.msra.mxu0 %v6065
  %6067 = vmatprep.subr.mxu0 0.0
  %6068 = vmatpush1.msra.mxu0 0.0
  %6069 = vmatprep.subr.mxu0 0.0
  %6070 = vmatpush1.msra.mxu0 0.0
  %6071 = vmatprep.subr.mxu0 0.0
  %6072 = vmatpush1.msra.mxu0 0.0
  %6073 = vmatprep.subr.mxu0 0.0
  %6074 = vmatpush1.msra.mxu0 0.0
  %6075 = vmatprep.subr.mxu0 0.0
  %6076 = vmatpush1.msra.mxu0 0.0
  %6077 = vmatprep.subr.mxu0 0.0
  %6078 = vmatpush1.msra.mxu0 0.0
  %6079 = vmatprep.subr.mxu0 0.0
  %6080 = vmatpush1.msra.mxu0 0.0
  %6081 = vmatprep.subr.mxu0 0.0
  %6082 = vmatpush1.msra.mxu0 0.0
  %6083 = vmatprep.subr.mxu0 0.0
  %6084 = vmatpush1.msra.mxu0 0.0
  %6085 = vmatprep.subr.mxu0 0.0
  %6086 = vmatpush1.msra.mxu0 0.0
  %6087 = vmatprep.subr.mxu0 0.0
  %6088 = vmatpush1.msra.mxu0 0.0
  %6089 = vmatprep.subr.mxu0 0.0
  %6090 = vmatpush1.msra.mxu0 0.0
  %6091 = vmatprep.subr.mxu0 0.0
  %6092 = vmatpush1.msra.mxu0 0.0
  %6093 = vmatprep.subr.mxu0 0.0
  %6094 = vmatpush1.msra.mxu0 0.0
  %6095 = vmatprep.subr.mxu0 0.0
  %6096 = vmatpush1.msra.mxu0 0.0
  %6097 = vmatprep.subr.mxu0 0.0
  %6098 = vmatpush1.msra.mxu0 0.0
  %6099 = vmatprep.subr.mxu0 0.0
  %6100 = vmatpush1.msra.mxu0 0.0
  %6101 = vmatprep.subr.mxu0 0.0
  %6102 = vmatpush1.msra.mxu0 0.0
  %6103 = vmatprep.subr.mxu0 0.0
  %6104 = vmatpush1.msra.mxu0 0.0
  %6105 = vmatprep.subr.mxu0 0.0
  %6106 = vmatpush1.msra.mxu0 0.0
  %6107 = vmatprep.subr.mxu0 0.0
  %6108 = vmatpush1.msra.mxu0 0.0
  %6109 = vmatprep.subr.mxu0 0.0
  %6110 = vmatpush1.msra.mxu0 0.0
  %6111 = vmatprep.subr.mxu0 0.0
  %6112 = vmatpush1.msra.mxu0 0.0
  %6113 = vmatprep.subr.mxu0 0.0
  %6114 = vmatpush1.msra.mxu0 0.0
  %6115 = vmatprep.subr.mxu0 0.0
  %6116 = vmatpush1.msra.mxu0 0.0
  %6117 = vmatprep.mubr.f32.mxu0 0.0
  %v6118 = vand.u32 %v3771, 4294901760
  %v6119 = vsub.f32 %v3771, %v6118
  %v6120 = vand.u32 %v6119, 4294901760
  %6121 = vmatmul.mubr.f32.gmra.mrb[0].mxu0 %v6120
  %v6122 = vpop.f32.mrb[0].mxu0
  %v6123 = vadd.f32 %v6035, %v6122
  %v6124 = vpop.f32.mrb[0].mxu0
  %v6125 = vadd.f32 %v6037, %v6124
  %6126 = vdwg.mxu0
  %v6127 = vand.u32 %v3610, 4294901760
  %v6128 = vsub.f32 %v3610, %v6127
  %v6129 = vand.u32 %v6128, 4294901760
  %6130 = vmatprep.subr.mxu0 %v6129
  %v6131 = vand.u32 %v3609, 4294901760
  %v6132 = vsub.f32 %v3609, %v6131
  %v6133 = vand.u32 %v6132, 4294901760
  %6134 = vmatpush1.msra.mxu0 %v6133
  %v6135 = vand.u32 %v3633, 4294901760
  %v6136 = vsub.f32 %v3633, %v6135
  %v6137 = vand.u32 %v6136, 4294901760
  %6138 = vmatprep.subr.mxu0 %v6137
  %v6139 = vand.u32 %v3632, 4294901760
  %v6140 = vsub.f32 %v3632, %v6139
  %v6141 = vand.u32 %v6140, 4294901760
  %6142 = vmatpush1.msra.mxu0 %v6141
  %v6143 = vand.u32 %v3656, 4294901760
  %v6144 = vsub.f32 %v3656, %v6143
  %v6145 = vand.u32 %v6144, 4294901760
  %6146 = vmatprep.subr.mxu0 %v6145
  %v6147 = vand.u32 %v3655, 4294901760
  %v6148 = vsub.f32 %v3655, %v6147
  %v6149 = vand.u32 %v6148, 4294901760
  %6150 = vmatpush1.msra.mxu0 %v6149
  %v6151 = vand.u32 %v3679, 4294901760
  %v6152 = vsub.f32 %v3679, %v6151
  %v6153 = vand.u32 %v6152, 4294901760
  %6154 = vmatprep.subr.mxu0 %v6153
  %v6155 = vand.u32 %v3678, 4294901760
  %v6156 = vsub.f32 %v3678, %v6155
  %v6157 = vand.u32 %v6156, 4294901760
  %6158 = vmatpush1.msra.mxu0 %v6157
  %v6159 = vand.u32 %v3702, 4294901760
  %v6160 = vsub.f32 %v3702, %v6159
  %v6161 = vand.u32 %v6160, 4294901760
  %6162 = vmatprep.subr.mxu0 %v6161
  %v6163 = vand.u32 %v3701, 4294901760
  %v6164 = vsub.f32 %v3701, %v6163
  %v6165 = vand.u32 %v6164, 4294901760
  %6166 = vmatpush1.msra.mxu0 %v6165
  %v6167 = vand.u32 %v3725, 4294901760
  %v6168 = vsub.f32 %v3725, %v6167
  %v6169 = vand.u32 %v6168, 4294901760
  %6170 = vmatprep.subr.mxu0 %v6169
  %v6171 = vand.u32 %v3724, 4294901760
  %v6172 = vsub.f32 %v3724, %v6171
  %v6173 = vand.u32 %v6172, 4294901760
  %6174 = vmatpush1.msra.mxu0 %v6173
  %v6175 = vand.u32 %v3796, 4294901760
  %v6176 = vsub.f32 %v3796, %v6175
  %v6177 = vand.u32 %v6176, 4294901760
  %6178 = vmatprep.subr.mxu0 %v6177
  %v6179 = vand.u32 %v3793, 4294901760
  %v6180 = vsub.f32 %v3793, %v6179
  %v6181 = vand.u32 %v6180, 4294901760
  %6182 = vmatpush1.msra.mxu0 %v6181
  %6183 = vmatprep.subr.mxu0 0.0
  %6184 = vmatpush1.msra.mxu0 0.0
  %6185 = vmatprep.subr.mxu0 0.0
  %6186 = vmatpush1.msra.mxu0 0.0
  %6187 = vmatprep.subr.mxu0 0.0
  %6188 = vmatpush1.msra.mxu0 0.0
  %6189 = vmatprep.subr.mxu0 0.0
  %6190 = vmatpush1.msra.mxu0 0.0
  %6191 = vmatprep.subr.mxu0 0.0
  %6192 = vmatpush1.msra.mxu0 0.0
  %6193 = vmatprep.subr.mxu0 0.0
  %6194 = vmatpush1.msra.mxu0 0.0
  %6195 = vmatprep.subr.mxu0 0.0
  %6196 = vmatpush1.msra.mxu0 0.0
  %6197 = vmatprep.subr.mxu0 0.0
  %6198 = vmatpush1.msra.mxu0 0.0
  %6199 = vmatprep.subr.mxu0 0.0
  %6200 = vmatpush1.msra.mxu0 0.0
  %6201 = vmatprep.subr.mxu0 0.0
  %6202 = vmatpush1.msra.mxu0 0.0
  %6203 = vmatprep.subr.mxu0 0.0
  %6204 = vmatpush1.msra.mxu0 0.0
  %6205 = vmatprep.subr.mxu0 0.0
  %6206 = vmatpush1.msra.mxu0 0.0
  %6207 = vmatprep.subr.mxu0 0.0
  %6208 = vmatpush1.msra.mxu0 0.0
  %6209 = vmatprep.subr.mxu0 0.0
  %6210 = vmatpush1.msra.mxu0 0.0
  %6211 = vmatprep.subr.mxu0 0.0
  %6212 = vmatpush1.msra.mxu0 0.0
  %6213 = vmatprep.subr.mxu0 0.0
  %6214 = vmatpush1.msra.mxu0 0.0
  %6215 = vmatprep.subr.mxu0 0.0
  %6216 = vmatpush1.msra.mxu0 0.0
  %6217 = vmatprep.subr.mxu0 0.0
  %6218 = vmatpush1.msra.mxu0 0.0
  %6219 = vmatprep.subr.mxu0 0.0
  %6220 = vmatpush1.msra.mxu0 0.0
  %6221 = vmatprep.subr.mxu0 0.0
  %6222 = vmatpush1.msra.mxu0 0.0
  %6223 = vmatprep.subr.mxu0 0.0
  %6224 = vmatpush1.msra.mxu0 0.0
  %6225 = vmatprep.subr.mxu0 0.0
  %6226 = vmatpush1.msra.mxu0 0.0
  %6227 = vmatprep.subr.mxu0 0.0
  %6228 = vmatpush1.msra.mxu0 0.0
  %6229 = vmatprep.subr.mxu0 0.0
  %6230 = vmatpush1.msra.mxu0 0.0
  %6231 = vmatprep.subr.mxu0 0.0
  %6232 = vmatpush1.msra.mxu0 0.0
  %6233 = vmatprep.mubr.f32.mxu0 0.0
  %v6234 = vand.u32 %v3771, 4294901760
  %6235 = vmatmul.mubr.f32.gmra.mrb[0].mxu0 %v6234
  %v6236 = vpop.f32.mrb[0].mxu0
  %v6237 = vadd.f32 %v6123, %v6236
  %v6238 = vpop.f32.mrb[0].mxu0
  %v6239 = vadd.f32 %v6125, %v6238
  %6240 = vdwg.mxu0
  %v6241 = vand.u32 %v3610, 4294901760
  %6242 = vmatprep.subr.mxu0 %v6241
  %v6243 = vand.u32 %v3609, 4294901760
  %6244 = vmatpush1.msra.mxu0 %v6243
  %v6245 = vand.u32 %v3633, 4294901760
  %6246 = vmatprep.subr.mxu0 %v6245
  %v6247 = vand.u32 %v3632, 4294901760
  %6248 = vmatpush1.msra.mxu0 %v6247
  %v6249 = vand.u32 %v3656, 4294901760
  %6250 = vmatprep.subr.mxu0 %v6249
  %v6251 = vand.u32 %v3655, 4294901760
  %6252 = vmatpush1.msra.mxu0 %v6251
  %v6253 = vand.u32 %v3679, 4294901760
  %6254 = vmatprep.subr.mxu0 %v6253
  %v6255 = vand.u32 %v3678, 4294901760
  %6256 = vmatpush1.msra.mxu0 %v6255
  %v6257 = vand.u32 %v3702, 4294901760
  %6258 = vmatprep.subr.mxu0 %v6257
  %v6259 = vand.u32 %v3701, 4294901760
  %6260 = vmatpush1.msra.mxu0 %v6259
  %v6261 = vand.u32 %v3725, 4294901760
  %6262 = vmatprep.subr.mxu0 %v6261
  %v6263 = vand.u32 %v3724, 4294901760
  %6264 = vmatpush1.msra.mxu0 %v6263
  %v6265 = vand.u32 %v3796, 4294901760
  %6266 = vmatprep.subr.mxu0 %v6265
  %v6267 = vand.u32 %v3793, 4294901760
  %6268 = vmatpush1.msra.mxu0 %v6267
  %6269 = vmatprep.subr.mxu0 0.0
  %6270 = vmatpush1.msra.mxu0 0.0
  %6271 = vmatprep.subr.mxu0 0.0
  %6272 = vmatpush1.msra.mxu0 0.0
  %6273 = vmatprep.subr.mxu0 0.0
  %6274 = vmatpush1.msra.mxu0 0.0
  %6275 = vmatprep.subr.mxu0 0.0
  %6276 = vmatpush1.msra.mxu0 0.0
  %6277 = vmatprep.subr.mxu0 0.0
  %6278 = vmatpush1.msra.mxu0 0.0
  %6279 = vmatprep.subr.mxu0 0.0
  %6280 = vmatpush1.msra.mxu0 0.0
  %6281 = vmatprep.subr.mxu0 0.0
  %6282 = vmatpush1.msra.mxu0 0.0
  %6283 = vmatprep.subr.mxu0 0.0
  %6284 = vmatpush1.msra.mxu0 0.0
  %6285 = vmatprep.subr.mxu0 0.0
  %6286 = vmatpush1.msra.mxu0 0.0
  %6287 = vmatprep.subr.mxu0 0.0
  %6288 = vmatpush1.msra.mxu0 0.0
  %6289 = vmatprep.subr.mxu0 0.0
  %6290 = vmatpush1.msra.mxu0 0.0
  %6291 = vmatprep.subr.mxu0 0.0
  %6292 = vmatpush1.msra.mxu0 0.0
  %6293 = vmatprep.subr.mxu0 0.0
  %6294 = vmatpush1.msra.mxu0 0.0
  %6295 = vmatprep.subr.mxu0 0.0
  %6296 = vmatpush1.msra.mxu0 0.0
  %6297 = vmatprep.subr.mxu0 0.0
  %6298 = vmatpush1.msra.mxu0 0.0
  %6299 = vmatprep.subr.mxu0 0.0
  %6300 = vmatpush1.msra.mxu0 0.0
  %6301 = vmatprep.subr.mxu0 0.0
  %6302 = vmatpush1.msra.mxu0 0.0
  %6303 = vmatprep.subr.mxu0 0.0
  %6304 = vmatpush1.msra.mxu0 0.0
  %6305 = vmatprep.subr.mxu0 0.0
  %6306 = vmatpush1.msra.mxu0 0.0
  %6307 = vmatprep.subr.mxu0 0.0
  %6308 = vmatpush1.msra.mxu0 0.0
  %6309 = vmatprep.subr.mxu0 0.0
  %6310 = vmatpush1.msra.mxu0 0.0
  %6311 = vmatprep.subr.mxu0 0.0
  %6312 = vmatpush1.msra.mxu0 0.0
  %6313 = vmatprep.subr.mxu0 0.0
  %6314 = vmatpush1.msra.mxu0 0.0
  %6315 = vmatprep.subr.mxu0 0.0
  %6316 = vmatpush1.msra.mxu0 0.0
  %6317 = vmatprep.subr.mxu0 0.0
  %6318 = vmatpush1.msra.mxu0 0.0
  %6319 = vmatprep.mubr.f32.mxu0 0.0
  %v6320 = vand.u32 %v3771, 4294901760
  %6321 = vmatmul.mubr.f32.gmra.mrb[0].mxu0 %v6320
  %v6322 = vpop.f32.mrb[0].mxu0
  %v6323 = vadd.f32 %v6237, %v6322
  %v6324 = vpop.f32.mrb[0].mxu0
  %v6325 = vadd.f32 %v6239, %v6324
  %6326 = vdwg.mxu0
  %v6327 = vand.u32 %v3612, 4294901760
  %6328 = vmatprep.subr.mxu0 %v6327
  %v6329 = vand.u32 %v3611, 4294901760
  %6330 = vmatpush1.msra.mxu0 %v6329
  %v6331 = vand.u32 %v3635, 4294901760
  %6332 = vmatprep.subr.mxu0 %v6331
  %v6333 = vand.u32 %v3634, 4294901760
  %6334 = vmatpush1.msra.mxu0 %v6333
  %v6335 = vand.u32 %v3658, 4294901760
  %6336 = vmatprep.subr.mxu0 %v6335
  %v6337 = vand.u32 %v3657, 4294901760
  %6338 = vmatpush1.msra.mxu0 %v6337
  %v6339 = vand.u32 %v3681, 4294901760
  %6340 = vmatprep.subr.mxu0 %v6339
  %v6341 = vand.u32 %v3680, 4294901760
  %6342 = vmatpush1.msra.mxu0 %v6341
  %v6343 = vand.u32 %v3704, 4294901760
  %6344 = vmatprep.subr.mxu0 %v6343
  %v6345 = vand.u32 %v3703, 4294901760
  %6346 = vmatpush1.msra.mxu0 %v6345
  %v6347 = vand.u32 %v3727, 4294901760
  %6348 = vmatprep.subr.mxu0 %v6347
  %v6349 = vand.u32 %v3726, 4294901760
  %6350 = vmatpush1.msra.mxu0 %v6349
  %v6351 = vand.u32 %v3802, 4294901760
  %6352 = vmatprep.subr.mxu0 %v6351
  %v6353 = vand.u32 %v3799, 4294901760
  %6354 = vmatpush1.msra.mxu0 %v6353
  %6355 = vmatprep.subr.mxu0 0.0
  %6356 = vmatpush1.msra.mxu0 0.0
  %6357 = vmatprep.subr.mxu0 0.0
  %6358 = vmatpush1.msra.mxu0 0.0
  %6359 = vmatprep.subr.mxu0 0.0
  %6360 = vmatpush1.msra.mxu0 0.0
  %6361 = vmatprep.subr.mxu0 0.0
  %6362 = vmatpush1.msra.mxu0 0.0
  %6363 = vmatprep.subr.mxu0 0.0
  %6364 = vmatpush1.msra.mxu0 0.0
  %6365 = vmatprep.subr.mxu0 0.0
  %6366 = vmatpush1.msra.mxu0 0.0
  %6367 = vmatprep.subr.mxu0 0.0
  %6368 = vmatpush1.msra.mxu0 0.0
  %6369 = vmatprep.subr.mxu0 0.0
  %6370 = vmatpush1.msra.mxu0 0.0
  %6371 = vmatprep.subr.mxu0 0.0
  %6372 = vmatpush1.msra.mxu0 0.0
  %6373 = vmatprep.subr.mxu0 0.0
  %6374 = vmatpush1.msra.mxu0 0.0
  %6375 = vmatprep.subr.mxu0 0.0
  %6376 = vmatpush1.msra.mxu0 0.0
  %6377 = vmatprep.subr.mxu0 0.0
  %6378 = vmatpush1.msra.mxu0 0.0
  %6379 = vmatprep.subr.mxu0 0.0
  %6380 = vmatpush1.msra.mxu0 0.0
  %6381 = vmatprep.subr.mxu0 0.0
  %6382 = vmatpush1.msra.mxu0 0.0
  %6383 = vmatprep.subr.mxu0 0.0
  %6384 = vmatpush1.msra.mxu0 0.0
  %6385 = vmatprep.subr.mxu0 0.0
  %6386 = vmatpush1.msra.mxu0 0.0
  %6387 = vmatprep.subr.mxu0 0.0
  %6388 = vmatpush1.msra.mxu0 0.0
  %6389 = vmatprep.subr.mxu0 0.0
  %6390 = vmatpush1.msra.mxu0 0.0
  %6391 = vmatprep.subr.mxu0 0.0
  %6392 = vmatpush1.msra.mxu0 0.0
  %6393 = vmatprep.subr.mxu0 0.0
  %6394 = vmatpush1.msra.mxu0 0.0
  %6395 = vmatprep.subr.mxu0 0.0
  %6396 = vmatpush1.msra.mxu0 0.0
  %6397 = vmatprep.subr.mxu0 0.0
  %6398 = vmatpush1.msra.mxu0 0.0
  %6399 = vmatprep.subr.mxu0 0.0
  %6400 = vmatpush1.msra.mxu0 0.0
  %6401 = vmatprep.subr.mxu0 0.0
  %6402 = vmatpush1.msra.mxu0 0.0
  %6403 = vmatprep.subr.mxu0 0.0
  %6404 = vmatpush1.msra.mxu0 0.0
  %6405 = vmatprep.mubr.f32.mxu0 0.0
  %v6406 = vand.u32 %v3771, 4294901760
  %v6407 = vsub.f32 %v3771, %v6406
  %v6408 = vand.u32 %v6407, 4294901760
  %v6409 = vsub.f32 %v6407, %v6408
  %v6410 = vand.u32 %v6409, 4294901760
  %6411 = vmatmul.mubr.f32.gmra.mrb[0].mxu0 %v6410
  %v6412 = vpop.f32.mrb[0].mxu0
  %v6413 = vadd.f32 %v3768, %v6412
  %v6414 = vpop.f32.mrb[0].mxu0
  %v6415 = vadd.f32 %v3768, %v6414
  %6416 = vdwg.mxu0
  %v6417 = vand.u32 %v3612, 4294901760
  %v6418 = vsub.f32 %v3612, %v6417
  %v6419 = vand.u32 %v6418, 4294901760
  %v6420 = vsub.f32 %v6418, %v6419
  %v6421 = vand.u32 %v6420, 4294901760
  %6422 = vmatprep.subr.mxu0 %v6421
  %v6423 = vand.u32 %v3611, 4294901760
  %v6424 = vsub.f32 %v3611, %v6423
  %v6425 = vand.u32 %v6424, 4294901760
  %v6426 = vsub.f32 %v6424, %v6425
  %v6427 = vand.u32 %v6426, 4294901760
  %6428 = vmatpush1.msra.mxu0 %v6427
  %v6429 = vand.u32 %v3635, 4294901760
  %v6430 = vsub.f32 %v3635, %v6429
  %v6431 = vand.u32 %v6430, 4294901760
  %v6432 = vsub.f32 %v6430, %v6431
  %v6433 = vand.u32 %v6432, 4294901760
  %6434 = vmatprep.subr.mxu0 %v6433
  %v6435 = vand.u32 %v3634, 4294901760
  %v6436 = vsub.f32 %v3634, %v6435
  %v6437 = vand.u32 %v6436, 4294901760
  %v6438 = vsub.f32 %v6436, %v6437
  %v6439 = vand.u32 %v6438, 4294901760
  %6440 = vmatpush1.msra.mxu0 %v6439
  %v6441 = vand.u32 %v3658, 4294901760
  %v6442 = vsub.f32 %v3658, %v6441
  %v6443 = vand.u32 %v6442, 4294901760
  %v6444 = vsub.f32 %v6442, %v6443
  %v6445 = vand.u32 %v6444, 4294901760
  %6446 = vmatprep.subr.mxu0 %v6445
  %v6447 = vand.u32 %v3657, 4294901760
  %v6448 = vsub.f32 %v3657, %v6447
  %v6449 = vand.u32 %v6448, 4294901760
  %v6450 = vsub.f32 %v6448, %v6449
  %v6451 = vand.u32 %v6450, 4294901760
  %6452 = vmatpush1.msra.mxu0 %v6451
  %v6453 = vand.u32 %v3681, 4294901760
  %v6454 = vsub.f32 %v3681, %v6453
  %v6455 = vand.u32 %v6454, 4294901760
  %v6456 = vsub.f32 %v6454, %v6455
  %v6457 = vand.u32 %v6456, 4294901760
  %6458 = vmatprep.subr.mxu0 %v6457
  %v6459 = vand.u32 %v3680, 4294901760
  %v6460 = vsub.f32 %v3680, %v6459
  %v6461 = vand.u32 %v6460, 4294901760
  %v6462 = vsub.f32 %v6460, %v6461
  %v6463 = vand.u32 %v6462, 4294901760
  %6464 = vmatpush1.msra.mxu0 %v6463
  %v6465 = vand.u32 %v3704, 4294901760
  %v6466 = vsub.f32 %v3704, %v6465
  %v6467 = vand.u32 %v6466, 4294901760
  %v6468 = vsub.f32 %v6466, %v6467
  %v6469 = vand.u32 %v6468, 4294901760
  %6470 = vmatprep.subr.mxu0 %v6469
  %v6471 = vand.u32 %v3703, 4294901760
  %v6472 = vsub.f32 %v3703, %v6471
  %v6473 = vand.u32 %v6472, 4294901760
  %v6474 = vsub.f32 %v6472, %v6473
  %v6475 = vand.u32 %v6474, 4294901760
  %6476 = vmatpush1.msra.mxu0 %v6475
  %v6477 = vand.u32 %v3727, 4294901760
  %v6478 = vsub.f32 %v3727, %v6477
  %v6479 = vand.u32 %v6478, 4294901760
  %v6480 = vsub.f32 %v6478, %v6479
  %v6481 = vand.u32 %v6480, 4294901760
  %6482 = vmatprep.subr.mxu0 %v6481
  %v6483 = vand.u32 %v3726, 4294901760
  %v6484 = vsub.f32 %v3726, %v6483
  %v6485 = vand.u32 %v6484, 4294901760
  %v6486 = vsub.f32 %v6484, %v6485
  %v6487 = vand.u32 %v6486, 4294901760
  %6488 = vmatpush1.msra.mxu0 %v6487
  %v6489 = vand.u32 %v3802, 4294901760
  %v6490 = vsub.f32 %v3802, %v6489
  %v6491 = vand.u32 %v6490, 4294901760
  %v6492 = vsub.f32 %v6490, %v6491
  %v6493 = vand.u32 %v6492, 4294901760
  %6494 = vmatprep.subr.mxu0 %v6493
  %v6495 = vand.u32 %v3799, 4294901760
  %v6496 = vsub.f32 %v3799, %v6495
  %v6497 = vand.u32 %v6496, 4294901760
  %v6498 = vsub.f32 %v6496, %v6497
  %v6499 = vand.u32 %v6498, 4294901760
  %6500 = vmatpush1.msra.mxu0 %v6499
  %6501 = vmatprep.subr.mxu0 0.0
  %6502 = vmatpush1.msra.mxu0 0.0
  %6503 = vmatprep.subr.mxu0 0.0
  %6504 = vmatpush1.msra.mxu0 0.0
  %6505 = vmatprep.subr.mxu0 0.0
  %6506 = vmatpush1.msra.mxu0 0.0
  %6507 = vmatprep.subr.mxu0 0.0
  %6508 = vmatpush1.msra.mxu0 0.0
  %6509 = vmatprep.subr.mxu0 0.0
  %6510 = vmatpush1.msra.mxu0 0.0
  %6511 = vmatprep.subr.mxu0 0.0
  %6512 = vmatpush1.msra.mxu0 0.0
  %6513 = vmatprep.subr.mxu0 0.0
  %6514 = vmatpush1.msra.mxu0 0.0
  %6515 = vmatprep.subr.mxu0 0.0
  %6516 = vmatpush1.msra.mxu0 0.0
  %6517 = vmatprep.subr.mxu0 0.0
  %6518 = vmatpush1.msra.mxu0 0.0
  %6519 = vmatprep.subr.mxu0 0.0
  %6520 = vmatpush1.msra.mxu0 0.0
  %6521 = vmatprep.subr.mxu0 0.0
  %6522 = vmatpush1.msra.mxu0 0.0
  %6523 = vmatprep.subr.mxu0 0.0
  %6524 = vmatpush1.msra.mxu0 0.0
  %6525 = vmatprep.subr.mxu0 0.0
  %6526 = vmatpush1.msra.mxu0 0.0
  %6527 = vmatprep.subr.mxu0 0.0
  %6528 = vmatpush1.msra.mxu0 0.0
  %6529 = vmatprep.subr.mxu0 0.0
  %6530 = vmatpush1.msra.mxu0 0.0
  %6531 = vmatprep.subr.mxu0 0.0
  %6532 = vmatpush1.msra.mxu0 0.0
  %6533 = vmatprep.subr.mxu0 0.0
  %6534 = vmatpush1.msra.mxu0 0.0
  %6535 = vmatprep.subr.mxu0 0.0
  %6536 = vmatpush1.msra.mxu0 0.0
  %6537 = vmatprep.subr.mxu0 0.0
  %6538 = vmatpush1.msra.mxu0 0.0
  %6539 = vmatprep.subr.mxu0 0.0
  %6540 = vmatpush1.msra.mxu0 0.0
  %6541 = vmatprep.subr.mxu0 0.0
  %6542 = vmatpush1.msra.mxu0 0.0
  %6543 = vmatprep.subr.mxu0 0.0
  %6544 = vmatpush1.msra.mxu0 0.0
  %6545 = vmatprep.subr.mxu0 0.0
  %6546 = vmatpush1.msra.mxu0 0.0
  %6547 = vmatprep.subr.mxu0 0.0
  %6548 = vmatpush1.msra.mxu0 0.0
  %6549 = vmatprep.subr.mxu0 0.0
  %6550 = vmatpush1.msra.mxu0 0.0
  %6551 = vmatprep.mubr.f32.mxu0 0.0
  %v6552 = vand.u32 %v3771, 4294901760
  %6553 = vmatmul.mubr.f32.gmra.mrb[0].mxu0 %v6552
  %v6554 = vpop.f32.mrb[0].mxu0
  %v6555 = vadd.f32 %v6413, %v6554
  %v6556 = vpop.f32.mrb[0].mxu0
  %v6557 = vadd.f32 %v6415, %v6556
  %6558 = vdwg.mxu0
  %v6559 = vand.u32 %v3612, 4294901760
  %v6560 = vsub.f32 %v3612, %v6559
  %6561 = vmatprep.subr.mxu0 %v6560
  %v6562 = vand.u32 %v3611, 4294901760
  %v6563 = vsub.f32 %v3611, %v6562
  %6564 = vmatpush1.msra.mxu0 %v6563
  %v6565 = vand.u32 %v3635, 4294901760
  %v6566 = vsub.f32 %v3635, %v6565
  %6567 = vmatprep.subr.mxu0 %v6566
  %v6568 = vand.u32 %v3634, 4294901760
  %v6569 = vsub.f32 %v3634, %v6568
  %6570 = vmatpush1.msra.mxu0 %v6569
  %v6571 = vand.u32 %v3658, 4294901760
  %v6572 = vsub.f32 %v3658, %v6571
  %6573 = vmatprep.subr.mxu0 %v6572
  %v6574 = vand.u32 %v3657, 4294901760
  %v6575 = vsub.f32 %v3657, %v6574
  %6576 = vmatpush1.msra.mxu0 %v6575
  %v6577 = vand.u32 %v3681, 4294901760
  %v6578 = vsub.f32 %v3681, %v6577
  %6579 = vmatprep.subr.mxu0 %v6578
  %v6580 = vand.u32 %v3680, 4294901760
  %v6581 = vsub.f32 %v3680, %v6580
  %6582 = vmatpush1.msra.mxu0 %v6581
  %v6583 = vand.u32 %v3704, 4294901760
  %v6584 = vsub.f32 %v3704, %v6583
  %6585 = vmatprep.subr.mxu0 %v6584
  %v6586 = vand.u32 %v3703, 4294901760
  %v6587 = vsub.f32 %v3703, %v6586
  %6588 = vmatpush1.msra.mxu0 %v6587
  %v6589 = vand.u32 %v3727, 4294901760
  %v6590 = vsub.f32 %v3727, %v6589
  %6591 = vmatprep.subr.mxu0 %v6590
  %v6592 = vand.u32 %v3726, 4294901760
  %v6593 = vsub.f32 %v3726, %v6592
  %6594 = vmatpush1.msra.mxu0 %v6593
  %v6595 = vand.u32 %v3802, 4294901760
  %v6596 = vsub.f32 %v3802, %v6595
  %6597 = vmatprep.subr.mxu0 %v6596
  %v6598 = vand.u32 %v3799, 4294901760
  %v6599 = vsub.f32 %v3799, %v6598
  %6600 = vmatpush1.msra.mxu0 %v6599
  %6601 = vmatprep.subr.mxu0 0.0
  %6602 = vmatpush1.msra.mxu0 0.0
  %6603 = vmatprep.subr.mxu0 0.0
  %6604 = vmatpush1.msra.mxu0 0.0
  %6605 = vmatprep.subr.mxu0 0.0
  %6606 = vmatpush1.msra.mxu0 0.0
  %6607 = vmatprep.subr.mxu0 0.0
  %6608 = vmatpush1.msra.mxu0 0.0
  %6609 = vmatprep.subr.mxu0 0.0
  %6610 = vmatpush1.msra.mxu0 0.0
  %6611 = vmatprep.subr.mxu0 0.0
  %6612 = vmatpush1.msra.mxu0 0.0
  %6613 = vmatprep.subr.mxu0 0.0
  %6614 = vmatpush1.msra.mxu0 0.0
  %6615 = vmatprep.subr.mxu0 0.0
  %6616 = vmatpush1.msra.mxu0 0.0
  %6617 = vmatprep.subr.mxu0 0.0
  %6618 = vmatpush1.msra.mxu0 0.0
  %6619 = vmatprep.subr.mxu0 0.0
  %6620 = vmatpush1.msra.mxu0 0.0
  %6621 = vmatprep.subr.mxu0 0.0
  %6622 = vmatpush1.msra.mxu0 0.0
  %6623 = vmatprep.subr.mxu0 0.0
  %6624 = vmatpush1.msra.mxu0 0.0
  %6625 = vmatprep.subr.mxu0 0.0
  %6626 = vmatpush1.msra.mxu0 0.0
  %6627 = vmatprep.subr.mxu0 0.0
  %6628 = vmatpush1.msra.mxu0 0.0
  %6629 = vmatprep.subr.mxu0 0.0
  %6630 = vmatpush1.msra.mxu0 0.0
  %6631 = vmatprep.subr.mxu0 0.0
  %6632 = vmatpush1.msra.mxu0 0.0
  %6633 = vmatprep.subr.mxu0 0.0
  %6634 = vmatpush1.msra.mxu0 0.0
  %6635 = vmatprep.subr.mxu0 0.0
  %6636 = vmatpush1.msra.mxu0 0.0
  %6637 = vmatprep.subr.mxu0 0.0
  %6638 = vmatpush1.msra.mxu0 0.0
  %6639 = vmatprep.subr.mxu0 0.0
  %6640 = vmatpush1.msra.mxu0 0.0
  %6641 = vmatprep.subr.mxu0 0.0
  %6642 = vmatpush1.msra.mxu0 0.0
  %6643 = vmatprep.subr.mxu0 0.0
  %6644 = vmatpush1.msra.mxu0 0.0
  %6645 = vmatprep.subr.mxu0 0.0
  %6646 = vmatpush1.msra.mxu0 0.0
  %6647 = vmatprep.subr.mxu0 0.0
  %6648 = vmatpush1.msra.mxu0 0.0
  %6649 = vmatprep.subr.mxu0 0.0
  %6650 = vmatpush1.msra.mxu0 0.0
  %6651 = vmatprep.mubr.f32.mxu0 0.0
  %v6652 = vand.u32 %v3771, 4294901760
  %v6653 = vsub.f32 %v3771, %v6652
  %6654 = vmatmul.mubr.f32.gmra.mrb[0].mxu0 %v6653
  %v6655 = vpop.f32.mrb[0].mxu0
  %v6656 = vadd.f32 %v6555, %v6655
  %v6657 = vpop.f32.mrb[0].mxu0
  %v6658 = vadd.f32 %v6557, %v6657
  %6659 = vdwg.mxu0
  %v6660 = vand.u32 %v3612, 4294901760
  %6661 = vmatprep.subr.mxu0 %v6660
  %v6662 = vand.u32 %v3611, 4294901760
  %6663 = vmatpush1.msra.mxu0 %v6662
  %v6664 = vand.u32 %v3635, 4294901760
  %6665 = vmatprep.subr.mxu0 %v6664
  %v6666 = vand.u32 %v3634, 4294901760
  %6667 = vmatpush1.msra.mxu0 %v6666
  %v6668 = vand.u32 %v3658, 4294901760
  %6669 = vmatprep.subr.mxu0 %v6668
  %v6670 = vand.u32 %v3657, 4294901760
  %6671 = vmatpush1.msra.mxu0 %v6670
  %v6672 = vand.u32 %v3681, 4294901760
  %6673 = vmatprep.subr.mxu0 %v6672
  %v6674 = vand.u32 %v3680, 4294901760
  %6675 = vmatpush1.msra.mxu0 %v6674
  %v6676 = vand.u32 %v3704, 4294901760
  %6677 = vmatprep.subr.mxu0 %v6676
  %v6678 = vand.u32 %v3703, 4294901760
  %6679 = vmatpush1.msra.mxu0 %v6678
  %v6680 = vand.u32 %v3727, 4294901760
  %6681 = vmatprep.subr.mxu0 %v6680
  %v6682 = vand.u32 %v3726, 4294901760
  %6683 = vmatpush1.msra.mxu0 %v6682
  %v6684 = vand.u32 %v3802, 4294901760
  %6685 = vmatprep.subr.mxu0 %v6684
  %v6686 = vand.u32 %v3799, 4294901760
  %6687 = vmatpush1.msra.mxu0 %v6686
  %6688 = vmatprep.subr.mxu0 0.0
  %6689 = vmatpush1.msra.mxu0 0.0
  %6690 = vmatprep.subr.mxu0 0.0
  %6691 = vmatpush1.msra.mxu0 0.0
  %6692 = vmatprep.subr.mxu0 0.0
  %6693 = vmatpush1.msra.mxu0 0.0
  %6694 = vmatprep.subr.mxu0 0.0
  %6695 = vmatpush1.msra.mxu0 0.0
  %6696 = vmatprep.subr.mxu0 0.0
  %6697 = vmatpush1.msra.mxu0 0.0
  %6698 = vmatprep.subr.mxu0 0.0
  %6699 = vmatpush1.msra.mxu0 0.0
  %6700 = vmatprep.subr.mxu0 0.0
  %6701 = vmatpush1.msra.mxu0 0.0
  %6702 = vmatprep.subr.mxu0 0.0
  %6703 = vmatpush1.msra.mxu0 0.0
  %6704 = vmatprep.subr.mxu0 0.0
  %6705 = vmatpush1.msra.mxu0 0.0
  %6706 = vmatprep.subr.mxu0 0.0
  %6707 = vmatpush1.msra.mxu0 0.0
  %6708 = vmatprep.subr.mxu0 0.0
  %6709 = vmatpush1.msra.mxu0 0.0
  %6710 = vmatprep.subr.mxu0 0.0
  %6711 = vmatpush1.msra.mxu0 0.0
  %6712 = vmatprep.subr.mxu0 0.0
  %6713 = vmatpush1.msra.mxu0 0.0
  %6714 = vmatprep.subr.mxu0 0.0
  %6715 = vmatpush1.msra.mxu0 0.0
  %6716 = vmatprep.subr.mxu0 0.0
  %6717 = vmatpush1.msra.mxu0 0.0
  %6718 = vmatprep.subr.mxu0 0.0
  %6719 = vmatpush1.msra.mxu0 0.0
  %6720 = vmatprep.subr.mxu0 0.0
  %6721 = vmatpush1.msra.mxu0 0.0
  %6722 = vmatprep.subr.mxu0 0.0
  %6723 = vmatpush1.msra.mxu0 0.0
  %6724 = vmatprep.subr.mxu0 0.0
  %6725 = vmatpush1.msra.mxu0 0.0
  %6726 = vmatprep.subr.mxu0 0.0
  %6727 = vmatpush1.msra.mxu0 0.0
  %6728 = vmatprep.subr.mxu0 0.0
  %6729 = vmatpush1.msra.mxu0 0.0
  %6730 = vmatprep.subr.mxu0 0.0
  %6731 = vmatpush1.msra.mxu0 0.0
  %6732 = vmatprep.subr.mxu0 0.0
  %6733 = vmatpush1.msra.mxu0 0.0
  %6734 = vmatprep.subr.mxu0 0.0
  %6735 = vmatpush1.msra.mxu0 0.0
  %6736 = vmatprep.subr.mxu0 0.0
  %6737 = vmatpush1.msra.mxu0 0.0
  %6738 = vmatprep.mubr.f32.mxu0 0.0
  %v6739 = vand.u32 %v3771, 4294901760
  %v6740 = vsub.f32 %v3771, %v6739
  %v6741 = vand.u32 %v6740, 4294901760
  %6742 = vmatmul.mubr.f32.gmra.mrb[0].mxu0 %v6741
  %v6743 = vpop.f32.mrb[0].mxu0
  %v6744 = vadd.f32 %v6656, %v6743
  %v6745 = vpop.f32.mrb[0].mxu0
  %v6746 = vadd.f32 %v6658, %v6745
  %6747 = vdwg.mxu0
  %v6748 = vand.u32 %v3612, 4294901760
  %v6749 = vsub.f32 %v3612, %v6748
  %v6750 = vand.u32 %v6749, 4294901760
  %6751 = vmatprep.subr.mxu0 %v6750
  %v6752 = vand.u32 %v3611, 4294901760
  %v6753 = vsub.f32 %v3611, %v6752
  %v6754 = vand.u32 %v6753, 4294901760
  %6755 = vmatpush1.msra.mxu0 %v6754
  %v6756 = vand.u32 %v3635, 4294901760
  %v6757 = vsub.f32 %v3635, %v6756
  %v6758 = vand.u32 %v6757, 4294901760
  %6759 = vmatprep.subr.mxu0 %v6758
  %v6760 = vand.u32 %v3634, 4294901760
  %v6761 = vsub.f32 %v3634, %v6760
  %v6762 = vand.u32 %v6761, 4294901760
  %6763 = vmatpush1.msra.mxu0 %v6762
  %v6764 = vand.u32 %v3658, 4294901760
  %v6765 = vsub.f32 %v3658, %v6764
  %v6766 = vand.u32 %v6765, 4294901760
  %6767 = vmatprep.subr.mxu0 %v6766
  %v6768 = vand.u32 %v3657, 4294901760
  %v6769 = vsub.f32 %v3657, %v6768
  %v6770 = vand.u32 %v6769, 4294901760
  %6771 = vmatpush1.msra.mxu0 %v6770
  %v6772 = vand.u32 %v3681, 4294901760
  %v6773 = vsub.f32 %v3681, %v6772
  %v6774 = vand.u32 %v6773, 4294901760
  %6775 = vmatprep.subr.mxu0 %v6774
  %v6776 = vand.u32 %v3680, 4294901760
  %v6777 = vsub.f32 %v3680, %v6776
  %v6778 = vand.u32 %v6777, 4294901760
  %6779 = vmatpush1.msra.mxu0 %v6778
  %v6780 = vand.u32 %v3704, 4294901760
  %v6781 = vsub.f32 %v3704, %v6780
  %v6782 = vand.u32 %v6781, 4294901760
  %6783 = vmatprep.subr.mxu0 %v6782
  %v6784 = vand.u32 %v3703, 4294901760
  %v6785 = vsub.f32 %v3703, %v6784
  %v6786 = vand.u32 %v6785, 4294901760
  %6787 = vmatpush1.msra.mxu0 %v6786
  %v6788 = vand.u32 %v3727, 4294901760
  %v6789 = vsub.f32 %v3727, %v6788
  %v6790 = vand.u32 %v6789, 4294901760
  %6791 = vmatprep.subr.mxu0 %v6790
  %v6792 = vand.u32 %v3726, 4294901760
  %v6793 = vsub.f32 %v3726, %v6792
  %v6794 = vand.u32 %v6793, 4294901760
  %6795 = vmatpush1.msra.mxu0 %v6794
  %v6796 = vand.u32 %v3802, 4294901760
  %v6797 = vsub.f32 %v3802, %v6796
  %v6798 = vand.u32 %v6797, 4294901760
  %6799 = vmatprep.subr.mxu0 %v6798
  %v6800 = vand.u32 %v3799, 4294901760
  %v6801 = vsub.f32 %v3799, %v6800
  %v6802 = vand.u32 %v6801, 4294901760
  %6803 = vmatpush1.msra.mxu0 %v6802
  %6804 = vmatprep.subr.mxu0 0.0
  %6805 = vmatpush1.msra.mxu0 0.0
  %6806 = vmatprep.subr.mxu0 0.0
  %6807 = vmatpush1.msra.mxu0 0.0
  %6808 = vmatprep.subr.mxu0 0.0
  %6809 = vmatpush1.msra.mxu0 0.0
  %6810 = vmatprep.subr.mxu0 0.0
  %6811 = vmatpush1.msra.mxu0 0.0
  %6812 = vmatprep.subr.mxu0 0.0
  %6813 = vmatpush1.msra.mxu0 0.0
  %6814 = vmatprep.subr.mxu0 0.0
  %6815 = vmatpush1.msra.mxu0 0.0
  %6816 = vmatprep.subr.mxu0 0.0
  %6817 = vmatpush1.msra.mxu0 0.0
  %6818 = vmatprep.subr.mxu0 0.0
  %6819 = vmatpush1.msra.mxu0 0.0
  %6820 = vmatprep.subr.mxu0 0.0
  %6821 = vmatpush1.msra.mxu0 0.0
  %6822 = vmatprep.subr.mxu0 0.0
  %6823 = vmatpush1.msra.mxu0 0.0
  %6824 = vmatprep.subr.mxu0 0.0
  %6825 = vmatpush1.msra.mxu0 0.0
  %6826 = vmatprep.subr.mxu0 0.0
  %6827 = vmatpush1.msra.mxu0 0.0
  %6828 = vmatprep.subr.mxu0 0.0
  %6829 = vmatpush1.msra.mxu0 0.0
  %6830 = vmatprep.subr.mxu0 0.0
  %6831 = vmatpush1.msra.mxu0 0.0
  %6832 = vmatprep.subr.mxu0 0.0
  %6833 = vmatpush1.msra.mxu0 0.0
  %6834 = vmatprep.subr.mxu0 0.0
  %6835 = vmatpush1.msra.mxu0 0.0
  %6836 = vmatprep.subr.mxu0 0.0
  %6837 = vmatpush1.msra.mxu0 0.0
  %6838 = vmatprep.subr.mxu0 0.0
  %6839 = vmatpush1.msra.mxu0 0.0
  %6840 = vmatprep.subr.mxu0 0.0
  %6841 = vmatpush1.msra.mxu0 0.0
  %6842 = vmatprep.subr.mxu0 0.0
  %6843 = vmatpush1.msra.mxu0 0.0
  %6844 = vmatprep.subr.mxu0 0.0
  %6845 = vmatpush1.msra.mxu0 0.0
  %6846 = vmatprep.subr.mxu0 0.0
  %6847 = vmatpush1.msra.mxu0 0.0
  %6848 = vmatprep.subr.mxu0 0.0
  %6849 = vmatpush1.msra.mxu0 0.0
  %6850 = vmatprep.subr.mxu0 0.0
  %6851 = vmatpush1.msra.mxu0 0.0
  %6852 = vmatprep.subr.mxu0 0.0
  %6853 = vmatpush1.msra.mxu0 0.0
  %6854 = vmatprep.mubr.f32.mxu0 0.0
  %v6855 = vand.u32 %v3771, 4294901760
  %6856 = vmatmul.mubr.f32.gmra.mrb[0].mxu0 %v6855
  %v6857 = vpop.f32.mrb[0].mxu0
  %v6858 = vadd.f32 %v6744, %v6857
  %v6859 = vpop.f32.mrb[0].mxu0
  %v6860 = vadd.f32 %v6746, %v6859
  %6861 = vdwg.mxu0
  %v6862 = vand.u32 %v3612, 4294901760
  %6863 = vmatprep.subr.mxu0 %v6862
  %v6864 = vand.u32 %v3611, 4294901760
  %6865 = vmatpush1.msra.mxu0 %v6864
  %v6866 = vand.u32 %v3635, 4294901760
  %6867 = vmatprep.subr.mxu0 %v6866
  %v6868 = vand.u32 %v3634, 4294901760
  %6869 = vmatpush1.msra.mxu0 %v6868
  %v6870 = vand.u32 %v3658, 4294901760
  %6871 = vmatprep.subr.mxu0 %v6870
  %v6872 = vand.u32 %v3657, 4294901760
  %6873 = vmatpush1.msra.mxu0 %v6872
  %v6874 = vand.u32 %v3681, 4294901760
  %6875 = vmatprep.subr.mxu0 %v6874
  %v6876 = vand.u32 %v3680, 4294901760
  %6877 = vmatpush1.msra.mxu0 %v6876
  %v6878 = vand.u32 %v3704, 4294901760
  %6879 = vmatprep.subr.mxu0 %v6878
  %v6880 = vand.u32 %v3703, 4294901760
  %6881 = vmatpush1.msra.mxu0 %v6880
  %v6882 = vand.u32 %v3727, 4294901760
  %6883 = vmatprep.subr.mxu0 %v6882
  %v6884 = vand.u32 %v3726, 4294901760
  %6885 = vmatpush1.msra.mxu0 %v6884
  %v6886 = vand.u32 %v3802, 4294901760
  %6887 = vmatprep.subr.mxu0 %v6886
  %v6888 = vand.u32 %v3799, 4294901760
  %6889 = vmatpush1.msra.mxu0 %v6888
  %6890 = vmatprep.subr.mxu0 0.0
  %6891 = vmatpush1.msra.mxu0 0.0
  %6892 = vmatprep.subr.mxu0 0.0
  %6893 = vmatpush1.msra.mxu0 0.0
  %6894 = vmatprep.subr.mxu0 0.0
  %6895 = vmatpush1.msra.mxu0 0.0
  %6896 = vmatprep.subr.mxu0 0.0
  %6897 = vmatpush1.msra.mxu0 0.0
  %6898 = vmatprep.subr.mxu0 0.0
  %6899 = vmatpush1.msra.mxu0 0.0
  %6900 = vmatprep.subr.mxu0 0.0
  %6901 = vmatpush1.msra.mxu0 0.0
  %6902 = vmatprep.subr.mxu0 0.0
  %6903 = vmatpush1.msra.mxu0 0.0
  %6904 = vmatprep.subr.mxu0 0.0
  %6905 = vmatpush1.msra.mxu0 0.0
  %6906 = vmatprep.subr.mxu0 0.0
  %6907 = vmatpush1.msra.mxu0 0.0
  %6908 = vmatprep.subr.mxu0 0.0
  %6909 = vmatpush1.msra.mxu0 0.0
  %6910 = vmatprep.subr.mxu0 0.0
  %6911 = vmatpush1.msra.mxu0 0.0
  %6912 = vmatprep.subr.mxu0 0.0
  %6913 = vmatpush1.msra.mxu0 0.0
  %6914 = vmatprep.subr.mxu0 0.0
  %6915 = vmatpush1.msra.mxu0 0.0
  %6916 = vmatprep.subr.mxu0 0.0
  %6917 = vmatpush1.msra.mxu0 0.0
  %6918 = vmatprep.subr.mxu0 0.0
  %6919 = vmatpush1.msra.mxu0 0.0
  %6920 = vmatprep.subr.mxu0 0.0
  %6921 = vmatpush1.msra.mxu0 0.0
  %6922 = vmatprep.subr.mxu0 0.0
  %6923 = vmatpush1.msra.mxu0 0.0
  %6924 = vmatprep.subr.mxu0 0.0
  %6925 = vmatpush1.msra.mxu0 0.0
  %6926 = vmatprep.subr.mxu0 0.0
  %6927 = vmatpush1.msra.mxu0 0.0
  %6928 = vmatprep.subr.mxu0 0.0
  %6929 = vmatpush1.msra.mxu0 0.0
  %6930 = vmatprep.subr.mxu0 0.0
  %6931 = vmatpush1.msra.mxu0 0.0
  %6932 = vmatprep.subr.mxu0 0.0
  %6933 = vmatpush1.msra.mxu0 0.0
  %6934 = vmatprep.subr.mxu0 0.0
  %6935 = vmatpush1.msra.mxu0 0.0
  %6936 = vmatprep.subr.mxu0 0.0
  %6937 = vmatpush1.msra.mxu0 0.0
  %6938 = vmatprep.subr.mxu0 0.0
  %6939 = vmatpush1.msra.mxu0 0.0
  %6940 = vmatprep.mubr.f32.mxu0 0.0
  %v6941 = vand.u32 %v3771, 4294901760
  %6942 = vmatmul.mubr.f32.gmra.mrb[0].mxu0 %v6941
  %v6943 = vpop.f32.mrb[0].mxu0
  %v6944 = vadd.f32 %v6858, %v6943
  %v6945 = vpop.f32.mrb[0].mxu0
  %v6946 = vadd.f32 %v6860, %v6945
  %6947 = vdwg.mxu0
  %v6948 = vand.u32 %v3614, 4294901760
  %6949 = vmatprep.subr.mxu0 %v6948
  %v6950 = vand.u32 %v3613, 4294901760
  %6951 = vmatpush1.msra.mxu0 %v6950
  %v6952 = vand.u32 %v3637, 4294901760
  %6953 = vmatprep.subr.mxu0 %v6952
  %v6954 = vand.u32 %v3636, 4294901760
  %6955 = vmatpush1.msra.mxu0 %v6954
  %v6956 = vand.u32 %v3660, 4294901760
  %6957 = vmatprep.subr.mxu0 %v6956
  %v6958 = vand.u32 %v3659, 4294901760
  %6959 = vmatpush1.msra.mxu0 %v6958
  %v6960 = vand.u32 %v3683, 4294901760
  %6961 = vmatprep.subr.mxu0 %v6960
  %v6962 = vand.u32 %v3682, 4294901760
  %6963 = vmatpush1.msra.mxu0 %v6962
  %v6964 = vand.u32 %v3706, 4294901760
  %6965 = vmatprep.subr.mxu0 %v6964
  %v6966 = vand.u32 %v3705, 4294901760
  %6967 = vmatpush1.msra.mxu0 %v6966
  %v6968 = vand.u32 %v3729, 4294901760
  %6969 = vmatprep.subr.mxu0 %v6968
  %v6970 = vand.u32 %v3728, 4294901760
  %6971 = vmatpush1.msra.mxu0 %v6970
  %v6972 = vand.u32 %v3808, 4294901760
  %6973 = vmatprep.subr.mxu0 %v6972
  %v6974 = vand.u32 %v3805, 4294901760
  %6975 = vmatpush1.msra.mxu0 %v6974
  %6976 = vmatprep.subr.mxu0 0.0
  %6977 = vmatpush1.msra.mxu0 0.0
  %6978 = vmatprep.subr.mxu0 0.0
  %6979 = vmatpush1.msra.mxu0 0.0
  %6980 = vmatprep.subr.mxu0 0.0
  %6981 = vmatpush1.msra.mxu0 0.0
  %6982 = vmatprep.subr.mxu0 0.0
  %6983 = vmatpush1.msra.mxu0 0.0
  %6984 = vmatprep.subr.mxu0 0.0
  %6985 = vmatpush1.msra.mxu0 0.0
  %6986 = vmatprep.subr.mxu0 0.0
  %6987 = vmatpush1.msra.mxu0 0.0
  %6988 = vmatprep.subr.mxu0 0.0
  %6989 = vmatpush1.msra.mxu0 0.0
  %6990 = vmatprep.subr.mxu0 0.0
  %6991 = vmatpush1.msra.mxu0 0.0
  %6992 = vmatprep.subr.mxu0 0.0
  %6993 = vmatpush1.msra.mxu0 0.0
  %6994 = vmatprep.subr.mxu0 0.0
  %6995 = vmatpush1.msra.mxu0 0.0
  %6996 = vmatprep.subr.mxu0 0.0
  %6997 = vmatpush1.msra.mxu0 0.0
  %6998 = vmatprep.subr.mxu0 0.0
  %6999 = vmatpush1.msra.mxu0 0.0
  %7000 = vmatprep.subr.mxu0 0.0
  %7001 = vmatpush1.msra.mxu0 0.0
  %7002 = vmatprep.subr.mxu0 0.0
  %7003 = vmatpush1.msra.mxu0 0.0
  %7004 = vmatprep.subr.mxu0 0.0
  %7005 = vmatpush1.msra.mxu0 0.0
  %7006 = vmatprep.subr.mxu0 0.0
  %7007 = vmatpush1.msra.mxu0 0.0
  %7008 = vmatprep.subr.mxu0 0.0
  %7009 = vmatpush1.msra.mxu0 0.0
  %7010 = vmatprep.subr.mxu0 0.0
  %7011 = vmatpush1.msra.mxu0 0.0
  %7012 = vmatprep.subr.mxu0 0.0
  %7013 = vmatpush1.msra.mxu0 0.0
  %7014 = vmatprep.subr.mxu0 0.0
  %7015 = vmatpush1.msra.mxu0 0.0
  %7016 = vmatprep.subr.mxu0 0.0
  %7017 = vmatpush1.msra.mxu0 0.0
  %7018 = vmatprep.subr.mxu0 0.0
  %7019 = vmatpush1.msra.mxu0 0.0
  %7020 = vmatprep.subr.mxu0 0.0
  %7021 = vmatpush1.msra.mxu0 0.0
  %7022 = vmatprep.subr.mxu0 0.0
  %7023 = vmatpush1.msra.mxu0 0.0
  %7024 = vmatprep.subr.mxu0 0.0
  %7025 = vmatpush1.msra.mxu0 0.0
  %7026 = vmatprep.mubr.f32.mxu0 0.0
  %v7027 = vand.u32 %v3771, 4294901760
  %v7028 = vsub.f32 %v3771, %v7027
  %v7029 = vand.u32 %v7028, 4294901760
  %v7030 = vsub.f32 %v7028, %v7029
  %v7031 = vand.u32 %v7030, 4294901760
  %7032 = vmatmul.mubr.f32.gmra.mrb[0].mxu0 %v7031
  %v7033 = vpop.f32.mrb[0].mxu0
  %v7034 = vadd.f32 %v3768, %v7033
  %v7035 = vpop.f32.mrb[0].mxu0
  %v7036 = vadd.f32 %v3768, %v7035
  %7037 = vdwg.mxu0
  %v7038 = vand.u32 %v3614, 4294901760
  %v7039 = vsub.f32 %v3614, %v7038
  %v7040 = vand.u32 %v7039, 4294901760
  %v7041 = vsub.f32 %v7039, %v7040
  %v7042 = vand.u32 %v7041, 4294901760
  %7043 = vmatprep.subr.mxu0 %v7042
  %v7044 = vand.u32 %v3613, 4294901760
  %v7045 = vsub.f32 %v3613, %v7044
  %v7046 = vand.u32 %v7045, 4294901760
  %v7047 = vsub.f32 %v7045, %v7046
  %v7048 = vand.u32 %v7047, 4294901760
  %7049 = vmatpush1.msra.mxu0 %v7048
  %v7050 = vand.u32 %v3637, 4294901760
  %v7051 = vsub.f32 %v3637, %v7050
  %v7052 = vand.u32 %v7051, 4294901760
  %v7053 = vsub.f32 %v7051, %v7052
  %v7054 = vand.u32 %v7053, 4294901760
  %7055 = vmatprep.subr.mxu0 %v7054
  %v7056 = vand.u32 %v3636, 4294901760
  %v7057 = vsub.f32 %v3636, %v7056
  %v7058 = vand.u32 %v7057, 4294901760
  %v7059 = vsub.f32 %v7057, %v7058
  %v7060 = vand.u32 %v7059, 4294901760
  %7061 = vmatpush1.msra.mxu0 %v7060
  %v7062 = vand.u32 %v3660, 4294901760
  %v7063 = vsub.f32 %v3660, %v7062
  %v7064 = vand.u32 %v7063, 4294901760
  %v7065 = vsub.f32 %v7063, %v7064
  %v7066 = vand.u32 %v7065, 4294901760
  %7067 = vmatprep.subr.mxu0 %v7066
  %v7068 = vand.u32 %v3659, 4294901760
  %v7069 = vsub.f32 %v3659, %v7068
  %v7070 = vand.u32 %v7069, 4294901760
  %v7071 = vsub.f32 %v7069, %v7070
  %v7072 = vand.u32 %v7071, 4294901760
  %7073 = vmatpush1.msra.mxu0 %v7072
  %v7074 = vand.u32 %v3683, 4294901760
  %v7075 = vsub.f32 %v3683, %v7074
  %v7076 = vand.u32 %v7075, 4294901760
  %v7077 = vsub.f32 %v7075, %v7076
  %v7078 = vand.u32 %v7077, 4294901760
  %7079 = vmatprep.subr.mxu0 %v7078
  %v7080 = vand.u32 %v3682, 4294901760
  %v7081 = vsub.f32 %v3682, %v7080
  %v7082 = vand.u32 %v7081, 4294901760
  %v7083 = vsub.f32 %v7081, %v7082
  %v7084 = vand.u32 %v7083, 4294901760
  %7085 = vmatpush1.msra.mxu0 %v7084
  %v7086 = vand.u32 %v3706, 4294901760
  %v7087 = vsub.f32 %v3706, %v7086
  %v7088 = vand.u32 %v7087, 4294901760
  %v7089 = vsub.f32 %v7087, %v7088
  %v7090 = vand.u32 %v7089, 4294901760
  %7091 = vmatprep.subr.mxu0 %v7090
  %v7092 = vand.u32 %v3705, 4294901760
  %v7093 = vsub.f32 %v3705, %v7092
  %v7094 = vand.u32 %v7093, 4294901760
  %v7095 = vsub.f32 %v7093, %v7094
  %v7096 = vand.u32 %v7095, 4294901760
  %7097 = vmatpush1.msra.mxu0 %v7096
  %v7098 = vand.u32 %v3729, 4294901760
  %v7099 = vsub.f32 %v3729, %v7098
  %v7100 = vand.u32 %v7099, 4294901760
  %v7101 = vsub.f32 %v7099, %v7100
  %v7102 = vand.u32 %v7101, 4294901760
  %7103 = vmatprep.subr.mxu0 %v7102
  %v7104 = vand.u32 %v3728, 4294901760
  %v7105 = vsub.f32 %v3728, %v7104
  %v7106 = vand.u32 %v7105, 4294901760
  %v7107 = vsub.f32 %v7105, %v7106
  %v7108 = vand.u32 %v7107, 4294901760
  %7109 = vmatpush1.msra.mxu0 %v7108
  %v7110 = vand.u32 %v3808, 4294901760
  %v7111 = vsub.f32 %v3808, %v7110
  %v7112 = vand.u32 %v7111, 4294901760
  %v7113 = vsub.f32 %v7111, %v7112
  %v7114 = vand.u32 %v7113, 4294901760
  %7115 = vmatprep.subr.mxu0 %v7114
  %v7116 = vand.u32 %v3805, 4294901760
  %v7117 = vsub.f32 %v3805, %v7116
  %v7118 = vand.u32 %v7117, 4294901760
  %v7119 = vsub.f32 %v7117, %v7118
  %v7120 = vand.u32 %v7119, 4294901760
  %7121 = vmatpush1.msra.mxu0 %v7120
  %7122 = vmatprep.subr.mxu0 0.0
  %7123 = vmatpush1.msra.mxu0 0.0
  %7124 = vmatprep.subr.mxu0 0.0
  %7125 = vmatpush1.msra.mxu0 0.0
  %7126 = vmatprep.subr.mxu0 0.0
  %7127 = vmatpush1.msra.mxu0 0.0
  %7128 = vmatprep.subr.mxu0 0.0
  %7129 = vmatpush1.msra.mxu0 0.0
  %7130 = vmatprep.subr.mxu0 0.0
  %7131 = vmatpush1.msra.mxu0 0.0
  %7132 = vmatprep.subr.mxu0 0.0
  %7133 = vmatpush1.msra.mxu0 0.0
  %7134 = vmatprep.subr.mxu0 0.0
  %7135 = vmatpush1.msra.mxu0 0.0
  %7136 = vmatprep.subr.mxu0 0.0
  %7137 = vmatpush1.msra.mxu0 0.0
  %7138 = vmatprep.subr.mxu0 0.0
  %7139 = vmatpush1.msra.mxu0 0.0
  %7140 = vmatprep.subr.mxu0 0.0
  %7141 = vmatpush1.msra.mxu0 0.0
  %7142 = vmatprep.subr.mxu0 0.0
  %7143 = vmatpush1.msra.mxu0 0.0
  %7144 = vmatprep.subr.mxu0 0.0
  %7145 = vmatpush1.msra.mxu0 0.0
  %7146 = vmatprep.subr.mxu0 0.0
  %7147 = vmatpush1.msra.mxu0 0.0
  %7148 = vmatprep.subr.mxu0 0.0
  %7149 = vmatpush1.msra.mxu0 0.0
  %7150 = vmatprep.subr.mxu0 0.0
  %7151 = vmatpush1.msra.mxu0 0.0
  %7152 = vmatprep.subr.mxu0 0.0
  %7153 = vmatpush1.msra.mxu0 0.0
  %7154 = vmatprep.subr.mxu0 0.0
  %7155 = vmatpush1.msra.mxu0 0.0
  %7156 = vmatprep.subr.mxu0 0.0
  %7157 = vmatpush1.msra.mxu0 0.0
  %7158 = vmatprep.subr.mxu0 0.0
  %7159 = vmatpush1.msra.mxu0 0.0
  %7160 = vmatprep.subr.mxu0 0.0
  %7161 = vmatpush1.msra.mxu0 0.0
  %7162 = vmatprep.subr.mxu0 0.0
  %7163 = vmatpush1.msra.mxu0 0.0
  %7164 = vmatprep.subr.mxu0 0.0
  %7165 = vmatpush1.msra.mxu0 0.0
  %7166 = vmatprep.subr.mxu0 0.0
  %7167 = vmatpush1.msra.mxu0 0.0
  %7168 = vmatprep.subr.mxu0 0.0
  %7169 = vmatpush1.msra.mxu0 0.0
  %7170 = vmatprep.subr.mxu0 0.0
  %7171 = vmatpush1.msra.mxu0 0.0
  %7172 = vmatprep.mubr.f32.mxu0 0.0
  %v7173 = vand.u32 %v3771, 4294901760
  %7174 = vmatmul.mubr.f32.gmra.mrb[0].mxu0 %v7173
  %v7175 = vpop.f32.mrb[0].mxu0
  %v7176 = vadd.f32 %v7034, %v7175
  %v7177 = vpop.f32.mrb[0].mxu0
  %v7178 = vadd.f32 %v7036, %v7177
  %7179 = vdwg.mxu0
  %v7180 = vand.u32 %v3614, 4294901760
  %v7181 = vsub.f32 %v3614, %v7180
  %7182 = vmatprep.subr.mxu0 %v7181
  %v7183 = vand.u32 %v3613, 4294901760
  %v7184 = vsub.f32 %v3613, %v7183
  %7185 = vmatpush1.msra.mxu0 %v7184
  %v7186 = vand.u32 %v3637, 4294901760
  %v7187 = vsub.f32 %v3637, %v7186
  %7188 = vmatprep.subr.mxu0 %v7187
  %v7189 = vand.u32 %v3636, 4294901760
  %v7190 = vsub.f32 %v3636, %v7189
  %7191 = vmatpush1.msra.mxu0 %v7190
  %v7192 = vand.u32 %v3660, 4294901760
  %v7193 = vsub.f32 %v3660, %v7192
  %7194 = vmatprep.subr.mxu0 %v7193
  %v7195 = vand.u32 %v3659, 4294901760
  %v7196 = vsub.f32 %v3659, %v7195
  %7197 = vmatpush1.msra.mxu0 %v7196
  %v7198 = vand.u32 %v3683, 4294901760
  %v7199 = vsub.f32 %v3683, %v7198
  %7200 = vmatprep.subr.mxu0 %v7199
  %v7201 = vand.u32 %v3682, 4294901760
  %v7202 = vsub.f32 %v3682, %v7201
  %7203 = vmatpush1.msra.mxu0 %v7202
  %v7204 = vand.u32 %v3706, 4294901760
  %v7205 = vsub.f32 %v3706, %v7204
  %7206 = vmatprep.subr.mxu0 %v7205
  %v7207 = vand.u32 %v3705, 4294901760
  %v7208 = vsub.f32 %v3705, %v7207
  %7209 = vmatpush1.msra.mxu0 %v7208
  %v7210 = vand.u32 %v3729, 4294901760
  %v7211 = vsub.f32 %v3729, %v7210
  %7212 = vmatprep.subr.mxu0 %v7211
  %v7213 = vand.u32 %v3728, 4294901760
  %v7214 = vsub.f32 %v3728, %v7213
  %7215 = vmatpush1.msra.mxu0 %v7214
  %v7216 = vand.u32 %v3808, 4294901760
  %v7217 = vsub.f32 %v3808, %v7216
  %7218 = vmatprep.subr.mxu0 %v7217
  %v7219 = vand.u32 %v3805, 4294901760
  %v7220 = vsub.f32 %v3805, %v7219
  %7221 = vmatpush1.msra.mxu0 %v7220
  %7222 = vmatprep.subr.mxu0 0.0
  %7223 = vmatpush1.msra.mxu0 0.0
  %7224 = vmatprep.subr.mxu0 0.0
  %7225 = vmatpush1.msra.mxu0 0.0
  %7226 = vmatprep.subr.mxu0 0.0
  %7227 = vmatpush1.msra.mxu0 0.0
  %7228 = vmatprep.subr.mxu0 0.0
  %7229 = vmatpush1.msra.mxu0 0.0
  %7230 = vmatprep.subr.mxu0 0.0
  %7231 = vmatpush1.msra.mxu0 0.0
  %7232 = vmatprep.subr.mxu0 0.0
  %7233 = vmatpush1.msra.mxu0 0.0
  %7234 = vmatprep.subr.mxu0 0.0
  %7235 = vmatpush1.msra.mxu0 0.0
  %7236 = vmatprep.subr.mxu0 0.0
  %7237 = vmatpush1.msra.mxu0 0.0
  %7238 = vmatprep.subr.mxu0 0.0
  %7239 = vmatpush1.msra.mxu0 0.0
  %7240 = vmatprep.subr.mxu0 0.0
  %7241 = vmatpush1.msra.mxu0 0.0
  %7242 = vmatprep.subr.mxu0 0.0
  %7243 = vmatpush1.msra.mxu0 0.0
  %7244 = vmatprep.subr.mxu0 0.0
  %7245 = vmatpush1.msra.mxu0 0.0
  %7246 = vmatprep.subr.mxu0 0.0
  %7247 = vmatpush1.msra.mxu0 0.0
  %7248 = vmatprep.subr.mxu0 0.0
  %7249 = vmatpush1.msra.mxu0 0.0
  %7250 = vmatprep.subr.mxu0 0.0
  %7251 = vmatpush1.msra.mxu0 0.0
  %7252 = vmatprep.subr.mxu0 0.0
  %7253 = vmatpush1.msra.mxu0 0.0
  %7254 = vmatprep.subr.mxu0 0.0
  %7255 = vmatpush1.msra.mxu0 0.0
  %7256 = vmatprep.subr.mxu0 0.0
  %7257 = vmatpush1.msra.mxu0 0.0
  %7258 = vmatprep.subr.mxu0 0.0
  %7259 = vmatpush1.msra.mxu0 0.0
  %7260 = vmatprep.subr.mxu0 0.0
  %7261 = vmatpush1.msra.mxu0 0.0
  %7262 = vmatprep.subr.mxu0 0.0
  %7263 = vmatpush1.msra.mxu0 0.0
  %7264 = vmatprep.subr.mxu0 0.0
  %7265 = vmatpush1.msra.mxu0 0.0
  %7266 = vmatprep.subr.mxu0 0.0
  %7267 = vmatpush1.msra.mxu0 0.0
  %7268 = vmatprep.subr.mxu0 0.0
  %7269 = vmatpush1.msra.mxu0 0.0
  %7270 = vmatprep.subr.mxu0 0.0
  %7271 = vmatpush1.msra.mxu0 0.0
  %7272 = vmatprep.mubr.f32.mxu0 0.0
  %v7273 = vand.u32 %v3771, 4294901760
  %v7274 = vsub.f32 %v3771, %v7273
  %7275 = vmatmul.mubr.f32.gmra.mrb[0].mxu0 %v7274
  %v7276 = vpop.f32.mrb[0].mxu0
  %v7277 = vadd.f32 %v7176, %v7276
  %v7278 = vpop.f32.mrb[0].mxu0
  %v7279 = vadd.f32 %v7178, %v7278
  %7280 = vdwg.mxu0
  %v7281 = vand.u32 %v3614, 4294901760
  %7282 = vmatprep.subr.mxu0 %v7281
  %v7283 = vand.u32 %v3613, 4294901760
  %7284 = vmatpush1.msra.mxu0 %v7283
  %v7285 = vand.u32 %v3637, 4294901760
  %7286 = vmatprep.subr.mxu0 %v7285
  %v7287 = vand.u32 %v3636, 4294901760
  %7288 = vmatpush1.msra.mxu0 %v7287
  %v7289 = vand.u32 %v3660, 4294901760
  %7290 = vmatprep.subr.mxu0 %v7289
  %v7291 = vand.u32 %v3659, 4294901760
  %7292 = vmatpush1.msra.mxu0 %v7291
  %v7293 = vand.u32 %v3683, 4294901760
  %7294 = vmatprep.subr.mxu0 %v7293
  %v7295 = vand.u32 %v3682, 4294901760
  %7296 = vmatpush1.msra.mxu0 %v7295
  %v7297 = vand.u32 %v3706, 4294901760
  %7298 = vmatprep.subr.mxu0 %v7297
  %v7299 = vand.u32 %v3705, 4294901760
  %7300 = vmatpush1.msra.mxu0 %v7299
  %v7301 = vand.u32 %v3729, 4294901760
  %7302 = vmatprep.subr.mxu0 %v7301
  %v7303 = vand.u32 %v3728, 4294901760
  %7304 = vmatpush1.msra.mxu0 %v7303
  %v7305 = vand.u32 %v3808, 4294901760
  %7306 = vmatprep.subr.mxu0 %v7305
  %v7307 = vand.u32 %v3805, 4294901760
  %7308 = vmatpush1.msra.mxu0 %v7307
  %7309 = vmatprep.subr.mxu0 0.0
  %7310 = vmatpush1.msra.mxu0 0.0
  %7311 = vmatprep.subr.mxu0 0.0
  %7312 = vmatpush1.msra.mxu0 0.0
  %7313 = vmatprep.subr.mxu0 0.0
  %7314 = vmatpush1.msra.mxu0 0.0
  %7315 = vmatprep.subr.mxu0 0.0
  %7316 = vmatpush1.msra.mxu0 0.0
  %7317 = vmatprep.subr.mxu0 0.0
  %7318 = vmatpush1.msra.mxu0 0.0
  %7319 = vmatprep.subr.mxu0 0.0
  %7320 = vmatpush1.msra.mxu0 0.0
  %7321 = vmatprep.subr.mxu0 0.0
  %7322 = vmatpush1.msra.mxu0 0.0
  %7323 = vmatprep.subr.mxu0 0.0
  %7324 = vmatpush1.msra.mxu0 0.0
  %7325 = vmatprep.subr.mxu0 0.0
  %7326 = vmatpush1.msra.mxu0 0.0
  %7327 = vmatprep.subr.mxu0 0.0
  %7328 = vmatpush1.msra.mxu0 0.0
  %7329 = vmatprep.subr.mxu0 0.0
  %7330 = vmatpush1.msra.mxu0 0.0
  %7331 = vmatprep.subr.mxu0 0.0
  %7332 = vmatpush1.msra.mxu0 0.0
  %7333 = vmatprep.subr.mxu0 0.0
  %7334 = vmatpush1.msra.mxu0 0.0
  %7335 = vmatprep.subr.mxu0 0.0
  %7336 = vmatpush1.msra.mxu0 0.0
  %7337 = vmatprep.subr.mxu0 0.0
  %7338 = vmatpush1.msra.mxu0 0.0
  %7339 = vmatprep.subr.mxu0 0.0
  %7340 = vmatpush1.msra.mxu0 0.0
  %7341 = vmatprep.subr.mxu0 0.0
  %7342 = vmatpush1.msra.mxu0 0.0
  %7343 = vmatprep.subr.mxu0 0.0
  %7344 = vmatpush1.msra.mxu0 0.0
  %7345 = vmatprep.subr.mxu0 0.0
  %7346 = vmatpush1.msra.mxu0 0.0
  %7347 = vmatprep.subr.mxu0 0.0
  %7348 = vmatpush1.msra.mxu0 0.0
  %7349 = vmatprep.subr.mxu0 0.0
  %7350 = vmatpush1.msra.mxu0 0.0
  %7351 = vmatprep.subr.mxu0 0.0
  %7352 = vmatpush1.msra.mxu0 0.0
  %7353 = vmatprep.subr.mxu0 0.0
  %7354 = vmatpush1.msra.mxu0 0.0
  %7355 = vmatprep.subr.mxu0 0.0
  %7356 = vmatpush1.msra.mxu0 0.0
  %7357 = vmatprep.subr.mxu0 0.0
  %7358 = vmatpush1.msra.mxu0 0.0
  %7359 = vmatprep.mubr.f32.mxu0 0.0
  %v7360 = vand.u32 %v3771, 4294901760
  %v7361 = vsub.f32 %v3771, %v7360
  %v7362 = vand.u32 %v7361, 4294901760
  %7363 = vmatmul.mubr.f32.gmra.mrb[0].mxu0 %v7362
  %v7364 = vpop.f32.mrb[0].mxu0
  %v7365 = vadd.f32 %v7277, %v7364
  %v7366 = vpop.f32.mrb[0].mxu0
  %v7367 = vadd.f32 %v7279, %v7366
  %7368 = vdwg.mxu0
  %v7369 = vand.u32 %v3614, 4294901760
  %v7370 = vsub.f32 %v3614, %v7369
  %v7371 = vand.u32 %v7370, 4294901760
  %7372 = vmatprep.subr.mxu0 %v7371
  %v7373 = vand.u32 %v3613, 4294901760
  %v7374 = vsub.f32 %v3613, %v7373
  %v7375 = vand.u32 %v7374, 4294901760
  %7376 = vmatpush1.msra.mxu0 %v7375
  %v7377 = vand.u32 %v3637, 4294901760
  %v7378 = vsub.f32 %v3637, %v7377
  %v7379 = vand.u32 %v7378, 4294901760
  %7380 = vmatprep.subr.mxu0 %v7379
  %v7381 = vand.u32 %v3636, 4294901760
  %v7382 = vsub.f32 %v3636, %v7381
  %v7383 = vand.u32 %v7382, 4294901760
  %7384 = vmatpush1.msra.mxu0 %v7383
  %v7385 = vand.u32 %v3660, 4294901760
  %v7386 = vsub.f32 %v3660, %v7385
  %v7387 = vand.u32 %v7386, 4294901760
  %7388 = vmatprep.subr.mxu0 %v7387
  %v7389 = vand.u32 %v3659, 4294901760
  %v7390 = vsub.f32 %v3659, %v7389
  %v7391 = vand.u32 %v7390, 4294901760
  %7392 = vmatpush1.msra.mxu0 %v7391
  %v7393 = vand.u32 %v3683, 4294901760
  %v7394 = vsub.f32 %v3683, %v7393
  %v7395 = vand.u32 %v7394, 4294901760
  %7396 = vmatprep.subr.mxu0 %v7395
  %v7397 = vand.u32 %v3682, 4294901760
  %v7398 = vsub.f32 %v3682, %v7397
  %v7399 = vand.u32 %v7398, 4294901760
  %7400 = vmatpush1.msra.mxu0 %v7399
  %v7401 = vand.u32 %v3706, 4294901760
  %v7402 = vsub.f32 %v3706, %v7401
  %v7403 = vand.u32 %v7402, 4294901760
  %7404 = vmatprep.subr.mxu0 %v7403
  %v7405 = vand.u32 %v3705, 4294901760
  %v7406 = vsub.f32 %v3705, %v7405
  %v7407 = vand.u32 %v7406, 4294901760
  %7408 = vmatpush1.msra.mxu0 %v7407
  %v7409 = vand.u32 %v3729, 4294901760
  %v7410 = vsub.f32 %v3729, %v7409
  %v7411 = vand.u32 %v7410, 4294901760
  %7412 = vmatprep.subr.mxu0 %v7411
  %v7413 = vand.u32 %v3728, 4294901760
  %v7414 = vsub.f32 %v3728, %v7413
  %v7415 = vand.u32 %v7414, 4294901760
  %7416 = vmatpush1.msra.mxu0 %v7415
  %v7417 = vand.u32 %v3808, 4294901760
  %v7418 = vsub.f32 %v3808, %v7417
  %v7419 = vand.u32 %v7418, 4294901760
  %7420 = vmatprep.subr.mxu0 %v7419
  %v7421 = vand.u32 %v3805, 4294901760
  %v7422 = vsub.f32 %v3805, %v7421
  %v7423 = vand.u32 %v7422, 4294901760
  %7424 = vmatpush1.msra.mxu0 %v7423
  %7425 = vmatprep.subr.mxu0 0.0
  %7426 = vmatpush1.msra.mxu0 0.0
  %7427 = vmatprep.subr.mxu0 0.0
  %7428 = vmatpush1.msra.mxu0 0.0
  %7429 = vmatprep.subr.mxu0 0.0
  %7430 = vmatpush1.msra.mxu0 0.0
  %7431 = vmatprep.subr.mxu0 0.0
  %7432 = vmatpush1.msra.mxu0 0.0
  %7433 = vmatprep.subr.mxu0 0.0
  %7434 = vmatpush1.msra.mxu0 0.0
  %7435 = vmatprep.subr.mxu0 0.0
  %7436 = vmatpush1.msra.mxu0 0.0
  %7437 = vmatprep.subr.mxu0 0.0
  %7438 = vmatpush1.msra.mxu0 0.0
  %7439 = vmatprep.subr.mxu0 0.0
  %7440 = vmatpush1.msra.mxu0 0.0
  %7441 = vmatprep.subr.mxu0 0.0
  %7442 = vmatpush1.msra.mxu0 0.0
  %7443 = vmatprep.subr.mxu0 0.0
  %7444 = vmatpush1.msra.mxu0 0.0
  %7445 = vmatprep.subr.mxu0 0.0
  %7446 = vmatpush1.msra.mxu0 0.0
  %7447 = vmatprep.subr.mxu0 0.0
  %7448 = vmatpush1.msra.mxu0 0.0
  %7449 = vmatprep.subr.mxu0 0.0
  %7450 = vmatpush1.msra.mxu0 0.0
  %7451 = vmatprep.subr.mxu0 0.0
  %7452 = vmatpush1.msra.mxu0 0.0
  %7453 = vmatprep.subr.mxu0 0.0
  %7454 = vmatpush1.msra.mxu0 0.0
  %7455 = vmatprep.subr.mxu0 0.0
  %7456 = vmatpush1.msra.mxu0 0.0
  %7457 = vmatprep.subr.mxu0 0.0
  %7458 = vmatpush1.msra.mxu0 0.0
  %7459 = vmatprep.subr.mxu0 0.0
  %7460 = vmatpush1.msra.mxu0 0.0
  %7461 = vmatprep.subr.mxu0 0.0
  %7462 = vmatpush1.msra.mxu0 0.0
  %7463 = vmatprep.subr.mxu0 0.0
  %7464 = vmatpush1.msra.mxu0 0.0
  %7465 = vmatprep.subr.mxu0 0.0
  %7466 = vmatpush1.msra.mxu0 0.0
  %7467 = vmatprep.subr.mxu0 0.0
  %7468 = vmatpush1.msra.mxu0 0.0
  %7469 = vmatprep.subr.mxu0 0.0
  %7470 = vmatpush1.msra.mxu0 0.0
  %7471 = vmatprep.subr.mxu0 0.0
  %7472 = vmatpush1.msra.mxu0 0.0
  %7473 = vmatprep.subr.mxu0 0.0
  %7474 = vmatpush1.msra.mxu0 0.0
  %7475 = vmatprep.mubr.f32.mxu0 0.0
  %v7476 = vand.u32 %v3771, 4294901760
  %7477 = vmatmul.mubr.f32.gmra.mrb[0].mxu0 %v7476
  %v7478 = vpop.f32.mrb[0].mxu0
  %v7479 = vadd.f32 %v7365, %v7478
  %v7480 = vpop.f32.mrb[0].mxu0
  %v7481 = vadd.f32 %v7367, %v7480
  %7482 = vdwg.mxu0
  %v7483 = vand.u32 %v3614, 4294901760
  %7484 = vmatprep.subr.mxu0 %v7483
  %v7485 = vand.u32 %v3613, 4294901760
  %7486 = vmatpush1.msra.mxu0 %v7485
  %v7487 = vand.u32 %v3637, 4294901760
  %7488 = vmatprep.subr.mxu0 %v7487
  %v7489 = vand.u32 %v3636, 4294901760
  %7490 = vmatpush1.msra.mxu0 %v7489
  %v7491 = vand.u32 %v3660, 4294901760
  %7492 = vmatprep.subr.mxu0 %v7491
  %v7493 = vand.u32 %v3659, 4294901760
  %7494 = vmatpush1.msra.mxu0 %v7493
  %v7495 = vand.u32 %v3683, 4294901760
  %7496 = vmatprep.subr.mxu0 %v7495
  %v7497 = vand.u32 %v3682, 4294901760
  %7498 = vmatpush1.msra.mxu0 %v7497
  %v7499 = vand.u32 %v3706, 4294901760
  %7500 = vmatprep.subr.mxu0 %v7499
  %v7501 = vand.u32 %v3705, 4294901760
  %7502 = vmatpush1.msra.mxu0 %v7501
  %v7503 = vand.u32 %v3729, 4294901760
  %7504 = vmatprep.subr.mxu0 %v7503
  %v7505 = vand.u32 %v3728, 4294901760
  %7506 = vmatpush1.msra.mxu0 %v7505
  %v7507 = vand.u32 %v3808, 4294901760
  %7508 = vmatprep.subr.mxu0 %v7507
  %v7509 = vand.u32 %v3805, 4294901760
  %7510 = vmatpush1.msra.mxu0 %v7509
  %7511 = vmatprep.subr.mxu0 0.0
  %7512 = vmatpush1.msra.mxu0 0.0
  %7513 = vmatprep.subr.mxu0 0.0
  %7514 = vmatpush1.msra.mxu0 0.0
  %7515 = vmatprep.subr.mxu0 0.0
  %7516 = vmatpush1.msra.mxu0 0.0
  %7517 = vmatprep.subr.mxu0 0.0
  %7518 = vmatpush1.msra.mxu0 0.0
  %7519 = vmatprep.subr.mxu0 0.0
  %7520 = vmatpush1.msra.mxu0 0.0
  %7521 = vmatprep.subr.mxu0 0.0
  %7522 = vmatpush1.msra.mxu0 0.0
  %7523 = vmatprep.subr.mxu0 0.0
  %7524 = vmatpush1.msra.mxu0 0.0
  %7525 = vmatprep.subr.mxu0 0.0
  %7526 = vmatpush1.msra.mxu0 0.0
  %7527 = vmatprep.subr.mxu0 0.0
  %7528 = vmatpush1.msra.mxu0 0.0
  %7529 = vmatprep.subr.mxu0 0.0
  %7530 = vmatpush1.msra.mxu0 0.0
  %7531 = vmatprep.subr.mxu0 0.0
  %7532 = vmatpush1.msra.mxu0 0.0
  %7533 = vmatprep.subr.mxu0 0.0
  %7534 = vmatpush1.msra.mxu0 0.0
  %7535 = vmatprep.subr.mxu0 0.0
  %7536 = vmatpush1.msra.mxu0 0.0
  %7537 = vmatprep.subr.mxu0 0.0
  %7538 = vmatpush1.msra.mxu0 0.0
  %7539 = vmatprep.subr.mxu0 0.0
  %7540 = vmatpush1.msra.mxu0 0.0
  %7541 = vmatprep.subr.mxu0 0.0
  %7542 = vmatpush1.msra.mxu0 0.0
  %7543 = vmatprep.subr.mxu0 0.0
  %7544 = vmatpush1.msra.mxu0 0.0
  %7545 = vmatprep.subr.mxu0 0.0
  %7546 = vmatpush1.msra.mxu0 0.0
  %7547 = vmatprep.subr.mxu0 0.0
  %7548 = vmatpush1.msra.mxu0 0.0
  %7549 = vmatprep.subr.mxu0 0.0
  %7550 = vmatpush1.msra.mxu0 0.0
  %7551 = vmatprep.subr.mxu0 0.0
  %7552 = vmatpush1.msra.mxu0 0.0
  %7553 = vmatprep.subr.mxu0 0.0
  %7554 = vmatpush1.msra.mxu0 0.0
  %7555 = vmatprep.subr.mxu0 0.0
  %7556 = vmatpush1.msra.mxu0 0.0
  %7557 = vmatprep.subr.mxu0 0.0
  %7558 = vmatpush1.msra.mxu0 0.0
  %7559 = vmatprep.subr.mxu0 0.0
  %7560 = vmatpush1.msra.mxu0 0.0
  %7561 = vmatprep.mubr.f32.mxu0 0.0
  %v7562 = vand.u32 %v3771, 4294901760
  %7563 = vmatmul.mubr.f32.gmra.mrb[0].mxu0 %v7562
  %v7564 = vpop.f32.mrb[0].mxu0
  %v7565 = vadd.f32 %v7479, %v7564
  %v7566 = vpop.f32.mrb[0].mxu0
  %v7567 = vadd.f32 %v7481, %v7566
  %7568 = vdwg.mxu0
  %v7569 = vand.u32 %v3616, 4294901760
  %7570 = vmatprep.subr.mxu0 %v7569
  %v7571 = vand.u32 %v3615, 4294901760
  %7572 = vmatpush1.msra.mxu0 %v7571
  %v7573 = vand.u32 %v3639, 4294901760
  %7574 = vmatprep.subr.mxu0 %v7573
  %v7575 = vand.u32 %v3638, 4294901760
  %7576 = vmatpush1.msra.mxu0 %v7575
  %v7577 = vand.u32 %v3662, 4294901760
  %7578 = vmatprep.subr.mxu0 %v7577
  %v7579 = vand.u32 %v3661, 4294901760
  %7580 = vmatpush1.msra.mxu0 %v7579
  %v7581 = vand.u32 %v3685, 4294901760
  %7582 = vmatprep.subr.mxu0 %v7581
  %v7583 = vand.u32 %v3684, 4294901760
  %7584 = vmatpush1.msra.mxu0 %v7583
  %v7585 = vand.u32 %v3708, 4294901760
  %7586 = vmatprep.subr.mxu0 %v7585
  %v7587 = vand.u32 %v3707, 4294901760
  %7588 = vmatpush1.msra.mxu0 %v7587
  %v7589 = vand.u32 %v3731, 4294901760
  %7590 = vmatprep.subr.mxu0 %v7589
  %v7591 = vand.u32 %v3730, 4294901760
  %7592 = vmatpush1.msra.mxu0 %v7591
  %v7593 = vand.u32 %v3814, 4294901760
  %7594 = vmatprep.subr.mxu0 %v7593
  %v7595 = vand.u32 %v3811, 4294901760
  %7596 = vmatpush1.msra.mxu0 %v7595
  %7597 = vmatprep.subr.mxu0 0.0
  %7598 = vmatpush1.msra.mxu0 0.0
  %7599 = vmatprep.subr.mxu0 0.0
  %7600 = vmatpush1.msra.mxu0 0.0
  %7601 = vmatprep.subr.mxu0 0.0
  %7602 = vmatpush1.msra.mxu0 0.0
  %7603 = vmatprep.subr.mxu0 0.0
  %7604 = vmatpush1.msra.mxu0 0.0
  %7605 = vmatprep.subr.mxu0 0.0
  %7606 = vmatpush1.msra.mxu0 0.0
  %7607 = vmatprep.subr.mxu0 0.0
  %7608 = vmatpush1.msra.mxu0 0.0
  %7609 = vmatprep.subr.mxu0 0.0
  %7610 = vmatpush1.msra.mxu0 0.0
  %7611 = vmatprep.subr.mxu0 0.0
  %7612 = vmatpush1.msra.mxu0 0.0
  %7613 = vmatprep.subr.mxu0 0.0
  %7614 = vmatpush1.msra.mxu0 0.0
  %7615 = vmatprep.subr.mxu0 0.0
  %7616 = vmatpush1.msra.mxu0 0.0
  %7617 = vmatprep.subr.mxu0 0.0
  %7618 = vmatpush1.msra.mxu0 0.0
  %7619 = vmatprep.subr.mxu0 0.0
  %7620 = vmatpush1.msra.mxu0 0.0
  %7621 = vmatprep.subr.mxu0 0.0
  %7622 = vmatpush1.msra.mxu0 0.0
  %7623 = vmatprep.subr.mxu0 0.0
  %7624 = vmatpush1.msra.mxu0 0.0
  %7625 = vmatprep.subr.mxu0 0.0
  %7626 = vmatpush1.msra.mxu0 0.0
  %7627 = vmatprep.subr.mxu0 0.0
  %7628 = vmatpush1.msra.mxu0 0.0
  %7629 = vmatprep.subr.mxu0 0.0
  %7630 = vmatpush1.msra.mxu0 0.0
  %7631 = vmatprep.subr.mxu0 0.0
  %7632 = vmatpush1.msra.mxu0 0.0
  %7633 = vmatprep.subr.mxu0 0.0
  %7634 = vmatpush1.msra.mxu0 0.0
  %7635 = vmatprep.subr.mxu0 0.0
  %7636 = vmatpush1.msra.mxu0 0.0
  %7637 = vmatprep.subr.mxu0 0.0
  %7638 = vmatpush1.msra.mxu0 0.0
  %7639 = vmatprep.subr.mxu0 0.0
  %7640 = vmatpush1.msra.mxu0 0.0
  %7641 = vmatprep.subr.mxu0 0.0
  %7642 = vmatpush1.msra.mxu0 0.0
  %7643 = vmatprep.subr.mxu0 0.0
  %7644 = vmatpush1.msra.mxu0 0.0
  %7645 = vmatprep.subr.mxu0 0.0
  %7646 = vmatpush1.msra.mxu0 0.0
  %7647 = vmatprep.mubr.f32.mxu0 0.0
  %v7648 = vand.u32 %v3771, 4294901760
  %v7649 = vsub.f32 %v3771, %v7648
  %v7650 = vand.u32 %v7649, 4294901760
  %v7651 = vsub.f32 %v7649, %v7650
  %v7652 = vand.u32 %v7651, 4294901760
  %7653 = vmatmul.mubr.f32.gmra.mrb[0].mxu0 %v7652
  %v7654 = vpop.f32.mrb[0].mxu0
  %v7655 = vadd.f32 %v3768, %v7654
  %v7656 = vpop.f32.mrb[0].mxu0
  %v7657 = vadd.f32 %v3768, %v7656
  %7658 = vdwg.mxu0
  %v7659 = vand.u32 %v3616, 4294901760
  %v7660 = vsub.f32 %v3616, %v7659
  %v7661 = vand.u32 %v7660, 4294901760
  %v7662 = vsub.f32 %v7660, %v7661
  %v7663 = vand.u32 %v7662, 4294901760
  %7664 = vmatprep.subr.mxu0 %v7663
  %v7665 = vand.u32 %v3615, 4294901760
  %v7666 = vsub.f32 %v3615, %v7665
  %v7667 = vand.u32 %v7666, 4294901760
  %v7668 = vsub.f32 %v7666, %v7667
  %v7669 = vand.u32 %v7668, 4294901760
  %7670 = vmatpush1.msra.mxu0 %v7669
  %v7671 = vand.u32 %v3639, 4294901760
  %v7672 = vsub.f32 %v3639, %v7671
  %v7673 = vand.u32 %v7672, 4294901760
  %v7674 = vsub.f32 %v7672, %v7673
  %v7675 = vand.u32 %v7674, 4294901760
  %7676 = vmatprep.subr.mxu0 %v7675
  %v7677 = vand.u32 %v3638, 4294901760
  %v7678 = vsub.f32 %v3638, %v7677
  %v7679 = vand.u32 %v7678, 4294901760
  %v7680 = vsub.f32 %v7678, %v7679
  %v7681 = vand.u32 %v7680, 4294901760
  %7682 = vmatpush1.msra.mxu0 %v7681
  %v7683 = vand.u32 %v3662, 4294901760
  %v7684 = vsub.f32 %v3662, %v7683
  %v7685 = vand.u32 %v7684, 4294901760
  %v7686 = vsub.f32 %v7684, %v7685
  %v7687 = vand.u32 %v7686, 4294901760
  %7688 = vmatprep.subr.mxu0 %v7687
  %v7689 = vand.u32 %v3661, 4294901760
  %v7690 = vsub.f32 %v3661, %v7689
  %v7691 = vand.u32 %v7690, 4294901760
  %v7692 = vsub.f32 %v7690, %v7691
  %v7693 = vand.u32 %v7692, 4294901760
  %7694 = vmatpush1.msra.mxu0 %v7693
  %v7695 = vand.u32 %v3685, 4294901760
  %v7696 = vsub.f32 %v3685, %v7695
  %v7697 = vand.u32 %v7696, 4294901760
  %v7698 = vsub.f32 %v7696, %v7697
  %v7699 = vand.u32 %v7698, 4294901760
  %7700 = vmatprep.subr.mxu0 %v7699
  %v7701 = vand.u32 %v3684, 4294901760
  %v7702 = vsub.f32 %v3684, %v7701
  %v7703 = vand.u32 %v7702, 4294901760
  %v7704 = vsub.f32 %v7702, %v7703
  %v7705 = vand.u32 %v7704, 4294901760
  %7706 = vmatpush1.msra.mxu0 %v7705
  %v7707 = vand.u32 %v3708, 4294901760
  %v7708 = vsub.f32 %v3708, %v7707
  %v7709 = vand.u32 %v7708, 4294901760
  %v7710 = vsub.f32 %v7708, %v7709
  %v7711 = vand.u32 %v7710, 4294901760
  %7712 = vmatprep.subr.mxu0 %v7711
  %v7713 = vand.u32 %v3707, 4294901760
  %v7714 = vsub.f32 %v3707, %v7713
  %v7715 = vand.u32 %v7714, 4294901760
  %v7716 = vsub.f32 %v7714, %v7715
  %v7717 = vand.u32 %v7716, 4294901760
  %7718 = vmatpush1.msra.mxu0 %v7717
  %v7719 = vand.u32 %v3731, 4294901760
  %v7720 = vsub.f32 %v3731, %v7719
  %v7721 = vand.u32 %v7720, 4294901760
  %v7722 = vsub.f32 %v7720, %v7721
  %v7723 = vand.u32 %v7722, 4294901760
  %7724 = vmatprep.subr.mxu0 %v7723
  %v7725 = vand.u32 %v3730, 4294901760
  %v7726 = vsub.f32 %v3730, %v7725
  %v7727 = vand.u32 %v7726, 4294901760
  %v7728 = vsub.f32 %v7726, %v7727
  %v7729 = vand.u32 %v7728, 4294901760
  %7730 = vmatpush1.msra.mxu0 %v7729
  %v7731 = vand.u32 %v3814, 4294901760
  %v7732 = vsub.f32 %v3814, %v7731
  %v7733 = vand.u32 %v7732, 4294901760
  %v7734 = vsub.f32 %v7732, %v7733
  %v7735 = vand.u32 %v7734, 4294901760
  %7736 = vmatprep.subr.mxu0 %v7735
  %v7737 = vand.u32 %v3811, 4294901760
  %v7738 = vsub.f32 %v3811, %v7737
  %v7739 = vand.u32 %v7738, 4294901760
  %v7740 = vsub.f32 %v7738, %v7739
  %v7741 = vand.u32 %v7740, 4294901760
  %7742 = vmatpush1.msra.mxu0 %v7741
  %7743 = vmatprep.subr.mxu0 0.0
  %7744 = vmatpush1.msra.mxu0 0.0
  %7745 = vmatprep.subr.mxu0 0.0
  %7746 = vmatpush1.msra.mxu0 0.0
  %7747 = vmatprep.subr.mxu0 0.0
  %7748 = vmatpush1.msra.mxu0 0.0
  %7749 = vmatprep.subr.mxu0 0.0
  %7750 = vmatpush1.msra.mxu0 0.0
  %7751 = vmatprep.subr.mxu0 0.0
  %7752 = vmatpush1.msra.mxu0 0.0
  %7753 = vmatprep.subr.mxu0 0.0
  %7754 = vmatpush1.msra.mxu0 0.0
  %7755 = vmatprep.subr.mxu0 0.0
  %7756 = vmatpush1.msra.mxu0 0.0
  %7757 = vmatprep.subr.mxu0 0.0
  %7758 = vmatpush1.msra.mxu0 0.0
  %7759 = vmatprep.subr.mxu0 0.0
  %7760 = vmatpush1.msra.mxu0 0.0
  %7761 = vmatprep.subr.mxu0 0.0
  %7762 = vmatpush1.msra.mxu0 0.0
  %7763 = vmatprep.subr.mxu0 0.0
  %7764 = vmatpush1.msra.mxu0 0.0
  %7765 = vmatprep.subr.mxu0 0.0
  %7766 = vmatpush1.msra.mxu0 0.0
  %7767 = vmatprep.subr.mxu0 0.0
  %7768 = vmatpush1.msra.mxu0 0.0
  %7769 = vmatprep.subr.mxu0 0.0
  %7770 = vmatpush1.msra.mxu0 0.0
  %7771 = vmatprep.subr.mxu0 0.0
  %7772 = vmatpush1.msra.mxu0 0.0
  %7773 = vmatprep.subr.mxu0 0.0
  %7774 = vmatpush1.msra.mxu0 0.0
  %7775 = vmatprep.subr.mxu0 0.0
  %7776 = vmatpush1.msra.mxu0 0.0
  %7777 = vmatprep.subr.mxu0 0.0
  %7778 = vmatpush1.msra.mxu0 0.0
  %7779 = vmatprep.subr.mxu0 0.0
  %7780 = vmatpush1.msra.mxu0 0.0
  %7781 = vmatprep.subr.mxu0 0.0
  %7782 = vmatpush1.msra.mxu0 0.0
  %7783 = vmatprep.subr.mxu0 0.0
  %7784 = vmatpush1.msra.mxu0 0.0
  %7785 = vmatprep.subr.mxu0 0.0
  %7786 = vmatpush1.msra.mxu0 0.0
  %7787 = vmatprep.subr.mxu0 0.0
  %7788 = vmatpush1.msra.mxu0 0.0
  %7789 = vmatprep.subr.mxu0 0.0
  %7790 = vmatpush1.msra.mxu0 0.0
  %7791 = vmatprep.subr.mxu0 0.0
  %7792 = vmatpush1.msra.mxu0 0.0
  %7793 = vmatprep.mubr.f32.mxu0 0.0
  %v7794 = vand.u32 %v3771, 4294901760
  %7795 = vmatmul.mubr.f32.gmra.mrb[0].mxu0 %v7794
  %v7796 = vpop.f32.mrb[0].mxu0
  %v7797 = vadd.f32 %v7655, %v7796
  %v7798 = vpop.f32.mrb[0].mxu0
  %v7799 = vadd.f32 %v7657, %v7798
  %7800 = vdwg.mxu0
  %v7801 = vand.u32 %v3616, 4294901760
  %v7802 = vsub.f32 %v3616, %v7801
  %7803 = vmatprep.subr.mxu0 %v7802
  %v7804 = vand.u32 %v3615, 4294901760
  %v7805 = vsub.f32 %v3615, %v7804
  %7806 = vmatpush1.msra.mxu0 %v7805
  %v7807 = vand.u32 %v3639, 4294901760
  %v7808 = vsub.f32 %v3639, %v7807
  %7809 = vmatprep.subr.mxu0 %v7808
  %v7810 = vand.u32 %v3638, 4294901760
  %v7811 = vsub.f32 %v3638, %v7810
  %7812 = vmatpush1.msra.mxu0 %v7811
  %v7813 = vand.u32 %v3662, 4294901760
  %v7814 = vsub.f32 %v3662, %v7813
  %7815 = vmatprep.subr.mxu0 %v7814
  %v7816 = vand.u32 %v3661, 4294901760
  %v7817 = vsub.f32 %v3661, %v7816
  %7818 = vmatpush1.msra.mxu0 %v7817
  %v7819 = vand.u32 %v3685, 4294901760
  %v7820 = vsub.f32 %v3685, %v7819
  %7821 = vmatprep.subr.mxu0 %v7820
  %v7822 = vand.u32 %v3684, 4294901760
  %v7823 = vsub.f32 %v3684, %v7822
  %7824 = vmatpush1.msra.mxu0 %v7823
  %v7825 = vand.u32 %v3708, 4294901760
  %v7826 = vsub.f32 %v3708, %v7825
  %7827 = vmatprep.subr.mxu0 %v7826
  %v7828 = vand.u32 %v3707, 4294901760
  %v7829 = vsub.f32 %v3707, %v7828
  %7830 = vmatpush1.msra.mxu0 %v7829
  %v7831 = vand.u32 %v3731, 4294901760
  %v7832 = vsub.f32 %v3731, %v7831
  %7833 = vmatprep.subr.mxu0 %v7832
  %v7834 = vand.u32 %v3730, 4294901760
  %v7835 = vsub.f32 %v3730, %v7834
  %7836 = vmatpush1.msra.mxu0 %v7835
  %v7837 = vand.u32 %v3814, 4294901760
  %v7838 = vsub.f32 %v3814, %v7837
  %7839 = vmatprep.subr.mxu0 %v7838
  %v7840 = vand.u32 %v3811, 4294901760
  %v7841 = vsub.f32 %v3811, %v7840
  %7842 = vmatpush1.msra.mxu0 %v7841
  %7843 = vmatprep.subr.mxu0 0.0
  %7844 = vmatpush1.msra.mxu0 0.0
  %7845 = vmatprep.subr.mxu0 0.0
  %7846 = vmatpush1.msra.mxu0 0.0
  %7847 = vmatprep.subr.mxu0 0.0
  %7848 = vmatpush1.msra.mxu0 0.0
  %7849 = vmatprep.subr.mxu0 0.0
  %7850 = vmatpush1.msra.mxu0 0.0
  %7851 = vmatprep.subr.mxu0 0.0
  %7852 = vmatpush1.msra.mxu0 0.0
  %7853 = vmatprep.subr.mxu0 0.0
  %7854 = vmatpush1.msra.mxu0 0.0
  %7855 = vmatprep.subr.mxu0 0.0
  %7856 = vmatpush1.msra.mxu0 0.0
  %7857 = vmatprep.subr.mxu0 0.0
  %7858 = vmatpush1.msra.mxu0 0.0
  %7859 = vmatprep.subr.mxu0 0.0
  %7860 = vmatpush1.msra.mxu0 0.0
  %7861 = vmatprep.subr.mxu0 0.0
  %7862 = vmatpush1.msra.mxu0 0.0
  %7863 = vmatprep.subr.mxu0 0.0
  %7864 = vmatpush1.msra.mxu0 0.0
  %7865 = vmatprep.subr.mxu0 0.0
  %7866 = vmatpush1.msra.mxu0 0.0
  %7867 = vmatprep.subr.mxu0 0.0
  %7868 = vmatpush1.msra.mxu0 0.0
  %7869 = vmatprep.subr.mxu0 0.0
  %7870 = vmatpush1.msra.mxu0 0.0
  %7871 = vmatprep.subr.mxu0 0.0
  %7872 = vmatpush1.msra.mxu0 0.0
  %7873 = vmatprep.subr.mxu0 0.0
  %7874 = vmatpush1.msra.mxu0 0.0
  %7875 = vmatprep.subr.mxu0 0.0
  %7876 = vmatpush1.msra.mxu0 0.0
  %7877 = vmatprep.subr.mxu0 0.0
  %7878 = vmatpush1.msra.mxu0 0.0
  %7879 = vmatprep.subr.mxu0 0.0
  %7880 = vmatpush1.msra.mxu0 0.0
  %7881 = vmatprep.subr.mxu0 0.0
  %7882 = vmatpush1.msra.mxu0 0.0
  %7883 = vmatprep.subr.mxu0 0.0
  %7884 = vmatpush1.msra.mxu0 0.0
  %7885 = vmatprep.subr.mxu0 0.0
  %7886 = vmatpush1.msra.mxu0 0.0
  %7887 = vmatprep.subr.mxu0 0.0
  %7888 = vmatpush1.msra.mxu0 0.0
  %7889 = vmatprep.subr.mxu0 0.0
  %7890 = vmatpush1.msra.mxu0 0.0
  %7891 = vmatprep.subr.mxu0 0.0
  %7892 = vmatpush1.msra.mxu0 0.0
  %7893 = vmatprep.mubr.f32.mxu0 0.0
  %v7894 = vand.u32 %v3771, 4294901760
  %v7895 = vsub.f32 %v3771, %v7894
  %7896 = vmatmul.mubr.f32.gmra.mrb[0].mxu0 %v7895
  %v7897 = vpop.f32.mrb[0].mxu0
  %v7898 = vadd.f32 %v7797, %v7897
  %v7899 = vpop.f32.mrb[0].mxu0
  %v7900 = vadd.f32 %v7799, %v7899
  %7901 = vdwg.mxu0
  %v7902 = vand.u32 %v3616, 4294901760
  %7903 = vmatprep.subr.mxu0 %v7902
  %v7904 = vand.u32 %v3615, 4294901760
  %7905 = vmatpush1.msra.mxu0 %v7904
  %v7906 = vand.u32 %v3639, 4294901760
  %7907 = vmatprep.subr.mxu0 %v7906
  %v7908 = vand.u32 %v3638, 4294901760
  %7909 = vmatpush1.msra.mxu0 %v7908
  %v7910 = vand.u32 %v3662, 4294901760
  %7911 = vmatprep.subr.mxu0 %v7910
  %v7912 = vand.u32 %v3661, 4294901760
  %7913 = vmatpush1.msra.mxu0 %v7912
  %v7914 = vand.u32 %v3685, 4294901760
  %7915 = vmatprep.subr.mxu0 %v7914
  %v7916 = vand.u32 %v3684, 4294901760
  %7917 = vmatpush1.msra.mxu0 %v7916
  %v7918 = vand.u32 %v3708, 4294901760
  %7919 = vmatprep.subr.mxu0 %v7918
  %v7920 = vand.u32 %v3707, 4294901760
  %7921 = vmatpush1.msra.mxu0 %v7920
  %v7922 = vand.u32 %v3731, 4294901760
  %7923 = vmatprep.subr.mxu0 %v7922
  %v7924 = vand.u32 %v3730, 4294901760
  %7925 = vmatpush1.msra.mxu0 %v7924
  %v7926 = vand.u32 %v3814, 4294901760
  %7927 = vmatprep.subr.mxu0 %v7926
  %v7928 = vand.u32 %v3811, 4294901760
  %7929 = vmatpush1.msra.mxu0 %v7928
  %7930 = vmatprep.subr.mxu0 0.0
  %7931 = vmatpush1.msra.mxu0 0.0
  %7932 = vmatprep.subr.mxu0 0.0
  %7933 = vmatpush1.msra.mxu0 0.0
  %7934 = vmatprep.subr.mxu0 0.0
  %7935 = vmatpush1.msra.mxu0 0.0
  %7936 = vmatprep.subr.mxu0 0.0
  %7937 = vmatpush1.msra.mxu0 0.0
  %7938 = vmatprep.subr.mxu0 0.0
  %7939 = vmatpush1.msra.mxu0 0.0
  %7940 = vmatprep.subr.mxu0 0.0
  %7941 = vmatpush1.msra.mxu0 0.0
  %7942 = vmatprep.subr.mxu0 0.0
  %7943 = vmatpush1.msra.mxu0 0.0
  %7944 = vmatprep.subr.mxu0 0.0
  %7945 = vmatpush1.msra.mxu0 0.0
  %7946 = vmatprep.subr.mxu0 0.0
  %7947 = vmatpush1.msra.mxu0 0.0
  %7948 = vmatprep.subr.mxu0 0.0
  %7949 = vmatpush1.msra.mxu0 0.0
  %7950 = vmatprep.subr.mxu0 0.0
  %7951 = vmatpush1.msra.mxu0 0.0
  %7952 = vmatprep.subr.mxu0 0.0
  %7953 = vmatpush1.msra.mxu0 0.0
  %7954 = vmatprep.subr.mxu0 0.0
  %7955 = vmatpush1.msra.mxu0 0.0
  %7956 = vmatprep.subr.mxu0 0.0
  %7957 = vmatpush1.msra.mxu0 0.0
  %7958 = vmatprep.subr.mxu0 0.0
  %7959 = vmatpush1.msra.mxu0 0.0
  %7960 = vmatprep.subr.mxu0 0.0
  %7961 = vmatpush1.msra.mxu0 0.0
  %7962 = vmatprep.subr.mxu0 0.0
  %7963 = vmatpush1.msra.mxu0 0.0
  %7964 = vmatprep.subr.mxu0 0.0
  %7965 = vmatpush1.msra.mxu0 0.0
  %7966 = vmatprep.subr.mxu0 0.0
  %7967 = vmatpush1.msra.mxu0 0.0
  %7968 = vmatprep.subr.mxu0 0.0
  %7969 = vmatpush1.msra.mxu0 0.0
  %7970 = vmatprep.subr.mxu0 0.0
  %7971 = vmatpush1.msra.mxu0 0.0
  %7972 = vmatprep.subr.mxu0 0.0
  %7973 = vmatpush1.msra.mxu0 0.0
  %7974 = vmatprep.subr.mxu0 0.0
  %7975 = vmatpush1.msra.mxu0 0.0
  %7976 = vmatprep.subr.mxu0 0.0
  %7977 = vmatpush1.msra.mxu0 0.0
  %7978 = vmatprep.subr.mxu0 0.0
  %7979 = vmatpush1.msra.mxu0 0.0
  %7980 = vmatprep.mubr.f32.mxu0 0.0
  %v7981 = vand.u32 %v3771, 4294901760
  %v7982 = vsub.f32 %v3771, %v7981
  %v7983 = vand.u32 %v7982, 4294901760
  %7984 = vmatmul.mubr.f32.gmra.mrb[0].mxu0 %v7983
  %v7985 = vpop.f32.mrb[0].mxu0
  %v7986 = vadd.f32 %v7898, %v7985
  %v7987 = vpop.f32.mrb[0].mxu0
  %v7988 = vadd.f32 %v7900, %v7987
  %7989 = vdwg.mxu0
  %v7990 = vand.u32 %v3616, 4294901760
  %v7991 = vsub.f32 %v3616, %v7990
  %v7992 = vand.u32 %v7991, 4294901760
  %7993 = vmatprep.subr.mxu0 %v7992
  %v7994 = vand.u32 %v3615, 4294901760
  %v7995 = vsub.f32 %v3615, %v7994
  %v7996 = vand.u32 %v7995, 4294901760
  %7997 = vmatpush1.msra.mxu0 %v7996
  %v7998 = vand.u32 %v3639, 4294901760
  %v7999 = vsub.f32 %v3639, %v7998
  %v8000 = vand.u32 %v7999, 4294901760
  %8001 = vmatprep.subr.mxu0 %v8000
  %v8002 = vand.u32 %v3638, 4294901760
  %v8003 = vsub.f32 %v3638, %v8002
  %v8004 = vand.u32 %v8003, 4294901760
  %8005 = vmatpush1.msra.mxu0 %v8004
  %v8006 = vand.u32 %v3662, 4294901760
  %v8007 = vsub.f32 %v3662, %v8006
  %v8008 = vand.u32 %v8007, 4294901760
  %8009 = vmatprep.subr.mxu0 %v8008
  %v8010 = vand.u32 %v3661, 4294901760
  %v8011 = vsub.f32 %v3661, %v8010
  %v8012 = vand.u32 %v8011, 4294901760
  %8013 = vmatpush1.msra.mxu0 %v8012
  %v8014 = vand.u32 %v3685, 4294901760
  %v8015 = vsub.f32 %v3685, %v8014
  %v8016 = vand.u32 %v8015, 4294901760
  %8017 = vmatprep.subr.mxu0 %v8016
  %v8018 = vand.u32 %v3684, 4294901760
  %v8019 = vsub.f32 %v3684, %v8018
  %v8020 = vand.u32 %v8019, 4294901760
  %8021 = vmatpush1.msra.mxu0 %v8020
  %v8022 = vand.u32 %v3708, 4294901760
  %v8023 = vsub.f32 %v3708, %v8022
  %v8024 = vand.u32 %v8023, 4294901760
  %8025 = vmatprep.subr.mxu0 %v8024
  %v8026 = vand.u32 %v3707, 4294901760
  %v8027 = vsub.f32 %v3707, %v8026
  %v8028 = vand.u32 %v8027, 4294901760
  %8029 = vmatpush1.msra.mxu0 %v8028
  %v8030 = vand.u32 %v3731, 4294901760
  %v8031 = vsub.f32 %v3731, %v8030
  %v8032 = vand.u32 %v8031, 4294901760
  %8033 = vmatprep.subr.mxu0 %v8032
  %v8034 = vand.u32 %v3730, 4294901760
  %v8035 = vsub.f32 %v3730, %v8034
  %v8036 = vand.u32 %v8035, 4294901760
  %8037 = vmatpush1.msra.mxu0 %v8036
  %v8038 = vand.u32 %v3814, 4294901760
  %v8039 = vsub.f32 %v3814, %v8038
  %v8040 = vand.u32 %v8039, 4294901760
  %8041 = vmatprep.subr.mxu0 %v8040
  %v8042 = vand.u32 %v3811, 4294901760
  %v8043 = vsub.f32 %v3811, %v8042
  %v8044 = vand.u32 %v8043, 4294901760
  %8045 = vmatpush1.msra.mxu0 %v8044
  %8046 = vmatprep.subr.mxu0 0.0
  %8047 = vmatpush1.msra.mxu0 0.0
  %8048 = vmatprep.subr.mxu0 0.0
  %8049 = vmatpush1.msra.mxu0 0.0
  %8050 = vmatprep.subr.mxu0 0.0
  %8051 = vmatpush1.msra.mxu0 0.0
  %8052 = vmatprep.subr.mxu0 0.0
  %8053 = vmatpush1.msra.mxu0 0.0
  %8054 = vmatprep.subr.mxu0 0.0
  %8055 = vmatpush1.msra.mxu0 0.0
  %8056 = vmatprep.subr.mxu0 0.0
  %8057 = vmatpush1.msra.mxu0 0.0
  %8058 = vmatprep.subr.mxu0 0.0
  %8059 = vmatpush1.msra.mxu0 0.0
  %8060 = vmatprep.subr.mxu0 0.0
  %8061 = vmatpush1.msra.mxu0 0.0
  %8062 = vmatprep.subr.mxu0 0.0
  %8063 = vmatpush1.msra.mxu0 0.0
  %8064 = vmatprep.subr.mxu0 0.0
  %8065 = vmatpush1.msra.mxu0 0.0
  %8066 = vmatprep.subr.mxu0 0.0
  %8067 = vmatpush1.msra.mxu0 0.0
  %8068 = vmatprep.subr.mxu0 0.0
  %8069 = vmatpush1.msra.mxu0 0.0
  %8070 = vmatprep.subr.mxu0 0.0
  %8071 = vmatpush1.msra.mxu0 0.0
  %8072 = vmatprep.subr.mxu0 0.0
  %8073 = vmatpush1.msra.mxu0 0.0
  %8074 = vmatprep.subr.mxu0 0.0
  %8075 = vmatpush1.msra.mxu0 0.0
  %8076 = vmatprep.subr.mxu0 0.0
  %8077 = vmatpush1.msra.mxu0 0.0
  %8078 = vmatprep.subr.mxu0 0.0
  %8079 = vmatpush1.msra.mxu0 0.0
  %8080 = vmatprep.subr.mxu0 0.0
  %8081 = vmatpush1.msra.mxu0 0.0
  %8082 = vmatprep.subr.mxu0 0.0
  %8083 = vmatpush1.msra.mxu0 0.0
  %8084 = vmatprep.subr.mxu0 0.0
  %8085 = vmatpush1.msra.mxu0 0.0
  %8086 = vmatprep.subr.mxu0 0.0
  %8087 = vmatpush1.msra.mxu0 0.0
  %8088 = vmatprep.subr.mxu0 0.0
  %8089 = vmatpush1.msra.mxu0 0.0
  %8090 = vmatprep.subr.mxu0 0.0
  %8091 = vmatpush1.msra.mxu0 0.0
  %8092 = vmatprep.subr.mxu0 0.0
  %8093 = vmatpush1.msra.mxu0 0.0
  %8094 = vmatprep.subr.mxu0 0.0
  %8095 = vmatpush1.msra.mxu0 0.0
  %8096 = vmatprep.mubr.f32.mxu0 0.0
  %v8097 = vand.u32 %v3771, 4294901760
  %8098 = vmatmul.mubr.f32.gmra.mrb[0].mxu0 %v8097
  %v8099 = vpop.f32.mrb[0].mxu0
  %v8100 = vadd.f32 %v7986, %v8099
  %v8101 = vpop.f32.mrb[0].mxu0
  %v8102 = vadd.f32 %v7988, %v8101
  %8103 = vdwg.mxu0
  %v8104 = vand.u32 %v3616, 4294901760
  %8105 = vmatprep.subr.mxu0 %v8104
  %v8106 = vand.u32 %v3615, 4294901760
  %8107 = vmatpush1.msra.mxu0 %v8106
  %v8108 = vand.u32 %v3639, 4294901760
  %8109 = vmatprep.subr.mxu0 %v8108
  %v8110 = vand.u32 %v3638, 4294901760
  %8111 = vmatpush1.msra.mxu0 %v8110
  %v8112 = vand.u32 %v3662, 4294901760
  %8113 = vmatprep.subr.mxu0 %v8112
  %v8114 = vand.u32 %v3661, 4294901760
  %8115 = vmatpush1.msra.mxu0 %v8114
  %v8116 = vand.u32 %v3685, 4294901760
  %8117 = vmatprep.subr.mxu0 %v8116
  %v8118 = vand.u32 %v3684, 4294901760
  %8119 = vmatpush1.msra.mxu0 %v8118
  %v8120 = vand.u32 %v3708, 4294901760
  %8121 = vmatprep.subr.mxu0 %v8120
  %v8122 = vand.u32 %v3707, 4294901760
  %8123 = vmatpush1.msra.mxu0 %v8122
  %v8124 = vand.u32 %v3731, 4294901760
  %8125 = vmatprep.subr.mxu0 %v8124
  %v8126 = vand.u32 %v3730, 4294901760
  %8127 = vmatpush1.msra.mxu0 %v8126
  %v8128 = vand.u32 %v3814, 4294901760
  %8129 = vmatprep.subr.mxu0 %v8128
  %v8130 = vand.u32 %v3811, 4294901760
  %8131 = vmatpush1.msra.mxu0 %v8130
  %8132 = vmatprep.subr.mxu0 0.0
  %8133 = vmatpush1.msra.mxu0 0.0
  %8134 = vmatprep.subr.mxu0 0.0
  %8135 = vmatpush1.msra.mxu0 0.0
  %8136 = vmatprep.subr.mxu0 0.0
  %8137 = vmatpush1.msra.mxu0 0.0
  %8138 = vmatprep.subr.mxu0 0.0
  %8139 = vmatpush1.msra.mxu0 0.0
  %8140 = vmatprep.subr.mxu0 0.0
  %8141 = vmatpush1.msra.mxu0 0.0
  %8142 = vmatprep.subr.mxu0 0.0
  %8143 = vmatpush1.msra.mxu0 0.0
  %8144 = vmatprep.subr.mxu0 0.0
  %8145 = vmatpush1.msra.mxu0 0.0
  %8146 = vmatprep.subr.mxu0 0.0
  %8147 = vmatpush1.msra.mxu0 0.0
  %8148 = vmatprep.subr.mxu0 0.0
  %8149 = vmatpush1.msra.mxu0 0.0
  %8150 = vmatprep.subr.mxu0 0.0
  %8151 = vmatpush1.msra.mxu0 0.0
  %8152 = vmatprep.subr.mxu0 0.0
  %8153 = vmatpush1.msra.mxu0 0.0
  %8154 = vmatprep.subr.mxu0 0.0
  %8155 = vmatpush1.msra.mxu0 0.0
  %8156 = vmatprep.subr.mxu0 0.0
  %8157 = vmatpush1.msra.mxu0 0.0
  %8158 = vmatprep.subr.mxu0 0.0
  %8159 = vmatpush1.msra.mxu0 0.0
  %8160 = vmatprep.subr.mxu0 0.0
  %8161 = vmatpush1.msra.mxu0 0.0
  %8162 = vmatprep.subr.mxu0 0.0
  %8163 = vmatpush1.msra.mxu0 0.0
  %8164 = vmatprep.subr.mxu0 0.0
  %8165 = vmatpush1.msra.mxu0 0.0
  %8166 = vmatprep.subr.mxu0 0.0
  %8167 = vmatpush1.msra.mxu0 0.0
  %8168 = vmatprep.subr.mxu0 0.0
  %8169 = vmatpush1.msra.mxu0 0.0
  %8170 = vmatprep.subr.mxu0 0.0
  %8171 = vmatpush1.msra.mxu0 0.0
  %8172 = vmatprep.subr.mxu0 0.0
  %8173 = vmatpush1.msra.mxu0 0.0
  %8174 = vmatprep.subr.mxu0 0.0
  %8175 = vmatpush1.msra.mxu0 0.0
  %8176 = vmatprep.subr.mxu0 0.0
  %8177 = vmatpush1.msra.mxu0 0.0
  %8178 = vmatprep.subr.mxu0 0.0
  %8179 = vmatpush1.msra.mxu0 0.0
  %8180 = vmatprep.subr.mxu0 0.0
  %8181 = vmatpush1.msra.mxu0 0.0
  %8182 = vmatprep.mubr.f32.mxu0 0.0
  %v8183 = vand.u32 %v3771, 4294901760
  %8184 = vmatmul.mubr.f32.gmra.mrb[0].mxu0 %v8183
  %v8185 = vpop.f32.mrb[0].mxu0
  %v8186 = vadd.f32 %v8100, %v8185
  %v8187 = vpop.f32.mrb[0].mxu0
  %v8188 = vadd.f32 %v8102, %v8187
  %8189 = vdwg.mxu0
  %v8190 = vand.u32 %v3618, 4294901760
  %8191 = vmatprep.subr.mxu0 %v8190
  %v8192 = vand.u32 %v3617, 4294901760
  %8193 = vmatpush1.msra.mxu0 %v8192
  %v8194 = vand.u32 %v3641, 4294901760
  %8195 = vmatprep.subr.mxu0 %v8194
  %v8196 = vand.u32 %v3640, 4294901760
  %8197 = vmatpush1.msra.mxu0 %v8196
  %v8198 = vand.u32 %v3664, 4294901760
  %8199 = vmatprep.subr.mxu0 %v8198
  %v8200 = vand.u32 %v3663, 4294901760
  %8201 = vmatpush1.msra.mxu0 %v8200
  %v8202 = vand.u32 %v3687, 4294901760
  %8203 = vmatprep.subr.mxu0 %v8202
  %v8204 = vand.u32 %v3686, 4294901760
  %8205 = vmatpush1.msra.mxu0 %v8204
  %v8206 = vand.u32 %v3710, 4294901760
  %8207 = vmatprep.subr.mxu0 %v8206
  %v8208 = vand.u32 %v3709, 4294901760
  %8209 = vmatpush1.msra.mxu0 %v8208
  %v8210 = vand.u32 %v3733, 4294901760
  %8211 = vmatprep.subr.mxu0 %v8210
  %v8212 = vand.u32 %v3732, 4294901760
  %8213 = vmatpush1.msra.mxu0 %v8212
  %v8214 = vand.u32 %v3820, 4294901760
  %8215 = vmatprep.subr.mxu0 %v8214
  %v8216 = vand.u32 %v3817, 4294901760
  %8217 = vmatpush1.msra.mxu0 %v8216
  %8218 = vmatprep.subr.mxu0 0.0
  %8219 = vmatpush1.msra.mxu0 0.0
  %8220 = vmatprep.subr.mxu0 0.0
  %8221 = vmatpush1.msra.mxu0 0.0
  %8222 = vmatprep.subr.mxu0 0.0
  %8223 = vmatpush1.msra.mxu0 0.0
  %8224 = vmatprep.subr.mxu0 0.0
  %8225 = vmatpush1.msra.mxu0 0.0
  %8226 = vmatprep.subr.mxu0 0.0
  %8227 = vmatpush1.msra.mxu0 0.0
  %8228 = vmatprep.subr.mxu0 0.0
  %8229 = vmatpush1.msra.mxu0 0.0
  %8230 = vmatprep.subr.mxu0 0.0
  %8231 = vmatpush1.msra.mxu0 0.0
  %8232 = vmatprep.subr.mxu0 0.0
  %8233 = vmatpush1.msra.mxu0 0.0
  %8234 = vmatprep.subr.mxu0 0.0
  %8235 = vmatpush1.msra.mxu0 0.0
  %8236 = vmatprep.subr.mxu0 0.0
  %8237 = vmatpush1.msra.mxu0 0.0
  %8238 = vmatprep.subr.mxu0 0.0
  %8239 = vmatpush1.msra.mxu0 0.0
  %8240 = vmatprep.subr.mxu0 0.0
  %8241 = vmatpush1.msra.mxu0 0.0
  %8242 = vmatprep.subr.mxu0 0.0
  %8243 = vmatpush1.msra.mxu0 0.0
  %8244 = vmatprep.subr.mxu0 0.0
  %8245 = vmatpush1.msra.mxu0 0.0
  %8246 = vmatprep.subr.mxu0 0.0
  %8247 = vmatpush1.msra.mxu0 0.0
  %8248 = vmatprep.subr.mxu0 0.0
  %8249 = vmatpush1.msra.mxu0 0.0
  %8250 = vmatprep.subr.mxu0 0.0
  %8251 = vmatpush1.msra.mxu0 0.0
  %8252 = vmatprep.subr.mxu0 0.0
  %8253 = vmatpush1.msra.mxu0 0.0
  %8254 = vmatprep.subr.mxu0 0.0
  %8255 = vmatpush1.msra.mxu0 0.0
  %8256 = vmatprep.subr.mxu0 0.0
  %8257 = vmatpush1.msra.mxu0 0.0
  %8258 = vmatprep.subr.mxu0 0.0
  %8259 = vmatpush1.msra.mxu0 0.0
  %8260 = vmatprep.subr.mxu0 0.0
  %8261 = vmatpush1.msra.mxu0 0.0
  %8262 = vmatprep.subr.mxu0 0.0
  %8263 = vmatpush1.msra.mxu0 0.0
  %8264 = vmatprep.subr.mxu0 0.0
  %8265 = vmatpush1.msra.mxu0 0.0
  %8266 = vmatprep.subr.mxu0 0.0
  %8267 = vmatpush1.msra.mxu0 0.0
  %8268 = vmatprep.mubr.f32.mxu0 0.0
  %v8269 = vand.u32 %v3771, 4294901760
  %v8270 = vsub.f32 %v3771, %v8269
  %v8271 = vand.u32 %v8270, 4294901760
  %v8272 = vsub.f32 %v8270, %v8271
  %v8273 = vand.u32 %v8272, 4294901760
  %8274 = vmatmul.mubr.f32.gmra.mrb[0].mxu0 %v8273
  %v8275 = vpop.f32.mrb[0].mxu0
  %v8276 = vadd.f32 %v3768, %v8275
  %v8277 = vpop.f32.mrb[0].mxu0
  %v8278 = vadd.f32 %v3768, %v8277
  %8279 = vdwg.mxu0
  %v8280 = vand.u32 %v3618, 4294901760
  %v8281 = vsub.f32 %v3618, %v8280
  %v8282 = vand.u32 %v8281, 4294901760
  %v8283 = vsub.f32 %v8281, %v8282
  %v8284 = vand.u32 %v8283, 4294901760
  %8285 = vmatprep.subr.mxu0 %v8284
  %v8286 = vand.u32 %v3617, 4294901760
  %v8287 = vsub.f32 %v3617, %v8286
  %v8288 = vand.u32 %v8287, 4294901760
  %v8289 = vsub.f32 %v8287, %v8288
  %v8290 = vand.u32 %v8289, 4294901760
  %8291 = vmatpush1.msra.mxu0 %v8290
  %v8292 = vand.u32 %v3641, 4294901760
  %v8293 = vsub.f32 %v3641, %v8292
  %v8294 = vand.u32 %v8293, 4294901760
  %v8295 = vsub.f32 %v8293, %v8294
  %v8296 = vand.u32 %v8295, 4294901760
  %8297 = vmatprep.subr.mxu0 %v8296
  %v8298 = vand.u32 %v3640, 4294901760
  %v8299 = vsub.f32 %v3640, %v8298
  %v8300 = vand.u32 %v8299, 4294901760
  %v8301 = vsub.f32 %v8299, %v8300
  %v8302 = vand.u32 %v8301, 4294901760
  %8303 = vmatpush1.msra.mxu0 %v8302
  %v8304 = vand.u32 %v3664, 4294901760
  %v8305 = vsub.f32 %v3664, %v8304
  %v8306 = vand.u32 %v8305, 4294901760
  %v8307 = vsub.f32 %v8305, %v8306
  %v8308 = vand.u32 %v8307, 4294901760
  %8309 = vmatprep.subr.mxu0 %v8308
  %v8310 = vand.u32 %v3663, 4294901760
  %v8311 = vsub.f32 %v3663, %v8310
  %v8312 = vand.u32 %v8311, 4294901760
  %v8313 = vsub.f32 %v8311, %v8312
  %v8314 = vand.u32 %v8313, 4294901760
  %8315 = vmatpush1.msra.mxu0 %v8314
  %v8316 = vand.u32 %v3687, 4294901760
  %v8317 = vsub.f32 %v3687, %v8316
  %v8318 = vand.u32 %v8317, 4294901760
  %v8319 = vsub.f32 %v8317, %v8318
  %v8320 = vand.u32 %v8319, 4294901760
  %8321 = vmatprep.subr.mxu0 %v8320
  %v8322 = vand.u32 %v3686, 4294901760
  %v8323 = vsub.f32 %v3686, %v8322
  %v8324 = vand.u32 %v8323, 4294901760
  %v8325 = vsub.f32 %v8323, %v8324
  %v8326 = vand.u32 %v8325, 4294901760
  %8327 = vmatpush1.msra.mxu0 %v8326
  %v8328 = vand.u32 %v3710, 4294901760
  %v8329 = vsub.f32 %v3710, %v8328
  %v8330 = vand.u32 %v8329, 4294901760
  %v8331 = vsub.f32 %v8329, %v8330
  %v8332 = vand.u32 %v8331, 4294901760
  %8333 = vmatprep.subr.mxu0 %v8332
  %v8334 = vand.u32 %v3709, 4294901760
  %v8335 = vsub.f32 %v3709, %v8334
  %v8336 = vand.u32 %v8335, 4294901760
  %v8337 = vsub.f32 %v8335, %v8336
  %v8338 = vand.u32 %v8337, 4294901760
  %8339 = vmatpush1.msra.mxu0 %v8338
  %v8340 = vand.u32 %v3733, 4294901760
  %v8341 = vsub.f32 %v3733, %v8340
  %v8342 = vand.u32 %v8341, 4294901760
  %v8343 = vsub.f32 %v8341, %v8342
  %v8344 = vand.u32 %v8343, 4294901760
  %8345 = vmatprep.subr.mxu0 %v8344
  %v8346 = vand.u32 %v3732, 4294901760
  %v8347 = vsub.f32 %v3732, %v8346
  %v8348 = vand.u32 %v8347, 4294901760
  %v8349 = vsub.f32 %v8347, %v8348
  %v8350 = vand.u32 %v8349, 4294901760
  %8351 = vmatpush1.msra.mxu0 %v8350
  %v8352 = vand.u32 %v3820, 4294901760
  %v8353 = vsub.f32 %v3820, %v8352
  %v8354 = vand.u32 %v8353, 4294901760
  %v8355 = vsub.f32 %v8353, %v8354
  %v8356 = vand.u32 %v8355, 4294901760
  %8357 = vmatprep.subr.mxu0 %v8356
  %v8358 = vand.u32 %v3817, 4294901760
  %v8359 = vsub.f32 %v3817, %v8358
  %v8360 = vand.u32 %v8359, 4294901760
  %v8361 = vsub.f32 %v8359, %v8360
  %v8362 = vand.u32 %v8361, 4294901760
  %8363 = vmatpush1.msra.mxu0 %v8362
  %8364 = vmatprep.subr.mxu0 0.0
  %8365 = vmatpush1.msra.mxu0 0.0
  %8366 = vmatprep.subr.mxu0 0.0
  %8367 = vmatpush1.msra.mxu0 0.0
  %8368 = vmatprep.subr.mxu0 0.0
  %8369 = vmatpush1.msra.mxu0 0.0
  %8370 = vmatprep.subr.mxu0 0.0
  %8371 = vmatpush1.msra.mxu0 0.0
  %8372 = vmatprep.subr.mxu0 0.0
  %8373 = vmatpush1.msra.mxu0 0.0
  %8374 = vmatprep.subr.mxu0 0.0
  %8375 = vmatpush1.msra.mxu0 0.0
  %8376 = vmatprep.subr.mxu0 0.0
  %8377 = vmatpush1.msra.mxu0 0.0
  %8378 = vmatprep.subr.mxu0 0.0
  %8379 = vmatpush1.msra.mxu0 0.0
  %8380 = vmatprep.subr.mxu0 0.0
  %8381 = vmatpush1.msra.mxu0 0.0
  %8382 = vmatprep.subr.mxu0 0.0
  %8383 = vmatpush1.msra.mxu0 0.0
  %8384 = vmatprep.subr.mxu0 0.0
  %8385 = vmatpush1.msra.mxu0 0.0
  %8386 = vmatprep.subr.mxu0 0.0
  %8387 = vmatpush1.msra.mxu0 0.0
  %8388 = vmatprep.subr.mxu0 0.0
  %8389 = vmatpush1.msra.mxu0 0.0
  %8390 = vmatprep.subr.mxu0 0.0
  %8391 = vmatpush1.msra.mxu0 0.0
  %8392 = vmatprep.subr.mxu0 0.0
  %8393 = vmatpush1.msra.mxu0 0.0
  %8394 = vmatprep.subr.mxu0 0.0
  %8395 = vmatpush1.msra.mxu0 0.0
  %8396 = vmatprep.subr.mxu0 0.0
  %8397 = vmatpush1.msra.mxu0 0.0
  %8398 = vmatprep.subr.mxu0 0.0
  %8399 = vmatpush1.msra.mxu0 0.0
  %8400 = vmatprep.subr.mxu0 0.0
  %8401 = vmatpush1.msra.mxu0 0.0
  %8402 = vmatprep.subr.mxu0 0.0
  %8403 = vmatpush1.msra.mxu0 0.0
  %8404 = vmatprep.subr.mxu0 0.0
  %8405 = vmatpush1.msra.mxu0 0.0
  %8406 = vmatprep.subr.mxu0 0.0
  %8407 = vmatpush1.msra.mxu0 0.0
  %8408 = vmatprep.subr.mxu0 0.0
  %8409 = vmatpush1.msra.mxu0 0.0
  %8410 = vmatprep.subr.mxu0 0.0
  %8411 = vmatpush1.msra.mxu0 0.0
  %8412 = vmatprep.subr.mxu0 0.0
  %8413 = vmatpush1.msra.mxu0 0.0
  %8414 = vmatprep.mubr.f32.mxu0 0.0
  %v8415 = vand.u32 %v3771, 4294901760
  %8416 = vmatmul.mubr.f32.gmra.mrb[0].mxu0 %v8415
  %v8417 = vpop.f32.mrb[0].mxu0
  %v8418 = vadd.f32 %v8276, %v8417
  %v8419 = vpop.f32.mrb[0].mxu0
  %v8420 = vadd.f32 %v8278, %v8419
  %8421 = vdwg.mxu0
  %v8422 = vand.u32 %v3618, 4294901760
  %v8423 = vsub.f32 %v3618, %v8422
  %8424 = vmatprep.subr.mxu0 %v8423
  %v8425 = vand.u32 %v3617, 4294901760
  %v8426 = vsub.f32 %v3617, %v8425
  %8427 = vmatpush1.msra.mxu0 %v8426
  %v8428 = vand.u32 %v3641, 4294901760
  %v8429 = vsub.f32 %v3641, %v8428
  %8430 = vmatprep.subr.mxu0 %v8429
  %v8431 = vand.u32 %v3640, 4294901760
  %v8432 = vsub.f32 %v3640, %v8431
  %8433 = vmatpush1.msra.mxu0 %v8432
  %v8434 = vand.u32 %v3664, 4294901760
  %v8435 = vsub.f32 %v3664, %v8434
  %8436 = vmatprep.subr.mxu0 %v8435
  %v8437 = vand.u32 %v3663, 4294901760
  %v8438 = vsub.f32 %v3663, %v8437
  %8439 = vmatpush1.msra.mxu0 %v8438
  %v8440 = vand.u32 %v3687, 4294901760
  %v8441 = vsub.f32 %v3687, %v8440
  %8442 = vmatprep.subr.mxu0 %v8441
  %v8443 = vand.u32 %v3686, 4294901760
  %v8444 = vsub.f32 %v3686, %v8443
  %8445 = vmatpush1.msra.mxu0 %v8444
  %v8446 = vand.u32 %v3710, 4294901760
  %v8447 = vsub.f32 %v3710, %v8446
  %8448 = vmatprep.subr.mxu0 %v8447
  %v8449 = vand.u32 %v3709, 4294901760
  %v8450 = vsub.f32 %v3709, %v8449
  %8451 = vmatpush1.msra.mxu0 %v8450
  %v8452 = vand.u32 %v3733, 4294901760
  %v8453 = vsub.f32 %v3733, %v8452
  %8454 = vmatprep.subr.mxu0 %v8453
  %v8455 = vand.u32 %v3732, 4294901760
  %v8456 = vsub.f32 %v3732, %v8455
  %8457 = vmatpush1.msra.mxu0 %v8456
  %v8458 = vand.u32 %v3820, 4294901760
  %v8459 = vsub.f32 %v3820, %v8458
  %8460 = vmatprep.subr.mxu0 %v8459
  %v8461 = vand.u32 %v3817, 4294901760
  %v8462 = vsub.f32 %v3817, %v8461
  %8463 = vmatpush1.msra.mxu0 %v8462
  %8464 = vmatprep.subr.mxu0 0.0
  %8465 = vmatpush1.msra.mxu0 0.0
  %8466 = vmatprep.subr.mxu0 0.0
  %8467 = vmatpush1.msra.mxu0 0.0
  %8468 = vmatprep.subr.mxu0 0.0
  %8469 = vmatpush1.msra.mxu0 0.0
  %8470 = vmatprep.subr.mxu0 0.0
  %8471 = vmatpush1.msra.mxu0 0.0
  %8472 = vmatprep.subr.mxu0 0.0
  %8473 = vmatpush1.msra.mxu0 0.0
  %8474 = vmatprep.subr.mxu0 0.0
  %8475 = vmatpush1.msra.mxu0 0.0
  %8476 = vmatprep.subr.mxu0 0.0
  %8477 = vmatpush1.msra.mxu0 0.0
  %8478 = vmatprep.subr.mxu0 0.0
  %8479 = vmatpush1.msra.mxu0 0.0
  %8480 = vmatprep.subr.mxu0 0.0
  %8481 = vmatpush1.msra.mxu0 0.0
  %8482 = vmatprep.subr.mxu0 0.0
  %8483 = vmatpush1.msra.mxu0 0.0
  %8484 = vmatprep.subr.mxu0 0.0
  %8485 = vmatpush1.msra.mxu0 0.0
  %8486 = vmatprep.subr.mxu0 0.0
  %8487 = vmatpush1.msra.mxu0 0.0
  %8488 = vmatprep.subr.mxu0 0.0
  %8489 = vmatpush1.msra.mxu0 0.0
  %8490 = vmatprep.subr.mxu0 0.0
  %8491 = vmatpush1.msra.mxu0 0.0
  %8492 = vmatprep.subr.mxu0 0.0
  %8493 = vmatpush1.msra.mxu0 0.0
  %8494 = vmatprep.subr.mxu0 0.0
  %8495 = vmatpush1.msra.mxu0 0.0
  %8496 = vmatprep.subr.mxu0 0.0
  %8497 = vmatpush1.msra.mxu0 0.0
  %8498 = vmatprep.subr.mxu0 0.0
  %8499 = vmatpush1.msra.mxu0 0.0
  %8500 = vmatprep.subr.mxu0 0.0
  %8501 = vmatpush1.msra.mxu0 0.0
  %8502 = vmatprep.subr.mxu0 0.0
  %8503 = vmatpush1.msra.mxu0 0.0
  %8504 = vmatprep.subr.mxu0 0.0
  %8505 = vmatpush1.msra.mxu0 0.0
  %8506 = vmatprep.subr.mxu0 0.0
  %8507 = vmatpush1.msra.mxu0 0.0
  %8508 = vmatprep.subr.mxu0 0.0
  %8509 = vmatpush1.msra.mxu0 0.0
  %8510 = vmatprep.subr.mxu0 0.0
  %8511 = vmatpush1.msra.mxu0 0.0
  %8512 = vmatprep.subr.mxu0 0.0
  %8513 = vmatpush1.msra.mxu0 0.0
  %8514 = vmatprep.mubr.f32.mxu0 0.0
  %v8515 = vand.u32 %v3771, 4294901760
  %v8516 = vsub.f32 %v3771, %v8515
  %8517 = vmatmul.mubr.f32.gmra.mrb[0].mxu0 %v8516
  %v8518 = vpop.f32.mrb[0].mxu0
  %v8519 = vadd.f32 %v8418, %v8518
  %v8520 = vpop.f32.mrb[0].mxu0
  %v8521 = vadd.f32 %v8420, %v8520
  %8522 = vdwg.mxu0
  %v8523 = vand.u32 %v3618, 4294901760
  %8524 = vmatprep.subr.mxu0 %v8523
  %v8525 = vand.u32 %v3617, 4294901760
  %8526 = vmatpush1.msra.mxu0 %v8525
  %v8527 = vand.u32 %v3641, 4294901760
  %8528 = vmatprep.subr.mxu0 %v8527
  %v8529 = vand.u32 %v3640, 4294901760
  %8530 = vmatpush1.msra.mxu0 %v8529
  %v8531 = vand.u32 %v3664, 4294901760
  %8532 = vmatprep.subr.mxu0 %v8531
  %v8533 = vand.u32 %v3663, 4294901760
  %8534 = vmatpush1.msra.mxu0 %v8533
  %v8535 = vand.u32 %v3687, 4294901760
  %8536 = vmatprep.subr.mxu0 %v8535
  %v8537 = vand.u32 %v3686, 4294901760
  %8538 = vmatpush1.msra.mxu0 %v8537
  %v8539 = vand.u32 %v3710, 4294901760
  %8540 = vmatprep.subr.mxu0 %v8539
  %v8541 = vand.u32 %v3709, 4294901760
  %8542 = vmatpush1.msra.mxu0 %v8541
  %v8543 = vand.u32 %v3733, 4294901760
  %8544 = vmatprep.subr.mxu0 %v8543
  %v8545 = vand.u32 %v3732, 4294901760
  %8546 = vmatpush1.msra.mxu0 %v8545
  %v8547 = vand.u32 %v3820, 4294901760
  %8548 = vmatprep.subr.mxu0 %v8547
  %v8549 = vand.u32 %v3817, 4294901760
  %8550 = vmatpush1.msra.mxu0 %v8549
  %8551 = vmatprep.subr.mxu0 0.0
  %8552 = vmatpush1.msra.mxu0 0.0
  %8553 = vmatprep.subr.mxu0 0.0
  %8554 = vmatpush1.msra.mxu0 0.0
  %8555 = vmatprep.subr.mxu0 0.0
  %8556 = vmatpush1.msra.mxu0 0.0
  %8557 = vmatprep.subr.mxu0 0.0
  %8558 = vmatpush1.msra.mxu0 0.0
  %8559 = vmatprep.subr.mxu0 0.0
  %8560 = vmatpush1.msra.mxu0 0.0
  %8561 = vmatprep.subr.mxu0 0.0
  %8562 = vmatpush1.msra.mxu0 0.0
  %8563 = vmatprep.subr.mxu0 0.0
  %8564 = vmatpush1.msra.mxu0 0.0
  %8565 = vmatprep.subr.mxu0 0.0
  %8566 = vmatpush1.msra.mxu0 0.0
  %8567 = vmatprep.subr.mxu0 0.0
  %8568 = vmatpush1.msra.mxu0 0.0
  %8569 = vmatprep.subr.mxu0 0.0
  %8570 = vmatpush1.msra.mxu0 0.0
  %8571 = vmatprep.subr.mxu0 0.0
  %8572 = vmatpush1.msra.mxu0 0.0
  %8573 = vmatprep.subr.mxu0 0.0
  %8574 = vmatpush1.msra.mxu0 0.0
  %8575 = vmatprep.subr.mxu0 0.0
  %8576 = vmatpush1.msra.mxu0 0.0
  %8577 = vmatprep.subr.mxu0 0.0
  %8578 = vmatpush1.msra.mxu0 0.0
  %8579 = vmatprep.subr.mxu0 0.0
  %8580 = vmatpush1.msra.mxu0 0.0
  %8581 = vmatprep.subr.mxu0 0.0
  %8582 = vmatpush1.msra.mxu0 0.0
  %8583 = vmatprep.subr.mxu0 0.0
  %8584 = vmatpush1.msra.mxu0 0.0
  %8585 = vmatprep.subr.mxu0 0.0
  %8586 = vmatpush1.msra.mxu0 0.0
  %8587 = vmatprep.subr.mxu0 0.0
  %8588 = vmatpush1.msra.mxu0 0.0
  %8589 = vmatprep.subr.mxu0 0.0
  %8590 = vmatpush1.msra.mxu0 0.0
  %8591 = vmatprep.subr.mxu0 0.0
  %8592 = vmatpush1.msra.mxu0 0.0
  %8593 = vmatprep.subr.mxu0 0.0
  %8594 = vmatpush1.msra.mxu0 0.0
  %8595 = vmatprep.subr.mxu0 0.0
  %8596 = vmatpush1.msra.mxu0 0.0
  %8597 = vmatprep.subr.mxu0 0.0
  %8598 = vmatpush1.msra.mxu0 0.0
  %8599 = vmatprep.subr.mxu0 0.0
  %8600 = vmatpush1.msra.mxu0 0.0
  %8601 = vmatprep.mubr.f32.mxu0 0.0
  %v8602 = vand.u32 %v3771, 4294901760
  %v8603 = vsub.f32 %v3771, %v8602
  %v8604 = vand.u32 %v8603, 4294901760
  %8605 = vmatmul.mubr.f32.gmra.mrb[0].mxu0 %v8604
  %v8606 = vpop.f32.mrb[0].mxu0
  %v8607 = vadd.f32 %v8519, %v8606
  %v8608 = vpop.f32.mrb[0].mxu0
  %v8609 = vadd.f32 %v8521, %v8608
  %8610 = vdwg.mxu0
  %v8611 = vand.u32 %v3618, 4294901760
  %v8612 = vsub.f32 %v3618, %v8611
  %v8613 = vand.u32 %v8612, 4294901760
  %8614 = vmatprep.subr.mxu0 %v8613
  %v8615 = vand.u32 %v3617, 4294901760
  %v8616 = vsub.f32 %v3617, %v8615
  %v8617 = vand.u32 %v8616, 4294901760
  %8618 = vmatpush1.msra.mxu0 %v8617
  %v8619 = vand.u32 %v3641, 4294901760
  %v8620 = vsub.f32 %v3641, %v8619
  %v8621 = vand.u32 %v8620, 4294901760
  %8622 = vmatprep.subr.mxu0 %v8621
  %v8623 = vand.u32 %v3640, 4294901760
  %v8624 = vsub.f32 %v3640, %v8623
  %v8625 = vand.u32 %v8624, 4294901760
  %8626 = vmatpush1.msra.mxu0 %v8625
  %v8627 = vand.u32 %v3664, 4294901760
  %v8628 = vsub.f32 %v3664, %v8627
  %v8629 = vand.u32 %v8628, 4294901760
  %8630 = vmatprep.subr.mxu0 %v8629
  %v8631 = vand.u32 %v3663, 4294901760
  %v8632 = vsub.f32 %v3663, %v8631
  %v8633 = vand.u32 %v8632, 4294901760
  %8634 = vmatpush1.msra.mxu0 %v8633
  %v8635 = vand.u32 %v3687, 4294901760
  %v8636 = vsub.f32 %v3687, %v8635
  %v8637 = vand.u32 %v8636, 4294901760
  %8638 = vmatprep.subr.mxu0 %v8637
  %v8639 = vand.u32 %v3686, 4294901760
  %v8640 = vsub.f32 %v3686, %v8639
  %v8641 = vand.u32 %v8640, 4294901760
  %8642 = vmatpush1.msra.mxu0 %v8641
  %v8643 = vand.u32 %v3710, 4294901760
  %v8644 = vsub.f32 %v3710, %v8643
  %v8645 = vand.u32 %v8644, 4294901760
  %8646 = vmatprep.subr.mxu0 %v8645
  %v8647 = vand.u32 %v3709, 4294901760
  %v8648 = vsub.f32 %v3709, %v8647
  %v8649 = vand.u32 %v8648, 4294901760
  %8650 = vmatpush1.msra.mxu0 %v8649
  %v8651 = vand.u32 %v3733, 4294901760
  %v8652 = vsub.f32 %v3733, %v8651
  %v8653 = vand.u32 %v8652, 4294901760
  %8654 = vmatprep.subr.mxu0 %v8653
  %v8655 = vand.u32 %v3732, 4294901760
  %v8656 = vsub.f32 %v3732, %v8655
  %v8657 = vand.u32 %v8656, 4294901760
  %8658 = vmatpush1.msra.mxu0 %v8657
  %v8659 = vand.u32 %v3820, 4294901760
  %v8660 = vsub.f32 %v3820, %v8659
  %v8661 = vand.u32 %v8660, 4294901760
  %8662 = vmatprep.subr.mxu0 %v8661
  %v8663 = vand.u32 %v3817, 4294901760
  %v8664 = vsub.f32 %v3817, %v8663
  %v8665 = vand.u32 %v8664, 4294901760
  %8666 = vmatpush1.msra.mxu0 %v8665
  %8667 = vmatprep.subr.mxu0 0.0
  %8668 = vmatpush1.msra.mxu0 0.0
  %8669 = vmatprep.subr.mxu0 0.0
  %8670 = vmatpush1.msra.mxu0 0.0
  %8671 = vmatprep.subr.mxu0 0.0
  %8672 = vmatpush1.msra.mxu0 0.0
  %8673 = vmatprep.subr.mxu0 0.0
  %8674 = vmatpush1.msra.mxu0 0.0
  %8675 = vmatprep.subr.mxu0 0.0
  %8676 = vmatpush1.msra.mxu0 0.0
  %8677 = vmatprep.subr.mxu0 0.0
  %8678 = vmatpush1.msra.mxu0 0.0
  %8679 = vmatprep.subr.mxu0 0.0
  %8680 = vmatpush1.msra.mxu0 0.0
  %8681 = vmatprep.subr.mxu0 0.0
  %8682 = vmatpush1.msra.mxu0 0.0
  %8683 = vmatprep.subr.mxu0 0.0
  %8684 = vmatpush1.msra.mxu0 0.0
  %8685 = vmatprep.subr.mxu0 0.0
  %8686 = vmatpush1.msra.mxu0 0.0
  %8687 = vmatprep.subr.mxu0 0.0
  %8688 = vmatpush1.msra.mxu0 0.0
  %8689 = vmatprep.subr.mxu0 0.0
  %8690 = vmatpush1.msra.mxu0 0.0
  %8691 = vmatprep.subr.mxu0 0.0
  %8692 = vmatpush1.msra.mxu0 0.0
  %8693 = vmatprep.subr.mxu0 0.0
  %8694 = vmatpush1.msra.mxu0 0.0
  %8695 = vmatprep.subr.mxu0 0.0
  %8696 = vmatpush1.msra.mxu0 0.0
  %8697 = vmatprep.subr.mxu0 0.0
  %8698 = vmatpush1.msra.mxu0 0.0
  %8699 = vmatprep.subr.mxu0 0.0
  %8700 = vmatpush1.msra.mxu0 0.0
  %8701 = vmatprep.subr.mxu0 0.0
  %8702 = vmatpush1.msra.mxu0 0.0
  %8703 = vmatprep.subr.mxu0 0.0
  %8704 = vmatpush1.msra.mxu0 0.0
  %8705 = vmatprep.subr.mxu0 0.0
  %8706 = vmatpush1.msra.mxu0 0.0
  %8707 = vmatprep.subr.mxu0 0.0
  %8708 = vmatpush1.msra.mxu0 0.0
  %8709 = vmatprep.subr.mxu0 0.0
  %8710 = vmatpush1.msra.mxu0 0.0
  %8711 = vmatprep.subr.mxu0 0.0
  %8712 = vmatpush1.msra.mxu0 0.0
  %8713 = vmatprep.subr.mxu0 0.0
  %8714 = vmatpush1.msra.mxu0 0.0
  %8715 = vmatprep.subr.mxu0 0.0
  %8716 = vmatpush1.msra.mxu0 0.0
  %8717 = vmatprep.mubr.f32.mxu0 0.0
  %v8718 = vand.u32 %v3771, 4294901760
  %8719 = vmatmul.mubr.f32.gmra.mrb[0].mxu0 %v8718
  %v8720 = vpop.f32.mrb[0].mxu0
  %v8721 = vadd.f32 %v8607, %v8720
  %v8722 = vpop.f32.mrb[0].mxu0
  %v8723 = vadd.f32 %v8609, %v8722
  %8724 = vdwg.mxu0
  %v8725 = vand.u32 %v3618, 4294901760
  %8726 = vmatprep.subr.mxu0 %v8725
  %v8727 = vand.u32 %v3617, 4294901760
  %8728 = vmatpush1.msra.mxu0 %v8727
  %v8729 = vand.u32 %v3641, 4294901760
  %8730 = vmatprep.subr.mxu0 %v8729
  %v8731 = vand.u32 %v3640, 4294901760
  %8732 = vmatpush1.msra.mxu0 %v8731
  %v8733 = vand.u32 %v3664, 4294901760
  %8734 = vmatprep.subr.mxu0 %v8733
  %v8735 = vand.u32 %v3663, 4294901760
  %8736 = vmatpush1.msra.mxu0 %v8735
  %v8737 = vand.u32 %v3687, 4294901760
  %8738 = vmatprep.subr.mxu0 %v8737
  %v8739 = vand.u32 %v3686, 4294901760
  %8740 = vmatpush1.msra.mxu0 %v8739
  %v8741 = vand.u32 %v3710, 4294901760
  %8742 = vmatprep.subr.mxu0 %v8741
  %v8743 = vand.u32 %v3709, 4294901760
  %8744 = vmatpush1.msra.mxu0 %v8743
  %v8745 = vand.u32 %v3733, 4294901760
  %8746 = vmatprep.subr.mxu0 %v8745
  %v8747 = vand.u32 %v3732, 4294901760
  %8748 = vmatpush1.msra.mxu0 %v8747
  %v8749 = vand.u32 %v3820, 4294901760
  %8750 = vmatprep.subr.mxu0 %v8749
  %v8751 = vand.u32 %v3817, 4294901760
  %8752 = vmatpush1.msra.mxu0 %v8751
  %8753 = vmatprep.subr.mxu0 0.0
  %8754 = vmatpush1.msra.mxu0 0.0
  %8755 = vmatprep.subr.mxu0 0.0
  %8756 = vmatpush1.msra.mxu0 0.0
  %8757 = vmatprep.subr.mxu0 0.0
  %8758 = vmatpush1.msra.mxu0 0.0
  %8759 = vmatprep.subr.mxu0 0.0
  %8760 = vmatpush1.msra.mxu0 0.0
  %8761 = vmatprep.subr.mxu0 0.0
  %8762 = vmatpush1.msra.mxu0 0.0
  %8763 = vmatprep.subr.mxu0 0.0
  %8764 = vmatpush1.msra.mxu0 0.0
  %8765 = vmatprep.subr.mxu0 0.0
  %8766 = vmatpush1.msra.mxu0 0.0
  %8767 = vmatprep.subr.mxu0 0.0
  %8768 = vmatpush1.msra.mxu0 0.0
  %8769 = vmatprep.subr.mxu0 0.0
  %8770 = vmatpush1.msra.mxu0 0.0
  %8771 = vmatprep.subr.mxu0 0.0
  %8772 = vmatpush1.msra.mxu0 0.0
  %8773 = vmatprep.subr.mxu0 0.0
  %8774 = vmatpush1.msra.mxu0 0.0
  %8775 = vmatprep.subr.mxu0 0.0
  %8776 = vmatpush1.msra.mxu0 0.0
  %8777 = vmatprep.subr.mxu0 0.0
  %8778 = vmatpush1.msra.mxu0 0.0
  %8779 = vmatprep.subr.mxu0 0.0
  %8780 = vmatpush1.msra.mxu0 0.0
  %8781 = vmatprep.subr.mxu0 0.0
  %8782 = vmatpush1.msra.mxu0 0.0
  %8783 = vmatprep.subr.mxu0 0.0
  %8784 = vmatpush1.msra.mxu0 0.0
  %8785 = vmatprep.subr.mxu0 0.0
  %8786 = vmatpush1.msra.mxu0 0.0
  %8787 = vmatprep.subr.mxu0 0.0
  %8788 = vmatpush1.msra.mxu0 0.0
  %8789 = vmatprep.subr.mxu0 0.0
  %8790 = vmatpush1.msra.mxu0 0.0
  %8791 = vmatprep.subr.mxu0 0.0
  %8792 = vmatpush1.msra.mxu0 0.0
  %8793 = vmatprep.subr.mxu0 0.0
  %8794 = vmatpush1.msra.mxu0 0.0
  %8795 = vmatprep.subr.mxu0 0.0
  %8796 = vmatpush1.msra.mxu0 0.0
  %8797 = vmatprep.subr.mxu0 0.0
  %8798 = vmatpush1.msra.mxu0 0.0
  %8799 = vmatprep.subr.mxu0 0.0
  %8800 = vmatpush1.msra.mxu0 0.0
  %8801 = vmatprep.subr.mxu0 0.0
  %8802 = vmatpush1.msra.mxu0 0.0
  %8803 = vmatprep.mubr.f32.mxu0 0.0
  %v8804 = vand.u32 %v3771, 4294901760
  %8805 = vmatmul.mubr.f32.gmra.mrb[0].mxu0 %v8804
  %v8806 = vpop.f32.mrb[0].mxu0
  %v8807 = vadd.f32 %v8721, %v8806
  %v8808 = vpop.f32.mrb[0].mxu0
  %v8809 = vadd.f32 %v8723, %v8808
  %8810 = vdwg.mxu0
  %v8811 = vand.u32 %v3620, 4294901760
  %8812 = vmatprep.subr.mxu0 %v8811
  %v8813 = vand.u32 %v3619, 4294901760
  %8814 = vmatpush1.msra.mxu0 %v8813
  %v8815 = vand.u32 %v3643, 4294901760
  %8816 = vmatprep.subr.mxu0 %v8815
  %v8817 = vand.u32 %v3642, 4294901760
  %8818 = vmatpush1.msra.mxu0 %v8817
  %v8819 = vand.u32 %v3666, 4294901760
  %8820 = vmatprep.subr.mxu0 %v8819
  %v8821 = vand.u32 %v3665, 4294901760
  %8822 = vmatpush1.msra.mxu0 %v8821
  %v8823 = vand.u32 %v3689, 4294901760
  %8824 = vmatprep.subr.mxu0 %v8823
  %v8825 = vand.u32 %v3688, 4294901760
  %8826 = vmatpush1.msra.mxu0 %v8825
  %v8827 = vand.u32 %v3712, 4294901760
  %8828 = vmatprep.subr.mxu0 %v8827
  %v8829 = vand.u32 %v3711, 4294901760
  %8830 = vmatpush1.msra.mxu0 %v8829
  %v8831 = vand.u32 %v3735, 4294901760
  %8832 = vmatprep.subr.mxu0 %v8831
  %v8833 = vand.u32 %v3734, 4294901760
  %8834 = vmatpush1.msra.mxu0 %v8833
  %v8835 = vand.u32 %v3826, 4294901760
  %8836 = vmatprep.subr.mxu0 %v8835
  %v8837 = vand.u32 %v3823, 4294901760
  %8838 = vmatpush1.msra.mxu0 %v8837
  %8839 = vmatprep.subr.mxu0 0.0
  %8840 = vmatpush1.msra.mxu0 0.0
  %8841 = vmatprep.subr.mxu0 0.0
  %8842 = vmatpush1.msra.mxu0 0.0
  %8843 = vmatprep.subr.mxu0 0.0
  %8844 = vmatpush1.msra.mxu0 0.0
  %8845 = vmatprep.subr.mxu0 0.0
  %8846 = vmatpush1.msra.mxu0 0.0
  %8847 = vmatprep.subr.mxu0 0.0
  %8848 = vmatpush1.msra.mxu0 0.0
  %8849 = vmatprep.subr.mxu0 0.0
  %8850 = vmatpush1.msra.mxu0 0.0
  %8851 = vmatprep.subr.mxu0 0.0
  %8852 = vmatpush1.msra.mxu0 0.0
  %8853 = vmatprep.subr.mxu0 0.0
  %8854 = vmatpush1.msra.mxu0 0.0
  %8855 = vmatprep.subr.mxu0 0.0
  %8856 = vmatpush1.msra.mxu0 0.0
  %8857 = vmatprep.subr.mxu0 0.0
  %8858 = vmatpush1.msra.mxu0 0.0
  %8859 = vmatprep.subr.mxu0 0.0
  %8860 = vmatpush1.msra.mxu0 0.0
  %8861 = vmatprep.subr.mxu0 0.0
  %8862 = vmatpush1.msra.mxu0 0.0
  %8863 = vmatprep.subr.mxu0 0.0
  %8864 = vmatpush1.msra.mxu0 0.0
  %8865 = vmatprep.subr.mxu0 0.0
  %8866 = vmatpush1.msra.mxu0 0.0
  %8867 = vmatprep.subr.mxu0 0.0
  %8868 = vmatpush1.msra.mxu0 0.0
  %8869 = vmatprep.subr.mxu0 0.0
  %8870 = vmatpush1.msra.mxu0 0.0
  %8871 = vmatprep.subr.mxu0 0.0
  %8872 = vmatpush1.msra.mxu0 0.0
  %8873 = vmatprep.subr.mxu0 0.0
  %8874 = vmatpush1.msra.mxu0 0.0
  %8875 = vmatprep.subr.mxu0 0.0
  %8876 = vmatpush1.msra.mxu0 0.0
  %8877 = vmatprep.subr.mxu0 0.0
  %8878 = vmatpush1.msra.mxu0 0.0
  %8879 = vmatprep.subr.mxu0 0.0
  %8880 = vmatpush1.msra.mxu0 0.0
  %8881 = vmatprep.subr.mxu0 0.0
  %8882 = vmatpush1.msra.mxu0 0.0
  %8883 = vmatprep.subr.mxu0 0.0
  %8884 = vmatpush1.msra.mxu0 0.0
  %8885 = vmatprep.subr.mxu0 0.0
  %8886 = vmatpush1.msra.mxu0 0.0
  %8887 = vmatprep.subr.mxu0 0.0
  %8888 = vmatpush1.msra.mxu0 0.0
  %8889 = vmatprep.mubr.f32.mxu0 0.0
  %v8890 = vand.u32 %v3771, 4294901760
  %v8891 = vsub.f32 %v3771, %v8890
  %v8892 = vand.u32 %v8891, 4294901760
  %v8893 = vsub.f32 %v8891, %v8892
  %v8894 = vand.u32 %v8893, 4294901760
  %8895 = vmatmul.mubr.f32.gmra.mrb[0].mxu0 %v8894
  %v8896 = vpop.f32.mrb[0].mxu0
  %v8897 = vadd.f32 %v3768, %v8896
  %v8898 = vpop.f32.mrb[0].mxu0
  %v8899 = vadd.f32 %v3768, %v8898
  %8900 = vdwg.mxu0
  %v8901 = vand.u32 %v3620, 4294901760
  %v8902 = vsub.f32 %v3620, %v8901
  %v8903 = vand.u32 %v8902, 4294901760
  %v8904 = vsub.f32 %v8902, %v8903
  %v8905 = vand.u32 %v8904, 4294901760
  %8906 = vmatprep.subr.mxu0 %v8905
  %v8907 = vand.u32 %v3619, 4294901760
  %v8908 = vsub.f32 %v3619, %v8907
  %v8909 = vand.u32 %v8908, 4294901760
  %v8910 = vsub.f32 %v8908, %v8909
  %v8911 = vand.u32 %v8910, 4294901760
  %8912 = vmatpush1.msra.mxu0 %v8911
  %v8913 = vand.u32 %v3643, 4294901760
  %v8914 = vsub.f32 %v3643, %v8913
  %v8915 = vand.u32 %v8914, 4294901760
  %v8916 = vsub.f32 %v8914, %v8915
  %v8917 = vand.u32 %v8916, 4294901760
  %8918 = vmatprep.subr.mxu0 %v8917
  %v8919 = vand.u32 %v3642, 4294901760
  %v8920 = vsub.f32 %v3642, %v8919
  %v8921 = vand.u32 %v8920, 4294901760
  %v8922 = vsub.f32 %v8920, %v8921
  %v8923 = vand.u32 %v8922, 4294901760
  %8924 = vmatpush1.msra.mxu0 %v8923
  %v8925 = vand.u32 %v3666, 4294901760
  %v8926 = vsub.f32 %v3666, %v8925
  %v8927 = vand.u32 %v8926, 4294901760
  %v8928 = vsub.f32 %v8926, %v8927
  %v8929 = vand.u32 %v8928, 4294901760
  %8930 = vmatprep.subr.mxu0 %v8929
  %v8931 = vand.u32 %v3665, 4294901760
  %v8932 = vsub.f32 %v3665, %v8931
  %v8933 = vand.u32 %v8932, 4294901760
  %v8934 = vsub.f32 %v8932, %v8933
  %v8935 = vand.u32 %v8934, 4294901760
  %8936 = vmatpush1.msra.mxu0 %v8935
  %v8937 = vand.u32 %v3689, 4294901760
  %v8938 = vsub.f32 %v3689, %v8937
  %v8939 = vand.u32 %v8938, 4294901760
  %v8940 = vsub.f32 %v8938, %v8939
  %v8941 = vand.u32 %v8940, 4294901760
  %8942 = vmatprep.subr.mxu0 %v8941
  %v8943 = vand.u32 %v3688, 4294901760
  %v8944 = vsub.f32 %v3688, %v8943
  %v8945 = vand.u32 %v8944, 4294901760
  %v8946 = vsub.f32 %v8944, %v8945
  %v8947 = vand.u32 %v8946, 4294901760
  %8948 = vmatpush1.msra.mxu0 %v8947
  %v8949 = vand.u32 %v3712, 4294901760
  %v8950 = vsub.f32 %v3712, %v8949
  %v8951 = vand.u32 %v8950, 4294901760
  %v8952 = vsub.f32 %v8950, %v8951
  %v8953 = vand.u32 %v8952, 4294901760
  %8954 = vmatprep.subr.mxu0 %v8953
  %v8955 = vand.u32 %v3711, 4294901760
  %v8956 = vsub.f32 %v3711, %v8955
  %v8957 = vand.u32 %v8956, 4294901760
  %v8958 = vsub.f32 %v8956, %v8957
  %v8959 = vand.u32 %v8958, 4294901760
  %8960 = vmatpush1.msra.mxu0 %v8959
  %v8961 = vand.u32 %v3735, 4294901760
  %v8962 = vsub.f32 %v3735, %v8961
  %v8963 = vand.u32 %v8962, 4294901760
  %v8964 = vsub.f32 %v8962, %v8963
  %v8965 = vand.u32 %v8964, 4294901760
  %8966 = vmatprep.subr.mxu0 %v8965
  %v8967 = vand.u32 %v3734, 4294901760
  %v8968 = vsub.f32 %v3734, %v8967
  %v8969 = vand.u32 %v8968, 4294901760
  %v8970 = vsub.f32 %v8968, %v8969
  %v8971 = vand.u32 %v8970, 4294901760
  %8972 = vmatpush1.msra.mxu0 %v8971
  %v8973 = vand.u32 %v3826, 4294901760
  %v8974 = vsub.f32 %v3826, %v8973
  %v8975 = vand.u32 %v8974, 4294901760
  %v8976 = vsub.f32 %v8974, %v8975
  %v8977 = vand.u32 %v8976, 4294901760
  %8978 = vmatprep.subr.mxu0 %v8977
  %v8979 = vand.u32 %v3823, 4294901760
  %v8980 = vsub.f32 %v3823, %v8979
  %v8981 = vand.u32 %v8980, 4294901760
  %v8982 = vsub.f32 %v8980, %v8981
  %v8983 = vand.u32 %v8982, 4294901760
  %8984 = vmatpush1.msra.mxu0 %v8983
  %8985 = vmatprep.subr.mxu0 0.0
  %8986 = vmatpush1.msra.mxu0 0.0
  %8987 = vmatprep.subr.mxu0 0.0
  %8988 = vmatpush1.msra.mxu0 0.0
  %8989 = vmatprep.subr.mxu0 0.0
  %8990 = vmatpush1.msra.mxu0 0.0
  %8991 = vmatprep.subr.mxu0 0.0
  %8992 = vmatpush1.msra.mxu0 0.0
  %8993 = vmatprep.subr.mxu0 0.0
  %8994 = vmatpush1.msra.mxu0 0.0
  %8995 = vmatprep.subr.mxu0 0.0
  %8996 = vmatpush1.msra.mxu0 0.0
  %8997 = vmatprep.subr.mxu0 0.0
  %8998 = vmatpush1.msra.mxu0 0.0
  %8999 = vmatprep.subr.mxu0 0.0
  %9000 = vmatpush1.msra.mxu0 0.0
  %9001 = vmatprep.subr.mxu0 0.0
  %9002 = vmatpush1.msra.mxu0 0.0
  %9003 = vmatprep.subr.mxu0 0.0
  %9004 = vmatpush1.msra.mxu0 0.0
  %9005 = vmatprep.subr.mxu0 0.0
  %9006 = vmatpush1.msra.mxu0 0.0
  %9007 = vmatprep.subr.mxu0 0.0
  %9008 = vmatpush1.msra.mxu0 0.0
  %9009 = vmatprep.subr.mxu0 0.0
  %9010 = vmatpush1.msra.mxu0 0.0
  %9011 = vmatprep.subr.mxu0 0.0
  %9012 = vmatpush1.msra.mxu0 0.0
  %9013 = vmatprep.subr.mxu0 0.0
  %9014 = vmatpush1.msra.mxu0 0.0
  %9015 = vmatprep.subr.mxu0 0.0
  %9016 = vmatpush1.msra.mxu0 0.0
  %9017 = vmatprep.subr.mxu0 0.0
  %9018 = vmatpush1.msra.mxu0 0.0
  %9019 = vmatprep.subr.mxu0 0.0
  %9020 = vmatpush1.msra.mxu0 0.0
  %9021 = vmatprep.subr.mxu0 0.0
  %9022 = vmatpush1.msra.mxu0 0.0
  %9023 = vmatprep.subr.mxu0 0.0
  %9024 = vmatpush1.msra.mxu0 0.0
  %9025 = vmatprep.subr.mxu0 0.0
  %9026 = vmatpush1.msra.mxu0 0.0
  %9027 = vmatprep.subr.mxu0 0.0
  %9028 = vmatpush1.msra.mxu0 0.0
  %9029 = vmatprep.subr.mxu0 0.0
  %9030 = vmatpush1.msra.mxu0 0.0
  %9031 = vmatprep.subr.mxu0 0.0
  %9032 = vmatpush1.msra.mxu0 0.0
  %9033 = vmatprep.subr.mxu0 0.0
  %9034 = vmatpush1.msra.mxu0 0.0
  %9035 = vmatprep.mubr.f32.mxu0 0.0
  %v9036 = vand.u32 %v3771, 4294901760
  %9037 = vmatmul.mubr.f32.gmra.mrb[0].mxu0 %v9036
  %v9038 = vpop.f32.mrb[0].mxu0
  %v9039 = vadd.f32 %v8897, %v9038
  %v9040 = vpop.f32.mrb[0].mxu0
  %v9041 = vadd.f32 %v8899, %v9040
  %9042 = vdwg.mxu0
  %v9043 = vand.u32 %v3620, 4294901760
  %v9044 = vsub.f32 %v3620, %v9043
  %9045 = vmatprep.subr.mxu0 %v9044
  %v9046 = vand.u32 %v3619, 4294901760
  %v9047 = vsub.f32 %v3619, %v9046
  %9048 = vmatpush1.msra.mxu0 %v9047
  %v9049 = vand.u32 %v3643, 4294901760
  %v9050 = vsub.f32 %v3643, %v9049
  %9051 = vmatprep.subr.mxu0 %v9050
  %v9052 = vand.u32 %v3642, 4294901760
  %v9053 = vsub.f32 %v3642, %v9052
  %9054 = vmatpush1.msra.mxu0 %v9053
  %v9055 = vand.u32 %v3666, 4294901760
  %v9056 = vsub.f32 %v3666, %v9055
  %9057 = vmatprep.subr.mxu0 %v9056
  %v9058 = vand.u32 %v3665, 4294901760
  %v9059 = vsub.f32 %v3665, %v9058
  %9060 = vmatpush1.msra.mxu0 %v9059
  %v9061 = vand.u32 %v3689, 4294901760
  %v9062 = vsub.f32 %v3689, %v9061
  %9063 = vmatprep.subr.mxu0 %v9062
  %v9064 = vand.u32 %v3688, 4294901760
  %v9065 = vsub.f32 %v3688, %v9064
  %9066 = vmatpush1.msra.mxu0 %v9065
  %v9067 = vand.u32 %v3712, 4294901760
  %v9068 = vsub.f32 %v3712, %v9067
  %9069 = vmatprep.subr.mxu0 %v9068
  %v9070 = vand.u32 %v3711, 4294901760
  %v9071 = vsub.f32 %v3711, %v9070
  %9072 = vmatpush1.msra.mxu0 %v9071
  %v9073 = vand.u32 %v3735, 4294901760
  %v9074 = vsub.f32 %v3735, %v9073
  %9075 = vmatprep.subr.mxu0 %v9074
  %v9076 = vand.u32 %v3734, 4294901760
  %v9077 = vsub.f32 %v3734, %v9076
  %9078 = vmatpush1.msra.mxu0 %v9077
  %v9079 = vand.u32 %v3826, 4294901760
  %v9080 = vsub.f32 %v3826, %v9079
  %9081 = vmatprep.subr.mxu0 %v9080
  %v9082 = vand.u32 %v3823, 4294901760
  %v9083 = vsub.f32 %v3823, %v9082
  %9084 = vmatpush1.msra.mxu0 %v9083
  %9085 = vmatprep.subr.mxu0 0.0
  %9086 = vmatpush1.msra.mxu0 0.0
  %9087 = vmatprep.subr.mxu0 0.0
  %9088 = vmatpush1.msra.mxu0 0.0
  %9089 = vmatprep.subr.mxu0 0.0
  %9090 = vmatpush1.msra.mxu0 0.0
  %9091 = vmatprep.subr.mxu0 0.0
  %9092 = vmatpush1.msra.mxu0 0.0
  %9093 = vmatprep.subr.mxu0 0.0
  %9094 = vmatpush1.msra.mxu0 0.0
  %9095 = vmatprep.subr.mxu0 0.0
  %9096 = vmatpush1.msra.mxu0 0.0
  %9097 = vmatprep.subr.mxu0 0.0
  %9098 = vmatpush1.msra.mxu0 0.0
  %9099 = vmatprep.subr.mxu0 0.0
  %9100 = vmatpush1.msra.mxu0 0.0
  %9101 = vmatprep.subr.mxu0 0.0
  %9102 = vmatpush1.msra.mxu0 0.0
  %9103 = vmatprep.subr.mxu0 0.0
  %9104 = vmatpush1.msra.mxu0 0.0
  %9105 = vmatprep.subr.mxu0 0.0
  %9106 = vmatpush1.msra.mxu0 0.0
  %9107 = vmatprep.subr.mxu0 0.0
  %9108 = vmatpush1.msra.mxu0 0.0
  %9109 = vmatprep.subr.mxu0 0.0
  %9110 = vmatpush1.msra.mxu0 0.0
  %9111 = vmatprep.subr.mxu0 0.0
  %9112 = vmatpush1.msra.mxu0 0.0
  %9113 = vmatprep.subr.mxu0 0.0
  %9114 = vmatpush1.msra.mxu0 0.0
  %9115 = vmatprep.subr.mxu0 0.0
  %9116 = vmatpush1.msra.mxu0 0.0
  %9117 = vmatprep.subr.mxu0 0.0
  %9118 = vmatpush1.msra.mxu0 0.0
  %9119 = vmatprep.subr.mxu0 0.0
  %9120 = vmatpush1.msra.mxu0 0.0
  %9121 = vmatprep.subr.mxu0 0.0
  %9122 = vmatpush1.msra.mxu0 0.0
  %9123 = vmatprep.subr.mxu0 0.0
  %9124 = vmatpush1.msra.mxu0 0.0
  %9125 = vmatprep.subr.mxu0 0.0
  %9126 = vmatpush1.msra.mxu0 0.0
  %9127 = vmatprep.subr.mxu0 0.0
  %9128 = vmatpush1.msra.mxu0 0.0
  %9129 = vmatprep.subr.mxu0 0.0
  %9130 = vmatpush1.msra.mxu0 0.0
  %9131 = vmatprep.subr.mxu0 0.0
  %9132 = vmatpush1.msra.mxu0 0.0
  %9133 = vmatprep.subr.mxu0 0.0
  %9134 = vmatpush1.msra.mxu0 0.0
  %9135 = vmatprep.mubr.f32.mxu0 0.0
  %v9136 = vand.u32 %v3771, 4294901760
  %v9137 = vsub.f32 %v3771, %v9136
  %9138 = vmatmul.mubr.f32.gmra.mrb[0].mxu0 %v9137
  %v9139 = vpop.f32.mrb[0].mxu0
  %v9140 = vadd.f32 %v9039, %v9139
  %v9141 = vpop.f32.mrb[0].mxu0
  %v9142 = vadd.f32 %v9041, %v9141
  %9143 = vdwg.mxu0
  %v9144 = vand.u32 %v3620, 4294901760
  %9145 = vmatprep.subr.mxu0 %v9144
  %v9146 = vand.u32 %v3619, 4294901760
  %9147 = vmatpush1.msra.mxu0 %v9146
  %v9148 = vand.u32 %v3643, 4294901760
  %9149 = vmatprep.subr.mxu0 %v9148
  %v9150 = vand.u32 %v3642, 4294901760
  %9151 = vmatpush1.msra.mxu0 %v9150
  %v9152 = vand.u32 %v3666, 4294901760
  %9153 = vmatprep.subr.mxu0 %v9152
  %v9154 = vand.u32 %v3665, 4294901760
  %9155 = vmatpush1.msra.mxu0 %v9154
  %v9156 = vand.u32 %v3689, 4294901760
  %9157 = vmatprep.subr.mxu0 %v9156
  %v9158 = vand.u32 %v3688, 4294901760
  %9159 = vmatpush1.msra.mxu0 %v9158
  %v9160 = vand.u32 %v3712, 4294901760
  %9161 = vmatprep.subr.mxu0 %v9160
  %v9162 = vand.u32 %v3711, 4294901760
  %9163 = vmatpush1.msra.mxu0 %v9162
  %v9164 = vand.u32 %v3735, 4294901760
  %9165 = vmatprep.subr.mxu0 %v9164
  %v9166 = vand.u32 %v3734, 4294901760
  %9167 = vmatpush1.msra.mxu0 %v9166
  %v9168 = vand.u32 %v3826, 4294901760
  %9169 = vmatprep.subr.mxu0 %v9168
  %v9170 = vand.u32 %v3823, 4294901760
  %9171 = vmatpush1.msra.mxu0 %v9170
  %9172 = vmatprep.subr.mxu0 0.0
  %9173 = vmatpush1.msra.mxu0 0.0
  %9174 = vmatprep.subr.mxu0 0.0
  %9175 = vmatpush1.msra.mxu0 0.0
  %9176 = vmatprep.subr.mxu0 0.0
  %9177 = vmatpush1.msra.mxu0 0.0
  %9178 = vmatprep.subr.mxu0 0.0
  %9179 = vmatpush1.msra.mxu0 0.0
  %9180 = vmatprep.subr.mxu0 0.0
  %9181 = vmatpush1.msra.mxu0 0.0
  %9182 = vmatprep.subr.mxu0 0.0
  %9183 = vmatpush1.msra.mxu0 0.0
  %9184 = vmatprep.subr.mxu0 0.0
  %9185 = vmatpush1.msra.mxu0 0.0
  %9186 = vmatprep.subr.mxu0 0.0
  %9187 = vmatpush1.msra.mxu0 0.0
  %9188 = vmatprep.subr.mxu0 0.0
  %9189 = vmatpush1.msra.mxu0 0.0
  %9190 = vmatprep.subr.mxu0 0.0
  %9191 = vmatpush1.msra.mxu0 0.0
  %9192 = vmatprep.subr.mxu0 0.0
  %9193 = vmatpush1.msra.mxu0 0.0
  %9194 = vmatprep.subr.mxu0 0.0
  %9195 = vmatpush1.msra.mxu0 0.0
  %9196 = vmatprep.subr.mxu0 0.0
  %9197 = vmatpush1.msra.mxu0 0.0
  %9198 = vmatprep.subr.mxu0 0.0
  %9199 = vmatpush1.msra.mxu0 0.0
  %9200 = vmatprep.subr.mxu0 0.0
  %9201 = vmatpush1.msra.mxu0 0.0
  %9202 = vmatprep.subr.mxu0 0.0
  %9203 = vmatpush1.msra.mxu0 0.0
  %9204 = vmatprep.subr.mxu0 0.0
  %9205 = vmatpush1.msra.mxu0 0.0
  %9206 = vmatprep.subr.mxu0 0.0
  %9207 = vmatpush1.msra.mxu0 0.0
  %9208 = vmatprep.subr.mxu0 0.0
  %9209 = vmatpush1.msra.mxu0 0.0
  %9210 = vmatprep.subr.mxu0 0.0
  %9211 = vmatpush1.msra.mxu0 0.0
  %9212 = vmatprep.subr.mxu0 0.0
  %9213 = vmatpush1.msra.mxu0 0.0
  %9214 = vmatprep.subr.mxu0 0.0
  %9215 = vmatpush1.msra.mxu0 0.0
  %9216 = vmatprep.subr.mxu0 0.0
  %9217 = vmatpush1.msra.mxu0 0.0
  %9218 = vmatprep.subr.mxu0 0.0
  %9219 = vmatpush1.msra.mxu0 0.0
  %9220 = vmatprep.subr.mxu0 0.0
  %9221 = vmatpush1.msra.mxu0 0.0
  %9222 = vmatprep.mubr.f32.mxu0 0.0
  %v9223 = vand.u32 %v3771, 4294901760
  %v9224 = vsub.f32 %v3771, %v9223
  %v9225 = vand.u32 %v9224, 4294901760
  %9226 = vmatmul.mubr.f32.gmra.mrb[0].mxu0 %v9225
  %v9227 = vpop.f32.mrb[0].mxu0
  %v9228 = vadd.f32 %v9140, %v9227
  %v9229 = vpop.f32.mrb[0].mxu0
  %v9230 = vadd.f32 %v9142, %v9229
  %9231 = vdwg.mxu0
  %v9232 = vand.u32 %v3620, 4294901760
  %v9233 = vsub.f32 %v3620, %v9232
  %v9234 = vand.u32 %v9233, 4294901760
  %9235 = vmatprep.subr.mxu0 %v9234
  %v9236 = vand.u32 %v3619, 4294901760
  %v9237 = vsub.f32 %v3619, %v9236
  %v9238 = vand.u32 %v9237, 4294901760
  %9239 = vmatpush1.msra.mxu0 %v9238
  %v9240 = vand.u32 %v3643, 4294901760
  %v9241 = vsub.f32 %v3643, %v9240
  %v9242 = vand.u32 %v9241, 4294901760
  %9243 = vmatprep.subr.mxu0 %v9242
  %v9244 = vand.u32 %v3642, 4294901760
  %v9245 = vsub.f32 %v3642, %v9244
  %v9246 = vand.u32 %v9245, 4294901760
  %9247 = vmatpush1.msra.mxu0 %v9246
  %v9248 = vand.u32 %v3666, 4294901760
  %v9249 = vsub.f32 %v3666, %v9248
  %v9250 = vand.u32 %v9249, 4294901760
  %9251 = vmatprep.subr.mxu0 %v9250
  %v9252 = vand.u32 %v3665, 4294901760
  %v9253 = vsub.f32 %v3665, %v9252
  %v9254 = vand.u32 %v9253, 4294901760
  %9255 = vmatpush1.msra.mxu0 %v9254
  %v9256 = vand.u32 %v3689, 4294901760
  %v9257 = vsub.f32 %v3689, %v9256
  %v9258 = vand.u32 %v9257, 4294901760
  %9259 = vmatprep.subr.mxu0 %v9258
  %v9260 = vand.u32 %v3688, 4294901760
  %v9261 = vsub.f32 %v3688, %v9260
  %v9262 = vand.u32 %v9261, 4294901760
  %9263 = vmatpush1.msra.mxu0 %v9262
  %v9264 = vand.u32 %v3712, 4294901760
  %v9265 = vsub.f32 %v3712, %v9264
  %v9266 = vand.u32 %v9265, 4294901760
  %9267 = vmatprep.subr.mxu0 %v9266
  %v9268 = vand.u32 %v3711, 4294901760
  %v9269 = vsub.f32 %v3711, %v9268
  %v9270 = vand.u32 %v9269, 4294901760
  %9271 = vmatpush1.msra.mxu0 %v9270
  %v9272 = vand.u32 %v3735, 4294901760
  %v9273 = vsub.f32 %v3735, %v9272
  %v9274 = vand.u32 %v9273, 4294901760
  %9275 = vmatprep.subr.mxu0 %v9274
  %v9276 = vand.u32 %v3734, 4294901760
  %v9277 = vsub.f32 %v3734, %v9276
  %v9278 = vand.u32 %v9277, 4294901760
  %9279 = vmatpush1.msra.mxu0 %v9278
  %v9280 = vand.u32 %v3826, 4294901760
  %v9281 = vsub.f32 %v3826, %v9280
  %v9282 = vand.u32 %v9281, 4294901760
  %9283 = vmatprep.subr.mxu0 %v9282
  %v9284 = vand.u32 %v3823, 4294901760
  %v9285 = vsub.f32 %v3823, %v9284
  %v9286 = vand.u32 %v9285, 4294901760
  %9287 = vmatpush1.msra.mxu0 %v9286
  %9288 = vmatprep.subr.mxu0 0.0
  %9289 = vmatpush1.msra.mxu0 0.0
  %9290 = vmatprep.subr.mxu0 0.0
  %9291 = vmatpush1.msra.mxu0 0.0
  %9292 = vmatprep.subr.mxu0 0.0
  %9293 = vmatpush1.msra.mxu0 0.0
  %9294 = vmatprep.subr.mxu0 0.0
  %9295 = vmatpush1.msra.mxu0 0.0
  %9296 = vmatprep.subr.mxu0 0.0
  %9297 = vmatpush1.msra.mxu0 0.0
  %9298 = vmatprep.subr.mxu0 0.0
  %9299 = vmatpush1.msra.mxu0 0.0
  %9300 = vmatprep.subr.mxu0 0.0
  %9301 = vmatpush1.msra.mxu0 0.0
  %9302 = vmatprep.subr.mxu0 0.0
  %9303 = vmatpush1.msra.mxu0 0.0
  %9304 = vmatprep.subr.mxu0 0.0
  %9305 = vmatpush1.msra.mxu0 0.0
  %9306 = vmatprep.subr.mxu0 0.0
  %9307 = vmatpush1.msra.mxu0 0.0
  %9308 = vmatprep.subr.mxu0 0.0
  %9309 = vmatpush1.msra.mxu0 0.0
  %9310 = vmatprep.subr.mxu0 0.0
  %9311 = vmatpush1.msra.mxu0 0.0
  %9312 = vmatprep.subr.mxu0 0.0
  %9313 = vmatpush1.msra.mxu0 0.0
  %9314 = vmatprep.subr.mxu0 0.0
  %9315 = vmatpush1.msra.mxu0 0.0
  %9316 = vmatprep.subr.mxu0 0.0
  %9317 = vmatpush1.msra.mxu0 0.0
  %9318 = vmatprep.subr.mxu0 0.0
  %9319 = vmatpush1.msra.mxu0 0.0
  %9320 = vmatprep.subr.mxu0 0.0
  %9321 = vmatpush1.msra.mxu0 0.0
  %9322 = vmatprep.subr.mxu0 0.0
  %9323 = vmatpush1.msra.mxu0 0.0
  %9324 = vmatprep.subr.mxu0 0.0
  %9325 = vmatpush1.msra.mxu0 0.0
  %9326 = vmatprep.subr.mxu0 0.0
  %9327 = vmatpush1.msra.mxu0 0.0
  %9328 = vmatprep.subr.mxu0 0.0
  %9329 = vmatpush1.msra.mxu0 0.0
  %9330 = vmatprep.subr.mxu0 0.0
  %9331 = vmatpush1.msra.mxu0 0.0
  %9332 = vmatprep.subr.mxu0 0.0
  %9333 = vmatpush1.msra.mxu0 0.0
  %9334 = vmatprep.subr.mxu0 0.0
  %9335 = vmatpush1.msra.mxu0 0.0
  %9336 = vmatprep.subr.mxu0 0.0
  %9337 = vmatpush1.msra.mxu0 0.0
  %9338 = vmatprep.mubr.f32.mxu0 0.0
  %v9339 = vand.u32 %v3771, 4294901760
  %9340 = vmatmul.mubr.f32.gmra.mrb[0].mxu0 %v9339
  %v9341 = vpop.f32.mrb[0].mxu0
  %v9342 = vadd.f32 %v9228, %v9341
  %v9343 = vpop.f32.mrb[0].mxu0
  %v9344 = vadd.f32 %v9230, %v9343
  %9345 = vdwg.mxu0
  %v9346 = vand.u32 %v3620, 4294901760
  %9347 = vmatprep.subr.mxu0 %v9346
  %v9348 = vand.u32 %v3619, 4294901760
  %9349 = vmatpush1.msra.mxu0 %v9348
  %v9350 = vand.u32 %v3643, 4294901760
  %9351 = vmatprep.subr.mxu0 %v9350
  %v9352 = vand.u32 %v3642, 4294901760
  %9353 = vmatpush1.msra.mxu0 %v9352
  %v9354 = vand.u32 %v3666, 4294901760
  %9355 = vmatprep.subr.mxu0 %v9354
  %v9356 = vand.u32 %v3665, 4294901760
  %9357 = vmatpush1.msra.mxu0 %v9356
  %v9358 = vand.u32 %v3689, 4294901760
  %9359 = vmatprep.subr.mxu0 %v9358
  %v9360 = vand.u32 %v3688, 4294901760
  %9361 = vmatpush1.msra.mxu0 %v9360
  %v9362 = vand.u32 %v3712, 4294901760
  %9363 = vmatprep.subr.mxu0 %v9362
  %v9364 = vand.u32 %v3711, 4294901760
  %9365 = vmatpush1.msra.mxu0 %v9364
  %v9366 = vand.u32 %v3735, 4294901760
  %9367 = vmatprep.subr.mxu0 %v9366
  %v9368 = vand.u32 %v3734, 4294901760
  %9369 = vmatpush1.msra.mxu0 %v9368
  %v9370 = vand.u32 %v3826, 4294901760
  %9371 = vmatprep.subr.mxu0 %v9370
  %v9372 = vand.u32 %v3823, 4294901760
  %9373 = vmatpush1.msra.mxu0 %v9372
  %9374 = vmatprep.subr.mxu0 0.0
  %9375 = vmatpush1.msra.mxu0 0.0
  %9376 = vmatprep.subr.mxu0 0.0
  %9377 = vmatpush1.msra.mxu0 0.0
  %9378 = vmatprep.subr.mxu0 0.0
  %9379 = vmatpush1.msra.mxu0 0.0
  %9380 = vmatprep.subr.mxu0 0.0
  %9381 = vmatpush1.msra.mxu0 0.0
  %9382 = vmatprep.subr.mxu0 0.0
  %9383 = vmatpush1.msra.mxu0 0.0
  %9384 = vmatprep.subr.mxu0 0.0
  %9385 = vmatpush1.msra.mxu0 0.0
  %9386 = vmatprep.subr.mxu0 0.0
  %9387 = vmatpush1.msra.mxu0 0.0
  %9388 = vmatprep.subr.mxu0 0.0
  %9389 = vmatpush1.msra.mxu0 0.0
  %9390 = vmatprep.subr.mxu0 0.0
  %9391 = vmatpush1.msra.mxu0 0.0
  %9392 = vmatprep.subr.mxu0 0.0
  %9393 = vmatpush1.msra.mxu0 0.0
  %9394 = vmatprep.subr.mxu0 0.0
  %9395 = vmatpush1.msra.mxu0 0.0
  %9396 = vmatprep.subr.mxu0 0.0
  %9397 = vmatpush1.msra.mxu0 0.0
  %9398 = vmatprep.subr.mxu0 0.0
  %9399 = vmatpush1.msra.mxu0 0.0
  %9400 = vmatprep.subr.mxu0 0.0
  %9401 = vmatpush1.msra.mxu0 0.0
  %9402 = vmatprep.subr.mxu0 0.0
  %9403 = vmatpush1.msra.mxu0 0.0
  %9404 = vmatprep.subr.mxu0 0.0
  %9405 = vmatpush1.msra.mxu0 0.0
  %9406 = vmatprep.subr.mxu0 0.0
  %9407 = vmatpush1.msra.mxu0 0.0
  %9408 = vmatprep.subr.mxu0 0.0
  %9409 = vmatpush1.msra.mxu0 0.0
  %9410 = vmatprep.subr.mxu0 0.0
  %9411 = vmatpush1.msra.mxu0 0.0
  %9412 = vmatprep.subr.mxu0 0.0
  %9413 = vmatpush1.msra.mxu0 0.0
  %9414 = vmatprep.subr.mxu0 0.0
  %9415 = vmatpush1.msra.mxu0 0.0
  %9416 = vmatprep.subr.mxu0 0.0
  %9417 = vmatpush1.msra.mxu0 0.0
  %9418 = vmatprep.subr.mxu0 0.0
  %9419 = vmatpush1.msra.mxu0 0.0
  %9420 = vmatprep.subr.mxu0 0.0
  %9421 = vmatpush1.msra.mxu0 0.0
  %9422 = vmatprep.subr.mxu0 0.0
  %9423 = vmatpush1.msra.mxu0 0.0
  %9424 = vmatprep.mubr.f32.mxu0 0.0
  %v9425 = vand.u32 %v3771, 4294901760
  %9426 = vmatmul.mubr.f32.gmra.mrb[0].mxu0 %v9425
  %v9427 = vpop.f32.mrb[0].mxu0
  %v9428 = vadd.f32 %v9342, %v9427
  %v9429 = vpop.f32.mrb[0].mxu0
  %v9430 = vadd.f32 %v9344, %v9429
  %9431 = vdwg.mxu0
  %v9432 = vand.u32 %v3622, 4294901760
  %9433 = vmatprep.subr.mxu0 %v9432
  %v9434 = vand.u32 %v3621, 4294901760
  %9435 = vmatpush1.msra.mxu0 %v9434
  %v9436 = vand.u32 %v3645, 4294901760
  %9437 = vmatprep.subr.mxu0 %v9436
  %v9438 = vand.u32 %v3644, 4294901760
  %9439 = vmatpush1.msra.mxu0 %v9438
  %v9440 = vand.u32 %v3668, 4294901760
  %9441 = vmatprep.subr.mxu0 %v9440
  %v9442 = vand.u32 %v3667, 4294901760
  %9443 = vmatpush1.msra.mxu0 %v9442
  %v9444 = vand.u32 %v3691, 4294901760
  %9445 = vmatprep.subr.mxu0 %v9444
  %v9446 = vand.u32 %v3690, 4294901760
  %9447 = vmatpush1.msra.mxu0 %v9446
  %v9448 = vand.u32 %v3714, 4294901760
  %9449 = vmatprep.subr.mxu0 %v9448
  %v9450 = vand.u32 %v3713, 4294901760
  %9451 = vmatpush1.msra.mxu0 %v9450
  %v9452 = vand.u32 %v3737, 4294901760
  %9453 = vmatprep.subr.mxu0 %v9452
  %v9454 = vand.u32 %v3736, 4294901760
  %9455 = vmatpush1.msra.mxu0 %v9454
  %v9456 = vand.u32 %v3832, 4294901760
  %9457 = vmatprep.subr.mxu0 %v9456
  %v9458 = vand.u32 %v3829, 4294901760
  %9459 = vmatpush1.msra.mxu0 %v9458
  %9460 = vmatprep.subr.mxu0 0.0
  %9461 = vmatpush1.msra.mxu0 0.0
  %9462 = vmatprep.subr.mxu0 0.0
  %9463 = vmatpush1.msra.mxu0 0.0
  %9464 = vmatprep.subr.mxu0 0.0
  %9465 = vmatpush1.msra.mxu0 0.0
  %9466 = vmatprep.subr.mxu0 0.0
  %9467 = vmatpush1.msra.mxu0 0.0
  %9468 = vmatprep.subr.mxu0 0.0
  %9469 = vmatpush1.msra.mxu0 0.0
  %9470 = vmatprep.subr.mxu0 0.0
  %9471 = vmatpush1.msra.mxu0 0.0
  %9472 = vmatprep.subr.mxu0 0.0
  %9473 = vmatpush1.msra.mxu0 0.0
  %9474 = vmatprep.subr.mxu0 0.0
  %9475 = vmatpush1.msra.mxu0 0.0
  %9476 = vmatprep.subr.mxu0 0.0
  %9477 = vmatpush1.msra.mxu0 0.0
  %9478 = vmatprep.subr.mxu0 0.0
  %9479 = vmatpush1.msra.mxu0 0.0
  %9480 = vmatprep.subr.mxu0 0.0
  %9481 = vmatpush1.msra.mxu0 0.0
  %9482 = vmatprep.subr.mxu0 0.0
  %9483 = vmatpush1.msra.mxu0 0.0
  %9484 = vmatprep.subr.mxu0 0.0
  %9485 = vmatpush1.msra.mxu0 0.0
  %9486 = vmatprep.subr.mxu0 0.0
  %9487 = vmatpush1.msra.mxu0 0.0
  %9488 = vmatprep.subr.mxu0 0.0
  %9489 = vmatpush1.msra.mxu0 0.0
  %9490 = vmatprep.subr.mxu0 0.0
  %9491 = vmatpush1.msra.mxu0 0.0
  %9492 = vmatprep.subr.mxu0 0.0
  %9493 = vmatpush1.msra.mxu0 0.0
  %9494 = vmatprep.subr.mxu0 0.0
  %9495 = vmatpush1.msra.mxu0 0.0
  %9496 = vmatprep.subr.mxu0 0.0
  %9497 = vmatpush1.msra.mxu0 0.0
  %9498 = vmatprep.subr.mxu0 0.0
  %9499 = vmatpush1.msra.mxu0 0.0
  %9500 = vmatprep.subr.mxu0 0.0
  %9501 = vmatpush1.msra.mxu0 0.0
  %9502 = vmatprep.subr.mxu0 0.0
  %9503 = vmatpush1.msra.mxu0 0.0
  %9504 = vmatprep.subr.mxu0 0.0
  %9505 = vmatpush1.msra.mxu0 0.0
  %9506 = vmatprep.subr.mxu0 0.0
  %9507 = vmatpush1.msra.mxu0 0.0
  %9508 = vmatprep.subr.mxu0 0.0
  %9509 = vmatpush1.msra.mxu0 0.0
  %9510 = vmatprep.mubr.f32.mxu0 0.0
  %v9511 = vand.u32 %v3771, 4294901760
  %v9512 = vsub.f32 %v3771, %v9511
  %v9513 = vand.u32 %v9512, 4294901760
  %v9514 = vsub.f32 %v9512, %v9513
  %v9515 = vand.u32 %v9514, 4294901760
  %9516 = vmatmul.mubr.f32.gmra.mrb[0].mxu0 %v9515
  %v9517 = vpop.f32.mrb[0].mxu0
  %v9518 = vadd.f32 %v3768, %v9517
  %v9519 = vpop.f32.mrb[0].mxu0
  %v9520 = vadd.f32 %v3768, %v9519
  %9521 = vdwg.mxu0
  %v9522 = vand.u32 %v3622, 4294901760
  %v9523 = vsub.f32 %v3622, %v9522
  %v9524 = vand.u32 %v9523, 4294901760
  %v9525 = vsub.f32 %v9523, %v9524
  %v9526 = vand.u32 %v9525, 4294901760
  %9527 = vmatprep.subr.mxu0 %v9526
  %v9528 = vand.u32 %v3621, 4294901760
  %v9529 = vsub.f32 %v3621, %v9528
  %v9530 = vand.u32 %v9529, 4294901760
  %v9531 = vsub.f32 %v9529, %v9530
  %v9532 = vand.u32 %v9531, 4294901760
  %9533 = vmatpush1.msra.mxu0 %v9532
  %v9534 = vand.u32 %v3645, 4294901760
  %v9535 = vsub.f32 %v3645, %v9534
  %v9536 = vand.u32 %v9535, 4294901760
  %v9537 = vsub.f32 %v9535, %v9536
  %v9538 = vand.u32 %v9537, 4294901760
  %9539 = vmatprep.subr.mxu0 %v9538
  %v9540 = vand.u32 %v3644, 4294901760
  %v9541 = vsub.f32 %v3644, %v9540
  %v9542 = vand.u32 %v9541, 4294901760
  %v9543 = vsub.f32 %v9541, %v9542
  %v9544 = vand.u32 %v9543, 4294901760
  %9545 = vmatpush1.msra.mxu0 %v9544
  %v9546 = vand.u32 %v3668, 4294901760
  %v9547 = vsub.f32 %v3668, %v9546
  %v9548 = vand.u32 %v9547, 4294901760
  %v9549 = vsub.f32 %v9547, %v9548
  %v9550 = vand.u32 %v9549, 4294901760
  %9551 = vmatprep.subr.mxu0 %v9550
  %v9552 = vand.u32 %v3667, 4294901760
  %v9553 = vsub.f32 %v3667, %v9552
  %v9554 = vand.u32 %v9553, 4294901760
  %v9555 = vsub.f32 %v9553, %v9554
  %v9556 = vand.u32 %v9555, 4294901760
  %9557 = vmatpush1.msra.mxu0 %v9556
  %v9558 = vand.u32 %v3691, 4294901760
  %v9559 = vsub.f32 %v3691, %v9558
  %v9560 = vand.u32 %v9559, 4294901760
  %v9561 = vsub.f32 %v9559, %v9560
  %v9562 = vand.u32 %v9561, 4294901760
  %9563 = vmatprep.subr.mxu0 %v9562
  %v9564 = vand.u32 %v3690, 4294901760
  %v9565 = vsub.f32 %v3690, %v9564
  %v9566 = vand.u32 %v9565, 4294901760
  %v9567 = vsub.f32 %v9565, %v9566
  %v9568 = vand.u32 %v9567, 4294901760
  %9569 = vmatpush1.msra.mxu0 %v9568
  %v9570 = vand.u32 %v3714, 4294901760
  %v9571 = vsub.f32 %v3714, %v9570
  %v9572 = vand.u32 %v9571, 4294901760
  %v9573 = vsub.f32 %v9571, %v9572
  %v9574 = vand.u32 %v9573, 4294901760
  %9575 = vmatprep.subr.mxu0 %v9574
  %v9576 = vand.u32 %v3713, 4294901760
  %v9577 = vsub.f32 %v3713, %v9576
  %v9578 = vand.u32 %v9577, 4294901760
  %v9579 = vsub.f32 %v9577, %v9578
  %v9580 = vand.u32 %v9579, 4294901760
  %9581 = vmatpush1.msra.mxu0 %v9580
  %v9582 = vand.u32 %v3737, 4294901760
  %v9583 = vsub.f32 %v3737, %v9582
  %v9584 = vand.u32 %v9583, 4294901760
  %v9585 = vsub.f32 %v9583, %v9584
  %v9586 = vand.u32 %v9585, 4294901760
  %9587 = vmatprep.subr.mxu0 %v9586
  %v9588 = vand.u32 %v3736, 4294901760
  %v9589 = vsub.f32 %v3736, %v9588
  %v9590 = vand.u32 %v9589, 4294901760
  %v9591 = vsub.f32 %v9589, %v9590
  %v9592 = vand.u32 %v9591, 4294901760
  %9593 = vmatpush1.msra.mxu0 %v9592
  %v9594 = vand.u32 %v3832, 4294901760
  %v9595 = vsub.f32 %v3832, %v9594
  %v9596 = vand.u32 %v9595, 4294901760
  %v9597 = vsub.f32 %v9595, %v9596
  %v9598 = vand.u32 %v9597, 4294901760
  %9599 = vmatprep.subr.mxu0 %v9598
  %v9600 = vand.u32 %v3829, 4294901760
  %v9601 = vsub.f32 %v3829, %v9600
  %v9602 = vand.u32 %v9601, 4294901760
  %v9603 = vsub.f32 %v9601, %v9602
  %v9604 = vand.u32 %v9603, 4294901760
  %9605 = vmatpush1.msra.mxu0 %v9604
  %9606 = vmatprep.subr.mxu0 0.0
  %9607 = vmatpush1.msra.mxu0 0.0
  %9608 = vmatprep.subr.mxu0 0.0
  %9609 = vmatpush1.msra.mxu0 0.0
  %9610 = vmatprep.subr.mxu0 0.0
  %9611 = vmatpush1.msra.mxu0 0.0
  %9612 = vmatprep.subr.mxu0 0.0
  %9613 = vmatpush1.msra.mxu0 0.0
  %9614 = vmatprep.subr.mxu0 0.0
  %9615 = vmatpush1.msra.mxu0 0.0
  %9616 = vmatprep.subr.mxu0 0.0
  %9617 = vmatpush1.msra.mxu0 0.0
  %9618 = vmatprep.subr.mxu0 0.0
  %9619 = vmatpush1.msra.mxu0 0.0
  %9620 = vmatprep.subr.mxu0 0.0
  %9621 = vmatpush1.msra.mxu0 0.0
  %9622 = vmatprep.subr.mxu0 0.0
  %9623 = vmatpush1.msra.mxu0 0.0
  %9624 = vmatprep.subr.mxu0 0.0
  %9625 = vmatpush1.msra.mxu0 0.0
  %9626 = vmatprep.subr.mxu0 0.0
  %9627 = vmatpush1.msra.mxu0 0.0
  %9628 = vmatprep.subr.mxu0 0.0
  %9629 = vmatpush1.msra.mxu0 0.0
  %9630 = vmatprep.subr.mxu0 0.0
  %9631 = vmatpush1.msra.mxu0 0.0
  %9632 = vmatprep.subr.mxu0 0.0
  %9633 = vmatpush1.msra.mxu0 0.0
  %9634 = vmatprep.subr.mxu0 0.0
  %9635 = vmatpush1.msra.mxu0 0.0
  %9636 = vmatprep.subr.mxu0 0.0
  %9637 = vmatpush1.msra.mxu0 0.0
  %9638 = vmatprep.subr.mxu0 0.0
  %9639 = vmatpush1.msra.mxu0 0.0
  %9640 = vmatprep.subr.mxu0 0.0
  %9641 = vmatpush1.msra.mxu0 0.0
  %9642 = vmatprep.subr.mxu0 0.0
  %9643 = vmatpush1.msra.mxu0 0.0
  %9644 = vmatprep.subr.mxu0 0.0
  %9645 = vmatpush1.msra.mxu0 0.0
  %9646 = vmatprep.subr.mxu0 0.0
  %9647 = vmatpush1.msra.mxu0 0.0
  %9648 = vmatprep.subr.mxu0 0.0
  %9649 = vmatpush1.msra.mxu0 0.0
  %9650 = vmatprep.subr.mxu0 0.0
  %9651 = vmatpush1.msra.mxu0 0.0
  %9652 = vmatprep.subr.mxu0 0.0
  %9653 = vmatpush1.msra.mxu0 0.0
  %9654 = vmatprep.subr.mxu0 0.0
  %9655 = vmatpush1.msra.mxu0 0.0
  %9656 = vmatprep.mubr.f32.mxu0 0.0
  %v9657 = vand.u32 %v3771, 4294901760
  %9658 = vmatmul.mubr.f32.gmra.mrb[0].mxu0 %v9657
  %v9659 = vpop.f32.mrb[0].mxu0
  %v9660 = vadd.f32 %v9518, %v9659
  %v9661 = vpop.f32.mrb[0].mxu0
  %v9662 = vadd.f32 %v9520, %v9661
  %9663 = vdwg.mxu0
  %v9664 = vand.u32 %v3622, 4294901760
  %v9665 = vsub.f32 %v3622, %v9664
  %9666 = vmatprep.subr.mxu0 %v9665
  %v9667 = vand.u32 %v3621, 4294901760
  %v9668 = vsub.f32 %v3621, %v9667
  %9669 = vmatpush1.msra.mxu0 %v9668
  %v9670 = vand.u32 %v3645, 4294901760
  %v9671 = vsub.f32 %v3645, %v9670
  %9672 = vmatprep.subr.mxu0 %v9671
  %v9673 = vand.u32 %v3644, 4294901760
  %v9674 = vsub.f32 %v3644, %v9673
  %9675 = vmatpush1.msra.mxu0 %v9674
  %v9676 = vand.u32 %v3668, 4294901760
  %v9677 = vsub.f32 %v3668, %v9676
  %9678 = vmatprep.subr.mxu0 %v9677
  %v9679 = vand.u32 %v3667, 4294901760
  %v9680 = vsub.f32 %v3667, %v9679
  %9681 = vmatpush1.msra.mxu0 %v9680
  %v9682 = vand.u32 %v3691, 4294901760
  %v9683 = vsub.f32 %v3691, %v9682
  %9684 = vmatprep.subr.mxu0 %v9683
  %v9685 = vand.u32 %v3690, 4294901760
  %v9686 = vsub.f32 %v3690, %v9685
  %9687 = vmatpush1.msra.mxu0 %v9686
  %v9688 = vand.u32 %v3714, 4294901760
  %v9689 = vsub.f32 %v3714, %v9688
  %9690 = vmatprep.subr.mxu0 %v9689
  %v9691 = vand.u32 %v3713, 4294901760
  %v9692 = vsub.f32 %v3713, %v9691
  %9693 = vmatpush1.msra.mxu0 %v9692
  %v9694 = vand.u32 %v3737, 4294901760
  %v9695 = vsub.f32 %v3737, %v9694
  %9696 = vmatprep.subr.mxu0 %v9695
  %v9697 = vand.u32 %v3736, 4294901760
  %v9698 = vsub.f32 %v3736, %v9697
  %9699 = vmatpush1.msra.mxu0 %v9698
  %v9700 = vand.u32 %v3832, 4294901760
  %v9701 = vsub.f32 %v3832, %v9700
  %9702 = vmatprep.subr.mxu0 %v9701
  %v9703 = vand.u32 %v3829, 4294901760
  %v9704 = vsub.f32 %v3829, %v9703
  %9705 = vmatpush1.msra.mxu0 %v9704
  %9706 = vmatprep.subr.mxu0 0.0
  %9707 = vmatpush1.msra.mxu0 0.0
  %9708 = vmatprep.subr.mxu0 0.0
  %9709 = vmatpush1.msra.mxu0 0.0
  %9710 = vmatprep.subr.mxu0 0.0
  %9711 = vmatpush1.msra.mxu0 0.0
  %9712 = vmatprep.subr.mxu0 0.0
  %9713 = vmatpush1.msra.mxu0 0.0
  %9714 = vmatprep.subr.mxu0 0.0
  %9715 = vmatpush1.msra.mxu0 0.0
  %9716 = vmatprep.subr.mxu0 0.0
  %9717 = vmatpush1.msra.mxu0 0.0
  %9718 = vmatprep.subr.mxu0 0.0
  %9719 = vmatpush1.msra.mxu0 0.0
  %9720 = vmatprep.subr.mxu0 0.0
  %9721 = vmatpush1.msra.mxu0 0.0
  %9722 = vmatprep.subr.mxu0 0.0
  %9723 = vmatpush1.msra.mxu0 0.0
  %9724 = vmatprep.subr.mxu0 0.0
  %9725 = vmatpush1.msra.mxu0 0.0
  %9726 = vmatprep.subr.mxu0 0.0
  %9727 = vmatpush1.msra.mxu0 0.0
  %9728 = vmatprep.subr.mxu0 0.0
  %9729 = vmatpush1.msra.mxu0 0.0
  %9730 = vmatprep.subr.mxu0 0.0
  %9731 = vmatpush1.msra.mxu0 0.0
  %9732 = vmatprep.subr.mxu0 0.0
  %9733 = vmatpush1.msra.mxu0 0.0
  %9734 = vmatprep.subr.mxu0 0.0
  %9735 = vmatpush1.msra.mxu0 0.0
  %9736 = vmatprep.subr.mxu0 0.0
  %9737 = vmatpush1.msra.mxu0 0.0
  %9738 = vmatprep.subr.mxu0 0.0
  %9739 = vmatpush1.msra.mxu0 0.0
  %9740 = vmatprep.subr.mxu0 0.0
  %9741 = vmatpush1.msra.mxu0 0.0
  %9742 = vmatprep.subr.mxu0 0.0
  %9743 = vmatpush1.msra.mxu0 0.0
  %9744 = vmatprep.subr.mxu0 0.0
  %9745 = vmatpush1.msra.mxu0 0.0
  %9746 = vmatprep.subr.mxu0 0.0
  %9747 = vmatpush1.msra.mxu0 0.0
  %9748 = vmatprep.subr.mxu0 0.0
  %9749 = vmatpush1.msra.mxu0 0.0
  %9750 = vmatprep.subr.mxu0 0.0
  %9751 = vmatpush1.msra.mxu0 0.0
  %9752 = vmatprep.subr.mxu0 0.0
  %9753 = vmatpush1.msra.mxu0 0.0
  %9754 = vmatprep.subr.mxu0 0.0
  %9755 = vmatpush1.msra.mxu0 0.0
  %9756 = vmatprep.mubr.f32.mxu0 0.0
  %v9757 = vand.u32 %v3771, 4294901760
  %v9758 = vsub.f32 %v3771, %v9757
  %9759 = vmatmul.mubr.f32.gmra.mrb[0].mxu0 %v9758
  %v9760 = vpop.f32.mrb[0].mxu0
  %v9761 = vadd.f32 %v9660, %v9760
  %v9762 = vpop.f32.mrb[0].mxu0
  %v9763 = vadd.f32 %v9662, %v9762
  %9764 = vdwg.mxu0
  %v9765 = vand.u32 %v3622, 4294901760
  %9766 = vmatprep.subr.mxu0 %v9765
  %v9767 = vand.u32 %v3621, 4294901760
  %9768 = vmatpush1.msra.mxu0 %v9767
  %v9769 = vand.u32 %v3645, 4294901760
  %9770 = vmatprep.subr.mxu0 %v9769
  %v9771 = vand.u32 %v3644, 4294901760
  %9772 = vmatpush1.msra.mxu0 %v9771
  %v9773 = vand.u32 %v3668, 4294901760
  %9774 = vmatprep.subr.mxu0 %v9773
  %v9775 = vand.u32 %v3667, 4294901760
  %9776 = vmatpush1.msra.mxu0 %v9775
  %v9777 = vand.u32 %v3691, 4294901760
  %9778 = vmatprep.subr.mxu0 %v9777
  %v9779 = vand.u32 %v3690, 4294901760
  %9780 = vmatpush1.msra.mxu0 %v9779
  %v9781 = vand.u32 %v3714, 4294901760
  %9782 = vmatprep.subr.mxu0 %v9781
  %v9783 = vand.u32 %v3713, 4294901760
  %9784 = vmatpush1.msra.mxu0 %v9783
  %v9785 = vand.u32 %v3737, 4294901760
  %9786 = vmatprep.subr.mxu0 %v9785
  %v9787 = vand.u32 %v3736, 4294901760
  %9788 = vmatpush1.msra.mxu0 %v9787
  %v9789 = vand.u32 %v3832, 4294901760
  %9790 = vmatprep.subr.mxu0 %v9789
  %v9791 = vand.u32 %v3829, 4294901760
  %9792 = vmatpush1.msra.mxu0 %v9791
  %9793 = vmatprep.subr.mxu0 0.0
  %9794 = vmatpush1.msra.mxu0 0.0
  %9795 = vmatprep.subr.mxu0 0.0
  %9796 = vmatpush1.msra.mxu0 0.0
  %9797 = vmatprep.subr.mxu0 0.0
  %9798 = vmatpush1.msra.mxu0 0.0
  %9799 = vmatprep.subr.mxu0 0.0
  %9800 = vmatpush1.msra.mxu0 0.0
  %9801 = vmatprep.subr.mxu0 0.0
  %9802 = vmatpush1.msra.mxu0 0.0
  %9803 = vmatprep.subr.mxu0 0.0
  %9804 = vmatpush1.msra.mxu0 0.0
  %9805 = vmatprep.subr.mxu0 0.0
  %9806 = vmatpush1.msra.mxu0 0.0
  %9807 = vmatprep.subr.mxu0 0.0
  %9808 = vmatpush1.msra.mxu0 0.0
  %9809 = vmatprep.subr.mxu0 0.0
  %9810 = vmatpush1.msra.mxu0 0.0
  %9811 = vmatprep.subr.mxu0 0.0
  %9812 = vmatpush1.msra.mxu0 0.0
  %9813 = vmatprep.subr.mxu0 0.0
  %9814 = vmatpush1.msra.mxu0 0.0
  %9815 = vmatprep.subr.mxu0 0.0
  %9816 = vmatpush1.msra.mxu0 0.0
  %9817 = vmatprep.subr.mxu0 0.0
  %9818 = vmatpush1.msra.mxu0 0.0
  %9819 = vmatprep.subr.mxu0 0.0
  %9820 = vmatpush1.msra.mxu0 0.0
  %9821 = vmatprep.subr.mxu0 0.0
  %9822 = vmatpush1.msra.mxu0 0.0
  %9823 = vmatprep.subr.mxu0 0.0
  %9824 = vmatpush1.msra.mxu0 0.0
  %9825 = vmatprep.subr.mxu0 0.0
  %9826 = vmatpush1.msra.mxu0 0.0
  %9827 = vmatprep.subr.mxu0 0.0
  %9828 = vmatpush1.msra.mxu0 0.0
  %9829 = vmatprep.subr.mxu0 0.0
  %9830 = vmatpush1.msra.mxu0 0.0
  %9831 = vmatprep.subr.mxu0 0.0
  %9832 = vmatpush1.msra.mxu0 0.0
  %9833 = vmatprep.subr.mxu0 0.0
  %9834 = vmatpush1.msra.mxu0 0.0
  %9835 = vmatprep.subr.mxu0 0.0
  %9836 = vmatpush1.msra.mxu0 0.0
  %9837 = vmatprep.subr.mxu0 0.0
  %9838 = vmatpush1.msra.mxu0 0.0
  %9839 = vmatprep.subr.mxu0 0.0
  %9840 = vmatpush1.msra.mxu0 0.0
  %9841 = vmatprep.subr.mxu0 0.0
  %9842 = vmatpush1.msra.mxu0 0.0
  %9843 = vmatprep.mubr.f32.mxu0 0.0
  %v9844 = vand.u32 %v3771, 4294901760
  %v9845 = vsub.f32 %v3771, %v9844
  %v9846 = vand.u32 %v9845, 4294901760
  %9847 = vmatmul.mubr.f32.gmra.mrb[0].mxu0 %v9846
  %v9848 = vpop.f32.mrb[0].mxu0
  %v9849 = vadd.f32 %v9761, %v9848
  %v9850 = vpop.f32.mrb[0].mxu0
  %v9851 = vadd.f32 %v9763, %v9850
  %9852 = vdwg.mxu0
  %v9853 = vand.u32 %v3622, 4294901760
  %v9854 = vsub.f32 %v3622, %v9853
  %v9855 = vand.u32 %v9854, 4294901760
  %9856 = vmatprep.subr.mxu0 %v9855
  %v9857 = vand.u32 %v3621, 4294901760
  %v9858 = vsub.f32 %v3621, %v9857
  %v9859 = vand.u32 %v9858, 4294901760
  %9860 = vmatpush1.msra.mxu0 %v9859
  %v9861 = vand.u32 %v3645, 4294901760
  %v9862 = vsub.f32 %v3645, %v9861
  %v9863 = vand.u32 %v9862, 4294901760
  %9864 = vmatprep.subr.mxu0 %v9863
  %v9865 = vand.u32 %v3644, 4294901760
  %v9866 = vsub.f32 %v3644, %v9865
  %v9867 = vand.u32 %v9866, 4294901760
  %9868 = vmatpush1.msra.mxu0 %v9867
  %v9869 = vand.u32 %v3668, 4294901760
  %v9870 = vsub.f32 %v3668, %v9869
  %v9871 = vand.u32 %v9870, 4294901760
  %9872 = vmatprep.subr.mxu0 %v9871
  %v9873 = vand.u32 %v3667, 4294901760
  %v9874 = vsub.f32 %v3667, %v9873
  %v9875 = vand.u32 %v9874, 4294901760
  %9876 = vmatpush1.msra.mxu0 %v9875
  %v9877 = vand.u32 %v3691, 4294901760
  %v9878 = vsub.f32 %v3691, %v9877
  %v9879 = vand.u32 %v9878, 4294901760
  %9880 = vmatprep.subr.mxu0 %v9879
  %v9881 = vand.u32 %v3690, 4294901760
  %v9882 = vsub.f32 %v3690, %v9881
  %v9883 = vand.u32 %v9882, 4294901760
  %9884 = vmatpush1.msra.mxu0 %v9883
  %v9885 = vand.u32 %v3714, 4294901760
  %v9886 = vsub.f32 %v3714, %v9885
  %v9887 = vand.u32 %v9886, 4294901760
  %9888 = vmatprep.subr.mxu0 %v9887
  %v9889 = vand.u32 %v3713, 4294901760
  %v9890 = vsub.f32 %v3713, %v9889
  %v9891 = vand.u32 %v9890, 4294901760
  %9892 = vmatpush1.msra.mxu0 %v9891
  %v9893 = vand.u32 %v3737, 4294901760
  %v9894 = vsub.f32 %v3737, %v9893
  %v9895 = vand.u32 %v9894, 4294901760
  %9896 = vmatprep.subr.mxu0 %v9895
  %v9897 = vand.u32 %v3736, 4294901760
  %v9898 = vsub.f32 %v3736, %v9897
  %v9899 = vand.u32 %v9898, 4294901760
  %9900 = vmatpush1.msra.mxu0 %v9899
  %v9901 = vand.u32 %v3832, 4294901760
  %v9902 = vsub.f32 %v3832, %v9901
  %v9903 = vand.u32 %v9902, 4294901760
  %9904 = vmatprep.subr.mxu0 %v9903
  %v9905 = vand.u32 %v3829, 4294901760
  %v9906 = vsub.f32 %v3829, %v9905
  %v9907 = vand.u32 %v9906, 4294901760
  %9908 = vmatpush1.msra.mxu0 %v9907
  %9909 = vmatprep.subr.mxu0 0.0
  %9910 = vmatpush1.msra.mxu0 0.0
  %9911 = vmatprep.subr.mxu0 0.0
  %9912 = vmatpush1.msra.mxu0 0.0
  %9913 = vmatprep.subr.mxu0 0.0
  %9914 = vmatpush1.msra.mxu0 0.0
  %9915 = vmatprep.subr.mxu0 0.0
  %9916 = vmatpush1.msra.mxu0 0.0
  %9917 = vmatprep.subr.mxu0 0.0
  %9918 = vmatpush1.msra.mxu0 0.0
  %9919 = vmatprep.subr.mxu0 0.0
  %9920 = vmatpush1.msra.mxu0 0.0
  %9921 = vmatprep.subr.mxu0 0.0
  %9922 = vmatpush1.msra.mxu0 0.0
  %9923 = vmatprep.subr.mxu0 0.0
  %9924 = vmatpush1.msra.mxu0 0.0
  %9925 = vmatprep.subr.mxu0 0.0
  %9926 = vmatpush1.msra.mxu0 0.0
  %9927 = vmatprep.subr.mxu0 0.0
  %9928 = vmatpush1.msra.mxu0 0.0
  %9929 = vmatprep.subr.mxu0 0.0
  %9930 = vmatpush1.msra.mxu0 0.0
  %9931 = vmatprep.subr.mxu0 0.0
  %9932 = vmatpush1.msra.mxu0 0.0
  %9933 = vmatprep.subr.mxu0 0.0
  %9934 = vmatpush1.msra.mxu0 0.0
  %9935 = vmatprep.subr.mxu0 0.0
  %9936 = vmatpush1.msra.mxu0 0.0
  %9937 = vmatprep.subr.mxu0 0.0
  %9938 = vmatpush1.msra.mxu0 0.0
  %9939 = vmatprep.subr.mxu0 0.0
  %9940 = vmatpush1.msra.mxu0 0.0
  %9941 = vmatprep.subr.mxu0 0.0
  %9942 = vmatpush1.msra.mxu0 0.0
  %9943 = vmatprep.subr.mxu0 0.0
  %9944 = vmatpush1.msra.mxu0 0.0
  %9945 = vmatprep.subr.mxu0 0.0
  %9946 = vmatpush1.msra.mxu0 0.0
  %9947 = vmatprep.subr.mxu0 0.0
  %9948 = vmatpush1.msra.mxu0 0.0
  %9949 = vmatprep.subr.mxu0 0.0
  %9950 = vmatpush1.msra.mxu0 0.0
  %9951 = vmatprep.subr.mxu0 0.0
  %9952 = vmatpush1.msra.mxu0 0.0
  %9953 = vmatprep.subr.mxu0 0.0
  %9954 = vmatpush1.msra.mxu0 0.0
  %9955 = vmatprep.subr.mxu0 0.0
  %9956 = vmatpush1.msra.mxu0 0.0
  %9957 = vmatprep.subr.mxu0 0.0
  %9958 = vmatpush1.msra.mxu0 0.0
  %9959 = vmatprep.mubr.f32.mxu0 0.0
  %v9960 = vand.u32 %v3771, 4294901760
  %9961 = vmatmul.mubr.f32.gmra.mrb[0].mxu0 %v9960
  %v9962 = vpop.f32.mrb[0].mxu0
  %v9963 = vadd.f32 %v9849, %v9962
  %v9964 = vpop.f32.mrb[0].mxu0
  %v9965 = vadd.f32 %v9851, %v9964
  %9966 = vdwg.mxu0
  %v9967 = vand.u32 %v3622, 4294901760
  %9968 = vmatprep.subr.mxu0 %v9967
  %v9969 = vand.u32 %v3621, 4294901760
  %9970 = vmatpush1.msra.mxu0 %v9969
  %v9971 = vand.u32 %v3645, 4294901760
  %9972 = vmatprep.subr.mxu0 %v9971
  %v9973 = vand.u32 %v3644, 4294901760
  %9974 = vmatpush1.msra.mxu0 %v9973
  %v9975 = vand.u32 %v3668, 4294901760
  %9976 = vmatprep.subr.mxu0 %v9975
  %v9977 = vand.u32 %v3667, 4294901760
  %9978 = vmatpush1.msra.mxu0 %v9977
  %v9979 = vand.u32 %v3691, 4294901760
  %9980 = vmatprep.subr.mxu0 %v9979
  %v9981 = vand.u32 %v3690, 4294901760
  %9982 = vmatpush1.msra.mxu0 %v9981
  %v9983 = vand.u32 %v3714, 4294901760
  %9984 = vmatprep.subr.mxu0 %v9983
  %v9985 = vand.u32 %v3713, 4294901760
  %9986 = vmatpush1.msra.mxu0 %v9985
  %v9987 = vand.u32 %v3737, 4294901760
  %9988 = vmatprep.subr.mxu0 %v9987
  %v9989 = vand.u32 %v3736, 4294901760
  %9990 = vmatpush1.msra.mxu0 %v9989
  %v9991 = vand.u32 %v3832, 4294901760
  %9992 = vmatprep.subr.mxu0 %v9991
  %v9993 = vand.u32 %v3829, 4294901760
  %9994 = vmatpush1.msra.mxu0 %v9993
  %9995 = vmatprep.subr.mxu0 0.0
  %9996 = vmatpush1.msra.mxu0 0.0
  %9997 = vmatprep.subr.mxu0 0.0
  %9998 = vmatpush1.msra.mxu0 0.0
  %9999 = vmatprep.subr.mxu0 0.0
  %10000 = vmatpush1.msra.mxu0 0.0
  %10001 = vmatprep.subr.mxu0 0.0
  %10002 = vmatpush1.msra.mxu0 0.0
  %10003 = vmatprep.subr.mxu0 0.0
  %10004 = vmatpush1.msra.mxu0 0.0
  %10005 = vmatprep.subr.mxu0 0.0
  %10006 = vmatpush1.msra.mxu0 0.0
  %10007 = vmatprep.subr.mxu0 0.0
  %10008 = vmatpush1.msra.mxu0 0.0
  %10009 = vmatprep.subr.mxu0 0.0
  %10010 = vmatpush1.msra.mxu0 0.0
  %10011 = vmatprep.subr.mxu0 0.0
  %10012 = vmatpush1.msra.mxu0 0.0
  %10013 = vmatprep.subr.mxu0 0.0
  %10014 = vmatpush1.msra.mxu0 0.0
  %10015 = vmatprep.subr.mxu0 0.0
  %10016 = vmatpush1.msra.mxu0 0.0
  %10017 = vmatprep.subr.mxu0 0.0
  %10018 = vmatpush1.msra.mxu0 0.0
  %10019 = vmatprep.subr.mxu0 0.0
  %10020 = vmatpush1.msra.mxu0 0.0
  %10021 = vmatprep.subr.mxu0 0.0
  %10022 = vmatpush1.msra.mxu0 0.0
  %10023 = vmatprep.subr.mxu0 0.0
  %10024 = vmatpush1.msra.mxu0 0.0
  %10025 = vmatprep.subr.mxu0 0.0
  %10026 = vmatpush1.msra.mxu0 0.0
  %10027 = vmatprep.subr.mxu0 0.0
  %10028 = vmatpush1.msra.mxu0 0.0
  %10029 = vmatprep.subr.mxu0 0.0
  %10030 = vmatpush1.msra.mxu0 0.0
  %10031 = vmatprep.subr.mxu0 0.0
  %10032 = vmatpush1.msra.mxu0 0.0
  %10033 = vmatprep.subr.mxu0 0.0
  %10034 = vmatpush1.msra.mxu0 0.0
  %10035 = vmatprep.subr.mxu0 0.0
  %10036 = vmatpush1.msra.mxu0 0.0
  %10037 = vmatprep.subr.mxu0 0.0
  %10038 = vmatpush1.msra.mxu0 0.0
  %10039 = vmatprep.subr.mxu0 0.0
  %10040 = vmatpush1.msra.mxu0 0.0
  %10041 = vmatprep.subr.mxu0 0.0
  %10042 = vmatpush1.msra.mxu0 0.0
  %10043 = vmatprep.subr.mxu0 0.0
  %10044 = vmatpush1.msra.mxu0 0.0
  %10045 = vmatprep.mubr.f32.mxu0 0.0
  %v10046 = vand.u32 %v3771, 4294901760
  %10047 = vmatmul.mubr.f32.gmra.mrb[0].mxu0 %v10046
  %v10048 = vpop.f32.mrb[0].mxu0
  %v10049 = vadd.f32 %v9963, %v10048
  %v10050 = vpop.f32.mrb[0].mxu0
  %v10051 = vadd.f32 %v9965, %v10050
  %10052 = vdwg.mxu0
  %v10053 = vand.u32 %v3624, 4294901760
  %10054 = vmatprep.subr.mxu0 %v10053
  %v10055 = vand.u32 %v3623, 4294901760
  %10056 = vmatpush1.msra.mxu0 %v10055
  %v10057 = vand.u32 %v3647, 4294901760
  %10058 = vmatprep.subr.mxu0 %v10057
  %v10059 = vand.u32 %v3646, 4294901760
  %10060 = vmatpush1.msra.mxu0 %v10059
  %v10061 = vand.u32 %v3670, 4294901760
  %10062 = vmatprep.subr.mxu0 %v10061
  %v10063 = vand.u32 %v3669, 4294901760
  %10064 = vmatpush1.msra.mxu0 %v10063
  %v10065 = vand.u32 %v3693, 4294901760
  %10066 = vmatprep.subr.mxu0 %v10065
  %v10067 = vand.u32 %v3692, 4294901760
  %10068 = vmatpush1.msra.mxu0 %v10067
  %v10069 = vand.u32 %v3716, 4294901760
  %10070 = vmatprep.subr.mxu0 %v10069
  %v10071 = vand.u32 %v3715, 4294901760
  %10072 = vmatpush1.msra.mxu0 %v10071
  %v10073 = vand.u32 %v3739, 4294901760
  %10074 = vmatprep.subr.mxu0 %v10073
  %v10075 = vand.u32 %v3738, 4294901760
  %10076 = vmatpush1.msra.mxu0 %v10075
  %v10077 = vand.u32 %v3838, 4294901760
  %10078 = vmatprep.subr.mxu0 %v10077
  %v10079 = vand.u32 %v3835, 4294901760
  %10080 = vmatpush1.msra.mxu0 %v10079
  %10081 = vmatprep.subr.mxu0 0.0
  %10082 = vmatpush1.msra.mxu0 0.0
  %10083 = vmatprep.subr.mxu0 0.0
  %10084 = vmatpush1.msra.mxu0 0.0
  %10085 = vmatprep.subr.mxu0 0.0
  %10086 = vmatpush1.msra.mxu0 0.0
  %10087 = vmatprep.subr.mxu0 0.0
  %10088 = vmatpush1.msra.mxu0 0.0
  %10089 = vmatprep.subr.mxu0 0.0
  %10090 = vmatpush1.msra.mxu0 0.0
  %10091 = vmatprep.subr.mxu0 0.0
  %10092 = vmatpush1.msra.mxu0 0.0
  %10093 = vmatprep.subr.mxu0 0.0
  %10094 = vmatpush1.msra.mxu0 0.0
  %10095 = vmatprep.subr.mxu0 0.0
  %10096 = vmatpush1.msra.mxu0 0.0
  %10097 = vmatprep.subr.mxu0 0.0
  %10098 = vmatpush1.msra.mxu0 0.0
  %10099 = vmatprep.subr.mxu0 0.0
  %10100 = vmatpush1.msra.mxu0 0.0
  %10101 = vmatprep.subr.mxu0 0.0
  %10102 = vmatpush1.msra.mxu0 0.0
  %10103 = vmatprep.subr.mxu0 0.0
  %10104 = vmatpush1.msra.mxu0 0.0
  %10105 = vmatprep.subr.mxu0 0.0
  %10106 = vmatpush1.msra.mxu0 0.0
  %10107 = vmatprep.subr.mxu0 0.0
  %10108 = vmatpush1.msra.mxu0 0.0
  %10109 = vmatprep.subr.mxu0 0.0
  %10110 = vmatpush1.msra.mxu0 0.0
  %10111 = vmatprep.subr.mxu0 0.0
  %10112 = vmatpush1.msra.mxu0 0.0
  %10113 = vmatprep.subr.mxu0 0.0
  %10114 = vmatpush1.msra.mxu0 0.0
  %10115 = vmatprep.subr.mxu0 0.0
  %10116 = vmatpush1.msra.mxu0 0.0
  %10117 = vmatprep.subr.mxu0 0.0
  %10118 = vmatpush1.msra.mxu0 0.0
  %10119 = vmatprep.subr.mxu0 0.0
  %10120 = vmatpush1.msra.mxu0 0.0
  %10121 = vmatprep.subr.mxu0 0.0
  %10122 = vmatpush1.msra.mxu0 0.0
  %10123 = vmatprep.subr.mxu0 0.0
  %10124 = vmatpush1.msra.mxu0 0.0
  %10125 = vmatprep.subr.mxu0 0.0
  %10126 = vmatpush1.msra.mxu0 0.0
  %10127 = vmatprep.subr.mxu0 0.0
  %10128 = vmatpush1.msra.mxu0 0.0
  %10129 = vmatprep.subr.mxu0 0.0
  %10130 = vmatpush1.msra.mxu0 0.0
  %10131 = vmatprep.mubr.f32.mxu0 0.0
  %v10132 = vand.u32 %v3771, 4294901760
  %v10133 = vsub.f32 %v3771, %v10132
  %v10134 = vand.u32 %v10133, 4294901760
  %v10135 = vsub.f32 %v10133, %v10134
  %v10136 = vand.u32 %v10135, 4294901760
  %10137 = vmatmul.mubr.f32.gmra.mrb[0].mxu0 %v10136
  %v10138 = vpop.f32.mrb[0].mxu0
  %v10139 = vadd.f32 %v3768, %v10138
  %v10140 = vpop.f32.mrb[0].mxu0
  %v10141 = vadd.f32 %v3768, %v10140
  %10142 = vdwg.mxu0
  %v10143 = vand.u32 %v3624, 4294901760
  %v10144 = vsub.f32 %v3624, %v10143
  %v10145 = vand.u32 %v10144, 4294901760
  %v10146 = vsub.f32 %v10144, %v10145
  %v10147 = vand.u32 %v10146, 4294901760
  %10148 = vmatprep.subr.mxu0 %v10147
  %v10149 = vand.u32 %v3623, 4294901760
  %v10150 = vsub.f32 %v3623, %v10149
  %v10151 = vand.u32 %v10150, 4294901760
  %v10152 = vsub.f32 %v10150, %v10151
  %v10153 = vand.u32 %v10152, 4294901760
  %10154 = vmatpush1.msra.mxu0 %v10153
  %v10155 = vand.u32 %v3647, 4294901760
  %v10156 = vsub.f32 %v3647, %v10155
  %v10157 = vand.u32 %v10156, 4294901760
  %v10158 = vsub.f32 %v10156, %v10157
  %v10159 = vand.u32 %v10158, 4294901760
  %10160 = vmatprep.subr.mxu0 %v10159
  %v10161 = vand.u32 %v3646, 4294901760
  %v10162 = vsub.f32 %v3646, %v10161
  %v10163 = vand.u32 %v10162, 4294901760
  %v10164 = vsub.f32 %v10162, %v10163
  %v10165 = vand.u32 %v10164, 4294901760
  %10166 = vmatpush1.msra.mxu0 %v10165
  %v10167 = vand.u32 %v3670, 4294901760
  %v10168 = vsub.f32 %v3670, %v10167
  %v10169 = vand.u32 %v10168, 4294901760
  %v10170 = vsub.f32 %v10168, %v10169
  %v10171 = vand.u32 %v10170, 4294901760
  %10172 = vmatprep.subr.mxu0 %v10171
  %v10173 = vand.u32 %v3669, 4294901760
  %v10174 = vsub.f32 %v3669, %v10173
  %v10175 = vand.u32 %v10174, 4294901760
  %v10176 = vsub.f32 %v10174, %v10175
  %v10177 = vand.u32 %v10176, 4294901760
  %10178 = vmatpush1.msra.mxu0 %v10177
  %v10179 = vand.u32 %v3693, 4294901760
  %v10180 = vsub.f32 %v3693, %v10179
  %v10181 = vand.u32 %v10180, 4294901760
  %v10182 = vsub.f32 %v10180, %v10181
  %v10183 = vand.u32 %v10182, 4294901760
  %10184 = vmatprep.subr.mxu0 %v10183
  %v10185 = vand.u32 %v3692, 4294901760
  %v10186 = vsub.f32 %v3692, %v10185
  %v10187 = vand.u32 %v10186, 4294901760
  %v10188 = vsub.f32 %v10186, %v10187
  %v10189 = vand.u32 %v10188, 4294901760
  %10190 = vmatpush1.msra.mxu0 %v10189
  %v10191 = vand.u32 %v3716, 4294901760
  %v10192 = vsub.f32 %v3716, %v10191
  %v10193 = vand.u32 %v10192, 4294901760
  %v10194 = vsub.f32 %v10192, %v10193
  %v10195 = vand.u32 %v10194, 4294901760
  %10196 = vmatprep.subr.mxu0 %v10195
  %v10197 = vand.u32 %v3715, 4294901760
  %v10198 = vsub.f32 %v3715, %v10197
  %v10199 = vand.u32 %v10198, 4294901760
  %v10200 = vsub.f32 %v10198, %v10199
  %v10201 = vand.u32 %v10200, 4294901760
  %10202 = vmatpush1.msra.mxu0 %v10201
  %v10203 = vand.u32 %v3739, 4294901760
  %v10204 = vsub.f32 %v3739, %v10203
  %v10205 = vand.u32 %v10204, 4294901760
  %v10206 = vsub.f32 %v10204, %v10205
  %v10207 = vand.u32 %v10206, 4294901760
  %10208 = vmatprep.subr.mxu0 %v10207
  %v10209 = vand.u32 %v3738, 4294901760
  %v10210 = vsub.f32 %v3738, %v10209
  %v10211 = vand.u32 %v10210, 4294901760
  %v10212 = vsub.f32 %v10210, %v10211
  %v10213 = vand.u32 %v10212, 4294901760
  %10214 = vmatpush1.msra.mxu0 %v10213
  %v10215 = vand.u32 %v3838, 4294901760
  %v10216 = vsub.f32 %v3838, %v10215
  %v10217 = vand.u32 %v10216, 4294901760
  %v10218 = vsub.f32 %v10216, %v10217
  %v10219 = vand.u32 %v10218, 4294901760
  %10220 = vmatprep.subr.mxu0 %v10219
  %v10221 = vand.u32 %v3835, 4294901760
  %v10222 = vsub.f32 %v3835, %v10221
  %v10223 = vand.u32 %v10222, 4294901760
  %v10224 = vsub.f32 %v10222, %v10223
  %v10225 = vand.u32 %v10224, 4294901760
  %10226 = vmatpush1.msra.mxu0 %v10225
  %10227 = vmatprep.subr.mxu0 0.0
  %10228 = vmatpush1.msra.mxu0 0.0
  %10229 = vmatprep.subr.mxu0 0.0
  %10230 = vmatpush1.msra.mxu0 0.0
  %10231 = vmatprep.subr.mxu0 0.0
  %10232 = vmatpush1.msra.mxu0 0.0
  %10233 = vmatprep.subr.mxu0 0.0
  %10234 = vmatpush1.msra.mxu0 0.0
  %10235 = vmatprep.subr.mxu0 0.0
  %10236 = vmatpush1.msra.mxu0 0.0
  %10237 = vmatprep.subr.mxu0 0.0
  %10238 = vmatpush1.msra.mxu0 0.0
  %10239 = vmatprep.subr.mxu0 0.0
  %10240 = vmatpush1.msra.mxu0 0.0
  %10241 = vmatprep.subr.mxu0 0.0
  %10242 = vmatpush1.msra.mxu0 0.0
  %10243 = vmatprep.subr.mxu0 0.0
  %10244 = vmatpush1.msra.mxu0 0.0
  %10245 = vmatprep.subr.mxu0 0.0
  %10246 = vmatpush1.msra.mxu0 0.0
  %10247 = vmatprep.subr.mxu0 0.0
  %10248 = vmatpush1.msra.mxu0 0.0
  %10249 = vmatprep.subr.mxu0 0.0
  %10250 = vmatpush1.msra.mxu0 0.0
  %10251 = vmatprep.subr.mxu0 0.0
  %10252 = vmatpush1.msra.mxu0 0.0
  %10253 = vmatprep.subr.mxu0 0.0
  %10254 = vmatpush1.msra.mxu0 0.0
  %10255 = vmatprep.subr.mxu0 0.0
  %10256 = vmatpush1.msra.mxu0 0.0
  %10257 = vmatprep.subr.mxu0 0.0
  %10258 = vmatpush1.msra.mxu0 0.0
  %10259 = vmatprep.subr.mxu0 0.0
  %10260 = vmatpush1.msra.mxu0 0.0
  %10261 = vmatprep.subr.mxu0 0.0
  %10262 = vmatpush1.msra.mxu0 0.0
  %10263 = vmatprep.subr.mxu0 0.0
  %10264 = vmatpush1.msra.mxu0 0.0
  %10265 = vmatprep.subr.mxu0 0.0
  %10266 = vmatpush1.msra.mxu0 0.0
  %10267 = vmatprep.subr.mxu0 0.0
  %10268 = vmatpush1.msra.mxu0 0.0
  %10269 = vmatprep.subr.mxu0 0.0
  %10270 = vmatpush1.msra.mxu0 0.0
  %10271 = vmatprep.subr.mxu0 0.0
  %10272 = vmatpush1.msra.mxu0 0.0
  %10273 = vmatprep.subr.mxu0 0.0
  %10274 = vmatpush1.msra.mxu0 0.0
  %10275 = vmatprep.subr.mxu0 0.0
  %10276 = vmatpush1.msra.mxu0 0.0
  %10277 = vmatprep.mubr.f32.mxu0 0.0
  %v10278 = vand.u32 %v3771, 4294901760
  %10279 = vmatmul.mubr.f32.gmra.mrb[0].mxu0 %v10278
  %v10280 = vpop.f32.mrb[0].mxu0
  %v10281 = vadd.f32 %v10139, %v10280
  %v10282 = vpop.f32.mrb[0].mxu0
  %v10283 = vadd.f32 %v10141, %v10282
  %10284 = vdwg.mxu0
  %v10285 = vand.u32 %v3624, 4294901760
  %v10286 = vsub.f32 %v3624, %v10285
  %10287 = vmatprep.subr.mxu0 %v10286
  %v10288 = vand.u32 %v3623, 4294901760
  %v10289 = vsub.f32 %v3623, %v10288
  %10290 = vmatpush1.msra.mxu0 %v10289
  %v10291 = vand.u32 %v3647, 4294901760
  %v10292 = vsub.f32 %v3647, %v10291
  %10293 = vmatprep.subr.mxu0 %v10292
  %v10294 = vand.u32 %v3646, 4294901760
  %v10295 = vsub.f32 %v3646, %v10294
  %10296 = vmatpush1.msra.mxu0 %v10295
  %v10297 = vand.u32 %v3670, 4294901760
  %v10298 = vsub.f32 %v3670, %v10297
  %10299 = vmatprep.subr.mxu0 %v10298
  %v10300 = vand.u32 %v3669, 4294901760
  %v10301 = vsub.f32 %v3669, %v10300
  %10302 = vmatpush1.msra.mxu0 %v10301
  %v10303 = vand.u32 %v3693, 4294901760
  %v10304 = vsub.f32 %v3693, %v10303
  %10305 = vmatprep.subr.mxu0 %v10304
  %v10306 = vand.u32 %v3692, 4294901760
  %v10307 = vsub.f32 %v3692, %v10306
  %10308 = vmatpush1.msra.mxu0 %v10307
  %v10309 = vand.u32 %v3716, 4294901760
  %v10310 = vsub.f32 %v3716, %v10309
  %10311 = vmatprep.subr.mxu0 %v10310
  %v10312 = vand.u32 %v3715, 4294901760
  %v10313 = vsub.f32 %v3715, %v10312
  %10314 = vmatpush1.msra.mxu0 %v10313
  %v10315 = vand.u32 %v3739, 4294901760
  %v10316 = vsub.f32 %v3739, %v10315
  %10317 = vmatprep.subr.mxu0 %v10316
  %v10318 = vand.u32 %v3738, 4294901760
  %v10319 = vsub.f32 %v3738, %v10318
  %10320 = vmatpush1.msra.mxu0 %v10319
  %v10321 = vand.u32 %v3838, 4294901760
  %v10322 = vsub.f32 %v3838, %v10321
  %10323 = vmatprep.subr.mxu0 %v10322
  %v10324 = vand.u32 %v3835, 4294901760
  %v10325 = vsub.f32 %v3835, %v10324
  %10326 = vmatpush1.msra.mxu0 %v10325
  %10327 = vmatprep.subr.mxu0 0.0
  %10328 = vmatpush1.msra.mxu0 0.0
  %10329 = vmatprep.subr.mxu0 0.0
  %10330 = vmatpush1.msra.mxu0 0.0
  %10331 = vmatprep.subr.mxu0 0.0
  %10332 = vmatpush1.msra.mxu0 0.0
  %10333 = vmatprep.subr.mxu0 0.0
  %10334 = vmatpush1.msra.mxu0 0.0
  %10335 = vmatprep.subr.mxu0 0.0
  %10336 = vmatpush1.msra.mxu0 0.0
  %10337 = vmatprep.subr.mxu0 0.0
  %10338 = vmatpush1.msra.mxu0 0.0
  %10339 = vmatprep.subr.mxu0 0.0
  %10340 = vmatpush1.msra.mxu0 0.0
  %10341 = vmatprep.subr.mxu0 0.0
  %10342 = vmatpush1.msra.mxu0 0.0
  %10343 = vmatprep.subr.mxu0 0.0
  %10344 = vmatpush1.msra.mxu0 0.0
  %10345 = vmatprep.subr.mxu0 0.0
  %10346 = vmatpush1.msra.mxu0 0.0
  %10347 = vmatprep.subr.mxu0 0.0
  %10348 = vmatpush1.msra.mxu0 0.0
  %10349 = vmatprep.subr.mxu0 0.0
  %10350 = vmatpush1.msra.mxu0 0.0
  %10351 = vmatprep.subr.mxu0 0.0
  %10352 = vmatpush1.msra.mxu0 0.0
  %10353 = vmatprep.subr.mxu0 0.0
  %10354 = vmatpush1.msra.mxu0 0.0
  %10355 = vmatprep.subr.mxu0 0.0
  %10356 = vmatpush1.msra.mxu0 0.0
  %10357 = vmatprep.subr.mxu0 0.0
  %10358 = vmatpush1.msra.mxu0 0.0
  %10359 = vmatprep.subr.mxu0 0.0
  %10360 = vmatpush1.msra.mxu0 0.0
  %10361 = vmatprep.subr.mxu0 0.0
  %10362 = vmatpush1.msra.mxu0 0.0
  %10363 = vmatprep.subr.mxu0 0.0
  %10364 = vmatpush1.msra.mxu0 0.0
  %10365 = vmatprep.subr.mxu0 0.0
  %10366 = vmatpush1.msra.mxu0 0.0
  %10367 = vmatprep.subr.mxu0 0.0
  %10368 = vmatpush1.msra.mxu0 0.0
  %10369 = vmatprep.subr.mxu0 0.0
  %10370 = vmatpush1.msra.mxu0 0.0
  %10371 = vmatprep.subr.mxu0 0.0
  %10372 = vmatpush1.msra.mxu0 0.0
  %10373 = vmatprep.subr.mxu0 0.0
  %10374 = vmatpush1.msra.mxu0 0.0
  %10375 = vmatprep.subr.mxu0 0.0
  %10376 = vmatpush1.msra.mxu0 0.0
  %10377 = vmatprep.mubr.f32.mxu0 0.0
  %v10378 = vand.u32 %v3771, 4294901760
  %v10379 = vsub.f32 %v3771, %v10378
  %10380 = vmatmul.mubr.f32.gmra.mrb[0].mxu0 %v10379
  %v10381 = vpop.f32.mrb[0].mxu0
  %v10382 = vadd.f32 %v10281, %v10381
  %v10383 = vpop.f32.mrb[0].mxu0
  %v10384 = vadd.f32 %v10283, %v10383
  %10385 = vdwg.mxu0
  %v10386 = vand.u32 %v3624, 4294901760
  %10387 = vmatprep.subr.mxu0 %v10386
  %v10388 = vand.u32 %v3623, 4294901760
  %10389 = vmatpush1.msra.mxu0 %v10388
  %v10390 = vand.u32 %v3647, 4294901760
  %10391 = vmatprep.subr.mxu0 %v10390
  %v10392 = vand.u32 %v3646, 4294901760
  %10393 = vmatpush1.msra.mxu0 %v10392
  %v10394 = vand.u32 %v3670, 4294901760
  %10395 = vmatprep.subr.mxu0 %v10394
  %v10396 = vand.u32 %v3669, 4294901760
  %10397 = vmatpush1.msra.mxu0 %v10396
  %v10398 = vand.u32 %v3693, 4294901760
  %10399 = vmatprep.subr.mxu0 %v10398
  %v10400 = vand.u32 %v3692, 4294901760
  %10401 = vmatpush1.msra.mxu0 %v10400
  %v10402 = vand.u32 %v3716, 4294901760
  %10403 = vmatprep.subr.mxu0 %v10402
  %v10404 = vand.u32 %v3715, 4294901760
  %10405 = vmatpush1.msra.mxu0 %v10404
  %v10406 = vand.u32 %v3739, 4294901760
  %10407 = vmatprep.subr.mxu0 %v10406
  %v10408 = vand.u32 %v3738, 4294901760
  %10409 = vmatpush1.msra.mxu0 %v10408
  %v10410 = vand.u32 %v3838, 4294901760
  %10411 = vmatprep.subr.mxu0 %v10410
  %v10412 = vand.u32 %v3835, 4294901760
  %10413 = vmatpush1.msra.mxu0 %v10412
  %10414 = vmatprep.subr.mxu0 0.0
  %10415 = vmatpush1.msra.mxu0 0.0
  %10416 = vmatprep.subr.mxu0 0.0
  %10417 = vmatpush1.msra.mxu0 0.0
  %10418 = vmatprep.subr.mxu0 0.0
  %10419 = vmatpush1.msra.mxu0 0.0
  %10420 = vmatprep.subr.mxu0 0.0
  %10421 = vmatpush1.msra.mxu0 0.0
  %10422 = vmatprep.subr.mxu0 0.0
  %10423 = vmatpush1.msra.mxu0 0.0
  %10424 = vmatprep.subr.mxu0 0.0
  %10425 = vmatpush1.msra.mxu0 0.0
  %10426 = vmatprep.subr.mxu0 0.0
  %10427 = vmatpush1.msra.mxu0 0.0
  %10428 = vmatprep.subr.mxu0 0.0
  %10429 = vmatpush1.msra.mxu0 0.0
  %10430 = vmatprep.subr.mxu0 0.0
  %10431 = vmatpush1.msra.mxu0 0.0
  %10432 = vmatprep.subr.mxu0 0.0
  %10433 = vmatpush1.msra.mxu0 0.0
  %10434 = vmatprep.subr.mxu0 0.0
  %10435 = vmatpush1.msra.mxu0 0.0
  %10436 = vmatprep.subr.mxu0 0.0
  %10437 = vmatpush1.msra.mxu0 0.0
  %10438 = vmatprep.subr.mxu0 0.0
  %10439 = vmatpush1.msra.mxu0 0.0
  %10440 = vmatprep.subr.mxu0 0.0
  %10441 = vmatpush1.msra.mxu0 0.0
  %10442 = vmatprep.subr.mxu0 0.0
  %10443 = vmatpush1.msra.mxu0 0.0
  %10444 = vmatprep.subr.mxu0 0.0
  %10445 = vmatpush1.msra.mxu0 0.0
  %10446 = vmatprep.subr.mxu0 0.0
  %10447 = vmatpush1.msra.mxu0 0.0
  %10448 = vmatprep.subr.mxu0 0.0
  %10449 = vmatpush1.msra.mxu0 0.0
  %10450 = vmatprep.subr.mxu0 0.0
  %10451 = vmatpush1.msra.mxu0 0.0
  %10452 = vmatprep.subr.mxu0 0.0
  %10453 = vmatpush1.msra.mxu0 0.0
  %10454 = vmatprep.subr.mxu0 0.0
  %10455 = vmatpush1.msra.mxu0 0.0
  %10456 = vmatprep.subr.mxu0 0.0
  %10457 = vmatpush1.msra.mxu0 0.0
  %10458 = vmatprep.subr.mxu0 0.0
  %10459 = vmatpush1.msra.mxu0 0.0
  %10460 = vmatprep.subr.mxu0 0.0
  %10461 = vmatpush1.msra.mxu0 0.0
  %10462 = vmatprep.subr.mxu0 0.0
  %10463 = vmatpush1.msra.mxu0 0.0
  %10464 = vmatprep.mubr.f32.mxu0 0.0
  %v10465 = vand.u32 %v3771, 4294901760
  %v10466 = vsub.f32 %v3771, %v10465
  %v10467 = vand.u32 %v10466, 4294901760
  %10468 = vmatmul.mubr.f32.gmra.mrb[0].mxu0 %v10467
  %v10469 = vpop.f32.mrb[0].mxu0
  %v10470 = vadd.f32 %v10382, %v10469
  %v10471 = vpop.f32.mrb[0].mxu0
  %v10472 = vadd.f32 %v10384, %v10471
  %10473 = vdwg.mxu0
  %v10474 = vand.u32 %v3624, 4294901760
  %v10475 = vsub.f32 %v3624, %v10474
  %v10476 = vand.u32 %v10475, 4294901760
  %10477 = vmatprep.subr.mxu0 %v10476
  %v10478 = vand.u32 %v3623, 4294901760
  %v10479 = vsub.f32 %v3623, %v10478
  %v10480 = vand.u32 %v10479, 4294901760
  %10481 = vmatpush1.msra.mxu0 %v10480
  %v10482 = vand.u32 %v3647, 4294901760
  %v10483 = vsub.f32 %v3647, %v10482
  %v10484 = vand.u32 %v10483, 4294901760
  %10485 = vmatprep.subr.mxu0 %v10484
  %v10486 = vand.u32 %v3646, 4294901760
  %v10487 = vsub.f32 %v3646, %v10486
  %v10488 = vand.u32 %v10487, 4294901760
  %10489 = vmatpush1.msra.mxu0 %v10488
  %v10490 = vand.u32 %v3670, 4294901760
  %v10491 = vsub.f32 %v3670, %v10490
  %v10492 = vand.u32 %v10491, 4294901760
  %10493 = vmatprep.subr.mxu0 %v10492
  %v10494 = vand.u32 %v3669, 4294901760
  %v10495 = vsub.f32 %v3669, %v10494
  %v10496 = vand.u32 %v10495, 4294901760
  %10497 = vmatpush1.msra.mxu0 %v10496
  %v10498 = vand.u32 %v3693, 4294901760
  %v10499 = vsub.f32 %v3693, %v10498
  %v10500 = vand.u32 %v10499, 4294901760
  %10501 = vmatprep.subr.mxu0 %v10500
  %v10502 = vand.u32 %v3692, 4294901760
  %v10503 = vsub.f32 %v3692, %v10502
  %v10504 = vand.u32 %v10503, 4294901760
  %10505 = vmatpush1.msra.mxu0 %v10504
  %v10506 = vand.u32 %v3716, 4294901760
  %v10507 = vsub.f32 %v3716, %v10506
  %v10508 = vand.u32 %v10507, 4294901760
  %10509 = vmatprep.subr.mxu0 %v10508
  %v10510 = vand.u32 %v3715, 4294901760
  %v10511 = vsub.f32 %v3715, %v10510
  %v10512 = vand.u32 %v10511, 4294901760
  %10513 = vmatpush1.msra.mxu0 %v10512
  %v10514 = vand.u32 %v3739, 4294901760
  %v10515 = vsub.f32 %v3739, %v10514
  %v10516 = vand.u32 %v10515, 4294901760
  %10517 = vmatprep.subr.mxu0 %v10516
  %v10518 = vand.u32 %v3738, 4294901760
  %v10519 = vsub.f32 %v3738, %v10518
  %v10520 = vand.u32 %v10519, 4294901760
  %10521 = vmatpush1.msra.mxu0 %v10520
  %v10522 = vand.u32 %v3838, 4294901760
  %v10523 = vsub.f32 %v3838, %v10522
  %v10524 = vand.u32 %v10523, 4294901760
  %10525 = vmatprep.subr.mxu0 %v10524
  %v10526 = vand.u32 %v3835, 4294901760
  %v10527 = vsub.f32 %v3835, %v10526
  %v10528 = vand.u32 %v10527, 4294901760
  %10529 = vmatpush1.msra.mxu0 %v10528
  %10530 = vmatprep.subr.mxu0 0.0
  %10531 = vmatpush1.msra.mxu0 0.0
  %10532 = vmatprep.subr.mxu0 0.0
  %10533 = vmatpush1.msra.mxu0 0.0
  %10534 = vmatprep.subr.mxu0 0.0
  %10535 = vmatpush1.msra.mxu0 0.0
  %10536 = vmatprep.subr.mxu0 0.0
  %10537 = vmatpush1.msra.mxu0 0.0
  %10538 = vmatprep.subr.mxu0 0.0
  %10539 = vmatpush1.msra.mxu0 0.0
  %10540 = vmatprep.subr.mxu0 0.0
  %10541 = vmatpush1.msra.mxu0 0.0
  %10542 = vmatprep.subr.mxu0 0.0
  %10543 = vmatpush1.msra.mxu0 0.0
  %10544 = vmatprep.subr.mxu0 0.0
  %10545 = vmatpush1.msra.mxu0 0.0
  %10546 = vmatprep.subr.mxu0 0.0
  %10547 = vmatpush1.msra.mxu0 0.0
  %10548 = vmatprep.subr.mxu0 0.0
  %10549 = vmatpush1.msra.mxu0 0.0
  %10550 = vmatprep.subr.mxu0 0.0
  %10551 = vmatpush1.msra.mxu0 0.0
  %10552 = vmatprep.subr.mxu0 0.0
  %10553 = vmatpush1.msra.mxu0 0.0
  %10554 = vmatprep.subr.mxu0 0.0
  %10555 = vmatpush1.msra.mxu0 0.0
  %10556 = vmatprep.subr.mxu0 0.0
  %10557 = vmatpush1.msra.mxu0 0.0
  %10558 = vmatprep.subr.mxu0 0.0
  %10559 = vmatpush1.msra.mxu0 0.0
  %10560 = vmatprep.subr.mxu0 0.0
  %10561 = vmatpush1.msra.mxu0 0.0
  %10562 = vmatprep.subr.mxu0 0.0
  %10563 = vmatpush1.msra.mxu0 0.0
  %10564 = vmatprep.subr.mxu0 0.0
  %10565 = vmatpush1.msra.mxu0 0.0
  %10566 = vmatprep.subr.mxu0 0.0
  %10567 = vmatpush1.msra.mxu0 0.0
  %10568 = vmatprep.subr.mxu0 0.0
  %10569 = vmatpush1.msra.mxu0 0.0
  %10570 = vmatprep.subr.mxu0 0.0
  %10571 = vmatpush1.msra.mxu0 0.0
  %10572 = vmatprep.subr.mxu0 0.0
  %10573 = vmatpush1.msra.mxu0 0.0
  %10574 = vmatprep.subr.mxu0 0.0
  %10575 = vmatpush1.msra.mxu0 0.0
  %10576 = vmatprep.subr.mxu0 0.0
  %10577 = vmatpush1.msra.mxu0 0.0
  %10578 = vmatprep.subr.mxu0 0.0
  %10579 = vmatpush1.msra.mxu0 0.0
  %10580 = vmatprep.mubr.f32.mxu0 0.0
  %v10581 = vand.u32 %v3771, 4294901760
  %10582 = vmatmul.mubr.f32.gmra.mrb[0].mxu0 %v10581
  %v10583 = vpop.f32.mrb[0].mxu0
  %v10584 = vadd.f32 %v10470, %v10583
  %v10585 = vpop.f32.mrb[0].mxu0
  %v10586 = vadd.f32 %v10472, %v10585
  %10587 = vdwg.mxu0
  %v10588 = vand.u32 %v3624, 4294901760
  %10589 = vmatprep.subr.mxu0 %v10588
  %v10590 = vand.u32 %v3623, 4294901760
  %10591 = vmatpush1.msra.mxu0 %v10590
  %v10592 = vand.u32 %v3647, 4294901760
  %10593 = vmatprep.subr.mxu0 %v10592
  %v10594 = vand.u32 %v3646, 4294901760
  %10595 = vmatpush1.msra.mxu0 %v10594
  %v10596 = vand.u32 %v3670, 4294901760
  %10597 = vmatprep.subr.mxu0 %v10596
  %v10598 = vand.u32 %v3669, 4294901760
  %10599 = vmatpush1.msra.mxu0 %v10598
  %v10600 = vand.u32 %v3693, 4294901760
  %10601 = vmatprep.subr.mxu0 %v10600
  %v10602 = vand.u32 %v3692, 4294901760
  %10603 = vmatpush1.msra.mxu0 %v10602
  %v10604 = vand.u32 %v3716, 4294901760
  %10605 = vmatprep.subr.mxu0 %v10604
  %v10606 = vand.u32 %v3715, 4294901760
  %10607 = vmatpush1.msra.mxu0 %v10606
  %v10608 = vand.u32 %v3739, 4294901760
  %10609 = vmatprep.subr.mxu0 %v10608
  %v10610 = vand.u32 %v3738, 4294901760
  %10611 = vmatpush1.msra.mxu0 %v10610
  %v10612 = vand.u32 %v3838, 4294901760
  %10613 = vmatprep.subr.mxu0 %v10612
  %v10614 = vand.u32 %v3835, 4294901760
  %10615 = vmatpush1.msra.mxu0 %v10614
  %10616 = vmatprep.subr.mxu0 0.0
  %10617 = vmatpush1.msra.mxu0 0.0
  %10618 = vmatprep.subr.mxu0 0.0
  %10619 = vmatpush1.msra.mxu0 0.0
  %10620 = vmatprep.subr.mxu0 0.0
  %10621 = vmatpush1.msra.mxu0 0.0
  %10622 = vmatprep.subr.mxu0 0.0
  %10623 = vmatpush1.msra.mxu0 0.0
  %10624 = vmatprep.subr.mxu0 0.0
  %10625 = vmatpush1.msra.mxu0 0.0
  %10626 = vmatprep.subr.mxu0 0.0
  %10627 = vmatpush1.msra.mxu0 0.0
  %10628 = vmatprep.subr.mxu0 0.0
  %10629 = vmatpush1.msra.mxu0 0.0
  %10630 = vmatprep.subr.mxu0 0.0
  %10631 = vmatpush1.msra.mxu0 0.0
  %10632 = vmatprep.subr.mxu0 0.0
  %10633 = vmatpush1.msra.mxu0 0.0
  %10634 = vmatprep.subr.mxu0 0.0
  %10635 = vmatpush1.msra.mxu0 0.0
  %10636 = vmatprep.subr.mxu0 0.0
  %10637 = vmatpush1.msra.mxu0 0.0
  %10638 = vmatprep.subr.mxu0 0.0
  %10639 = vmatpush1.msra.mxu0 0.0
  %10640 = vmatprep.subr.mxu0 0.0
  %10641 = vmatpush1.msra.mxu0 0.0
  %10642 = vmatprep.subr.mxu0 0.0
  %10643 = vmatpush1.msra.mxu0 0.0
  %10644 = vmatprep.subr.mxu0 0.0
  %10645 = vmatpush1.msra.mxu0 0.0
  %10646 = vmatprep.subr.mxu0 0.0
  %10647 = vmatpush1.msra.mxu0 0.0
  %10648 = vmatprep.subr.mxu0 0.0
  %10649 = vmatpush1.msra.mxu0 0.0
  %10650 = vmatprep.subr.mxu0 0.0
  %10651 = vmatpush1.msra.mxu0 0.0
  %10652 = vmatprep.subr.mxu0 0.0
  %10653 = vmatpush1.msra.mxu0 0.0
  %10654 = vmatprep.subr.mxu0 0.0
  %10655 = vmatpush1.msra.mxu0 0.0
  %10656 = vmatprep.subr.mxu0 0.0
  %10657 = vmatpush1.msra.mxu0 0.0
  %10658 = vmatprep.subr.mxu0 0.0
  %10659 = vmatpush1.msra.mxu0 0.0
  %10660 = vmatprep.subr.mxu0 0.0
  %10661 = vmatpush1.msra.mxu0 0.0
  %10662 = vmatprep.subr.mxu0 0.0
  %10663 = vmatpush1.msra.mxu0 0.0
  %10664 = vmatprep.subr.mxu0 0.0
  %10665 = vmatpush1.msra.mxu0 0.0
  %10666 = vmatprep.mubr.f32.mxu0 0.0
  %v10667 = vand.u32 %v3771, 4294901760
  %10668 = vmatmul.mubr.f32.gmra.mrb[0].mxu0 %v10667
  %v10669 = vpop.f32.mrb[0].mxu0
  %v10670 = vadd.f32 %v10584, %v10669
  %v10671 = vpop.f32.mrb[0].mxu0
  %v10672 = vadd.f32 %v10586, %v10671
  %10673 = vdwg.mxu0
  %10674 = vmatprep.subr.mxu0 0.0
  %v10675 = vand.u32 %v3625, 4294901760
  %10676 = vmatpush1.msra.mxu0 %v10675
  %10677 = vmatprep.subr.mxu0 0.0
  %v10678 = vand.u32 %v3648, 4294901760
  %10679 = vmatpush1.msra.mxu0 %v10678
  %10680 = vmatprep.subr.mxu0 0.0
  %v10681 = vand.u32 %v3671, 4294901760
  %10682 = vmatpush1.msra.mxu0 %v10681
  %10683 = vmatprep.subr.mxu0 0.0
  %v10684 = vand.u32 %v3694, 4294901760
  %10685 = vmatpush1.msra.mxu0 %v10684
  %10686 = vmatprep.subr.mxu0 0.0
  %v10687 = vand.u32 %v3717, 4294901760
  %10688 = vmatpush1.msra.mxu0 %v10687
  %10689 = vmatprep.subr.mxu0 0.0
  %v10690 = vand.u32 %v3740, 4294901760
  %10691 = vmatpush1.msra.mxu0 %v10690
  %10692 = vmatprep.subr.mxu0 0.0
  %v10693 = vand.u32 %v3841, 4294901760
  %10694 = vmatpush1.msra.mxu0 %v10693
  %10695 = vmatprep.subr.mxu0 0.0
  %10696 = vmatpush1.msra.mxu0 0.0
  %10697 = vmatprep.subr.mxu0 0.0
  %10698 = vmatpush1.msra.mxu0 0.0
  %10699 = vmatprep.subr.mxu0 0.0
  %10700 = vmatpush1.msra.mxu0 0.0
  %10701 = vmatprep.subr.mxu0 0.0
  %10702 = vmatpush1.msra.mxu0 0.0
  %10703 = vmatprep.subr.mxu0 0.0
  %10704 = vmatpush1.msra.mxu0 0.0
  %10705 = vmatprep.subr.mxu0 0.0
  %10706 = vmatpush1.msra.mxu0 0.0
  %10707 = vmatprep.subr.mxu0 0.0
  %10708 = vmatpush1.msra.mxu0 0.0
  %10709 = vmatprep.subr.mxu0 0.0
  %10710 = vmatpush1.msra.mxu0 0.0
  %10711 = vmatprep.subr.mxu0 0.0
  %10712 = vmatpush1.msra.mxu0 0.0
  %10713 = vmatprep.subr.mxu0 0.0
  %10714 = vmatpush1.msra.mxu0 0.0
  %10715 = vmatprep.subr.mxu0 0.0
  %10716 = vmatpush1.msra.mxu0 0.0
  %10717 = vmatprep.subr.mxu0 0.0
  %10718 = vmatpush1.msra.mxu0 0.0
  %10719 = vmatprep.subr.mxu0 0.0
  %10720 = vmatpush1.msra.mxu0 0.0
  %10721 = vmatprep.subr.mxu0 0.0
  %10722 = vmatpush1.msra.mxu0 0.0
  %10723 = vmatprep.subr.mxu0 0.0
  %10724 = vmatpush1.msra.mxu0 0.0
  %10725 = vmatprep.subr.mxu0 0.0
  %10726 = vmatpush1.msra.mxu0 0.0
  %10727 = vmatprep.subr.mxu0 0.0
  %10728 = vmatpush1.msra.mxu0 0.0
  %10729 = vmatprep.subr.mxu0 0.0
  %10730 = vmatpush1.msra.mxu0 0.0
  %10731 = vmatprep.subr.mxu0 0.0
  %10732 = vmatpush1.msra.mxu0 0.0
  %10733 = vmatprep.subr.mxu0 0.0
  %10734 = vmatpush1.msra.mxu0 0.0
  %10735 = vmatprep.subr.mxu0 0.0
  %10736 = vmatpush1.msra.mxu0 0.0
  %10737 = vmatprep.subr.mxu0 0.0
  %10738 = vmatpush1.msra.mxu0 0.0
  %10739 = vmatprep.subr.mxu0 0.0
  %10740 = vmatpush1.msra.mxu0 0.0
  %10741 = vmatprep.subr.mxu0 0.0
  %10742 = vmatpush1.msra.mxu0 0.0
  %10743 = vmatprep.subr.mxu0 0.0
  %10744 = vmatpush1.msra.mxu0 0.0
  %10745 = vmatprep.mubr.f32.mxu0 0.0
  %v10746 = vand.u32 %v3771, 4294901760
  %v10747 = vsub.f32 %v3771, %v10746
  %v10748 = vand.u32 %v10747, 4294901760
  %v10749 = vsub.f32 %v10747, %v10748
  %v10750 = vand.u32 %v10749, 4294901760
  %10751 = vmatmul.mubr.f32.gmra.mrb[0].mxu0 %v10750
  %v10752 = vpop.f32.mrb[0].mxu0
  %v10753 = vadd.f32 %v3768, %v10752
  %v10754 = vpop.f32.mrb[0].mxu0
  %10755 = vdwg.mxu0
  %10756 = vmatprep.subr.mxu0 0.0
  %v10757 = vand.u32 %v3625, 4294901760
  %v10758 = vsub.f32 %v3625, %v10757
  %v10759 = vand.u32 %v10758, 4294901760
  %v10760 = vsub.f32 %v10758, %v10759
  %v10761 = vand.u32 %v10760, 4294901760
  %10762 = vmatpush1.msra.mxu0 %v10761
  %10763 = vmatprep.subr.mxu0 0.0
  %v10764 = vand.u32 %v3648, 4294901760
  %v10765 = vsub.f32 %v3648, %v10764
  %v10766 = vand.u32 %v10765, 4294901760
  %v10767 = vsub.f32 %v10765, %v10766
  %v10768 = vand.u32 %v10767, 4294901760
  %10769 = vmatpush1.msra.mxu0 %v10768
  %10770 = vmatprep.subr.mxu0 0.0
  %v10771 = vand.u32 %v3671, 4294901760
  %v10772 = vsub.f32 %v3671, %v10771
  %v10773 = vand.u32 %v10772, 4294901760
  %v10774 = vsub.f32 %v10772, %v10773
  %v10775 = vand.u32 %v10774, 4294901760
  %10776 = vmatpush1.msra.mxu0 %v10775
  %10777 = vmatprep.subr.mxu0 0.0
  %v10778 = vand.u32 %v3694, 4294901760
  %v10779 = vsub.f32 %v3694, %v10778
  %v10780 = vand.u32 %v10779, 4294901760
  %v10781 = vsub.f32 %v10779, %v10780
  %v10782 = vand.u32 %v10781, 4294901760
  %10783 = vmatpush1.msra.mxu0 %v10782
  %10784 = vmatprep.subr.mxu0 0.0
  %v10785 = vand.u32 %v3717, 4294901760
  %v10786 = vsub.f32 %v3717, %v10785
  %v10787 = vand.u32 %v10786, 4294901760
  %v10788 = vsub.f32 %v10786, %v10787
  %v10789 = vand.u32 %v10788, 4294901760
  %10790 = vmatpush1.msra.mxu0 %v10789
  %10791 = vmatprep.subr.mxu0 0.0
  %v10792 = vand.u32 %v3740, 4294901760
  %v10793 = vsub.f32 %v3740, %v10792
  %v10794 = vand.u32 %v10793, 4294901760
  %v10795 = vsub.f32 %v10793, %v10794
  %v10796 = vand.u32 %v10795, 4294901760
  %10797 = vmatpush1.msra.mxu0 %v10796
  %10798 = vmatprep.subr.mxu0 0.0
  %v10799 = vand.u32 %v3841, 4294901760
  %v10800 = vsub.f32 %v3841, %v10799
  %v10801 = vand.u32 %v10800, 4294901760
  %v10802 = vsub.f32 %v10800, %v10801
  %v10803 = vand.u32 %v10802, 4294901760
  %10804 = vmatpush1.msra.mxu0 %v10803
  %10805 = vmatprep.subr.mxu0 0.0
  %10806 = vmatpush1.msra.mxu0 0.0
  %10807 = vmatprep.subr.mxu0 0.0
  %10808 = vmatpush1.msra.mxu0 0.0
  %10809 = vmatprep.subr.mxu0 0.0
  %10810 = vmatpush1.msra.mxu0 0.0
  %10811 = vmatprep.subr.mxu0 0.0
  %10812 = vmatpush1.msra.mxu0 0.0
  %10813 = vmatprep.subr.mxu0 0.0
  %10814 = vmatpush1.msra.mxu0 0.0
  %10815 = vmatprep.subr.mxu0 0.0
  %10816 = vmatpush1.msra.mxu0 0.0
  %10817 = vmatprep.subr.mxu0 0.0
  %10818 = vmatpush1.msra.mxu0 0.0
  %10819 = vmatprep.subr.mxu0 0.0
  %10820 = vmatpush1.msra.mxu0 0.0
  %10821 = vmatprep.subr.mxu0 0.0
  %10822 = vmatpush1.msra.mxu0 0.0
  %10823 = vmatprep.subr.mxu0 0.0
  %10824 = vmatpush1.msra.mxu0 0.0
  %10825 = vmatprep.subr.mxu0 0.0
  %10826 = vmatpush1.msra.mxu0 0.0
  %10827 = vmatprep.subr.mxu0 0.0
  %10828 = vmatpush1.msra.mxu0 0.0
  %10829 = vmatprep.subr.mxu0 0.0
  %10830 = vmatpush1.msra.mxu0 0.0
  %10831 = vmatprep.subr.mxu0 0.0
  %10832 = vmatpush1.msra.mxu0 0.0
  %10833 = vmatprep.subr.mxu0 0.0
  %10834 = vmatpush1.msra.mxu0 0.0
  %10835 = vmatprep.subr.mxu0 0.0
  %10836 = vmatpush1.msra.mxu0 0.0
  %10837 = vmatprep.subr.mxu0 0.0
  %10838 = vmatpush1.msra.mxu0 0.0
  %10839 = vmatprep.subr.mxu0 0.0
  %10840 = vmatpush1.msra.mxu0 0.0
  %10841 = vmatprep.subr.mxu0 0.0
  %10842 = vmatpush1.msra.mxu0 0.0
  %10843 = vmatprep.subr.mxu0 0.0
  %10844 = vmatpush1.msra.mxu0 0.0
  %10845 = vmatprep.subr.mxu0 0.0
  %10846 = vmatpush1.msra.mxu0 0.0
  %10847 = vmatprep.subr.mxu0 0.0
  %10848 = vmatpush1.msra.mxu0 0.0
  %10849 = vmatprep.subr.mxu0 0.0
  %10850 = vmatpush1.msra.mxu0 0.0
  %10851 = vmatprep.subr.mxu0 0.0
  %10852 = vmatpush1.msra.mxu0 0.0
  %10853 = vmatprep.subr.mxu0 0.0
  %10854 = vmatpush1.msra.mxu0 0.0
  %10855 = vmatprep.mubr.f32.mxu0 0.0
  %v10856 = vand.u32 %v3771, 4294901760
  %10857 = vmatmul.mubr.f32.gmra.mrb[0].mxu0 %v10856
  %v10858 = vpop.f32.mrb[0].mxu0
  %v10859 = vadd.f32 %v10753, %v10858
  %v10860 = vpop.f32.mrb[0].mxu0
  %10861 = vdwg.mxu0
  %10862 = vmatprep.subr.mxu0 0.0
  %v10863 = vand.u32 %v3625, 4294901760
  %v10864 = vsub.f32 %v3625, %v10863
  %10865 = vmatpush1.msra.mxu0 %v10864
  %10866 = vmatprep.subr.mxu0 0.0
  %v10867 = vand.u32 %v3648, 4294901760
  %v10868 = vsub.f32 %v3648, %v10867
  %10869 = vmatpush1.msra.mxu0 %v10868
  %10870 = vmatprep.subr.mxu0 0.0
  %v10871 = vand.u32 %v3671, 4294901760
  %v10872 = vsub.f32 %v3671, %v10871
  %10873 = vmatpush1.msra.mxu0 %v10872
  %10874 = vmatprep.subr.mxu0 0.0
  %v10875 = vand.u32 %v3694, 4294901760
  %v10876 = vsub.f32 %v3694, %v10875
  %10877 = vmatpush1.msra.mxu0 %v10876
  %10878 = vmatprep.subr.mxu0 0.0
  %v10879 = vand.u32 %v3717, 4294901760
  %v10880 = vsub.f32 %v3717, %v10879
  %10881 = vmatpush1.msra.mxu0 %v10880
  %10882 = vmatprep.subr.mxu0 0.0
  %v10883 = vand.u32 %v3740, 4294901760
  %v10884 = vsub.f32 %v3740, %v10883
  %10885 = vmatpush1.msra.mxu0 %v10884
  %10886 = vmatprep.subr.mxu0 0.0
  %v10887 = vand.u32 %v3841, 4294901760
  %v10888 = vsub.f32 %v3841, %v10887
  %10889 = vmatpush1.msra.mxu0 %v10888
  %10890 = vmatprep.subr.mxu0 0.0
  %10891 = vmatpush1.msra.mxu0 0.0
  %10892 = vmatprep.subr.mxu0 0.0
  %10893 = vmatpush1.msra.mxu0 0.0
  %10894 = vmatprep.subr.mxu0 0.0
  %10895 = vmatpush1.msra.mxu0 0.0
  %10896 = vmatprep.subr.mxu0 0.0
  %10897 = vmatpush1.msra.mxu0 0.0
  %10898 = vmatprep.subr.mxu0 0.0
  %10899 = vmatpush1.msra.mxu0 0.0
  %10900 = vmatprep.subr.mxu0 0.0
  %10901 = vmatpush1.msra.mxu0 0.0
  %10902 = vmatprep.subr.mxu0 0.0
  %10903 = vmatpush1.msra.mxu0 0.0
  %10904 = vmatprep.subr.mxu0 0.0
  %10905 = vmatpush1.msra.mxu0 0.0
  %10906 = vmatprep.subr.mxu0 0.0
  %10907 = vmatpush1.msra.mxu0 0.0
  %10908 = vmatprep.subr.mxu0 0.0
  %10909 = vmatpush1.msra.mxu0 0.0
  %10910 = vmatprep.subr.mxu0 0.0
  %10911 = vmatpush1.msra.mxu0 0.0
  %10912 = vmatprep.subr.mxu0 0.0
  %10913 = vmatpush1.msra.mxu0 0.0
  %10914 = vmatprep.subr.mxu0 0.0
  %10915 = vmatpush1.msra.mxu0 0.0
  %10916 = vmatprep.subr.mxu0 0.0
  %10917 = vmatpush1.msra.mxu0 0.0
  %10918 = vmatprep.subr.mxu0 0.0
  %10919 = vmatpush1.msra.mxu0 0.0
  %10920 = vmatprep.subr.mxu0 0.0
  %10921 = vmatpush1.msra.mxu0 0.0
  %10922 = vmatprep.subr.mxu0 0.0
  %10923 = vmatpush1.msra.mxu0 0.0
  %10924 = vmatprep.subr.mxu0 0.0
  %10925 = vmatpush1.msra.mxu0 0.0
  %10926 = vmatprep.subr.mxu0 0.0
  %10927 = vmatpush1.msra.mxu0 0.0
  %10928 = vmatprep.subr.mxu0 0.0
  %10929 = vmatpush1.msra.mxu0 0.0
  %10930 = vmatprep.subr.mxu0 0.0
  %10931 = vmatpush1.msra.mxu0 0.0
  %10932 = vmatprep.subr.mxu0 0.0
  %10933 = vmatpush1.msra.mxu0 0.0
  %10934 = vmatprep.subr.mxu0 0.0
  %10935 = vmatpush1.msra.mxu0 0.0
  %10936 = vmatprep.subr.mxu0 0.0
  %10937 = vmatpush1.msra.mxu0 0.0
  %10938 = vmatprep.subr.mxu0 0.0
  %10939 = vmatpush1.msra.mxu0 0.0
  %10940 = vmatprep.mubr.f32.mxu0 0.0
  %v10941 = vand.u32 %v3771, 4294901760
  %v10942 = vsub.f32 %v3771, %v10941
  %10943 = vmatmul.mubr.f32.gmra.mrb[0].mxu0 %v10942
  %v10944 = vpop.f32.mrb[0].mxu0
  %v10945 = vadd.f32 %v10859, %v10944
  %v10946 = vpop.f32.mrb[0].mxu0
  %10947 = vdwg.mxu0
  %10948 = vmatprep.subr.mxu0 0.0
  %v10949 = vand.u32 %v3625, 4294901760
  %10950 = vmatpush1.msra.mxu0 %v10949
  %10951 = vmatprep.subr.mxu0 0.0
  %v10952 = vand.u32 %v3648, 4294901760
  %10953 = vmatpush1.msra.mxu0 %v10952
  %10954 = vmatprep.subr.mxu0 0.0
  %v10955 = vand.u32 %v3671, 4294901760
  %10956 = vmatpush1.msra.mxu0 %v10955
  %10957 = vmatprep.subr.mxu0 0.0
  %v10958 = vand.u32 %v3694, 4294901760
  %10959 = vmatpush1.msra.mxu0 %v10958
  %10960 = vmatprep.subr.mxu0 0.0
  %v10961 = vand.u32 %v3717, 4294901760
  %10962 = vmatpush1.msra.mxu0 %v10961
  %10963 = vmatprep.subr.mxu0 0.0
  %v10964 = vand.u32 %v3740, 4294901760
  %10965 = vmatpush1.msra.mxu0 %v10964
  %10966 = vmatprep.subr.mxu0 0.0
  %v10967 = vand.u32 %v3841, 4294901760
  %10968 = vmatpush1.msra.mxu0 %v10967
  %10969 = vmatprep.subr.mxu0 0.0
  %10970 = vmatpush1.msra.mxu0 0.0
  %10971 = vmatprep.subr.mxu0 0.0
  %10972 = vmatpush1.msra.mxu0 0.0
  %10973 = vmatprep.subr.mxu0 0.0
  %10974 = vmatpush1.msra.mxu0 0.0
  %10975 = vmatprep.subr.mxu0 0.0
  %10976 = vmatpush1.msra.mxu0 0.0
  %10977 = vmatprep.subr.mxu0 0.0
  %10978 = vmatpush1.msra.mxu0 0.0
  %10979 = vmatprep.subr.mxu0 0.0
  %10980 = vmatpush1.msra.mxu0 0.0
  %10981 = vmatprep.subr.mxu0 0.0
  %10982 = vmatpush1.msra.mxu0 0.0
  %10983 = vmatprep.subr.mxu0 0.0
  %10984 = vmatpush1.msra.mxu0 0.0
  %10985 = vmatprep.subr.mxu0 0.0
  %10986 = vmatpush1.msra.mxu0 0.0
  %10987 = vmatprep.subr.mxu0 0.0
  %10988 = vmatpush1.msra.mxu0 0.0
  %10989 = vmatprep.subr.mxu0 0.0
  %10990 = vmatpush1.msra.mxu0 0.0
  %10991 = vmatprep.subr.mxu0 0.0
  %10992 = vmatpush1.msra.mxu0 0.0
  %10993 = vmatprep.subr.mxu0 0.0
  %10994 = vmatpush1.msra.mxu0 0.0
  %10995 = vmatprep.subr.mxu0 0.0
  %10996 = vmatpush1.msra.mxu0 0.0
  %10997 = vmatprep.subr.mxu0 0.0
  %10998 = vmatpush1.msra.mxu0 0.0
  %10999 = vmatprep.subr.mxu0 0.0
  %11000 = vmatpush1.msra.mxu0 0.0
  %11001 = vmatprep.subr.mxu0 0.0
  %11002 = vmatpush1.msra.mxu0 0.0
  %11003 = vmatprep.subr.mxu0 0.0
  %11004 = vmatpush1.msra.mxu0 0.0
  %11005 = vmatprep.subr.mxu0 0.0
  %11006 = vmatpush1.msra.mxu0 0.0
  %11007 = vmatprep.subr.mxu0 0.0
  %11008 = vmatpush1.msra.mxu0 0.0
  %11009 = vmatprep.subr.mxu0 0.0
  %11010 = vmatpush1.msra.mxu0 0.0
  %11011 = vmatprep.subr.mxu0 0.0
  %11012 = vmatpush1.msra.mxu0 0.0
  %11013 = vmatprep.subr.mxu0 0.0
  %11014 = vmatpush1.msra.mxu0 0.0
  %11015 = vmatprep.subr.mxu0 0.0
  %11016 = vmatpush1.msra.mxu0 0.0
  %11017 = vmatprep.subr.mxu0 0.0
  %11018 = vmatpush1.msra.mxu0 0.0
  %11019 = vmatprep.mubr.f32.mxu0 0.0
  %v11020 = vand.u32 %v3771, 4294901760
  %v11021 = vsub.f32 %v3771, %v11020
  %v11022 = vand.u32 %v11021, 4294901760
  %11023 = vmatmul.mubr.f32.gmra.mrb[0].mxu0 %v11022
  %v11024 = vpop.f32.mrb[0].mxu0
  %v11025 = vadd.f32 %v10945, %v11024
  %v11026 = vpop.f32.mrb[0].mxu0
  %11027 = vdwg.mxu0
  %11028 = vmatprep.subr.mxu0 0.0
  %v11029 = vand.u32 %v3625, 4294901760
  %v11030 = vsub.f32 %v3625, %v11029
  %v11031 = vand.u32 %v11030, 4294901760
  %11032 = vmatpush1.msra.mxu0 %v11031
  %11033 = vmatprep.subr.mxu0 0.0
  %v11034 = vand.u32 %v3648, 4294901760
  %v11035 = vsub.f32 %v3648, %v11034
  %v11036 = vand.u32 %v11035, 4294901760
  %11037 = vmatpush1.msra.mxu0 %v11036
  %11038 = vmatprep.subr.mxu0 0.0
  %v11039 = vand.u32 %v3671, 4294901760
  %v11040 = vsub.f32 %v3671, %v11039
  %v11041 = vand.u32 %v11040, 4294901760
  %11042 = vmatpush1.msra.mxu0 %v11041
  %11043 = vmatprep.subr.mxu0 0.0
  %v11044 = vand.u32 %v3694, 4294901760
  %v11045 = vsub.f32 %v3694, %v11044
  %v11046 = vand.u32 %v11045, 4294901760
  %11047 = vmatpush1.msra.mxu0 %v11046
  %11048 = vmatprep.subr.mxu0 0.0
  %v11049 = vand.u32 %v3717, 4294901760
  %v11050 = vsub.f32 %v3717, %v11049
  %v11051 = vand.u32 %v11050, 4294901760
  %11052 = vmatpush1.msra.mxu0 %v11051
  %11053 = vmatprep.subr.mxu0 0.0
  %v11054 = vand.u32 %v3740, 4294901760
  %v11055 = vsub.f32 %v3740, %v11054
  %v11056 = vand.u32 %v11055, 4294901760
  %11057 = vmatpush1.msra.mxu0 %v11056
  %11058 = vmatprep.subr.mxu0 0.0
  %v11059 = vand.u32 %v3841, 4294901760
  %v11060 = vsub.f32 %v3841, %v11059
  %v11061 = vand.u32 %v11060, 4294901760
  %11062 = vmatpush1.msra.mxu0 %v11061
  %11063 = vmatprep.subr.mxu0 0.0
  %11064 = vmatpush1.msra.mxu0 0.0
  %11065 = vmatprep.subr.mxu0 0.0
  %11066 = vmatpush1.msra.mxu0 0.0
  %11067 = vmatprep.subr.mxu0 0.0
  %11068 = vmatpush1.msra.mxu0 0.0
  %11069 = vmatprep.subr.mxu0 0.0
  %11070 = vmatpush1.msra.mxu0 0.0
  %11071 = vmatprep.subr.mxu0 0.0
  %11072 = vmatpush1.msra.mxu0 0.0
  %11073 = vmatprep.subr.mxu0 0.0
  %11074 = vmatpush1.msra.mxu0 0.0
  %11075 = vmatprep.subr.mxu0 0.0
  %11076 = vmatpush1.msra.mxu0 0.0
  %11077 = vmatprep.subr.mxu0 0.0
  %11078 = vmatpush1.msra.mxu0 0.0
  %11079 = vmatprep.subr.mxu0 0.0
  %11080 = vmatpush1.msra.mxu0 0.0
  %11081 = vmatprep.subr.mxu0 0.0
  %11082 = vmatpush1.msra.mxu0 0.0
  %11083 = vmatprep.subr.mxu0 0.0
  %11084 = vmatpush1.msra.mxu0 0.0
  %11085 = vmatprep.subr.mxu0 0.0
  %11086 = vmatpush1.msra.mxu0 0.0
  %11087 = vmatprep.subr.mxu0 0.0
  %11088 = vmatpush1.msra.mxu0 0.0
  %11089 = vmatprep.subr.mxu0 0.0
  %11090 = vmatpush1.msra.mxu0 0.0
  %11091 = vmatprep.subr.mxu0 0.0
  %11092 = vmatpush1.msra.mxu0 0.0
  %11093 = vmatprep.subr.mxu0 0.0
  %11094 = vmatpush1.msra.mxu0 0.0
  %11095 = vmatprep.subr.mxu0 0.0
  %11096 = vmatpush1.msra.mxu0 0.0
  %11097 = vmatprep.subr.mxu0 0.0
  %11098 = vmatpush1.msra.mxu0 0.0
  %11099 = vmatprep.subr.mxu0 0.0
  %11100 = vmatpush1.msra.mxu0 0.0
  %11101 = vmatprep.subr.mxu0 0.0
  %11102 = vmatpush1.msra.mxu0 0.0
  %11103 = vmatprep.subr.mxu0 0.0
  %11104 = vmatpush1.msra.mxu0 0.0
  %11105 = vmatprep.subr.mxu0 0.0
  %11106 = vmatpush1.msra.mxu0 0.0
  %11107 = vmatprep.subr.mxu0 0.0
  %11108 = vmatpush1.msra.mxu0 0.0
  %11109 = vmatprep.subr.mxu0 0.0
  %11110 = vmatpush1.msra.mxu0 0.0
  %11111 = vmatprep.subr.mxu0 0.0
  %11112 = vmatpush1.msra.mxu0 0.0
  %11113 = vmatprep.mubr.f32.mxu0 0.0
  %v11114 = vand.u32 %v3771, 4294901760
  %11115 = vmatmul.mubr.f32.gmra.mrb[0].mxu0 %v11114
  %v11116 = vpop.f32.mrb[0].mxu0
  %v11117 = vadd.f32 %v11025, %v11116
  %v11118 = vpop.f32.mrb[0].mxu0
  %11119 = vdwg.mxu0
  %11120 = vmatprep.subr.mxu0 0.0
  %v11121 = vand.u32 %v3625, 4294901760
  %11122 = vmatpush1.msra.mxu0 %v11121
  %11123 = vmatprep.subr.mxu0 0.0
  %v11124 = vand.u32 %v3648, 4294901760
  %11125 = vmatpush1.msra.mxu0 %v11124
  %11126 = vmatprep.subr.mxu0 0.0
  %v11127 = vand.u32 %v3671, 4294901760
  %11128 = vmatpush1.msra.mxu0 %v11127
  %11129 = vmatprep.subr.mxu0 0.0
  %v11130 = vand.u32 %v3694, 4294901760
  %11131 = vmatpush1.msra.mxu0 %v11130
  %11132 = vmatprep.subr.mxu0 0.0
  %v11133 = vand.u32 %v3717, 4294901760
  %11134 = vmatpush1.msra.mxu0 %v11133
  %11135 = vmatprep.subr.mxu0 0.0
  %v11136 = vand.u32 %v3740, 4294901760
  %11137 = vmatpush1.msra.mxu0 %v11136
  %11138 = vmatprep.subr.mxu0 0.0
  %v11139 = vand.u32 %v3841, 4294901760
  %11140 = vmatpush1.msra.mxu0 %v11139
  %11141 = vmatprep.subr.mxu0 0.0
  %11142 = vmatpush1.msra.mxu0 0.0
  %11143 = vmatprep.subr.mxu0 0.0
  %11144 = vmatpush1.msra.mxu0 0.0
  %11145 = vmatprep.subr.mxu0 0.0
  %11146 = vmatpush1.msra.mxu0 0.0
  %11147 = vmatprep.subr.mxu0 0.0
  %11148 = vmatpush1.msra.mxu0 0.0
  %11149 = vmatprep.subr.mxu0 0.0
  %11150 = vmatpush1.msra.mxu0 0.0
  %11151 = vmatprep.subr.mxu0 0.0
  %11152 = vmatpush1.msra.mxu0 0.0
  %11153 = vmatprep.subr.mxu0 0.0
  %11154 = vmatpush1.msra.mxu0 0.0
  %11155 = vmatprep.subr.mxu0 0.0
  %11156 = vmatpush1.msra.mxu0 0.0
  %11157 = vmatprep.subr.mxu0 0.0
  %11158 = vmatpush1.msra.mxu0 0.0
  %11159 = vmatprep.subr.mxu0 0.0
  %11160 = vmatpush1.msra.mxu0 0.0
  %11161 = vmatprep.subr.mxu0 0.0
  %11162 = vmatpush1.msra.mxu0 0.0
  %11163 = vmatprep.subr.mxu0 0.0
  %11164 = vmatpush1.msra.mxu0 0.0
  %11165 = vmatprep.subr.mxu0 0.0
  %11166 = vmatpush1.msra.mxu0 0.0
  %11167 = vmatprep.subr.mxu0 0.0
  %11168 = vmatpush1.msra.mxu0 0.0
  %11169 = vmatprep.subr.mxu0 0.0
  %11170 = vmatpush1.msra.mxu0 0.0
  %11171 = vmatprep.subr.mxu0 0.0
  %11172 = vmatpush1.msra.mxu0 0.0
  %11173 = vmatprep.subr.mxu0 0.0
  %11174 = vmatpush1.msra.mxu0 0.0
  %11175 = vmatprep.subr.mxu0 0.0
  %11176 = vmatpush1.msra.mxu0 0.0
  %11177 = vmatprep.subr.mxu0 0.0
  %11178 = vmatpush1.msra.mxu0 0.0
  %11179 = vmatprep.subr.mxu0 0.0
  %11180 = vmatpush1.msra.mxu0 0.0
  %11181 = vmatprep.subr.mxu0 0.0
  %11182 = vmatpush1.msra.mxu0 0.0
  %11183 = vmatprep.subr.mxu0 0.0
  %11184 = vmatpush1.msra.mxu0 0.0
  %11185 = vmatprep.subr.mxu0 0.0
  %11186 = vmatpush1.msra.mxu0 0.0
  %11187 = vmatprep.subr.mxu0 0.0
  %11188 = vmatpush1.msra.mxu0 0.0
  %11189 = vmatprep.subr.mxu0 0.0
  %11190 = vmatpush1.msra.mxu0 0.0
  %11191 = vmatprep.mubr.f32.mxu0 0.0
  %v11192 = vand.u32 %v3771, 4294901760
  %11193 = vmatmul.mubr.f32.gmra.mrb[0].mxu0 %v11192
  %v11194 = vpop.f32.mrb[0].mxu0
  %v11195 = vadd.f32 %v11117, %v11194
  %v11196 = vpop.f32.mrb[0].mxu0
  %11197 = vdwg.mxu0
  %11198 = vst [vmem:[%s6] sm:$0x1f] %v4460
  %11199 = vst [vmem:[%s6 + $0x8] sm:$0x1f] %v4462
  %11200 = vst [vmem:[%s6 + $0x10] sm:$0x1f] %v5081
  %11201 = vst [vmem:[%s6 + $0x18] sm:$0x1f] %v5083
  %11202 = vst [vmem:[%s6 + $0x20] sm:$0x1f] %v5702
  %11203 = vst [vmem:[%s6 + $0x28] sm:$0x1f] %v5704
  %11204 = vst [vmem:[%s6 + $0x30] sm:$0x1f] %v6323
  %11205 = vst [vmem:[%s6 + $0x38] sm:$0x1f] %v6325
  %11206 = vst [vmem:[%s6 + $0x40] sm:$0x1f] %v6944
  %11207 = vst [vmem:[%s6 + $0x48] sm:$0x1f] %v6946
  %11208 = vst [vmem:[%s6 + $0x50] sm:$0x1f] %v7565
  %11209 = vst [vmem:[%s6 + $0x58] sm:$0x1f] %v7567
  %11210 = vst [vmem:[%s6 + $0x60] sm:$0x1f] %v8186
  %11211 = vst [vmem:[%s6 + $0x68] sm:$0x1f] %v8188
  %11212 = vst [vmem:[%s6 + $0x70] sm:$0x1f] %v8807
  %11213 = vst [vmem:[%s6 + $0x78] sm:$0x1f] %v8809
  %11214 = vst [vmem:[%s6 + $0x80] sm:$0x1f] %v9428
  %11215 = vst [vmem:[%s6 + $0x88] sm:$0x1f] %v9430
  %11216 = vst [vmem:[%s6 + $0x90] sm:$0x1f] %v10049
  %11217 = vst [vmem:[%s6 + $0x98] sm:$0x1f] %v10051
  %11218 = vst [vmem:[%s6 + $0xa0] sm:$0x1f] %v10670
  %11219 = vst [vmem:[%s6 + $0xa8] sm:$0x1f] %v10672
  %vm11220 = vcmask 585728
  %11221 = vst.msk [vmem:[%s6 + $0xb0] sm:$0x1f] %vm11220, %v11195
  // Predicated region
  $region26: #{model_forward.1} parent=0 // pred_check
    _
  $region27: #{model_forward.1} parent=0 // pred_check_branch
    %11223 = sbr.rel (0) target = $region29
  $region28: #{model_forward.1} parent=0 // pred_region
    _
  $region29: #{model_forward.1} parent=0 // pred_fallthru
    _
  // Predicated region
  $region30: #{model_forward.1} parent=0 // pred_check
    _
  $region31: #{model_forward.1} parent=0 // pred_check_branch
    %11225 = sbr.rel (0) target = $region33
  $region32: #{model_forward.1} parent=0 // pred_region
    _
  $region33: #{model_forward.1} parent=0 // pred_fallthru
    _

</llo_original>
